<compile_context>
chip_gen: v7x
topology: tpu7x:2x2x1
jax: 0.10.0
libtpu: 0.0.40
codegen_flags: <defaults>
</compile_context>

<pallas_src>
import functools
import math

import jax
import jax.numpy as jnp
from jax.experimental import pallas as pl
from jax.experimental.pallas import tpu as pltpu

BETA = 0.25
LEAKY_SLOPE = 0.01  # nn.LeakyReLU default


def _round_up(x, m):
    return (x + m - 1) // m * m


def _vmem_budget_bytes():
    # Generation-aware scoped-VMEM budget (v7x has 64 MiB physical, v5e/v6e 128 MiB).
    try:
        cap = int(pltpu.get_tpu_info().vmem_capacity_bytes)
    except Exception:
        cap = 64 * 1024 * 1024
    return max(16 * 1024 * 1024, min(cap * 3 // 4, 100 * 1024 * 1024))


VMEM_BUDGET = _vmem_budget_bytes()


def _apply_act(y, act):
    if act == "leaky_relu":
        return jnp.where(y >= 0, y, LEAKY_SLOPE * y)
    if act == "relu":
        return jnp.maximum(y, 0.0)
    if act == "tanh":
        return jnp.tanh(y)
    return y


# --------------------------------------------------------------------------
# Kernel 1: row-tiled matmul with fused bias + activation (used for 1x1 conv)
# --------------------------------------------------------------------------
def _mm_kernel(a_ref, w_ref, b_ref, o_ref, *, act):
    y = jnp.dot(a_ref[...], w_ref[...], preferred_element_type=jnp.float32)
    y = _apply_act(y + b_ref[...], act)
    o_ref[...] = y.astype(o_ref.dtype)


def _pick_tm(M, K, N, out_bytes):
    def fits(tm):
        need = (2 * tm * K * 2              # double-buffered bf16 A stream
                + 2 * tm * N * out_bytes    # double-buffered output
                + K * N * 2 + 4 * N)        # resident weight + bias
        return need <= VMEM_BUDGET

    if fits(M):
        return M
    for cand in (4096, 2048, 1024, 512, 256, 128, 64, 32, 16, 8):
        if M % cand == 0 and fits(cand):
            return cand
    # TODO(synk): add a K-tiled fallback (K grid axis + f32 accumulator scratch)
    # for channel counts where even a single row block does not fit VMEM.
    return M


def matmul_bias_act(a, w, bias, act="none", out_dtype=jnp.bfloat16):
    """a: (M, K), w: (K, N), bias: (N,) or None. bf16 MXU operands, f32 accum."""
    M, K = a.shape
    N = w.shape[-1]
    tm = _pick_tm(M, K, N, jnp.dtype(out_dtype).itemsize)
    bias2 = (jnp.zeros((1, N), jnp.float32) if bias is None
             else bias.reshape(1, N).astype(jnp.float32))
    return pl.pallas_call(
        functools.partial(_mm_kernel, act=act),
        out_shape=jax.ShapeDtypeStruct((M, N), out_dtype),
        grid_spec=pltpu.PrefetchScalarGridSpec(
            num_scalar_prefetch=0,
            grid=(M // tm,),
            in_specs=[
                pl.BlockSpec((tm, K), lambda i: (i, 0)),
                pl.BlockSpec((K, N), lambda i: (0, 0)),
                pl.BlockSpec((1, N), lambda i: (0, 0)),
            ],
            out_specs=pl.BlockSpec((tm, N), lambda i: (i, 0)),
        ),
        compiler_params=pltpu.CompilerParams(
            dimension_semantics=("parallel",),
            vmem_limit_bytes=VMEM_BUDGET),
    )(a.astype(jnp.bfloat16), w.astype(jnp.bfloat16), bias2)


# --------------------------------------------------------------------------
# Kernel 2: kh x kw VALID stride-1 conv on pre-padded per-image planes.
#   Patches are built inside the kernel (static slices + lane concat), so the
#   im2col expansion never touches HBM.
# --------------------------------------------------------------------------
def _conv_plane_kernel(x_ref, w_ref, b_ref, o_ref, *, kh, kw, Ho, Wo, act):
    xp = x_ref[0]                                       # (Hp, Wp, Cp) bf16
    cols = []
    for dy in range(kh):
        for dx in range(kw):
            cols.append(xp[dy:dy + Ho, dx:dx + Wo, :].reshape(Ho * Wo, -1))
    patches = jnp.concatenate(cols, axis=-1)            # (Ho*Wo, kh*kw*Cp)
    y = jnp.dot(patches, w_ref[...], preferred_element_type=jnp.float32)
    y = _apply_act(y + b_ref[...], act)
    o_ref[0] = y.astype(o_ref.dtype)


def _conv_plane(xplane, w2, bias, kh, kw, act, out_dtype):
    N, Hp, Wp, Cp = xplane.shape
    Ho, Wo = Hp - kh + 1, Wp - kw + 1
    Cout = w2.shape[-1]
    bias2 = (jnp.zeros((1, Cout), jnp.float32) if bias is None
             else bias.reshape(1, Cout).astype(jnp.float32))
    out = pl.pallas_call(
        functools.partial(_conv_plane_kernel, kh=kh, kw=kw, Ho=Ho, Wo=Wo, act=act),
        out_shape=jax.ShapeDtypeStruct((N, Ho * Wo, Cout), out_dtype),
        grid_spec=pltpu.PrefetchScalarGridSpec(
            num_scalar_prefetch=0,
            grid=(N,),
            in_specs=[
                pl.BlockSpec((1, Hp, Wp, Cp), lambda n: (n, 0, 0, 0)),
                pl.BlockSpec((kh * kw * Cp, Cout), lambda n: (0, 0)),
                pl.BlockSpec((1, Cout), lambda n: (0, 0)),
            ],
            out_specs=pl.BlockSpec((1, Ho * Wo, Cout), lambda n: (n, 0, 0)),
        ),
        compiler_params=pltpu.CompilerParams(
            dimension_semantics=("parallel",),
            vmem_limit_bytes=VMEM_BUDGET),
    )(xplane.astype(jnp.bfloat16), w2.astype(jnp.bfloat16), bias2)
    return out.reshape(N, Ho, Wo, Cout)


def conv3x3(x, w_hwio, b, act, out_dtype=jnp.bfloat16):
    Cin, Cout = w_hwio.shape[2], w_hwio.shape[3]
    xp = jnp.pad(x.astype(jnp.bfloat16), ((0, 0), (1, 1), (1, 1), (0, 0)))
    w2 = w_hwio.reshape(9 * Cin, Cout)                  # feature order (dy, dx, cin)
    return _conv_plane(xp, w2, b, 3, 3, act, out_dtype)


def conv_down(x, w_hwio, b, act, out_dtype=jnp.bfloat16):
    """Conv2d(k=4, s=2, p=1) == 2x2 VALID conv on a space-to-depth padded plane."""
    N, H, W, Cin = x.shape
    Cout = w_hwio.shape[-1]
    xp = jnp.pad(x.astype(jnp.bfloat16), ((0, 0), (1, 1), (1, 1), (0, 0)))
    Hp, Wp = H + 2, W + 2
    s2d = xp.reshape(N, Hp // 2, 2, Wp // 2, 2, Cin)
    s2d = jnp.transpose(s2d, (0, 1, 3, 2, 4, 5)).reshape(N, Hp // 2, Wp // 2, 4 * Cin)
    # weight reorder to (DY, DX, sy, sx, cin) matching the s2d channel order
    w = w_hwio.reshape(2, 2, 2, 2, Cin, Cout)           # (DY, sy, DX, sx, cin, cout)
    w = jnp.transpose(w, (0, 2, 1, 3, 4, 5)).reshape(16 * Cin, Cout)
    return _conv_plane(s2d, w, b, 2, 2, act, out_dtype)


# --------------------------------------------------------------------------
# Kernel 3: fused residual block (3x3 conv + ReLU + 1x1 conv + skip add),
#   per-image plane in VMEM, optional fused LeakyReLU epilogue.
# --------------------------------------------------------------------------
def _residual_kernel(x_ref, w3_ref, w1_ref, o_ref, *, H, W, post_act):
    xp = x_ref[0]                                       # (H+2, W+2, C) bf16
    C = xp.shape[-1]
    cols = [xp[dy:dy + H, dx:dx + W, :].reshape(H * W, C)
            for dy in range(3) for dx in range(3)]
    patches = jnp.concatenate(cols, axis=-1)            # (H*W, 9C)
    h = jnp.dot(patches, w3_ref[...], preferred_element_type=jnp.float32)
    h = jnp.maximum(h, 0.0).astype(jnp.bfloat16)
    y = jnp.dot(h, w1_ref[...], preferred_element_type=jnp.float32)
    out = xp[1:1 + H, 1:1 + W, :].reshape(H * W, C).astype(jnp.float32) + y
    if post_act:                                        # fused standalone LeakyReLU
        out = jnp.where(out >= 0, out, LEAKY_SLOPE * out)
    o_ref[0] = out.astype(o_ref.dtype)


def residual_layer(x, w3_hwio, w1_hwio, post_act=False):
    N, H, W, C = x.shape
    xp = jnp.pad(x.astype(jnp.bfloat16), ((0, 0), (1, 1), (1, 1), (0, 0)))
    w3 = w3_hwio.reshape(9 * C, C).astype(jnp.bfloat16)
    w1 = w1_hwio.reshape(C, C).astype(jnp.bfloat16)
    out = pl.pallas_call(
        functools.partial(_residual_kernel, H=H, W=W, post_act=post_act),
        out_shape=jax.ShapeDtypeStruct((N, H * W, C), jnp.bfloat16),
        grid_spec=pltpu.PrefetchScalarGridSpec(
            num_scalar_prefetch=0,
            grid=(N,),
            in_specs=[
                pl.BlockSpec((1, H + 2, W + 2, C), lambda n: (n, 0, 0, 0)),
                pl.BlockSpec((9 * C, C), lambda n: (0, 0)),
                pl.BlockSpec((C, C), lambda n: (0, 0)),
            ],
            out_specs=pl.BlockSpec((1, H * W, C), lambda n: (n, 0, 0)),
        ),
        compiler_params=pltpu.CompilerParams(
            dimension_semantics=("parallel",),
            vmem_limit_bytes=VMEM_BUDGET),
    )(xp, w3, w1)
    return out.reshape(N, H, W, C)


# --------------------------------------------------------------------------
# Kernel 4: ConvTranspose2d(k=4, s=2, p=1) via sub-pixel phase decomposition.
#   All 4 phases computed from one padded plane; output stored directly in
#   (N, H, 2, W, 2*Cout) so the pixel-shuffle is a free reshape.
# --------------------------------------------------------------------------
def _convT_kernel(x_ref, w_ref, b_ref, o_ref, *, H, W, act):
    xp = x_ref[0]                                       # (H+2, W+2, Cin) bf16
    Cout = w_ref.shape[-1]
    phase_rows = []
    for py in (0, 1):
        parts = []
        for px in (0, 1):
            cols = [xp[py + dy: py + dy + H, px + dx: px + dx + W, :].reshape(H * W, -1)
                    for dy in (0, 1) for dx in (0, 1)]
            patches = jnp.concatenate(cols, axis=-1)    # (H*W, 4*Cin)
            y = jnp.dot(patches, w_ref[2 * py + px],
                        preferred_element_type=jnp.float32)
            parts.append(_apply_act(y + b_ref[...], act))
        phase_rows.append(jnp.concatenate(parts, axis=-1).reshape(H, W, 2 * Cout))
    out = jnp.stack(phase_rows, axis=1)                 # (H, 2, W, 2*Cout)
    o_ref[0] = out.astype(o_ref.dtype)


def conv_transpose2d(x, w_t, b, act, out_dtype=jnp.bfloat16):
    """w_t has PyTorch ConvTranspose2d layout (Cin, Cout, 4, 4)."""
    N, H, W, Cin = x.shape
    Cout = w_t.shape[1]
    xp = jnp.pad(x.astype(jnp.bfloat16), ((0, 0), (1, 1), (1, 1), (0, 0)))
    ws = []
    for py in (0, 1):
        for px in (0, 1):
            ky = [3 - py, 1 - py]                       # kernel tap for slice dy = 0, 1
            kx = [3 - px, 1 - px]
            sub = w_t[:, :, ky, :][:, :, :, kx]         # (Cin, Cout, dy, dx)
            ws.append(jnp.transpose(sub, (2, 3, 0, 1)).reshape(4 * Cin, Cout))
    w4 = jnp.stack(ws).astype(jnp.bfloat16)             # (4, 4*Cin, Cout)
    bias2 = b.reshape(1, Cout).astype(jnp.float32)
    out = pl.pallas_call(
        functools.partial(_convT_kernel, H=H, W=W, act=act),
        out_shape=jax.ShapeDtypeStruct((N, H, 2, W, 2 * Cout), out_dtype),
        grid_spec=pltpu.PrefetchScalarGridSpec(
            num_scalar_prefetch=0,
            grid=(N,),
            in_specs=[
                pl.BlockSpec((1, H + 2, W + 2, Cin), lambda n: (n, 0, 0, 0)),
                pl.BlockSpec((4, 4 * Cin, Cout), lambda n: (0, 0, 0)),
                pl.BlockSpec((1, Cout), lambda n: (0, 0)),
            ],
            out_specs=pl.BlockSpec((1, H, 2, W, 2 * Cout),
                                   lambda n: (n, 0, 0, 0, 0)),
        ),
        compiler_params=pltpu.CompilerParams(
            dimension_semantics=("parallel",),
            vmem_limit_bytes=VMEM_BUDGET),
    )(xp, w4, bias2)
    # free reshape: (n, h, py, w, (px, c)) row-major == (n, 2h+py, 2w+px, c)
    return out.reshape(N, 2 * H, 2 * W, Cout)


# --------------------------------------------------------------------------
# Kernel 5: VectorQuantizer (distances + argmin + gather + partial SSE)
#   codebook resident (padded to 128 lanes), bf16 distance matmul, per-tile
#   partial SSE outputs so the grid axis stays "parallel" (megacore on v7x).
# --------------------------------------------------------------------------
def _vq_kernel(x_ref, e_ref, e2_ref, q_ref, sse_ref, *, n_valid, tr):
    i = pl.program_id(0)
    x = x_ref[...]                                      # (tr, D) f32
    e = e_ref[...]                                      # (Kp, D) f32 (zero-padded rows)
    Kp = e.shape[0]
    xe = jax.lax.dot_general(
        x.astype(jnp.bfloat16), e.astype(jnp.bfloat16),
        (((1,), (1,)), ((), ())), preferred_element_type=jnp.float32)  # (tr, Kp)
    x2 = jnp.sum(x * x, axis=1, keepdims=True)
    dist = x2 + e2_ref[...] - 2.0 * xe                  # padded cols carry +1e30

    col = jax.lax.broadcasted_iota(jnp.int32, dist.shape, 1)
    min_d = jnp.min(dist, axis=1, keepdims=True)
    # first index attaining the minimum (torch.argmin semantics)
    idx = jnp.min(jnp.where(dist == min_d, col, Kp), axis=1, keepdims=True)
    one_hot = (col == idx).astype(jnp.float32)
    q = jnp.dot(one_hot, e, preferred_element_type=jnp.float32)        # exact gather
    q_ref[...] = q

    row = jax.lax.broadcasted_iota(jnp.int32, x.shape, 0) + i * tr
    diff = jnp.where(row < n_valid, q - x, 0.0)         # mask padded rows
    sse_ref[0, 0] = jnp.sum(diff * diff)                # per-tile partial SSE


def vq_quantize(flat, codebook):
    n, d = flat.shape
    K = codebook.shape[0]
    Kp = _round_up(K, 128)                              # lane-dense dist/one_hot
    e_pad = jnp.zeros((Kp, d), jnp.float32).at[:K, :].set(codebook)
    e2_pad = jnp.full((1, Kp), 1e30, jnp.float32).at[0, :K].set(
        jnp.sum(codebook * codebook, axis=1))

    np8 = _round_up(n, 8)
    x_in = flat if np8 == n else jnp.pad(flat, ((0, np8 - n), (0, 0)))
    tr = np8
    for cand in (1024, 512, 256, 128, 64, 32, 16, 8):
        if np8 % cand == 0:
            tr = cand
            break
    g = np8 // tr

    q_p, partial = pl.pallas_call(
        functools.partial(_vq_kernel, n_valid=n, tr=tr),
        out_shape=(jax.ShapeDtypeStruct((np8, d), jnp.float32),
                   jax.ShapeDtypeStruct((g, 1), jnp.float32)),
        grid_spec=pltpu.PrefetchScalarGridSpec(
            num_scalar_prefetch=0,
            grid=(g,),
            in_specs=[
                pl.BlockSpec((tr, d), lambda i: (i, 0)),
                pl.BlockSpec((Kp, d), lambda i: (0, 0)),       # codebook resident
                pl.BlockSpec((1, Kp), lambda i: (0, 0)),
            ],
            out_specs=(
                pl.BlockSpec((tr, d), lambda i: (i, 0)),
                pl.BlockSpec((1, 1), lambda i: (i, 0),
                             memory_space=pltpu.MemorySpace.SMEM),
            ),
        ),
        compiler_params=pltpu.CompilerParams(
            dimension_semantics=("parallel",),
            vmem_limit_bytes=VMEM_BUDGET),
    )(x_in, e_pad, e2_pad)
    q = q_p if np8 == n else q_p[:n]
    return q, jnp.sum(partial)


# --------------------------------------------------------------------------
# Parameters (deterministic synthetic init, PyTorch-like uniform bounds)
# --------------------------------------------------------------------------
def init_params(key, in_ch, emb_dim, num_emb, hidden_dims):
    keys = iter(jax.random.split(key, 64))

    def uni(shape, bound):
        return jax.random.uniform(next(keys), shape, jnp.float32, -bound, bound)

    def conv(cin, cout, k, bias=True):
        bound = 1.0 / math.sqrt(cin * k * k)
        return {"w": uni((k, k, cin, cout), bound),          # HWIO
                "b": uni((cout,), bound) if bias else None}

    def convT(cin, cout, k):
        bound = 1.0 / math.sqrt(cout * k * k)
        return {"w": uni((cin, cout, k, k), bound),          # PyTorch ConvT layout
                "b": uni((cout,), bound)}

    p = {}
    c = in_ch
    p["enc_down"] = []
    for h in hidden_dims:
        p["enc_down"].append(conv(c, h, 4))
        c = h
    p["enc_mid"] = conv(c, c, 3)
    p["enc_res"] = [(conv(c, c, 3, bias=False), conv(c, c, 1, bias=False))
                    for _ in range(3)]
    p["enc_out"] = conv(c, emb_dim, 1)
    p["codebook"] = uni((num_emb, emb_dim), 1.0 / num_emb)   # Embedding init
    hd = hidden_dims[-1]
    p["dec_in"] = conv(emb_dim, hd, 3)
    p["dec_res"] = [(conv(hd, hd, 3, bias=False), conv(hd, hd, 1, bias=False))
                    for _ in range(3)]
    rev = list(reversed(hidden_dims))
    p["dec_up"] = [convT(rev[i], rev[i + 1], 4) for i in range(len(rev) - 1)]
    p["dec_final"] = convT(rev[-1], 3, 4)
    return p


# --------------------------------------------------------------------------
# Full VQVAE forward (returns (recons, input, vq_loss), matching PyTorch)
# --------------------------------------------------------------------------
def vqvae_forward(params, x_nchw, beta=BETA):
    x_nhwc = jnp.transpose(x_nchw, (0, 2, 3, 1)).astype(jnp.float32)   # NCHW -> NHWC

    # ---- encoder (bf16 activations on the conv path) ----
    h = x_nhwc
    for cv in params["enc_down"]:
        h = conv_down(h, cv["w"], cv["b"], "leaky_relu")
    cv = params["enc_mid"]
    h = conv3x3(h, cv["w"], cv["b"], "leaky_relu")
    n_res = len(params["enc_res"])
    for li, (p3, p1) in enumerate(params["enc_res"]):
        # standalone encoder LeakyReLU fused into the last residual block's epilogue
        h = residual_layer(h, p3["w"], p1["w"], post_act=(li == n_res - 1))
    N, Hh, Ww, C = h.shape
    cv = params["enc_out"]
    z = matmul_bias_act(h.reshape(N * Hh * Ww, C), cv["w"].reshape(C, -1), cv["b"],
                        act="leaky_relu", out_dtype=jnp.float32)        # (M, D) f32

    # ---- vector quantizer (NHWC flatten == permute(0,2,3,1).view(-1, D)) ----
    D = z.shape[-1]
    q_flat, sse = vq_quantize(z, params["codebook"])
    mse = sse / z.size
    vq_loss = beta * mse + mse
    # TODO(synk): .detach()/straight-through only change gradients; forward value is q.
    q = q_flat.reshape(N, Hh, Ww, D)

    # ---- decoder ----
    cv = params["dec_in"]
    d = conv3x3(q, cv["w"], cv["b"], "leaky_relu")
    n_res = len(params["dec_res"])
    for li, (p3, p1) in enumerate(params["dec_res"]):
        # standalone decoder LeakyReLU fused into the last residual block's epilogue
        d = residual_layer(d, p3["w"], p1["w"], post_act=(li == n_res - 1))
    for ct in params["dec_up"]:
        d = conv_transpose2d(d, ct["w"], ct["b"], "leaky_relu", out_dtype=jnp.bfloat16)
    ct = params["dec_final"]
    d = conv_transpose2d(d, ct["w"], ct["b"], "tanh", out_dtype=jnp.float32)

    return jnp.transpose(d, (0, 3, 1, 2)), x_nchw, vq_loss


if __name__ == "__main__":
    key = jax.random.PRNGKey(0)
    kp, kx = jax.random.split(key)

    in_channels, embedding_dim, num_embeddings = 3, 64, 32
    hidden_dims = [32, 64]
    img_size, batch = 32, 2      # keeps every conv-plane width a multiple of 8

    params = init_params(kp, in_channels, embedding_dim, num_embeddings,
                         hidden_dims)
    x = jax.random.normal(kx, (batch, in_channels, img_size, img_size),
                          jnp.float32)

    fwd = jax.jit(functools.partial(vqvae_forward, params))
    recons, inp, vq_loss = fwd(x)
    jax.block_until_ready((recons, inp, vq_loss))

    assert recons.shape == (batch, 3, img_size, img_size)
    assert inp.shape == x.shape
    assert vq_loss.shape == ()
    print("KERNEL_OK")
</pallas_src>

<mosaic_0001>
module attributes {stable_mosaic.version = 11 : i64} {
  func.func @_conv_plane_kernel(%arg0: i32, %arg1: memref<1x17x17x12xbf16, #tpu.memory_space<vmem>>, %arg2: memref<48x32xbf16, #tpu.memory_space<vmem>>, %arg3: memref<1x32xf32, #tpu.memory_space<vmem>>, %arg4: memref<1x256x32xbf16, #tpu.memory_space<vmem>>) attributes {dimension_semantics = [#tpu.dimension_semantics<parallel>], iteration_bounds = array<i64: 2>, scalar_prefetch = 0 : i64, scratch_operands = 0 : i64, tpu.core_type = #tpu.core_type<tc>, window_params = [{transform_indices = @transform_0, window_bounds = array<i64: 1, 17, 17, 12>}, {pipeline_mode = #tpu.pipeline_mode<synchronous>, transform_indices = @transform_1, window_bounds = array<i64: 48, 32>}, {pipeline_mode = #tpu.pipeline_mode<synchronous>, transform_indices = @transform_2, window_bounds = array<i64: 1, 32>}, {transform_indices = @transform_3, window_bounds = array<i64: 1, 256, 32>}]} {
    %c0 = arith.constant 0 : index
    %c0_0 = arith.constant 0 : index
    %c0_1 = arith.constant 0 : index
    %c0_2 = arith.constant 0 : index
    %0 = vector.load %arg1[%c0, %c0_0, %c0_1, %c0_2] : memref<1x17x17x12xbf16, #tpu.memory_space<vmem>>, vector<1x17x17x12xbf16>
    %1 = vector.shape_cast %0 : vector<1x17x17x12xbf16> to vector<17x17x12xbf16>
    %2 = vector.extract_strided_slice %1 {offsets = [0, 0, 0], sizes = [16, 16, 12], strides = [1, 1, 1]} : vector<17x17x12xbf16> to vector<16x16x12xbf16>
    %3 = vector.shape_cast %2 : vector<16x16x12xbf16> to vector<256x12xbf16>
    %4 = vector.extract_strided_slice %1 {offsets = [0, 1, 0], sizes = [16, 16, 12], strides = [1, 1, 1]} : vector<17x17x12xbf16> to vector<16x16x12xbf16>
    %5 = vector.shape_cast %4 : vector<16x16x12xbf16> to vector<256x12xbf16>
    %6 = vector.extract_strided_slice %1 {offsets = [1, 0, 0], sizes = [16, 16, 12], strides = [1, 1, 1]} : vector<17x17x12xbf16> to vector<16x16x12xbf16>
    %7 = vector.shape_cast %6 : vector<16x16x12xbf16> to vector<256x12xbf16>
    %8 = vector.extract_strided_slice %1 {offsets = [1, 1, 0], sizes = [16, 16, 12], strides = [1, 1, 1]} : vector<17x17x12xbf16> to vector<16x16x12xbf16>
    %9 = vector.shape_cast %8 : vector<16x16x12xbf16> to vector<256x12xbf16>
    %10 = tpu.concatenate %3, %5, %7, %9 in 1 : vector<256x12xbf16>, vector<256x12xbf16>, vector<256x12xbf16>, vector<256x12xbf16> -> vector<256x48xbf16>
    %c0_3 = arith.constant 0 : index
    %c0_4 = arith.constant 0 : index
    %11 = vector.load %arg2[%c0_3, %c0_4] : memref<48x32xbf16, #tpu.memory_space<vmem>>, vector<48x32xbf16>
    %cst = arith.constant dense<0.000000e+00> : vector<256x32xf32>
    %12 = tpu.matmul %10, %11, %cst {dimension_numbers = #tpu.dot_dimension_numbers<[1], [0], [0], [1], [0, 0, 1, 1], [], []>} : vector<256x48xbf16>, vector<48x32xbf16>, vector<256x32xf32> -> vector<256x32xf32>
    %c0_5 = arith.constant 0 : index
    %c0_6 = arith.constant 0 : index
    %13 = vector.load %arg3[%c0_5, %c0_6] : memref<1x32xf32, #tpu.memory_space<vmem>>, vector<1x32xf32>
    %14 = vector.broadcast %13 : vector<1x32xf32> to vector<256x32xf32>
    %15 = arith.addf %12, %14 : vector<256x32xf32>
    %cst_7 = arith.constant 0.000000e+00 : f32
    %16 = vector.broadcast %cst_7 : f32 to vector<256x32xf32>
    %17 = arith.cmpf oge, %15, %16 : vector<256x32xf32>
    %cst_8 = arith.constant 0.00999999977 : f32
    %18 = vector.broadcast %cst_8 : f32 to vector<256x32xf32>
    %19 = arith.mulf %18, %15 : vector<256x32xf32>
    %20 = arith.select %17, %15, %19 : vector<256x32xi1>, vector<256x32xf32>
    %21 = arith.truncf %20 : vector<256x32xf32> to vector<256x32xbf16>
    %c0_9 = arith.constant 0 : index
    %c0_10 = arith.constant 0 : index
    %c0_11 = arith.constant 0 : index
    %22 = vector.load %arg4[%c0_9, %c0_10, %c0_11] : memref<1x256x32xbf16, #tpu.memory_space<vmem>>, vector<1x256x32xbf16>
    %23 = vector.shape_cast %22 : vector<1x256x32xbf16> to vector<256x32xbf16>
    %24 = vector.shape_cast %21 : vector<256x32xbf16> to vector<1x256x32xbf16>
    tpu.vector_store %arg4[%c0_9, %c0_10, %c0_11], %24 {strides = array<i32>} : memref<1x256x32xbf16, #tpu.memory_space<vmem>>, vector<1x256x32xbf16>,
    return
  }
  func.func @transform_0(%arg0: i32) -> (i32, i32, i32, i32) {
    %c0_i32 = arith.constant 0 : i32
    %c0_i32_0 = arith.constant 0 : i32
    %c0_i32_1 = arith.constant 0 : i32
    %c0_i32_2 = arith.constant 0 : i32
    return %arg0, %c0_i32, %c0_i32_0, %c0_i32_1 : i32, i32, i32, i32
  }
  func.func @transform_1(%arg0: i32) -> (i32, i32) {
    %c0_i32 = arith.constant 0 : i32
    %c0_i32_0 = arith.constant 0 : i32
    %c0_i32_1 = arith.constant 0 : i32
    return %c0_i32, %c0_i32_0 : i32, i32
  }
  func.func @transform_2(%arg0: i32) -> (i32, i32) {
    %c0_i32 = arith.constant 0 : i32
    %c0_i32_0 = arith.constant 0 : i32
    %c0_i32_1 = arith.constant 0 : i32
    return %c0_i32, %c0_i32_0 : i32, i32
  }
  func.func @transform_3(%arg0: i32) -> (i32, i32, i32) {
    %c0_i32 = arith.constant 0 : i32
    %c0_i32_0 = arith.constant 0 : i32
    %c0_i32_1 = arith.constant 0 : i32
    return %arg0, %c0_i32, %c0_i32_0 : i32, i32, i32
  }
}

module attributes {stable_mosaic.version = 11 : i64} {
  func.func @_conv_plane_kernel(%arg0: i32, %arg1: memref<1x9x9x128xbf16, #tpu.memory_space<vmem>>, %arg2: memref<512x64xbf16, #tpu.memory_space<vmem>>, %arg3: memref<1x64xf32, #tpu.memory_space<vmem>>, %arg4: memref<1x64x64xbf16, #tpu.memory_space<vmem>>) attributes {dimension_semantics = [#tpu.dimension_semantics<parallel>], iteration_bounds = array<i64: 2>, scalar_prefetch = 0 : i64, scratch_operands = 0 : i64, tpu.core_type = #tpu.core_type<tc>, window_params = [{transform_indices = @transform_0, window_bounds = array<i64: 1, 9, 9, 128>}, {pipeline_mode = #tpu.pipeline_mode<synchronous>, transform_indices = @transform_1, window_bounds = array<i64: 512, 64>}, {pipeline_mode = #tpu.pipeline_mode<synchronous>, transform_indices = @transform_2, window_bounds = array<i64: 1, 64>}, {transform_indices = @transform_3, window_bounds = array<i64: 1, 64, 64>}]} {
    %c0 = arith.constant 0 : index
    %c0_0 = arith.constant 0 : index
    %c0_1 = arith.constant 0 : index
    %c0_2 = arith.constant 0 : index
    %0 = vector.load %arg1[%c0, %c0_0, %c0_1, %c0_2] : memref<1x9x9x128xbf16, #tpu.memory_space<vmem>>, vector<1x9x9x128xbf16>
    %1 = vector.shape_cast %0 : vector<1x9x9x128xbf16> to vector<9x9x128xbf16>
    %2 = vector.extract_strided_slice %1 {offsets = [0, 0, 0], sizes = [8, 8, 128], strides = [1, 1, 1]} : vector<9x9x128xbf16> to vector<8x8x128xbf16>
    %3 = vector.shape_cast %2 : vector<8x8x128xbf16> to vector<64x128xbf16>
    %4 = vector.extract_strided_slice %1 {offsets = [0, 1, 0], sizes = [8, 8, 128], strides = [1, 1, 1]} : vector<9x9x128xbf16> to vector<8x8x128xbf16>
    %5 = vector.shape_cast %4 : vector<8x8x128xbf16> to vector<64x128xbf16>
    %6 = vector.extract_strided_slice %1 {offsets = [1, 0, 0], sizes = [8, 8, 128], strides = [1, 1, 1]} : vector<9x9x128xbf16> to vector<8x8x128xbf16>
    %7 = vector.shape_cast %6 : vector<8x8x128xbf16> to vector<64x128xbf16>
    %8 = vector.extract_strided_slice %1 {offsets = [1, 1, 0], sizes = [8, 8, 128], strides = [1, 1, 1]} : vector<9x9x128xbf16> to vector<8x8x128xbf16>
    %9 = vector.shape_cast %8 : vector<8x8x128xbf16> to vector<64x128xbf16>
    %10 = tpu.concatenate %3, %5, %7, %9 in 1 : vector<64x128xbf16>, vector<64x128xbf16>, vector<64x128xbf16>, vector<64x128xbf16> -> vector<64x512xbf16>
    %c0_3 = arith.constant 0 : index
    %c0_4 = arith.constant 0 : index
    %11 = vector.load %arg2[%c0_3, %c0_4] : memref<512x64xbf16, #tpu.memory_space<vmem>>, vector<512x64xbf16>
    %cst = arith.constant dense<0.000000e+00> : vector<64x64xf32>
    %12 = tpu.matmul %10, %11, %cst {dimension_numbers = #tpu.dot_dimension_numbers<[1], [0], [0], [1], [0, 0, 1, 1], [], []>} : vector<64x512xbf16>, vector<512x64xbf16>, vector<64x64xf32> -> vector<64x64xf32>
    %c0_5 = arith.constant 0 : index
    %c0_6 = arith.constant 0 : index
    %13 = vector.load %arg3[%c0_5, %c0_6] : memref<1x64xf32, #tpu.memory_space<vmem>>, vector<1x64xf32>
    %14 = vector.broadcast %13 : vector<1x64xf32> to vector<64x64xf32>
    %15 = arith.addf %12, %14 : vector<64x64xf32>
    %cst_7 = arith.constant 0.000000e+00 : f32
    %16 = vector.broadcast %cst_7 : f32 to vector<64x64xf32>
    %17 = arith.cmpf oge, %15, %16 : vector<64x64xf32>
    %cst_8 = arith.constant 0.00999999977 : f32
    %18 = vector.broadcast %cst_8 : f32 to vector<64x64xf32>
    %19 = arith.mulf %18, %15 : vector<64x64xf32>
    %20 = arith.select %17, %15, %19 : vector<64x64xi1>, vector<64x64xf32>
    %21 = arith.truncf %20 : vector<64x64xf32> to vector<64x64xbf16>
    %c0_9 = arith.constant 0 : index
    %c0_10 = arith.constant 0 : index
    %c0_11 = arith.constant 0 : index
    %22 = vector.load %arg4[%c0_9, %c0_10, %c0_11] : memref<1x64x64xbf16, #tpu.memory_space<vmem>>, vector<1x64x64xbf16>
    %23 = vector.shape_cast %22 : vector<1x64x64xbf16> to vector<64x64xbf16>
    %24 = vector.shape_cast %21 : vector<64x64xbf16> to vector<1x64x64xbf16>
    tpu.vector_store %arg4[%c0_9, %c0_10, %c0_11], %24 {strides = array<i32>} : memref<1x64x64xbf16, #tpu.memory_space<vmem>>, vector<1x64x64xbf16>,
    return
  }
  func.func @transform_0(%arg0: i32) -> (i32, i32, i32, i32) {
    %c0_i32 = arith.constant 0 : i32
    %c0_i32_0 = arith.constant 0 : i32
    %c0_i32_1 = arith.constant 0 : i32
    %c0_i32_2 = arith.constant 0 : i32
    return %arg0, %c0_i32, %c0_i32_0, %c0_i32_1 : i32, i32, i32, i32
  }
  func.func @transform_1(%arg0: i32) -> (i32, i32) {
    %c0_i32 = arith.constant 0 : i32
    %c0_i32_0 = arith.constant 0 : i32
    %c0_i32_1 = arith.constant 0 : i32
    return %c0_i32, %c0_i32_0 : i32, i32
  }
  func.func @transform_2(%arg0: i32) -> (i32, i32) {
    %c0_i32 = arith.constant 0 : i32
    %c0_i32_0 = arith.constant 0 : i32
    %c0_i32_1 = arith.constant 0 : i32
    return %c0_i32, %c0_i32_0 : i32, i32
  }
  func.func @transform_3(%arg0: i32) -> (i32, i32, i32) {
    %c0_i32 = arith.constant 0 : i32
    %c0_i32_0 = arith.constant 0 : i32
    %c0_i32_1 = arith.constant 0 : i32
    return %arg0, %c0_i32, %c0_i32_0 : i32, i32, i32
  }
}

module attributes {stable_mosaic.version = 11 : i64} {
  func.func @_conv_plane_kernel(%arg0: i32, %arg1: memref<1x10x10x64xbf16, #tpu.memory_space<vmem>>, %arg2: memref<576x64xbf16, #tpu.memory_space<vmem>>, %arg3: memref<1x64xf32, #tpu.memory_space<vmem>>, %arg4: memref<1x64x64xbf16, #tpu.memory_space<vmem>>) attributes {dimension_semantics = [#tpu.dimension_semantics<parallel>], iteration_bounds = array<i64: 2>, scalar_prefetch = 0 : i64, scratch_operands = 0 : i64, tpu.core_type = #tpu.core_type<tc>, window_params = [{transform_indices = @transform_0, window_bounds = array<i64: 1, 10, 10, 64>}, {pipeline_mode = #tpu.pipeline_mode<synchronous>, transform_indices = @transform_1, window_bounds = array<i64: 576, 64>}, {pipeline_mode = #tpu.pipeline_mode<synchronous>, transform_indices = @transform_2, window_bounds = array<i64: 1, 64>}, {transform_indices = @transform_3, window_bounds = array<i64: 1, 64, 64>}]} {
    %c0 = arith.constant 0 : index
    %c0_0 = arith.constant 0 : index
    %c0_1 = arith.constant 0 : index
    %c0_2 = arith.constant 0 : index
    %0 = vector.load %arg1[%c0, %c0_0, %c0_1, %c0_2] : memref<1x10x10x64xbf16, #tpu.memory_space<vmem>>, vector<1x10x10x64xbf16>
    %1 = vector.shape_cast %0 : vector<1x10x10x64xbf16> to vector<10x10x64xbf16>
    %2 = vector.extract_strided_slice %1 {offsets = [0, 0, 0], sizes = [8, 8, 64], strides = [1, 1, 1]} : vector<10x10x64xbf16> to vector<8x8x64xbf16>
    %3 = vector.shape_cast %2 : vector<8x8x64xbf16> to vector<64x64xbf16>
    %4 = vector.extract_strided_slice %1 {offsets = [0, 1, 0], sizes = [8, 8, 64], strides = [1, 1, 1]} : vector<10x10x64xbf16> to vector<8x8x64xbf16>
    %5 = vector.shape_cast %4 : vector<8x8x64xbf16> to vector<64x64xbf16>
    %6 = vector.extract_strided_slice %1 {offsets = [0, 2, 0], sizes = [8, 8, 64], strides = [1, 1, 1]} : vector<10x10x64xbf16> to vector<8x8x64xbf16>
    %7 = vector.shape_cast %6 : vector<8x8x64xbf16> to vector<64x64xbf16>
    %8 = vector.extract_strided_slice %1 {offsets = [1, 0, 0], sizes = [8, 8, 64], strides = [1, 1, 1]} : vector<10x10x64xbf16> to vector<8x8x64xbf16>
    %9 = vector.shape_cast %8 : vector<8x8x64xbf16> to vector<64x64xbf16>
    %10 = vector.extract_strided_slice %1 {offsets = [1, 1, 0], sizes = [8, 8, 64], strides = [1, 1, 1]} : vector<10x10x64xbf16> to vector<8x8x64xbf16>
    %11 = vector.shape_cast %10 : vector<8x8x64xbf16> to vector<64x64xbf16>
    %12 = vector.extract_strided_slice %1 {offsets = [1, 2, 0], sizes = [8, 8, 64], strides = [1, 1, 1]} : vector<10x10x64xbf16> to vector<8x8x64xbf16>
    %13 = vector.shape_cast %12 : vector<8x8x64xbf16> to vector<64x64xbf16>
    %14 = vector.extract_strided_slice %1 {offsets = [2, 0, 0], sizes = [8, 8, 64], strides = [1, 1, 1]} : vector<10x10x64xbf16> to vector<8x8x64xbf16>
    %15 = vector.shape_cast %14 : vector<8x8x64xbf16> to vector<64x64xbf16>
    %16 = vector.extract_strided_slice %1 {offsets = [2, 1, 0], sizes = [8, 8, 64], strides = [1, 1, 1]} : vector<10x10x64xbf16> to vector<8x8x64xbf16>
    %17 = vector.shape_cast %16 : vector<8x8x64xbf16> to vector<64x64xbf16>
    %18 = vector.extract_strided_slice %1 {offsets = [2, 2, 0], sizes = [8, 8, 64], strides = [1, 1, 1]} : vector<10x10x64xbf16> to vector<8x8x64xbf16>
    %19 = vector.shape_cast %18 : vector<8x8x64xbf16> to vector<64x64xbf16>
    %20 = tpu.concatenate %3, %5, %7, %9, %11, %13, %15, %17, %19 in 1 : vector<64x64xbf16>, vector<64x64xbf16>, vector<64x64xbf16>, vector<64x64xbf16>, vector<64x64xbf16>, vector<64x64xbf16>, vector<64x64xbf16>, vector<64x64xbf16>, vector<64x64xbf16> -> vector<64x576xbf16>
    %c0_3 = arith.constant 0 : index
    %c0_4 = arith.constant 0 : index
    %21 = vector.load %arg2[%c0_3, %c0_4] : memref<576x64xbf16, #tpu.memory_space<vmem>>, vector<576x64xbf16>
    %cst = arith.constant dense<0.000000e+00> : vector<64x64xf32>
    %22 = tpu.matmul %20, %21, %cst {dimension_numbers = #tpu.dot_dimension_numbers<[1], [0], [0], [1], [0, 0, 1, 1], [], []>} : vector<64x576xbf16>, vector<576x64xbf16>, vector<64x64xf32> -> vector<64x64xf32>
    %c0_5 = arith.constant 0 : index
    %c0_6 = arith.constant 0 : index
    %23 = vector.load %arg3[%c0_5, %c0_6] : memref<1x64xf32, #tpu.memory_space<vmem>>, vector<1x64xf32>
    %24 = vector.broadcast %23 : vector<1x64xf32> to vector<64x64xf32>
    %25 = arith.addf %22, %24 : vector<64x64xf32>
    %cst_7 = arith.constant 0.000000e+00 : f32
    %26 = vector.broadcast %cst_7 : f32 to vector<64x64xf32>
    %27 = arith.cmpf oge, %25, %26 : vector<64x64xf32>
    %cst_8 = arith.constant 0.00999999977 : f32
    %28 = vector.broadcast %cst_8 : f32 to vector<64x64xf32>
    %29 = arith.mulf %28, %25 : vector<64x64xf32>
    %30 = arith.select %27, %25, %29 : vector<64x64xi1>, vector<64x64xf32>
    %31 = arith.truncf %30 : vector<64x64xf32> to vector<64x64xbf16>
    %c0_9 = arith.constant 0 : index
    %c0_10 = arith.constant 0 : index
    %c0_11 = arith.constant 0 : index
    %32 = vector.load %arg4[%c0_9, %c0_10, %c0_11] : memref<1x64x64xbf16, #tpu.memory_space<vmem>>, vector<1x64x64xbf16>
    %33 = vector.shape_cast %32 : vector<1x64x64xbf16> to vector<64x64xbf16>
    %34 = vector.shape_cast %31 : vector<64x64xbf16> to vector<1x64x64xbf16>
    tpu.vector_store %arg4[%c0_9, %c0_10, %c0_11], %34 {strides = array<i32>} : memref<1x64x64xbf16, #tpu.memory_space<vmem>>, vector<1x64x64xbf16>,
    return
  }
  func.func @transform_0(%arg0: i32) -> (i32, i32, i32, i32) {
    %c0_i32 = arith.constant 0 : i32
    %c0_i32_0 = arith.constant 0 : i32
    %c0_i32_1 = arith.constant 0 : i32
    %c0_i32_2 = arith.constant 0 : i32
    return %arg0, %c0_i32, %c0_i32_0, %c0_i32_1 : i32, i32, i32, i32
  }
  func.func @transform_1(%arg0: i32) -> (i32, i32) {
    %c0_i32 = arith.constant 0 : i32
    %c0_i32_0 = arith.constant 0 : i32
    %c0_i32_1 = arith.constant 0 : i32
    return %c0_i32, %c0_i32_0 : i32, i32
  }
  func.func @transform_2(%arg0: i32) -> (i32, i32) {
    %c0_i32 = arith.constant 0 : i32
    %c0_i32_0 = arith.constant 0 : i32
    %c0_i32_1 = arith.constant 0 : i32
    return %c0_i32, %c0_i32_0 : i32, i32
  }
  func.func @transform_3(%arg0: i32) -> (i32, i32, i32) {
    %c0_i32 = arith.constant 0 : i32
    %c0_i32_0 = arith.constant 0 : i32
    %c0_i32_1 = arith.constant 0 : i32
    return %arg0, %c0_i32, %c0_i32_0 : i32, i32, i32
  }
}

module attributes {stable_mosaic.version = 11 : i64} {
  func.func @_residual_kernel(%arg0: i32, %arg1: memref<1x10x10x64xbf16, #tpu.memory_space<vmem>>, %arg2: memref<576x64xbf16, #tpu.memory_space<vmem>>, %arg3: memref<64x64xbf16, #tpu.memory_space<vmem>>, %arg4: memref<1x64x64xbf16, #tpu.memory_space<vmem>>) attributes {dimension_semantics = [#tpu.dimension_semantics<parallel>], iteration_bounds = array<i64: 2>, scalar_prefetch = 0 : i64, scratch_operands = 0 : i64, tpu.core_type = #tpu.core_type<tc>, window_params = [{transform_indices = @transform_0, window_bounds = array<i64: 1, 10, 10, 64>}, {pipeline_mode = #tpu.pipeline_mode<synchronous>, transform_indices = @transform_1, window_bounds = array<i64: 576, 64>}, {pipeline_mode = #tpu.pipeline_mode<synchronous>, transform_indices = @transform_2, window_bounds = array<i64: 64, 64>}, {transform_indices = @transform_3, window_bounds = array<i64: 1, 64, 64>}]} {
    %c0 = arith.constant 0 : index
    %c0_0 = arith.constant 0 : index
    %c0_1 = arith.constant 0 : index
    %c0_2 = arith.constant 0 : index
    %0 = vector.load %arg1[%c0, %c0_0, %c0_1, %c0_2] : memref<1x10x10x64xbf16, #tpu.memory_space<vmem>>, vector<1x10x10x64xbf16>
    %1 = vector.shape_cast %0 : vector<1x10x10x64xbf16> to vector<10x10x64xbf16>
    %2 = vector.extract_strided_slice %1 {offsets = [0, 0, 0], sizes = [8, 8, 64], strides = [1, 1, 1]} : vector<10x10x64xbf16> to vector<8x8x64xbf16>
    %3 = vector.shape_cast %2 : vector<8x8x64xbf16> to vector<64x64xbf16>
    %4 = vector.extract_strided_slice %1 {offsets = [0, 1, 0], sizes = [8, 8, 64], strides = [1, 1, 1]} : vector<10x10x64xbf16> to vector<8x8x64xbf16>
    %5 = vector.shape_cast %4 : vector<8x8x64xbf16> to vector<64x64xbf16>
    %6 = vector.extract_strided_slice %1 {offsets = [0, 2, 0], sizes = [8, 8, 64], strides = [1, 1, 1]} : vector<10x10x64xbf16> to vector<8x8x64xbf16>
    %7 = vector.shape_cast %6 : vector<8x8x64xbf16> to vector<64x64xbf16>
    %8 = vector.extract_strided_slice %1 {offsets = [1, 0, 0], sizes = [8, 8, 64], strides = [1, 1, 1]} : vector<10x10x64xbf16> to vector<8x8x64xbf16>
    %9 = vector.shape_cast %8 : vector<8x8x64xbf16> to vector<64x64xbf16>
    %10 = vector.extract_strided_slice %1 {offsets = [1, 1, 0], sizes = [8, 8, 64], strides = [1, 1, 1]} : vector<10x10x64xbf16> to vector<8x8x64xbf16>
    %11 = vector.shape_cast %10 : vector<8x8x64xbf16> to vector<64x64xbf16>
    %12 = vector.extract_strided_slice %1 {offsets = [1, 2, 0], sizes = [8, 8, 64], strides = [1, 1, 1]} : vector<10x10x64xbf16> to vector<8x8x64xbf16>
    %13 = vector.shape_cast %12 : vector<8x8x64xbf16> to vector<64x64xbf16>
    %14 = vector.extract_strided_slice %1 {offsets = [2, 0, 0], sizes = [8, 8, 64], strides = [1, 1, 1]} : vector<10x10x64xbf16> to vector<8x8x64xbf16>
    %15 = vector.shape_cast %14 : vector<8x8x64xbf16> to vector<64x64xbf16>
    %16 = vector.extract_strided_slice %1 {offsets = [2, 1, 0], sizes = [8, 8, 64], strides = [1, 1, 1]} : vector<10x10x64xbf16> to vector<8x8x64xbf16>
    %17 = vector.shape_cast %16 : vector<8x8x64xbf16> to vector<64x64xbf16>
    %18 = vector.extract_strided_slice %1 {offsets = [2, 2, 0], sizes = [8, 8, 64], strides = [1, 1, 1]} : vector<10x10x64xbf16> to vector<8x8x64xbf16>
    %19 = vector.shape_cast %18 : vector<8x8x64xbf16> to vector<64x64xbf16>
    %20 = tpu.concatenate %3, %5, %7, %9, %11, %13, %15, %17, %19 in 1 : vector<64x64xbf16>, vector<64x64xbf16>, vector<64x64xbf16>, vector<64x64xbf16>, vector<64x64xbf16>, vector<64x64xbf16>, vector<64x64xbf16>, vector<64x64xbf16>, vector<64x64xbf16> -> vector<64x576xbf16>
    %c0_3 = arith.constant 0 : index
    %c0_4 = arith.constant 0 : index
    %21 = vector.load %arg2[%c0_3, %c0_4] : memref<576x64xbf16, #tpu.memory_space<vmem>>, vector<576x64xbf16>
    %cst = arith.constant dense<0.000000e+00> : vector<64x64xf32>
    %22 = tpu.matmul %20, %21, %cst {dimension_numbers = #tpu.dot_dimension_numbers<[1], [0], [0], [1], [0, 0, 1, 1], [], []>} : vector<64x576xbf16>, vector<576x64xbf16>, vector<64x64xf32> -> vector<64x64xf32>
    %cst_5 = arith.constant 0.000000e+00 : f32
    %23 = vector.broadcast %cst_5 : f32 to vector<64x64xf32>
    %24 = arith.maximumf %22, %23 : vector<64x64xf32>
    %25 = arith.truncf %24 : vector<64x64xf32> to vector<64x64xbf16>
    %c0_6 = arith.constant 0 : index
    %c0_7 = arith.constant 0 : index
    %26 = vector.load %arg3[%c0_6, %c0_7] : memref<64x64xbf16, #tpu.memory_space<vmem>>, vector<64x64xbf16>
    %cst_8 = arith.constant dense<0.000000e+00> : vector<64x64xf32>
    %27 = tpu.matmul %25, %26, %cst_8 {dimension_numbers = #tpu.dot_dimension_numbers<[1], [0], [0], [1], [0, 0, 1, 1], [], []>} : vector<64x64xbf16>, vector<64x64xbf16>, vector<64x64xf32> -> vector<64x64xf32>
    %28 = vector.extract_strided_slice %1 {offsets = [1, 1, 0], sizes = [8, 8, 64], strides = [1, 1, 1]} : vector<10x10x64xbf16> to vector<8x8x64xbf16>
    %29 = vector.shape_cast %28 : vector<8x8x64xbf16> to vector<64x64xbf16>
    %30 = arith.extf %29 : vector<64x64xbf16> to vector<64x64xf32>
    %31 = arith.addf %30, %27 : vector<64x64xf32>
    %32 = arith.truncf %31 : vector<64x64xf32> to vector<64x64xbf16>
    %c0_9 = arith.constant 0 : index
    %c0_10 = arith.constant 0 : index
    %c0_11 = arith.constant 0 : index
    %33 = vector.load %arg4[%c0_9, %c0_10, %c0_11] : memref<1x64x64xbf16, #tpu.memory_space<vmem>>, vector<1x64x64xbf16>
    %34 = vector.shape_cast %33 : vector<1x64x64xbf16> to vector<64x64xbf16>
    %35 = vector.shape_cast %32 : vector<64x64xbf16> to vector<1x64x64xbf16>
    tpu.vector_store %arg4[%c0_9, %c0_10, %c0_11], %35 {strides = array<i32>} : memref<1x64x64xbf16, #tpu.memory_space<vmem>>, vector<1x64x64xbf16>,
    return
  }
  func.func @transform_0(%arg0: i32) -> (i32, i32, i32, i32) {
    %c0_i32 = arith.constant 0 : i32
    %c0_i32_0 = arith.constant 0 : i32
    %c0_i32_1 = arith.constant 0 : i32
    %c0_i32_2 = arith.constant 0 : i32
    return %arg0, %c0_i32, %c0_i32_0, %c0_i32_1 : i32, i32, i32, i32
  }
  func.func @transform_1(%arg0: i32) -> (i32, i32) {
    %c0_i32 = arith.constant 0 : i32
    %c0_i32_0 = arith.constant 0 : i32
    %c0_i32_1 = arith.constant 0 : i32
    return %c0_i32, %c0_i32_0 : i32, i32
  }
  func.func @transform_2(%arg0: i32) -> (i32, i32) {
    %c0_i32 = arith.constant 0 : i32
    %c0_i32_0 = arith.constant 0 : i32
    %c0_i32_1 = arith.constant 0 : i32
    return %c0_i32, %c0_i32_0 : i32, i32
  }
  func.func @transform_3(%arg0: i32) -> (i32, i32, i32) {
    %c0_i32 = arith.constant 0 : i32
    %c0_i32_0 = arith.constant 0 : i32
    %c0_i32_1 = arith.constant 0 : i32
    return %arg0, %c0_i32, %c0_i32_0 : i32, i32, i32
  }
}

module attributes {stable_mosaic.version = 11 : i64} {
  func.func @_residual_kernel(%arg0: i32, %arg1: memref<1x10x10x64xbf16, #tpu.memory_space<vmem>>, %arg2: memref<576x64xbf16, #tpu.memory_space<vmem>>, %arg3: memref<64x64xbf16, #tpu.memory_space<vmem>>, %arg4: memref<1x64x64xbf16, #tpu.memory_space<vmem>>) attributes {dimension_semantics = [#tpu.dimension_semantics<parallel>], iteration_bounds = array<i64: 2>, scalar_prefetch = 0 : i64, scratch_operands = 0 : i64, tpu.core_type = #tpu.core_type<tc>, window_params = [{transform_indices = @transform_0, window_bounds = array<i64: 1, 10, 10, 64>}, {pipeline_mode = #tpu.pipeline_mode<synchronous>, transform_indices = @transform_1, window_bounds = array<i64: 576, 64>}, {pipeline_mode = #tpu.pipeline_mode<synchronous>, transform_indices = @transform_2, window_bounds = array<i64: 64, 64>}, {transform_indices = @transform_3, window_bounds = array<i64: 1, 64, 64>}]} {
    %c0 = arith.constant 0 : index
    %c0_0 = arith.constant 0 : index
    %c0_1 = arith.constant 0 : index
    %c0_2 = arith.constant 0 : index
    %0 = vector.load %arg1[%c0, %c0_0, %c0_1, %c0_2] : memref<1x10x10x64xbf16, #tpu.memory_space<vmem>>, vector<1x10x10x64xbf16>
    %1 = vector.shape_cast %0 : vector<1x10x10x64xbf16> to vector<10x10x64xbf16>
    %2 = vector.extract_strided_slice %1 {offsets = [0, 0, 0], sizes = [8, 8, 64], strides = [1, 1, 1]} : vector<10x10x64xbf16> to vector<8x8x64xbf16>
    %3 = vector.shape_cast %2 : vector<8x8x64xbf16> to vector<64x64xbf16>
    %4 = vector.extract_strided_slice %1 {offsets = [0, 1, 0], sizes = [8, 8, 64], strides = [1, 1, 1]} : vector<10x10x64xbf16> to vector<8x8x64xbf16>
    %5 = vector.shape_cast %4 : vector<8x8x64xbf16> to vector<64x64xbf16>
    %6 = vector.extract_strided_slice %1 {offsets = [0, 2, 0], sizes = [8, 8, 64], strides = [1, 1, 1]} : vector<10x10x64xbf16> to vector<8x8x64xbf16>
    %7 = vector.shape_cast %6 : vector<8x8x64xbf16> to vector<64x64xbf16>
    %8 = vector.extract_strided_slice %1 {offsets = [1, 0, 0], sizes = [8, 8, 64], strides = [1, 1, 1]} : vector<10x10x64xbf16> to vector<8x8x64xbf16>
    %9 = vector.shape_cast %8 : vector<8x8x64xbf16> to vector<64x64xbf16>
    %10 = vector.extract_strided_slice %1 {offsets = [1, 1, 0], sizes = [8, 8, 64], strides = [1, 1, 1]} : vector<10x10x64xbf16> to vector<8x8x64xbf16>
    %11 = vector.shape_cast %10 : vector<8x8x64xbf16> to vector<64x64xbf16>
    %12 = vector.extract_strided_slice %1 {offsets = [1, 2, 0], sizes = [8, 8, 64], strides = [1, 1, 1]} : vector<10x10x64xbf16> to vector<8x8x64xbf16>
    %13 = vector.shape_cast %12 : vector<8x8x64xbf16> to vector<64x64xbf16>
    %14 = vector.extract_strided_slice %1 {offsets = [2, 0, 0], sizes = [8, 8, 64], strides = [1, 1, 1]} : vector<10x10x64xbf16> to vector<8x8x64xbf16>
    %15 = vector.shape_cast %14 : vector<8x8x64xbf16> to vector<64x64xbf16>
    %16 = vector.extract_strided_slice %1 {offsets = [2, 1, 0], sizes = [8, 8, 64], strides = [1, 1, 1]} : vector<10x10x64xbf16> to vector<8x8x64xbf16>
    %17 = vector.shape_cast %16 : vector<8x8x64xbf16> to vector<64x64xbf16>
    %18 = vector.extract_strided_slice %1 {offsets = [2, 2, 0], sizes = [8, 8, 64], strides = [1, 1, 1]} : vector<10x10x64xbf16> to vector<8x8x64xbf16>
    %19 = vector.shape_cast %18 : vector<8x8x64xbf16> to vector<64x64xbf16>
    %20 = tpu.concatenate %3, %5, %7, %9, %11, %13, %15, %17, %19 in 1 : vector<64x64xbf16>, vector<64x64xbf16>, vector<64x64xbf16>, vector<64x64xbf16>, vector<64x64xbf16>, vector<64x64xbf16>, vector<64x64xbf16>, vector<64x64xbf16>, vector<64x64xbf16> -> vector<64x576xbf16>
    %c0_3 = arith.constant 0 : index
    %c0_4 = arith.constant 0 : index
    %21 = vector.load %arg2[%c0_3, %c0_4] : memref<576x64xbf16, #tpu.memory_space<vmem>>, vector<576x64xbf16>
    %cst = arith.constant dense<0.000000e+00> : vector<64x64xf32>
    %22 = tpu.matmul %20, %21, %cst {dimension_numbers = #tpu.dot_dimension_numbers<[1], [0], [0], [1], [0, 0, 1, 1], [], []>} : vector<64x576xbf16>, vector<576x64xbf16>, vector<64x64xf32> -> vector<64x64xf32>
    %cst_5 = arith.constant 0.000000e+00 : f32
    %23 = vector.broadcast %cst_5 : f32 to vector<64x64xf32>
    %24 = arith.maximumf %22, %23 : vector<64x64xf32>
    %25 = arith.truncf %24 : vector<64x64xf32> to vector<64x64xbf16>
    %c0_6 = arith.constant 0 : index
    %c0_7 = arith.constant 0 : index
    %26 = vector.load %arg3[%c0_6, %c0_7] : memref<64x64xbf16, #tpu.memory_space<vmem>>, vector<64x64xbf16>
    %cst_8 = arith.constant dense<0.000000e+00> : vector<64x64xf32>
    %27 = tpu.matmul %25, %26, %cst_8 {dimension_numbers = #tpu.dot_dimension_numbers<[1], [0], [0], [1], [0, 0, 1, 1], [], []>} : vector<64x64xbf16>, vector<64x64xbf16>, vector<64x64xf32> -> vector<64x64xf32>
    %28 = vector.extract_strided_slice %1 {offsets = [1, 1, 0], sizes = [8, 8, 64], strides = [1, 1, 1]} : vector<10x10x64xbf16> to vector<8x8x64xbf16>
    %29 = vector.shape_cast %28 : vector<8x8x64xbf16> to vector<64x64xbf16>
    %30 = arith.extf %29 : vector<64x64xbf16> to vector<64x64xf32>
    %31 = arith.addf %30, %27 : vector<64x64xf32>
    %cst_9 = arith.constant 0.000000e+00 : f32
    %32 = vector.broadcast %cst_9 : f32 to vector<64x64xf32>
    %33 = arith.cmpf oge, %31, %32 : vector<64x64xf32>
    %cst_10 = arith.constant 0.00999999977 : f32
    %34 = vector.broadcast %cst_10 : f32 to vector<64x64xf32>
    %35 = arith.mulf %34, %31 : vector<64x64xf32>
    %36 = arith.select %33, %31, %35 : vector<64x64xi1>, vector<64x64xf32>
    %37 = arith.truncf %36 : vector<64x64xf32> to vector<64x64xbf16>
    %c0_11 = arith.constant 0 : index
    %c0_12 = arith.constant 0 : index
    %c0_13 = arith.constant 0 : index
    %38 = vector.load %arg4[%c0_11, %c0_12, %c0_13] : memref<1x64x64xbf16, #tpu.memory_space<vmem>>, vector<1x64x64xbf16>
    %39 = vector.shape_cast %38 : vector<1x64x64xbf16> to vector<64x64xbf16>
    %40 = vector.shape_cast %37 : vector<64x64xbf16> to vector<1x64x64xbf16>
    tpu.vector_store %arg4[%c0_11, %c0_12, %c0_13], %40 {strides = array<i32>} : memref<1x64x64xbf16, #tpu.memory_space<vmem>>, vector<1x64x64xbf16>,
    return
  }
  func.func @transform_0(%arg0: i32) -> (i32, i32, i32, i32) {
    %c0_i32 = arith.constant 0 : i32
    %c0_i32_0 = arith.constant 0 : i32
    %c0_i32_1 = arith.constant 0 : i32
    %c0_i32_2 = arith.constant 0 : i32
    return %arg0, %c0_i32, %c0_i32_0, %c0_i32_1 : i32, i32, i32, i32
  }
  func.func @transform_1(%arg0: i32) -> (i32, i32) {
    %c0_i32 = arith.constant 0 : i32
    %c0_i32_0 = arith.constant 0 : i32
    %c0_i32_1 = arith.constant 0 : i32
    return %c0_i32, %c0_i32_0 : i32, i32
  }
  func.func @transform_2(%arg0: i32) -> (i32, i32) {
    %c0_i32 = arith.constant 0 : i32
    %c0_i32_0 = arith.constant 0 : i32
    %c0_i32_1 = arith.constant 0 : i32
    return %c0_i32, %c0_i32_0 : i32, i32
  }
  func.func @transform_3(%arg0: i32) -> (i32, i32, i32) {
    %c0_i32 = arith.constant 0 : i32
    %c0_i32_0 = arith.constant 0 : i32
    %c0_i32_1 = arith.constant 0 : i32
    return %arg0, %c0_i32, %c0_i32_0 : i32, i32, i32
  }
}

module attributes {stable_mosaic.version = 11 : i64} {
  func.func @_mm_kernel(%arg0: i32, %arg1: memref<128x64xbf16, #tpu.memory_space<vmem>>, %arg2: memref<64x64xbf16, #tpu.memory_space<vmem>>, %arg3: memref<1x64xf32, #tpu.memory_space<vmem>>, %arg4: memref<128x64xf32, #tpu.memory_space<vmem>>) attributes {dimension_semantics = [#tpu.dimension_semantics<parallel>], iteration_bounds = array<i64: 1>, scalar_prefetch = 0 : i64, scratch_operands = 0 : i64, tpu.core_type = #tpu.core_type<tc>, window_params = [{transform_indices = @transform_0, window_bounds = array<i64: 128, 64>}, {pipeline_mode = #tpu.pipeline_mode<synchronous>, transform_indices = @transform_1, window_bounds = array<i64: 64, 64>}, {pipeline_mode = #tpu.pipeline_mode<synchronous>, transform_indices = @transform_2, window_bounds = array<i64: 1, 64>}, {transform_indices = @transform_3, window_bounds = array<i64: 128, 64>}]} {
    %c0 = arith.constant 0 : index
    %c0_0 = arith.constant 0 : index
    %0 = vector.load %arg1[%c0, %c0_0] : memref<128x64xbf16, #tpu.memory_space<vmem>>, vector<128x64xbf16>
    %c0_1 = arith.constant 0 : index
    %c0_2 = arith.constant 0 : index
    %1 = vector.load %arg2[%c0_1, %c0_2] : memref<64x64xbf16, #tpu.memory_space<vmem>>, vector<64x64xbf16>
    %cst = arith.constant dense<0.000000e+00> : vector<128x64xf32>
    %2 = tpu.matmul %0, %1, %cst {dimension_numbers = #tpu.dot_dimension_numbers<[1], [0], [0], [1], [0, 0, 1, 1], [], []>} : vector<128x64xbf16>, vector<64x64xbf16>, vector<128x64xf32> -> vector<128x64xf32>
    %c0_3 = arith.constant 0 : index
    %c0_4 = arith.constant 0 : index
    %3 = vector.load %arg3[%c0_3, %c0_4] : memref<1x64xf32, #tpu.memory_space<vmem>>, vector<1x64xf32>
    %4 = vector.broadcast %3 : vector<1x64xf32> to vector<128x64xf32>
    %5 = arith.addf %2, %4 : vector<128x64xf32>
    %cst_5 = arith.constant 0.000000e+00 : f32
    %6 = vector.broadcast %cst_5 : f32 to vector<128x64xf32>
    %7 = arith.cmpf oge, %5, %6 : vector<128x64xf32>
    %cst_6 = arith.constant 0.00999999977 : f32
    %8 = vector.broadcast %cst_6 : f32 to vector<128x64xf32>
    %9 = arith.mulf %8, %5 : vector<128x64xf32>
    %10 = arith.select %7, %5, %9 : vector<128x64xi1>, vector<128x64xf32>
    %c0_7 = arith.constant 0 : index
    %c0_8 = arith.constant 0 : index
    %11 = vector.load %arg4[%c0_7, %c0_8] : memref<128x64xf32, #tpu.memory_space<vmem>>, vector<128x64xf32>
    tpu.vector_store %arg4[%c0_7, %c0_8], %10 {strides = array<i32>} : memref<128x64xf32, #tpu.memory_space<vmem>>, vector<128x64xf32>,
    return
  }
  func.func @transform_0(%arg0: i32) -> (i32, i32) {
    %c0_i32 = arith.constant 0 : i32
    %c0_i32_0 = arith.constant 0 : i32
    return %arg0, %c0_i32 : i32, i32
  }
  func.func @transform_1(%arg0: i32) -> (i32, i32) {
    %c0_i32 = arith.constant 0 : i32
    %c0_i32_0 = arith.constant 0 : i32
    %c0_i32_1 = arith.constant 0 : i32
    return %c0_i32, %c0_i32_0 : i32, i32
  }
  func.func @transform_2(%arg0: i32) -> (i32, i32) {
    %c0_i32 = arith.constant 0 : i32
    %c0_i32_0 = arith.constant 0 : i32
    %c0_i32_1 = arith.constant 0 : i32
    return %c0_i32, %c0_i32_0 : i32, i32
  }
  func.func @transform_3(%arg0: i32) -> (i32, i32) {
    %c0_i32 = arith.constant 0 : i32
    %c0_i32_0 = arith.constant 0 : i32
    return %arg0, %c0_i32 : i32, i32
  }
}

module attributes {stable_mosaic.version = 11 : i64} {
  func.func @_vq_kernel(%arg0: i32, %arg1: memref<128x64xf32, #tpu.memory_space<vmem>>, %arg2: memref<128x64xf32, #tpu.memory_space<vmem>>, %arg3: memref<1x128xf32, #tpu.memory_space<vmem>>, %arg4: memref<128x64xf32, #tpu.memory_space<vmem>>, %arg5: memref<1x1xf32, #tpu.memory_space<smem>>) attributes {dimension_semantics = [#tpu.dimension_semantics<parallel>], iteration_bounds = array<i64: 1>, scalar_prefetch = 0 : i64, scratch_operands = 0 : i64, tpu.core_type = #tpu.core_type<tc>, window_params = [{transform_indices = @transform_0, window_bounds = array<i64: 128, 64>}, {pipeline_mode = #tpu.pipeline_mode<synchronous>, transform_indices = @transform_1, window_bounds = array<i64: 128, 64>}, {pipeline_mode = #tpu.pipeline_mode<synchronous>, transform_indices = @transform_2, window_bounds = array<i64: 1, 128>}, {transform_indices = @transform_3, window_bounds = array<i64: 128, 64>}, {transform_indices = @transform_4, window_bounds = array<i64: 1, 1>}]} {
    %c0 = arith.constant 0 : index
    %c0_0 = arith.constant 0 : index
    %0 = vector.load %arg1[%c0, %c0_0] : memref<128x64xf32, #tpu.memory_space<vmem>>, vector<128x64xf32>
    %c0_1 = arith.constant 0 : index
    %c0_2 = arith.constant 0 : index
    %1 = vector.load %arg2[%c0_1, %c0_2] : memref<128x64xf32, #tpu.memory_space<vmem>>, vector<128x64xf32>
    %2 = arith.truncf %0 : vector<128x64xf32> to vector<128x64xbf16>
    %3 = arith.truncf %1 : vector<128x64xf32> to vector<128x64xbf16>
    %cst = arith.constant dense<0.000000e+00> : vector<128x128xf32>
    %4 = tpu.matmul %2, %3, %cst {dimension_numbers = #tpu.dot_dimension_numbers<[1], [1], [0], [0], [0, 0, 1, 0], [], []>} : vector<128x64xbf16>, vector<128x64xbf16>, vector<128x128xf32> -> vector<128x128xf32>
    %5 = arith.mulf %0, %0 : vector<128x64xf32>
    %cst_3 = arith.constant dense<0.000000e+00> : vector<128xf32>
    %6 = vector.multi_reduction <add>, %5, %cst_3 [1] : vector<128x64xf32> to vector<128xf32>
    %7 = vector.shape_cast %6 : vector<128xf32> to vector<128x1xf32>
    %c0_4 = arith.constant 0 : index
    %c0_5 = arith.constant 0 : index
    %8 = vector.load %arg3[%c0_4, %c0_5] : memref<1x128xf32, #tpu.memory_space<vmem>>, vector<1x128xf32>
    %9 = vector.broadcast %7 : vector<128x1xf32> to vector<128x128xf32>
    %10 = vector.broadcast %8 : vector<1x128xf32> to vector<128x128xf32>
    %11 = arith.addf %9, %10 : vector<128x128xf32>
    %cst_6 = arith.constant 2.000000e+00 : f32
    %12 = vector.broadcast %cst_6 : f32 to vector<128x128xf32>
    %13 = arith.mulf %12, %4 : vector<128x128xf32>
    %14 = arith.subf %11, %13 : vector<128x128xf32>
    %15 = tpu.iota {dimensions = array<i32: 1>} : vector<128x128xi32>
    %cst_7 = arith.constant dense<0x7F800000> : vector<128xf32>
    %16 = vector.multi_reduction <minimumf>, %14, %cst_7 [1] : vector<128x128xf32> to vector<128xf32>
    %17 = vector.shape_cast %16 : vector<128xf32> to vector<128x1xf32>
    %18 = vector.broadcast %17 : vector<128x1xf32> to vector<128x128xf32>
    %19 = arith.cmpf oeq, %14, %18 : vector<128x128xf32>
    %c128_i32 = arith.constant 128 : i32
    %20 = vector.broadcast %c128_i32 : i32 to vector<128x128xi32>
    %21 = arith.select %19, %15, %20 : vector<128x128xi1>, vector<128x128xi32>
    %cst_8 = arith.constant dense<2147483647> : vector<128xi32>
    %22 = vector.multi_reduction <minsi>, %21, %cst_8 [1] : vector<128x128xi32> to vector<128xi32>
    %23 = vector.shape_cast %22 : vector<128xi32> to vector<128x1xi32>
    %24 = vector.broadcast %23 : vector<128x1xi32> to vector<128x128xi32>
    %25 = arith.cmpi eq, %15, %24 : vector<128x128xi32>
    %26 = arith.extui %25 : vector<128x128xi1> to vector<128x128xi32>
    %27 = arith.sitofp %26 : vector<128x128xi32> to vector<128x128xf32>
    %cst_9 = arith.constant dense<0.000000e+00> : vector<128x64xf32>
    %28 = tpu.matmul %27, %1, %cst_9 {dimension_numbers = #tpu.dot_dimension_numbers<[1], [0], [0], [1], [0, 0, 1, 1], [], []>} : vector<128x128xf32>, vector<128x64xf32>, vector<128x64xf32> -> vector<128x64xf32>
    %c0_10 = arith.constant 0 : index
    %c0_11 = arith.constant 0 : index
    %29 = vector.load %arg4[%c0_10, %c0_11] : memref<128x64xf32, #tpu.memory_space<vmem>>, vector<128x64xf32>
    tpu.vector_store %arg4[%c0_10, %c0_11], %28 {strides = array<i32>} : memref<128x64xf32, #tpu.memory_space<vmem>>, vector<128x64xf32>,
    %30 = tpu.iota {dimensions = array<i32: 0>} : vector<128x64xi32>
    %c128_i32_12 = arith.constant 128 : i32
    %31 = arith.muli %arg0, %c128_i32_12 : i32
    %32 = vector.broadcast %31 : i32 to vector<128x64xi32>
    %33 = arith.addi %30, %32 : vector<128x64xi32>
    %c128_i32_13 = arith.constant 128 : i32
    %34 = vector.broadcast %c128_i32_13 : i32 to vector<128x64xi32>
    %35 = arith.cmpi slt, %33, %34 : vector<128x64xi32>
    %36 = arith.subf %28, %0 : vector<128x64xf32>
    %cst_14 = arith.constant 0.000000e+00 : f32
    %37 = vector.broadcast %cst_14 : f32 to vector<128x64xf32>
    %38 = arith.select %35, %36, %37 : vector<128x64xi1>, vector<128x64xf32>
    %39 = arith.mulf %38, %38 : vector<128x64xf32>
    %40 = vector.shape_cast %39 : vector<128x64xf32> to vector<1x128x64xf32>
    %cst_15 = arith.constant dense<0.000000e+00> : vector<1xf32>
    %41 = vector.multi_reduction <add>, %40, %cst_15 [1, 2] : vector<1x128x64xf32> to vector<1xf32>
    %42 = vector.shape_cast %41 : vector<1xf32> to vector<1x1x1xf32>
    %43 = vector.extract %42[0, 0, 0] : f32 from vector<1x1x1xf32>
    %c0_16 = arith.constant 0 : index
    %c0_17 = arith.constant 0 : index
    %44 = memref.load %arg5[%c0_16, %c0_17] : memref<1x1xf32, #tpu.memory_space<smem>>
    memref.store %43, %arg5[%c0_16, %c0_17] : memref<1x1xf32, #tpu.memory_space<smem>>
    return
  }
  func.func @transform_0(%arg0: i32) -> (i32, i32) {
    %c0_i32 = arith.constant 0 : i32
    %c0_i32_0 = arith.constant 0 : i32
    return %arg0, %c0_i32 : i32, i32
  }
  func.func @transform_1(%arg0: i32) -> (i32, i32) {
    %c0_i32 = arith.constant 0 : i32
    %c0_i32_0 = arith.constant 0 : i32
    %c0_i32_1 = arith.constant 0 : i32
    return %c0_i32, %c0_i32_0 : i32, i32
  }
  func.func @transform_2(%arg0: i32) -> (i32, i32) {
    %c0_i32 = arith.constant 0 : i32
    %c0_i32_0 = arith.constant 0 : i32
    %c0_i32_1 = arith.constant 0 : i32
    return %c0_i32, %c0_i32_0 : i32, i32
  }
  func.func @transform_3(%arg0: i32) -> (i32, i32) {
    %c0_i32 = arith.constant 0 : i32
    %c0_i32_0 = arith.constant 0 : i32
    return %arg0, %c0_i32 : i32, i32
  }
  func.func @transform_4(%arg0: i32) -> (i32, i32) {
    %c0_i32 = arith.constant 0 : i32
    %c0_i32_0 = arith.constant 0 : i32
    return %arg0, %c0_i32 : i32, i32
  }
}

module attributes {stable_mosaic.version = 11 : i64} {
  func.func @_convT_kernel(%arg0: i32, %arg1: memref<1x10x10x64xbf16, #tpu.memory_space<vmem>>, %arg2: memref<4x256x32xbf16, #tpu.memory_space<vmem>>, %arg3: memref<1x32xf32, #tpu.memory_space<vmem>>, %arg4: memref<1x8x2x8x64xbf16, #tpu.memory_space<vmem>>) attributes {dimension_semantics = [#tpu.dimension_semantics<parallel>], iteration_bounds = array<i64: 2>, scalar_prefetch = 0 : i64, scratch_operands = 0 : i64, tpu.core_type = #tpu.core_type<tc>, window_params = [{transform_indices = @transform_0, window_bounds = array<i64: 1, 10, 10, 64>}, {pipeline_mode = #tpu.pipeline_mode<synchronous>, transform_indices = @transform_1, window_bounds = array<i64: 4, 256, 32>}, {pipeline_mode = #tpu.pipeline_mode<synchronous>, transform_indices = @transform_2, window_bounds = array<i64: 1, 32>}, {transform_indices = @transform_3, window_bounds = array<i64: 1, 8, 2, 8, 64>}]} {
    %c0 = arith.constant 0 : index
    %c0_0 = arith.constant 0 : index
    %c0_1 = arith.constant 0 : index
    %c0_2 = arith.constant 0 : index
    %0 = vector.load %arg1[%c0, %c0_0, %c0_1, %c0_2] : memref<1x10x10x64xbf16, #tpu.memory_space<vmem>>, vector<1x10x10x64xbf16>
    %1 = vector.shape_cast %0 : vector<1x10x10x64xbf16> to vector<10x10x64xbf16>
    %2 = vector.extract_strided_slice %1 {offsets = [0, 0, 0], sizes = [8, 8, 64], strides = [1, 1, 1]} : vector<10x10x64xbf16> to vector<8x8x64xbf16>
    %3 = vector.shape_cast %2 : vector<8x8x64xbf16> to vector<64x64xbf16>
    %4 = vector.extract_strided_slice %1 {offsets = [0, 1, 0], sizes = [8, 8, 64], strides = [1, 1, 1]} : vector<10x10x64xbf16> to vector<8x8x64xbf16>
    %5 = vector.shape_cast %4 : vector<8x8x64xbf16> to vector<64x64xbf16>
    %6 = vector.extract_strided_slice %1 {offsets = [1, 0, 0], sizes = [8, 8, 64], strides = [1, 1, 1]} : vector<10x10x64xbf16> to vector<8x8x64xbf16>
    %7 = vector.shape_cast %6 : vector<8x8x64xbf16> to vector<64x64xbf16>
    %8 = vector.extract_strided_slice %1 {offsets = [1, 1, 0], sizes = [8, 8, 64], strides = [1, 1, 1]} : vector<10x10x64xbf16> to vector<8x8x64xbf16>
    %9 = vector.shape_cast %8 : vector<8x8x64xbf16> to vector<64x64xbf16>
    %10 = tpu.concatenate %3, %5, %7, %9 in 1 : vector<64x64xbf16>, vector<64x64xbf16>, vector<64x64xbf16>, vector<64x64xbf16> -> vector<64x256xbf16>
    %c0_3 = arith.constant 0 : index
    %c0_4 = arith.constant 0 : index
    %c0_5 = arith.constant 0 : index
    %11 = vector.load %arg2[%c0_3, %c0_4, %c0_5] : memref<4x256x32xbf16, #tpu.memory_space<vmem>>, vector<1x256x32xbf16>
    %12 = vector.shape_cast %11 : vector<1x256x32xbf16> to vector<256x32xbf16>
    %cst = arith.constant dense<0.000000e+00> : vector<64x32xf32>
    %13 = tpu.matmul %10, %12, %cst {dimension_numbers = #tpu.dot_dimension_numbers<[1], [0], [0], [1], [0, 0, 1, 1], [], []>} : vector<64x256xbf16>, vector<256x32xbf16>, vector<64x32xf32> -> vector<64x32xf32>
    %c0_6 = arith.constant 0 : index
    %c0_7 = arith.constant 0 : index
    %14 = vector.load %arg3[%c0_6, %c0_7] : memref<1x32xf32, #tpu.memory_space<vmem>>, vector<1x32xf32>
    %15 = vector.broadcast %14 : vector<1x32xf32> to vector<64x32xf32>
    %16 = arith.addf %13, %15 : vector<64x32xf32>
    %cst_8 = arith.constant 0.000000e+00 : f32
    %17 = vector.broadcast %cst_8 : f32 to vector<64x32xf32>
    %18 = arith.cmpf oge, %16, %17 : vector<64x32xf32>
    %cst_9 = arith.constant 0.00999999977 : f32
    %19 = vector.broadcast %cst_9 : f32 to vector<64x32xf32>
    %20 = arith.mulf %19, %16 : vector<64x32xf32>
    %21 = arith.select %18, %16, %20 : vector<64x32xi1>, vector<64x32xf32>
    %22 = vector.extract_strided_slice %1 {offsets = [0, 1, 0], sizes = [8, 8, 64], strides = [1, 1, 1]} : vector<10x10x64xbf16> to vector<8x8x64xbf16>
    %23 = vector.shape_cast %22 : vector<8x8x64xbf16> to vector<64x64xbf16>
    %24 = vector.extract_strided_slice %1 {offsets = [0, 2, 0], sizes = [8, 8, 64], strides = [1, 1, 1]} : vector<10x10x64xbf16> to vector<8x8x64xbf16>
    %25 = vector.shape_cast %24 : vector<8x8x64xbf16> to vector<64x64xbf16>
    %26 = vector.extract_strided_slice %1 {offsets = [1, 1, 0], sizes = [8, 8, 64], strides = [1, 1, 1]} : vector<10x10x64xbf16> to vector<8x8x64xbf16>
    %27 = vector.shape_cast %26 : vector<8x8x64xbf16> to vector<64x64xbf16>
    %28 = vector.extract_strided_slice %1 {offsets = [1, 2, 0], sizes = [8, 8, 64], strides = [1, 1, 1]} : vector<10x10x64xbf16> to vector<8x8x64xbf16>
    %29 = vector.shape_cast %28 : vector<8x8x64xbf16> to vector<64x64xbf16>
    %30 = tpu.concatenate %23, %25, %27, %29 in 1 : vector<64x64xbf16>, vector<64x64xbf16>, vector<64x64xbf16>, vector<64x64xbf16> -> vector<64x256xbf16>
    %c1 = arith.constant 1 : index
    %c0_10 = arith.constant 0 : index
    %c0_11 = arith.constant 0 : index
    %31 = vector.load %arg2[%c1, %c0_10, %c0_11] : memref<4x256x32xbf16, #tpu.memory_space<vmem>>, vector<1x256x32xbf16>
    %32 = vector.shape_cast %31 : vector<1x256x32xbf16> to vector<256x32xbf16>
    %cst_12 = arith.constant dense<0.000000e+00> : vector<64x32xf32>
    %33 = tpu.matmul %30, %32, %cst_12 {dimension_numbers = #tpu.dot_dimension_numbers<[1], [0], [0], [1], [0, 0, 1, 1], [], []>} : vector<64x256xbf16>, vector<256x32xbf16>, vector<64x32xf32> -> vector<64x32xf32>
    %c0_13 = arith.constant 0 : index
    %c0_14 = arith.constant 0 : index
    %34 = vector.load %arg3[%c0_13, %c0_14] : memref<1x32xf32, #tpu.memory_space<vmem>>, vector<1x32xf32>
    %35 = vector.broadcast %34 : vector<1x32xf32> to vector<64x32xf32>
    %36 = arith.addf %33, %35 : vector<64x32xf32>
    %cst_15 = arith.constant 0.000000e+00 : f32
    %37 = vector.broadcast %cst_15 : f32 to vector<64x32xf32>
    %38 = arith.cmpf oge, %36, %37 : vector<64x32xf32>
    %cst_16 = arith.constant 0.00999999977 : f32
    %39 = vector.broadcast %cst_16 : f32 to vector<64x32xf32>
    %40 = arith.mulf %39, %36 : vector<64x32xf32>
    %41 = arith.select %38, %36, %40 : vector<64x32xi1>, vector<64x32xf32>
    %42 = tpu.concatenate %21, %41 in 1 : vector<64x32xf32>, vector<64x32xf32> -> vector<64x64xf32>
    %43 = vector.shape_cast %42 : vector<64x64xf32> to vector<8x8x64xf32>
    %44 = vector.extract_strided_slice %1 {offsets = [1, 0, 0], sizes = [8, 8, 64], strides = [1, 1, 1]} : vector<10x10x64xbf16> to vector<8x8x64xbf16>
    %45 = vector.shape_cast %44 : vector<8x8x64xbf16> to vector<64x64xbf16>
    %46 = vector.extract_strided_slice %1 {offsets = [1, 1, 0], sizes = [8, 8, 64], strides = [1, 1, 1]} : vector<10x10x64xbf16> to vector<8x8x64xbf16>
    %47 = vector.shape_cast %46 : vector<8x8x64xbf16> to vector<64x64xbf16>
    %48 = vector.extract_strided_slice %1 {offsets = [2, 0, 0], sizes = [8, 8, 64], strides = [1, 1, 1]} : vector<10x10x64xbf16> to vector<8x8x64xbf16>
    %49 = vector.shape_cast %48 : vector<8x8x64xbf16> to vector<64x64xbf16>
    %50 = vector.extract_strided_slice %1 {offsets = [2, 1, 0], sizes = [8, 8, 64], strides = [1, 1, 1]} : vector<10x10x64xbf16> to vector<8x8x64xbf16>
    %51 = vector.shape_cast %50 : vector<8x8x64xbf16> to vector<64x64xbf16>
    %52 = tpu.concatenate %45, %47, %49, %51 in 1 : vector<64x64xbf16>, vector<64x64xbf16>, vector<64x64xbf16>, vector<64x64xbf16> -> vector<64x256xbf16>
    %c2 = arith.constant 2 : index
    %c0_17 = arith.constant 0 : index
    %c0_18 = arith.constant 0 : index
    %53 = vector.load %arg2[%c2, %c0_17, %c0_18] : memref<4x256x32xbf16, #tpu.memory_space<vmem>>, vector<1x256x32xbf16>
    %54 = vector.shape_cast %53 : vector<1x256x32xbf16> to vector<256x32xbf16>
    %cst_19 = arith.constant dense<0.000000e+00> : vector<64x32xf32>
    %55 = tpu.matmul %52, %54, %cst_19 {dimension_numbers = #tpu.dot_dimension_numbers<[1], [0], [0], [1], [0, 0, 1, 1], [], []>} : vector<64x256xbf16>, vector<256x32xbf16>, vector<64x32xf32> -> vector<64x32xf32>
    %c0_20 = arith.constant 0 : index
    %c0_21 = arith.constant 0 : index
    %56 = vector.load %arg3[%c0_20, %c0_21] : memref<1x32xf32, #tpu.memory_space<vmem>>, vector<1x32xf32>
    %57 = vector.broadcast %56 : vector<1x32xf32> to vector<64x32xf32>
    %58 = arith.addf %55, %57 : vector<64x32xf32>
    %cst_22 = arith.constant 0.000000e+00 : f32
    %59 = vector.broadcast %cst_22 : f32 to vector<64x32xf32>
    %60 = arith.cmpf oge, %58, %59 : vector<64x32xf32>
    %cst_23 = arith.constant 0.00999999977 : f32
    %61 = vector.broadcast %cst_23 : f32 to vector<64x32xf32>
    %62 = arith.mulf %61, %58 : vector<64x32xf32>
    %63 = arith.select %60, %58, %62 : vector<64x32xi1>, vector<64x32xf32>
    %64 = vector.extract_strided_slice %1 {offsets = [1, 1, 0], sizes = [8, 8, 64], strides = [1, 1, 1]} : vector<10x10x64xbf16> to vector<8x8x64xbf16>
    %65 = vector.shape_cast %64 : vector<8x8x64xbf16> to vector<64x64xbf16>
    %66 = vector.extract_strided_slice %1 {offsets = [1, 2, 0], sizes = [8, 8, 64], strides = [1, 1, 1]} : vector<10x10x64xbf16> to vector<8x8x64xbf16>
    %67 = vector.shape_cast %66 : vector<8x8x64xbf16> to vector<64x64xbf16>
    %68 = vector.extract_strided_slice %1 {offsets = [2, 1, 0], sizes = [8, 8, 64], strides = [1, 1, 1]} : vector<10x10x64xbf16> to vector<8x8x64xbf16>
    %69 = vector.shape_cast %68 : vector<8x8x64xbf16> to vector<64x64xbf16>
    %70 = vector.extract_strided_slice %1 {offsets = [2, 2, 0], sizes = [8, 8, 64], strides = [1, 1, 1]} : vector<10x10x64xbf16> to vector<8x8x64xbf16>
    %71 = vector.shape_cast %70 : vector<8x8x64xbf16> to vector<64x64xbf16>
    %72 = tpu.concatenate %65, %67, %69, %71 in 1 : vector<64x64xbf16>, vector<64x64xbf16>, vector<64x64xbf16>, vector<64x64xbf16> -> vector<64x256xbf16>
    %c3 = arith.constant 3 : index
    %c0_24 = arith.constant 0 : index
    %c0_25 = arith.constant 0 : index
    %73 = vector.load %arg2[%c3, %c0_24, %c0_25] : memref<4x256x32xbf16, #tpu.memory_space<vmem>>, vector<1x256x32xbf16>
    %74 = vector.shape_cast %73 : vector<1x256x32xbf16> to vector<256x32xbf16>
    %cst_26 = arith.constant dense<0.000000e+00> : vector<64x32xf32>
    %75 = tpu.matmul %72, %74, %cst_26 {dimension_numbers = #tpu.dot_dimension_numbers<[1], [0], [0], [1], [0, 0, 1, 1], [], []>} : vector<64x256xbf16>, vector<256x32xbf16>, vector<64x32xf32> -> vector<64x32xf32>
    %c0_27 = arith.constant 0 : index
    %c0_28 = arith.constant 0 : index
    %76 = vector.load %arg3[%c0_27, %c0_28] : memref<1x32xf32, #tpu.memory_space<vmem>>, vector<1x32xf32>
    %77 = vector.broadcast %76 : vector<1x32xf32> to vector<64x32xf32>
    %78 = arith.addf %75, %77 : vector<64x32xf32>
    %cst_29 = arith.constant 0.000000e+00 : f32
    %79 = vector.broadcast %cst_29 : f32 to vector<64x32xf32>
    %80 = arith.cmpf oge, %78, %79 : vector<64x32xf32>
    %cst_30 = arith.constant 0.00999999977 : f32
    %81 = vector.broadcast %cst_30 : f32 to vector<64x32xf32>
    %82 = arith.mulf %81, %78 : vector<64x32xf32>
    %83 = arith.select %80, %78, %82 : vector<64x32xi1>, vector<64x32xf32>
    %84 = tpu.concatenate %63, %83 in 1 : vector<64x32xf32>, vector<64x32xf32> -> vector<64x64xf32>
    %85 = vector.shape_cast %84 : vector<64x64xf32> to vector<8x8x64xf32>
    %86 = vector.shape_cast %43 : vector<8x8x64xf32> to vector<8x1x8x64xf32>
    %87 = vector.shape_cast %85 : vector<8x8x64xf32> to vector<8x1x8x64xf32>
    %88 = tpu.concatenate %86, %87 in 1 : vector<8x1x8x64xf32>, vector<8x1x8x64xf32> -> vector<8x2x8x64xf32>
    %89 = arith.truncf %88 : vector<8x2x8x64xf32> to vector<8x2x8x64xbf16>
    %c0_31 = arith.constant 0 : index
    %c0_32 = arith.constant 0 : index
    %c0_33 = arith.constant 0 : index
    %c0_34 = arith.constant 0 : index
    %c0_35 = arith.constant 0 : index
    %90 = vector.load %arg4[%c0_31, %c0_32, %c0_33, %c0_34, %c0_35] : memref<1x8x2x8x64xbf16, #tpu.memory_space<vmem>>, vector<1x8x2x8x64xbf16>
    %91 = vector.shape_cast %90 : vector<1x8x2x8x64xbf16> to vector<8x2x8x64xbf16>
    %92 = vector.shape_cast %89 : vector<8x2x8x64xbf16> to vector<1x8x2x8x64xbf16>
    tpu.vector_store %arg4[%c0_31, %c0_32, %c0_33, %c0_34, %c0_35], %92 {strides = array<i32>} : memref<1x8x2x8x64xbf16, #tpu.memory_space<vmem>>, vector<1x8x2x8x64xbf16>,
    return
  }
  func.func @transform_0(%arg0: i32) -> (i32, i32, i32, i32) {
    %c0_i32 = arith.constant 0 : i32
    %c0_i32_0 = arith.constant 0 : i32
    %c0_i32_1 = arith.constant 0 : i32
    %c0_i32_2 = arith.constant 0 : i32
    return %arg0, %c0_i32, %c0_i32_0, %c0_i32_1 : i32, i32, i32, i32
  }
  func.func @transform_1(%arg0: i32) -> (i32, i32, i32) {
    %c0_i32 = arith.constant 0 : i32
    %c0_i32_0 = arith.constant 0 : i32
    %c0_i32_1 = arith.constant 0 : i32
    %c0_i32_2 = arith.constant 0 : i32
    return %c0_i32, %c0_i32_0, %c0_i32_1 : i32, i32, i32
  }
  func.func @transform_2(%arg0: i32) -> (i32, i32) {
    %c0_i32 = arith.constant 0 : i32
    %c0_i32_0 = arith.constant 0 : i32
    %c0_i32_1 = arith.constant 0 : i32
    return %c0_i32, %c0_i32_0 : i32, i32
  }
  func.func @transform_3(%arg0: i32) -> (i32, i32, i32, i32, i32) {
    %c0_i32 = arith.constant 0 : i32
    %c0_i32_0 = arith.constant 0 : i32
    %c0_i32_1 = arith.constant 0 : i32
    %c0_i32_2 = arith.constant 0 : i32
    %c0_i32_3 = arith.constant 0 : i32
    return %arg0, %c0_i32, %c0_i32_0, %c0_i32_1, %c0_i32_2 : i32, i32, i32, i32, i32
  }
}

module attributes {stable_mosaic.version = 11 : i64} {
  func.func @_convT_kernel(%arg0: i32, %arg1: memref<1x18x18x32xbf16, #tpu.memory_space<vmem>>, %arg2: memref<4x128x3xbf16, #tpu.memory_space<vmem>>, %arg3: memref<1x3xf32, #tpu.memory_space<vmem>>, %arg4: memref<1x16x2x16x6xf32, #tpu.memory_space<vmem>>) attributes {dimension_semantics = [#tpu.dimension_semantics<parallel>], iteration_bounds = array<i64: 2>, scalar_prefetch = 0 : i64, scratch_operands = 0 : i64, tpu.core_type = #tpu.core_type<tc>, window_params = [{transform_indices = @transform_0, window_bounds = array<i64: 1, 18, 18, 32>}, {pipeline_mode = #tpu.pipeline_mode<synchronous>, transform_indices = @transform_1, window_bounds = array<i64: 4, 128, 3>}, {pipeline_mode = #tpu.pipeline_mode<synchronous>, transform_indices = @transform_2, window_bounds = array<i64: 1, 3>}, {transform_indices = @transform_3, window_bounds = array<i64: 1, 16, 2, 16, 6>}]} {
    %c0 = arith.constant 0 : index
    %c0_0 = arith.constant 0 : index
    %c0_1 = arith.constant 0 : index
    %c0_2 = arith.constant 0 : index
    %0 = vector.load %arg1[%c0, %c0_0, %c0_1, %c0_2] : memref<1x18x18x32xbf16, #tpu.memory_space<vmem>>, vector<1x18x18x32xbf16>
    %1 = vector.shape_cast %0 : vector<1x18x18x32xbf16> to vector<18x18x32xbf16>
    %2 = vector.extract_strided_slice %1 {offsets = [0, 0, 0], sizes = [16, 16, 32], strides = [1, 1, 1]} : vector<18x18x32xbf16> to vector<16x16x32xbf16>
    %3 = vector.shape_cast %2 : vector<16x16x32xbf16> to vector<256x32xbf16>
    %4 = vector.extract_strided_slice %1 {offsets = [0, 1, 0], sizes = [16, 16, 32], strides = [1, 1, 1]} : vector<18x18x32xbf16> to vector<16x16x32xbf16>
    %5 = vector.shape_cast %4 : vector<16x16x32xbf16> to vector<256x32xbf16>
    %6 = vector.extract_strided_slice %1 {offsets = [1, 0, 0], sizes = [16, 16, 32], strides = [1, 1, 1]} : vector<18x18x32xbf16> to vector<16x16x32xbf16>
    %7 = vector.shape_cast %6 : vector<16x16x32xbf16> to vector<256x32xbf16>
    %8 = vector.extract_strided_slice %1 {offsets = [1, 1, 0], sizes = [16, 16, 32], strides = [1, 1, 1]} : vector<18x18x32xbf16> to vector<16x16x32xbf16>
    %9 = vector.shape_cast %8 : vector<16x16x32xbf16> to vector<256x32xbf16>
    %10 = tpu.concatenate %3, %5, %7, %9 in 1 : vector<256x32xbf16>, vector<256x32xbf16>, vector<256x32xbf16>, vector<256x32xbf16> -> vector<256x128xbf16>
    %c0_3 = arith.constant 0 : index
    %c0_4 = arith.constant 0 : index
    %c0_5 = arith.constant 0 : index
    %11 = vector.load %arg2[%c0_3, %c0_4, %c0_5] : memref<4x128x3xbf16, #tpu.memory_space<vmem>>, vector<1x128x3xbf16>
    %12 = vector.shape_cast %11 : vector<1x128x3xbf16> to vector<128x3xbf16>
    %cst = arith.constant dense<0.000000e+00> : vector<256x3xf32>
    %13 = tpu.matmul %10, %12, %cst {dimension_numbers = #tpu.dot_dimension_numbers<[1], [0], [0], [1], [0, 0, 1, 1], [], []>} : vector<256x128xbf16>, vector<128x3xbf16>, vector<256x3xf32> -> vector<256x3xf32>
    %c0_6 = arith.constant 0 : index
    %c0_7 = arith.constant 0 : index
    %14 = vector.load %arg3[%c0_6, %c0_7] : memref<1x3xf32, #tpu.memory_space<vmem>>, vector<1x3xf32>
    %15 = vector.broadcast %14 : vector<1x3xf32> to vector<256x3xf32>
    %16 = arith.addf %13, %15 : vector<256x3xf32>
    %17 = math.tanh %16 : vector<256x3xf32>
    %18 = vector.extract_strided_slice %1 {offsets = [0, 1, 0], sizes = [16, 16, 32], strides = [1, 1, 1]} : vector<18x18x32xbf16> to vector<16x16x32xbf16>
    %19 = vector.shape_cast %18 : vector<16x16x32xbf16> to vector<256x32xbf16>
    %20 = vector.extract_strided_slice %1 {offsets = [0, 2, 0], sizes = [16, 16, 32], strides = [1, 1, 1]} : vector<18x18x32xbf16> to vector<16x16x32xbf16>
    %21 = vector.shape_cast %20 : vector<16x16x32xbf16> to vector<256x32xbf16>
    %22 = vector.extract_strided_slice %1 {offsets = [1, 1, 0], sizes = [16, 16, 32], strides = [1, 1, 1]} : vector<18x18x32xbf16> to vector<16x16x32xbf16>
    %23 = vector.shape_cast %22 : vector<16x16x32xbf16> to vector<256x32xbf16>
    %24 = vector.extract_strided_slice %1 {offsets = [1, 2, 0], sizes = [16, 16, 32], strides = [1, 1, 1]} : vector<18x18x32xbf16> to vector<16x16x32xbf16>
    %25 = vector.shape_cast %24 : vector<16x16x32xbf16> to vector<256x32xbf16>
    %26 = tpu.concatenate %19, %21, %23, %25 in 1 : vector<256x32xbf16>, vector<256x32xbf16>, vector<256x32xbf16>, vector<256x32xbf16> -> vector<256x128xbf16>
    %c1 = arith.constant 1 : index
    %c0_8 = arith.constant 0 : index
    %c0_9 = arith.constant 0 : index
    %27 = vector.load %arg2[%c1, %c0_8, %c0_9] : memref<4x128x3xbf16, #tpu.memory_space<vmem>>, vector<1x128x3xbf16>
    %28 = vector.shape_cast %27 : vector<1x128x3xbf16> to vector<128x3xbf16>
    %cst_10 = arith.constant dense<0.000000e+00> : vector<256x3xf32>
    %29 = tpu.matmul %26, %28, %cst_10 {dimension_numbers = #tpu.dot_dimension_numbers<[1], [0], [0], [1], [0, 0, 1, 1], [], []>} : vector<256x128xbf16>, vector<128x3xbf16>, vector<256x3xf32> -> vector<256x3xf32>
    %c0_11 = arith.constant 0 : index
    %c0_12 = arith.constant 0 : index
    %30 = vector.load %arg3[%c0_11, %c0_12] : memref<1x3xf32, #tpu.memory_space<vmem>>, vector<1x3xf32>
    %31 = vector.broadcast %30 : vector<1x3xf32> to vector<256x3xf32>
    %32 = arith.addf %29, %31 : vector<256x3xf32>
    %33 = math.tanh %32 : vector<256x3xf32>
    %34 = tpu.concatenate %17, %33 in 1 : vector<256x3xf32>, vector<256x3xf32> -> vector<256x6xf32>
    %35 = vector.shape_cast %34 : vector<256x6xf32> to vector<16x16x6xf32>
    %36 = vector.extract_strided_slice %1 {offsets = [1, 0, 0], sizes = [16, 16, 32], strides = [1, 1, 1]} : vector<18x18x32xbf16> to vector<16x16x32xbf16>
    %37 = vector.shape_cast %36 : vector<16x16x32xbf16> to vector<256x32xbf16>
    %38 = vector.extract_strided_slice %1 {offsets = [1, 1, 0], sizes = [16, 16, 32], strides = [1, 1, 1]} : vector<18x18x32xbf16> to vector<16x16x32xbf16>
    %39 = vector.shape_cast %38 : vector<16x16x32xbf16> to vector<256x32xbf16>
    %40 = vector.extract_strided_slice %1 {offsets = [2, 0, 0], sizes = [16, 16, 32], strides = [1, 1, 1]} : vector<18x18x32xbf16> to vector<16x16x32xbf16>
    %41 = vector.shape_cast %40 : vector<16x16x32xbf16> to vector<256x32xbf16>
    %42 = vector.extract_strided_slice %1 {offsets = [2, 1, 0], sizes = [16, 16, 32], strides = [1, 1, 1]} : vector<18x18x32xbf16> to vector<16x16x32xbf16>
    %43 = vector.shape_cast %42 : vector<16x16x32xbf16> to vector<256x32xbf16>
    %44 = tpu.concatenate %37, %39, %41, %43 in 1 : vector<256x32xbf16>, vector<256x32xbf16>, vector<256x32xbf16>, vector<256x32xbf16> -> vector<256x128xbf16>
    %c2 = arith.constant 2 : index
    %c0_13 = arith.constant 0 : index
    %c0_14 = arith.constant 0 : index
    %45 = vector.load %arg2[%c2, %c0_13, %c0_14] : memref<4x128x3xbf16, #tpu.memory_space<vmem>>, vector<1x128x3xbf16>
    %46 = vector.shape_cast %45 : vector<1x128x3xbf16> to vector<128x3xbf16>
    %cst_15 = arith.constant dense<0.000000e+00> : vector<256x3xf32>
    %47 = tpu.matmul %44, %46, %cst_15 {dimension_numbers = #tpu.dot_dimension_numbers<[1], [0], [0], [1], [0, 0, 1, 1], [], []>} : vector<256x128xbf16>, vector<128x3xbf16>, vector<256x3xf32> -> vector<256x3xf32>
    %c0_16 = arith.constant 0 : index
    %c0_17 = arith.constant 0 : index
    %48 = vector.load %arg3[%c0_16, %c0_17] : memref<1x3xf32, #tpu.memory_space<vmem>>, vector<1x3xf32>
    %49 = vector.broadcast %48 : vector<1x3xf32> to vector<256x3xf32>
    %50 = arith.addf %47, %49 : vector<256x3xf32>
    %51 = math.tanh %50 : vector<256x3xf32>
    %52 = vector.extract_strided_slice %1 {offsets = [1, 1, 0], sizes = [16, 16, 32], strides = [1, 1, 1]} : vector<18x18x32xbf16> to vector<16x16x32xbf16>
    %53 = vector.shape_cast %52 : vector<16x16x32xbf16> to vector<256x32xbf16>
    %54 = vector.extract_strided_slice %1 {offsets = [1, 2, 0], sizes = [16, 16, 32], strides = [1, 1, 1]} : vector<18x18x32xbf16> to vector<16x16x32xbf16>
    %55 = vector.shape_cast %54 : vector<16x16x32xbf16> to vector<256x32xbf16>
    %56 = vector.extract_strided_slice %1 {offsets = [2, 1, 0], sizes = [16, 16, 32], strides = [1, 1, 1]} : vector<18x18x32xbf16> to vector<16x16x32xbf16>
    %57 = vector.shape_cast %56 : vector<16x16x32xbf16> to vector<256x32xbf16>
    %58 = vector.extract_strided_slice %1 {offsets = [2, 2, 0], sizes = [16, 16, 32], strides = [1, 1, 1]} : vector<18x18x32xbf16> to vector<16x16x32xbf16>
    %59 = vector.shape_cast %58 : vector<16x16x32xbf16> to vector<256x32xbf16>
    %60 = tpu.concatenate %53, %55, %57, %59 in 1 : vector<256x32xbf16>, vector<256x32xbf16>, vector<256x32xbf16>, vector<256x32xbf16> -> vector<256x128xbf16>
    %c3 = arith.constant 3 : index
    %c0_18 = arith.constant 0 : index
    %c0_19 = arith.constant 0 : index
    %61 = vector.load %arg2[%c3, %c0_18, %c0_19] : memref<4x128x3xbf16, #tpu.memory_space<vmem>>, vector<1x128x3xbf16>
    %62 = vector.shape_cast %61 : vector<1x128x3xbf16> to vector<128x3xbf16>
    %cst_20 = arith.constant dense<0.000000e+00> : vector<256x3xf32>
    %63 = tpu.matmul %60, %62, %cst_20 {dimension_numbers = #tpu.dot_dimension_numbers<[1], [0], [0], [1], [0, 0, 1, 1], [], []>} : vector<256x128xbf16>, vector<128x3xbf16>, vector<256x3xf32> -> vector<256x3xf32>
    %c0_21 = arith.constant 0 : index
    %c0_22 = arith.constant 0 : index
    %64 = vector.load %arg3[%c0_21, %c0_22] : memref<1x3xf32, #tpu.memory_space<vmem>>, vector<1x3xf32>
    %65 = vector.broadcast %64 : vector<1x3xf32> to vector<256x3xf32>
    %66 = arith.addf %63, %65 : vector<256x3xf32>
    %67 = math.tanh %66 : vector<256x3xf32>
    %68 = tpu.concatenate %51, %67 in 1 : vector<256x3xf32>, vector<256x3xf32> -> vector<256x6xf32>
    %69 = vector.shape_cast %68 : vector<256x6xf32> to vector<16x16x6xf32>
    %70 = vector.shape_cast %35 : vector<16x16x6xf32> to vector<16x1x16x6xf32>
    %71 = vector.shape_cast %69 : vector<16x16x6xf32> to vector<16x1x16x6xf32>
    %72 = tpu.concatenate %70, %71 in 1 : vector<16x1x16x6xf32>, vector<16x1x16x6xf32> -> vector<16x2x16x6xf32>
    %c0_23 = arith.constant 0 : index
    %c0_24 = arith.constant 0 : index
    %c0_25 = arith.constant 0 : index
    %c0_26 = arith.constant 0 : index
    %c0_27 = arith.constant 0 : index
    %73 = vector.load %arg4[%c0_23, %c0_24, %c0_25, %c0_26, %c0_27] : memref<1x16x2x16x6xf32, #tpu.memory_space<vmem>>, vector<1x16x2x16x6xf32>
    %74 = vector.shape_cast %73 : vector<1x16x2x16x6xf32> to vector<16x2x16x6xf32>
    %75 = vector.shape_cast %72 : vector<16x2x16x6xf32> to vector<1x16x2x16x6xf32>
    tpu.vector_store %arg4[%c0_23, %c0_24, %c0_25, %c0_26, %c0_27], %75 {strides = array<i32>} : memref<1x16x2x16x6xf32, #tpu.memory_space<vmem>>, vector<1x16x2x16x6xf32>,
    return
  }
  func.func @transform_0(%arg0: i32) -> (i32, i32, i32, i32) {
    %c0_i32 = arith.constant 0 : i32
    %c0_i32_0 = arith.constant 0 : i32
    %c0_i32_1 = arith.constant 0 : i32
    %c0_i32_2 = arith.constant 0 : i32
    return %arg0, %c0_i32, %c0_i32_0, %c0_i32_1 : i32, i32, i32, i32
  }
  func.func @transform_1(%arg0: i32) -> (i32, i32, i32) {
    %c0_i32 = arith.constant 0 : i32
    %c0_i32_0 = arith.constant 0 : i32
    %c0_i32_1 = arith.constant 0 : i32
    %c0_i32_2 = arith.constant 0 : i32
    return %c0_i32, %c0_i32_0, %c0_i32_1 : i32, i32, i32
  }
  func.func @transform_2(%arg0: i32) -> (i32, i32) {
    %c0_i32 = arith.constant 0 : i32
    %c0_i32_0 = arith.constant 0 : i32
    %c0_i32_1 = arith.constant 0 : i32
    return %c0_i32, %c0_i32_0 : i32, i32
  }
  func.func @transform_3(%arg0: i32) -> (i32, i32, i32, i32, i32) {
    %c0_i32 = arith.constant 0 : i32
    %c0_i32_0 = arith.constant 0 : i32
    %c0_i32_1 = arith.constant 0 : i32
    %c0_i32_2 = arith.constant 0 : i32
    %c0_i32_3 = arith.constant 0 : i32
    return %arg0, %c0_i32, %c0_i32_0, %c0_i32_1, %c0_i32_2 : i32, i32, i32, i32, i32
  }
}

</mosaic_0001>

<llo_original>
// kernel: vqvae_forward.14
$region0: #{vqvae_forward.14}
  #allocation0 [shape = 'u32[]', space=smem, size = 0x4, offset = 0x4, fixed_abs, tag = 'smem constant byte address 0x4 - core index']
  #allocation1 [shape = 'u32[144,128]{1,0:T(1,128)}', space=vmem, size = 0x12000, scoped, tag = 'internal scratch']
  %s0 = inlined_call_operand.vmem [shape: bf16[2,17,17,12], index: 0, kind: input, shape index: {}]
  %s1 = inlined_call_operand.vmem [shape: bf16[48,32], index: 1, kind: input, shape index: {}]
  %s2 = inlined_call_operand.vmem [shape: f32[1,32], index: 2, kind: input, shape index: {}]
  %s3 = inlined_call_operand.vmem [shape: bf16[2,256,32], index: 3, kind: output, shape index: {}]
  %s4 = sld [smem:[#allocation0]]
  $region45: #{vqvae_forward.14} parent=0
    _
  %s6 = ssub.s32 1, %s4
  %s7 = scalar_select 0, %s6, %s4
  loop: start=0, step=1, limit=4
  $region2: #{vqvae_forward.14} parent=0 // loop_pre_header
    _
  $region3: #{vqvae_forward.14} parent=0 // loop_header
    %s9 = sphi 0, %s13
    %p10 = scmp.ge.s32.totalorder %s9, 4
    %s19 = sphi 0, %s21
    %s22 = sphi 0, %s19
    %s23 = sphi 0, %s22
    %s39 = sphi 0, %s23
    %s43 = sphi 0, %s43
    %s45 = sphi 0, %s43
    %s46 = sphi 0, %s45
    %s60 = sphi 0, %s46
    %s64 = sphi 0, %s64
    %s66 = sphi 0, %s64
    %s67 = sphi 0, %s66
    %s81 = sphi 0, %s67
    %s87 = sphi 0, %s89
    %s90 = sphi 0, %s87
    %s91 = sphi 0, %s90
    %s107 = sphi 0, %s91
  $region4: #{vqvae_forward.14} parent=0 // loop_header_branch
    %12 = sbr.rel (%p10) target = $region8
  $region5: #{vqvae_forward.14} parent=0 // loop_body
    %s14 = ssub.s32 %s9, 1
    %s15 = ssub.s32 %s9, 2
    %s16 = sadd.s32 %s9, 1
    %s17 = ssub.s32 %s9, %s16
    %p18 = scmp.eq.s32.totalorder %s17, 0
    %s20 = sadd.s32 %s19, 1
    %s21 = scalar_select %p18, %s19, %s20
    %p24 = pneg %p18
    %p25 = scmp.eq.s32.totalorder %s9, 1
    %p26 = por %p24, %p25
    %p27 = scmp.ne.s32.totalorder %s19, %s22
    %p28 = scmp.eq.s32.totalorder %s9, 0
    %p29 = por %p27, %p28
    %p30 = scmp.ne.s32.totalorder %s19, %s22
    %p31 = scmp.eq.s32.totalorder %s14, 1
    %p32 = por %p30, %p31
    %p33 = scmp.ne.s32.totalorder %s22, %s23
    %p34 = scmp.eq.s32.totalorder %s14, 0
    %p35 = por %p33, %p34
    %p36 = scmp.ne.s32.totalorder %s22, %s23
    %p37 = scmp.eq.s32.totalorder %s15, 1
    %p38 = por %p36, %p37
    %p40 = scmp.ne.s32.totalorder %s23, %s39
    %p41 = scmp.eq.s32.totalorder %s15, 0
    %p42 = por %p40, %p41
    %s44 = sadd.s32 %s43, 1
    %p47 = scmp.eq.s32.totalorder %s9, 1
    %p48 = scmp.ne.s32.totalorder %s43, %s45
    %p49 = scmp.eq.s32.totalorder %s9, 0
    %p50 = por %p48, %p49
    %p51 = scmp.ne.s32.totalorder %s43, %s45
    %p52 = scmp.eq.s32.totalorder %s14, 1
    %p53 = por %p51, %p52
    %p54 = scmp.ne.s32.totalorder %s45, %s46
    %p55 = scmp.eq.s32.totalorder %s14, 0
    %p56 = por %p54, %p55
    %p57 = scmp.ne.s32.totalorder %s45, %s46
    %p58 = scmp.eq.s32.totalorder %s15, 1
    %p59 = por %p57, %p58
    %p61 = scmp.ne.s32.totalorder %s46, %s60
    %p62 = scmp.eq.s32.totalorder %s15, 0
    %p63 = por %p61, %p62
    %s65 = sadd.s32 %s64, 1
    %p68 = scmp.eq.s32.totalorder %s9, 1
    %p69 = scmp.ne.s32.totalorder %s64, %s66
    %p70 = scmp.eq.s32.totalorder %s9, 0
    %p71 = por %p69, %p70
    %p72 = scmp.ne.s32.totalorder %s64, %s66
    %p73 = scmp.eq.s32.totalorder %s14, 1
    %p74 = por %p72, %p73
    %p75 = scmp.ne.s32.totalorder %s66, %s67
    %p76 = scmp.eq.s32.totalorder %s14, 0
    %p77 = por %p75, %p76
    %p78 = scmp.ne.s32.totalorder %s66, %s67
    %p79 = scmp.eq.s32.totalorder %s15, 1
    %p80 = por %p78, %p79
    %p82 = scmp.ne.s32.totalorder %s67, %s81
    %p83 = scmp.eq.s32.totalorder %s15, 0
    %p84 = por %p82, %p83
    %s85 = ssub.s32 %s9, %s16
    %p86 = scmp.eq.s32.totalorder %s85, 0
    %s88 = sadd.s32 %s87, 1
    %s89 = scalar_select %p86, %s87, %s88
    %p92 = pneg %p86
    %p93 = scmp.eq.s32.totalorder %s9, 1
    %p94 = por %p92, %p93
    %p95 = scmp.ne.s32.totalorder %s87, %s90
    %p96 = scmp.eq.s32.totalorder %s9, 0
    %p97 = por %p95, %p96
    %p98 = scmp.ne.s32.totalorder %s87, %s90
    %p99 = scmp.eq.s32.totalorder %s14, 1
    %p100 = por %p98, %p99
    %p101 = scmp.ne.s32.totalorder %s90, %s91
    %p102 = scmp.eq.s32.totalorder %s14, 0
    %p103 = por %p101, %p102
    %p104 = scmp.ne.s32.totalorder %s90, %s91
    %p105 = scmp.eq.s32.totalorder %s15, 1
    %p106 = por %p104, %p105
    %p108 = scmp.ne.s32.totalorder %s91, %s107
    %p109 = scmp.eq.s32.totalorder %s15, 0
    %p110 = por %p108, %p109
    %p111 = scmp.le.s32.totalorder 1, %s9
    %p112 = scmp.lt.s32.totalorder %s9, 3
    %p113 = pnand %p111, %p112
    %p114 = pneg %p113
    // Predicated region
    $region9: #{vqvae_forward.14} parent=5 // pred_check
      _
    $region10: #{vqvae_forward.14} parent=5 // pred_check_branch
      %116 = sbr.rel (%p113) target = $region12
    $region11: #{vqvae_forward.14} parent=5 // pred_region
      %s117 = ssub.s32 %s9, 1
      // Predicated region
      $region13: #{vqvae_forward.14} parent=11 // pred_check
        %p118 = pneg %p56
      $region14: #{vqvae_forward.14} parent=11 // pred_check_branch
        %120 = sbr.rel (%p118) target = $region16
      $region15: #{vqvae_forward.14} parent=11 // pred_region
        _
      $region16: #{vqvae_forward.14} parent=11 // pred_fallthru
        _
      // Predicated region
      $region17: #{vqvae_forward.14} parent=11 // pred_check
        %p121 = pneg %p77
      $region18: #{vqvae_forward.14} parent=11 // pred_check_branch
        %123 = sbr.rel (%p121) target = $region20
      $region19: #{vqvae_forward.14} parent=11 // pred_region
        _
      $region20: #{vqvae_forward.14} parent=11 // pred_fallthru
        _
    $region12: #{vqvae_forward.14} parent=5 // pred_fallthru
      _
    %p124 = scmp.lt.s32.totalorder %s9, 2
    // Predicated region
    $region21: #{vqvae_forward.14} parent=5 // pred_check
      %p125 = pneg %p124
    $region22: #{vqvae_forward.14} parent=5 // pred_check_branch
      %127 = sbr.rel (%p125) target = $region24
    $region23: #{vqvae_forward.14} parent=5 // pred_region
      // Predicated region
      $region25: #{vqvae_forward.14} parent=23 // pred_check
        %p128 = pneg %p29
      $region26: #{vqvae_forward.14} parent=23 // pred_check_branch
        %130 = sbr.rel (%p128) target = $region28
      $region27: #{vqvae_forward.14} parent=23 // pred_region
        %p131 = scmp.lt.s32.totalorder %s9, 1
        %s132 = scalar_select %p131, %s9, 1
        %s133 = smul.addr %s132, 51
        %s134 = smul.addr %s133, 4
        %s135 = scalar_lea.vmem %s0, %s134
      $region28: #{vqvae_forward.14} parent=23 // pred_fallthru
        _
    $region24: #{vqvae_forward.14} parent=5 // pred_fallthru
      _
    %p136 = scmp.le.s32.totalorder 1, %s9
    %p137 = scmp.lt.s32.totalorder %s9, 3
    %p138 = pnand %p136, %p137
    %p139 = pneg %p138
    // Predicated region
    $region29: #{vqvae_forward.14} parent=5 // pred_check
      _
    $region30: #{vqvae_forward.14} parent=5 // pred_check_branch
      %141 = sbr.rel (%p138) target = $region32
    $region31: #{vqvae_forward.14} parent=5 // pred_region
      %s142 = ssub.s32 %s9, 1
      %p143 = scmp.lt.s32.totalorder %s14, 1
      %s144 = scalar_select %p143, %s14, 1
      %s145 = smul.addr %s144, 51
      %s146 = smul.addr %s145, 4
      %s147 = scalar_lea.vmem %s0, %s146
      %p148 = pneg %p35
      %p149 = pneg %p32
      %p150 = pneg %p56
      %p151 = pneg %p53
      %p152 = pneg %p77
      %p153 = pneg %p74
      %p154 = pneg %p103
      %p155 = pneg %p100
      %p156 = scmp.lt.s32.totalorder %s14, 1
      %s157 = scalar_select %p156, %s14, 1
      %s158 = smul.addr %s157, 32
      %s159 = smul.addr %s158, 4
      %s160 = scalar_lea.vmem %s3, %s159
      %p161 = scmp.lt.s32.totalorder %s14, 1
      %s162 = scalar_select %p161, %s14, 1
      %s163 = smul.addr %s162, 51
      %s164 = smul.addr %s163, 4
      %s165 = scalar_lea.vmem %s0, %s164
      %p166 = scmp.lt.s32.totalorder %s14, 1
      %s167 = scalar_select %p166, %s14, 1
      %s168 = smul.addr %s167, 32
      %s169 = smul.addr %s168, 4
      %s170 = scalar_lea.vmem %s3, %s169
      %v172 = vld [vmem:[%s165] sm:$0xf]
      %v173 = vld [vmem:[%s165 + $0x4] sm:$0xf]
      %v174 = vld [vmem:[%s165 + $0x8] sm:$0x1]
      %v175 = vld [vmem:[%s165 + $0xc] sm:$0xf]
      %v176 = vld [vmem:[%s165 + $0x10] sm:$0xf]
      %v177 = vld [vmem:[%s165 + $0x14] sm:$0x1]
      %v178 = vld [vmem:[%s165 + $0x18] sm:$0xf]
      %v179 = vld [vmem:[%s165 + $0x1c] sm:$0xf]
      %v180 = vld [vmem:[%s165 + $0x20] sm:$0x1]
      %v181 = vld [vmem:[%s165 + $0x24] sm:$0xf]
      %v182 = vld [vmem:[%s165 + $0x28] sm:$0xf]
      %v183 = vld [vmem:[%s165 + $0x2c] sm:$0x1]
      %v184 = vld [vmem:[%s165 + $0x30] sm:$0xf]
      %v185 = vld [vmem:[%s165 + $0x34] sm:$0xf]
      %v186 = vld [vmem:[%s165 + $0x38] sm:$0x1]
      %v187 = vld [vmem:[%s165 + $0x3c] sm:$0xf]
      %v188 = vld [vmem:[%s165 + $0x40] sm:$0xf]
      %v189 = vld [vmem:[%s165 + $0x44] sm:$0x1]
      %v190 = vld [vmem:[%s165 + $0x48] sm:$0xf]
      %v191 = vld [vmem:[%s165 + $0x4c] sm:$0xf]
      %v192 = vld [vmem:[%s165 + $0x50] sm:$0x1]
      %v193 = vld [vmem:[%s165 + $0x54] sm:$0xf]
      %v194 = vld [vmem:[%s165 + $0x58] sm:$0xf]
      %v195 = vld [vmem:[%s165 + $0x5c] sm:$0x1]
      %v196 = vld [vmem:[%s165 + $0x60] sm:$0xf]
      %v197 = vld [vmem:[%s165 + $0x64] sm:$0xf]
      %v198 = vld [vmem:[%s165 + $0x68] sm:$0x1]
      %v199 = vld [vmem:[%s165 + $0x6c] sm:$0xf]
      %v200 = vld [vmem:[%s165 + $0x70] sm:$0xf]
      %v201 = vld [vmem:[%s165 + $0x74] sm:$0x1]
      %v202 = vld [vmem:[%s165 + $0x78] sm:$0xf]
      %v203 = vld [vmem:[%s165 + $0x7c] sm:$0xf]
      %v204 = vld [vmem:[%s165 + $0x80] sm:$0x1]
      %v205 = vld [vmem:[%s165 + $0x84] sm:$0xf]
      %v206 = vld [vmem:[%s165 + $0x88] sm:$0xf]
      %v207 = vld [vmem:[%s165 + $0x8c] sm:$0x1]
      %v208 = vld [vmem:[%s165 + $0x90] sm:$0xf]
      %v209 = vld [vmem:[%s165 + $0x94] sm:$0xf]
      %v210 = vld [vmem:[%s165 + $0x98] sm:$0x1]
      %v211 = vld [vmem:[%s165 + $0x9c] sm:$0xf]
      %v212 = vld [vmem:[%s165 + $0xa0] sm:$0xf]
      %v213 = vld [vmem:[%s165 + $0xa4] sm:$0x1]
      %v214 = vld [vmem:[%s165 + $0xa8] sm:$0xf]
      %v215 = vld [vmem:[%s165 + $0xac] sm:$0xf]
      %v216 = vld [vmem:[%s165 + $0xb0] sm:$0x1]
      %v217 = vld [vmem:[%s165 + $0xb4] sm:$0xf]
      %v218 = vld [vmem:[%s165 + $0xb8] sm:$0xf]
      %v219 = vld [vmem:[%s165 + $0xbc] sm:$0x1]
      %v220 = vld [vmem:[%s165 + $0xc0] sm:$0xf]
      %v221 = vld [vmem:[%s165 + $0xc4] sm:$0xf]
      %v222 = vld [vmem:[%s165 + $0xc8] sm:$0x1]
      %vm223 = vsmask.f32 3328
      %vm224 = vsmask.f32 7440
      %vm225 = vmor %vm223, %vm224
      %v227 = vshrl.u32 %v172, 16
      %v229 = vrot.slane %v227, 4
      %v230 = vshll.u32 %v172, 16
      %v232 = vrot.slane %v230, 5
      %v233 = vor.u32 %v229, %v232
      %v234 = vrot.slane %v233, 4
      %v236 = vshll.u32 %v173, 16
      %v238 = vrot.slane %v236, 5
      %v239 = vsel %vm225, %v234, %v238
      %v240 = vshrl.u32 %v173, 16
      %v242 = vrot.slane %v240, 4
      %v243 = vor.u32 %v242, %v238
      %v244 = vrot.slane %v243, 4
      %v246 = vshll.u32 %v174, 16
      %v248 = vrot.slane %v246, 5
      %v249 = vsel %vm225, %v244, %v248
      %v251 = vshrl.u32 %v175, 16
      %v253 = vrot.slane %v251, 4
      %v254 = vshll.u32 %v175, 16
      %v256 = vrot.slane %v254, 5
      %v257 = vor.u32 %v253, %v256
      %v258 = vrot.slane %v257, 4
      %v260 = vshll.u32 %v176, 16
      %v262 = vrot.slane %v260, 5
      %v263 = vsel %vm225, %v258, %v262
      %v264 = vshrl.u32 %v176, 16
      %v266 = vrot.slane %v264, 4
      %v267 = vor.u32 %v266, %v262
      %v268 = vrot.slane %v267, 4
      %v270 = vshll.u32 %v177, 16
      %v272 = vrot.slane %v270, 5
      %v273 = vsel %vm225, %v268, %v272
      %v275 = vshrl.u32 %v178, 16
      %v277 = vrot.slane %v275, 4
      %v278 = vshll.u32 %v178, 16
      %v280 = vrot.slane %v278, 5
      %v281 = vor.u32 %v277, %v280
      %v282 = vrot.slane %v281, 4
      %v284 = vshll.u32 %v179, 16
      %v286 = vrot.slane %v284, 5
      %v287 = vsel %vm225, %v282, %v286
      %v288 = vshrl.u32 %v179, 16
      %v290 = vrot.slane %v288, 4
      %v291 = vor.u32 %v290, %v286
      %v292 = vrot.slane %v291, 4
      %v294 = vshll.u32 %v180, 16
      %v296 = vrot.slane %v294, 5
      %v297 = vsel %vm225, %v292, %v296
      %v299 = vshrl.u32 %v181, 16
      %v301 = vrot.slane %v299, 4
      %v302 = vshll.u32 %v181, 16
      %v304 = vrot.slane %v302, 5
      %v305 = vor.u32 %v301, %v304
      %v306 = vrot.slane %v305, 4
      %v308 = vshll.u32 %v182, 16
      %v310 = vrot.slane %v308, 5
      %v311 = vsel %vm225, %v306, %v310
      %v312 = vshrl.u32 %v182, 16
      %v314 = vrot.slane %v312, 4
      %v315 = vor.u32 %v314, %v310
      %v316 = vrot.slane %v315, 4
      %v318 = vshll.u32 %v183, 16
      %v320 = vrot.slane %v318, 5
      %v321 = vsel %vm225, %v316, %v320
      %v323 = vshrl.u32 %v184, 16
      %v325 = vrot.slane %v323, 4
      %v326 = vshll.u32 %v184, 16
      %v328 = vrot.slane %v326, 5
      %v329 = vor.u32 %v325, %v328
      %v330 = vrot.slane %v329, 4
      %v332 = vshll.u32 %v185, 16
      %v334 = vrot.slane %v332, 5
      %v335 = vsel %vm225, %v330, %v334
      %v336 = vshrl.u32 %v185, 16
      %v338 = vrot.slane %v336, 4
      %v339 = vor.u32 %v338, %v334
      %v340 = vrot.slane %v339, 4
      %v342 = vshll.u32 %v186, 16
      %v344 = vrot.slane %v342, 5
      %v345 = vsel %vm225, %v340, %v344
      %v347 = vshrl.u32 %v187, 16
      %v349 = vrot.slane %v347, 4
      %v350 = vshll.u32 %v187, 16
      %v352 = vrot.slane %v350, 5
      %v353 = vor.u32 %v349, %v352
      %v354 = vrot.slane %v353, 4
      %v356 = vshll.u32 %v188, 16
      %v358 = vrot.slane %v356, 5
      %v359 = vsel %vm225, %v354, %v358
      %v360 = vshrl.u32 %v188, 16
      %v362 = vrot.slane %v360, 4
      %v363 = vor.u32 %v362, %v358
      %v364 = vrot.slane %v363, 4
      %v366 = vshll.u32 %v189, 16
      %v368 = vrot.slane %v366, 5
      %v369 = vsel %vm225, %v364, %v368
      %v371 = vshrl.u32 %v190, 16
      %v373 = vrot.slane %v371, 4
      %v374 = vshll.u32 %v190, 16
      %v376 = vrot.slane %v374, 5
      %v377 = vor.u32 %v373, %v376
      %v378 = vrot.slane %v377, 4
      %v380 = vshll.u32 %v191, 16
      %v382 = vrot.slane %v380, 5
      %v383 = vsel %vm225, %v378, %v382
      %v384 = vshrl.u32 %v191, 16
      %v386 = vrot.slane %v384, 4
      %v387 = vor.u32 %v386, %v382
      %v388 = vrot.slane %v387, 4
      %v390 = vshll.u32 %v192, 16
      %v392 = vrot.slane %v390, 5
      %v393 = vsel %vm225, %v388, %v392
      %v395 = vshrl.u32 %v193, 16
      %v397 = vrot.slane %v395, 4
      %v398 = vshll.u32 %v193, 16
      %v400 = vrot.slane %v398, 5
      %v401 = vor.u32 %v397, %v400
      %v402 = vrot.slane %v401, 4
      %v404 = vshll.u32 %v194, 16
      %v406 = vrot.slane %v404, 5
      %v407 = vsel %vm225, %v402, %v406
      %v408 = vshrl.u32 %v194, 16
      %v410 = vrot.slane %v408, 4
      %v411 = vor.u32 %v410, %v406
      %v412 = vrot.slane %v411, 4
      %v414 = vshll.u32 %v195, 16
      %v416 = vrot.slane %v414, 5
      %v417 = vsel %vm225, %v412, %v416
      %v419 = vshrl.u32 %v196, 16
      %v421 = vrot.slane %v419, 4
      %v422 = vshll.u32 %v196, 16
      %v424 = vrot.slane %v422, 5
      %v425 = vor.u32 %v421, %v424
      %v426 = vrot.slane %v425, 4
      %v428 = vshll.u32 %v197, 16
      %v430 = vrot.slane %v428, 5
      %v431 = vsel %vm225, %v426, %v430
      %v432 = vshrl.u32 %v197, 16
      %v434 = vrot.slane %v432, 4
      %v435 = vor.u32 %v434, %v430
      %v436 = vrot.slane %v435, 4
      %v438 = vshll.u32 %v198, 16
      %v440 = vrot.slane %v438, 5
      %v441 = vsel %vm225, %v436, %v440
      %v443 = vshrl.u32 %v199, 16
      %v445 = vrot.slane %v443, 4
      %v446 = vshll.u32 %v199, 16
      %v448 = vrot.slane %v446, 5
      %v449 = vor.u32 %v445, %v448
      %v450 = vrot.slane %v449, 4
      %v452 = vshll.u32 %v200, 16
      %v454 = vrot.slane %v452, 5
      %v455 = vsel %vm225, %v450, %v454
      %v456 = vshrl.u32 %v200, 16
      %v458 = vrot.slane %v456, 4
      %v459 = vor.u32 %v458, %v454
      %v460 = vrot.slane %v459, 4
      %v462 = vshll.u32 %v201, 16
      %v464 = vrot.slane %v462, 5
      %v465 = vsel %vm225, %v460, %v464
      %v467 = vshrl.u32 %v202, 16
      %v469 = vrot.slane %v467, 4
      %v470 = vshll.u32 %v202, 16
      %v472 = vrot.slane %v470, 5
      %v473 = vor.u32 %v469, %v472
      %v474 = vrot.slane %v473, 4
      %v476 = vshll.u32 %v203, 16
      %v478 = vrot.slane %v476, 5
      %v479 = vsel %vm225, %v474, %v478
      %v480 = vshrl.u32 %v203, 16
      %v482 = vrot.slane %v480, 4
      %v483 = vor.u32 %v482, %v478
      %v484 = vrot.slane %v483, 4
      %v486 = vshll.u32 %v204, 16
      %v488 = vrot.slane %v486, 5
      %v489 = vsel %vm225, %v484, %v488
      %v491 = vshrl.u32 %v205, 16
      %v493 = vrot.slane %v491, 4
      %v494 = vshll.u32 %v205, 16
      %v496 = vrot.slane %v494, 5
      %v497 = vor.u32 %v493, %v496
      %v498 = vrot.slane %v497, 4
      %v500 = vshll.u32 %v206, 16
      %v502 = vrot.slane %v500, 5
      %v503 = vsel %vm225, %v498, %v502
      %v504 = vshrl.u32 %v206, 16
      %v506 = vrot.slane %v504, 4
      %v507 = vor.u32 %v506, %v502
      %v508 = vrot.slane %v507, 4
      %v510 = vshll.u32 %v207, 16
      %v512 = vrot.slane %v510, 5
      %v513 = vsel %vm225, %v508, %v512
      %v515 = vshrl.u32 %v208, 16
      %v517 = vrot.slane %v515, 4
      %v518 = vshll.u32 %v208, 16
      %v520 = vrot.slane %v518, 5
      %v521 = vor.u32 %v517, %v520
      %v522 = vrot.slane %v521, 4
      %v524 = vshll.u32 %v209, 16
      %v526 = vrot.slane %v524, 5
      %v527 = vsel %vm225, %v522, %v526
      %v528 = vshrl.u32 %v209, 16
      %v530 = vrot.slane %v528, 4
      %v531 = vor.u32 %v530, %v526
      %v532 = vrot.slane %v531, 4
      %v534 = vshll.u32 %v210, 16
      %v536 = vrot.slane %v534, 5
      %v537 = vsel %vm225, %v532, %v536
      %v539 = vshrl.u32 %v211, 16
      %v541 = vrot.slane %v539, 4
      %v542 = vshll.u32 %v211, 16
      %v544 = vrot.slane %v542, 5
      %v545 = vor.u32 %v541, %v544
      %v546 = vrot.slane %v545, 4
      %v548 = vshll.u32 %v212, 16
      %v550 = vrot.slane %v548, 5
      %v551 = vsel %vm225, %v546, %v550
      %v552 = vshrl.u32 %v212, 16
      %v554 = vrot.slane %v552, 4
      %v555 = vor.u32 %v554, %v550
      %v556 = vrot.slane %v555, 4
      %v558 = vshll.u32 %v213, 16
      %v560 = vrot.slane %v558, 5
      %v561 = vsel %vm225, %v556, %v560
      %v563 = vshrl.u32 %v214, 16
      %v565 = vrot.slane %v563, 4
      %v566 = vshll.u32 %v214, 16
      %v568 = vrot.slane %v566, 5
      %v569 = vor.u32 %v565, %v568
      %v570 = vrot.slane %v569, 4
      %v572 = vshll.u32 %v215, 16
      %v574 = vrot.slane %v572, 5
      %v575 = vsel %vm225, %v570, %v574
      %v576 = vshrl.u32 %v215, 16
      %v578 = vrot.slane %v576, 4
      %v579 = vor.u32 %v578, %v574
      %v580 = vrot.slane %v579, 4
      %v582 = vshll.u32 %v216, 16
      %v584 = vrot.slane %v582, 5
      %v585 = vsel %vm225, %v580, %v584
      %v587 = vshrl.u32 %v217, 16
      %v589 = vrot.slane %v587, 4
      %v590 = vshll.u32 %v217, 16
      %v592 = vrot.slane %v590, 5
      %v593 = vor.u32 %v589, %v592
      %v594 = vrot.slane %v593, 4
      %v596 = vshll.u32 %v218, 16
      %v598 = vrot.slane %v596, 5
      %v599 = vsel %vm225, %v594, %v598
      %v600 = vshrl.u32 %v218, 16
      %v602 = vrot.slane %v600, 4
      %v603 = vor.u32 %v602, %v598
      %v604 = vrot.slane %v603, 4
      %v606 = vshll.u32 %v219, 16
      %v608 = vrot.slane %v606, 5
      %v609 = vsel %vm225, %v604, %v608
      %v611 = vshrl.u32 %v220, 16
      %v613 = vrot.slane %v611, 4
      %v614 = vshll.u32 %v220, 16
      %v616 = vrot.slane %v614, 5
      %v617 = vor.u32 %v613, %v616
      %v618 = vrot.slane %v617, 4
      %v620 = vshll.u32 %v221, 16
      %v622 = vrot.slane %v620, 5
      %v623 = vsel %vm225, %v618, %v622
      %v624 = vshrl.u32 %v221, 16
      %v626 = vrot.slane %v624, 4
      %v627 = vor.u32 %v626, %v622
      %v628 = vrot.slane %v627, 4
      %v630 = vshll.u32 %v222, 16
      %v632 = vrot.slane %v630, 5
      %v633 = vsel %vm225, %v628, %v632
      %v666 = vunpack.c.l.b16 %v172
      %v667 = vunpack.c.l.b16 %v173
      %v668 = vunpack.c.l.b16 %v175
      %v669 = vunpack.c.l.b16 %v176
      %v670 = vunpack.c.l.b16 %v178
      %v671 = vunpack.c.l.b16 %v179
      %v672 = vunpack.c.l.b16 %v181
      %v673 = vunpack.c.l.b16 %v182
      %v674 = vunpack.c.l.b16 %v184
      %v675 = vunpack.c.l.b16 %v185
      %v676 = vunpack.c.l.b16 %v187
      %v677 = vunpack.c.l.b16 %v188
      %v678 = vunpack.c.l.b16 %v190
      %v679 = vunpack.c.l.b16 %v191
      %v680 = vunpack.c.l.b16 %v193
      %v681 = vunpack.c.l.b16 %v194
      %v682 = vunpack.c.l.b16 %v196
      %v683 = vunpack.c.l.b16 %v197
      %v684 = vunpack.c.l.b16 %v199
      %v685 = vunpack.c.l.b16 %v200
      %v686 = vunpack.c.l.b16 %v202
      %v687 = vunpack.c.l.b16 %v203
      %v688 = vunpack.c.l.b16 %v205
      %v689 = vunpack.c.l.b16 %v206
      %v690 = vunpack.c.l.b16 %v208
      %v691 = vunpack.c.l.b16 %v209
      %v692 = vunpack.c.l.b16 %v211
      %v693 = vunpack.c.l.b16 %v212
      %v694 = vunpack.c.l.b16 %v214
      %v695 = vunpack.c.l.b16 %v215
      %v696 = vunpack.c.l.b16 %v217
      %v697 = vunpack.c.l.b16 %v218
      %v698 = vpack.c.b16 %v667, %v666
      %v699 = vpack.c.b16 %v669, %v668
      %v700 = vpack.c.b16 %v671, %v670
      %v701 = vpack.c.b16 %v673, %v672
      %v702 = vpack.c.b16 %v675, %v674
      %v703 = vpack.c.b16 %v677, %v676
      %v704 = vpack.c.b16 %v679, %v678
      %v705 = vpack.c.b16 %v681, %v680
      %v706 = vpack.c.b16 %v683, %v682
      %v707 = vpack.c.b16 %v685, %v684
      %v708 = vpack.c.b16 %v687, %v686
      %v709 = vpack.c.b16 %v689, %v688
      %v710 = vpack.c.b16 %v691, %v690
      %v711 = vpack.c.b16 %v693, %v692
      %v712 = vpack.c.b16 %v695, %v694
      %v713 = vpack.c.b16 %v697, %v696
      %v714 = vunpack.c.l.b16 %v239
      %v715 = vunpack.c.l.b16 %v249
      %v716 = vunpack.c.l.b16 %v263
      %v717 = vunpack.c.l.b16 %v273
      %v718 = vunpack.c.l.b16 %v287
      %v719 = vunpack.c.l.b16 %v297
      %v720 = vunpack.c.l.b16 %v311
      %v721 = vunpack.c.l.b16 %v321
      %v722 = vunpack.c.l.b16 %v335
      %v723 = vunpack.c.l.b16 %v345
      %v724 = vunpack.c.l.b16 %v359
      %v725 = vunpack.c.l.b16 %v369
      %v726 = vunpack.c.l.b16 %v383
      %v727 = vunpack.c.l.b16 %v393
      %v728 = vunpack.c.l.b16 %v407
      %v729 = vunpack.c.l.b16 %v417
      %v730 = vunpack.c.l.b16 %v431
      %v731 = vunpack.c.l.b16 %v441
      %v732 = vunpack.c.l.b16 %v455
      %v733 = vunpack.c.l.b16 %v465
      %v734 = vunpack.c.l.b16 %v479
      %v735 = vunpack.c.l.b16 %v489
      %v736 = vunpack.c.l.b16 %v503
      %v737 = vunpack.c.l.b16 %v513
      %v738 = vunpack.c.l.b16 %v527
      %v739 = vunpack.c.l.b16 %v537
      %v740 = vunpack.c.l.b16 %v551
      %v741 = vunpack.c.l.b16 %v561
      %v742 = vunpack.c.l.b16 %v575
      %v743 = vunpack.c.l.b16 %v585
      %v744 = vunpack.c.l.b16 %v599
      %v745 = vunpack.c.l.b16 %v609
      %v746 = vpack.c.b16 %v715, %v714
      %v747 = vpack.c.b16 %v717, %v716
      %v748 = vpack.c.b16 %v719, %v718
      %v749 = vpack.c.b16 %v721, %v720
      %v750 = vpack.c.b16 %v723, %v722
      %v751 = vpack.c.b16 %v725, %v724
      %v752 = vpack.c.b16 %v727, %v726
      %v753 = vpack.c.b16 %v729, %v728
      %v754 = vpack.c.b16 %v731, %v730
      %v755 = vpack.c.b16 %v733, %v732
      %v756 = vpack.c.b16 %v735, %v734
      %v757 = vpack.c.b16 %v737, %v736
      %v758 = vpack.c.b16 %v739, %v738
      %v759 = vpack.c.b16 %v741, %v740
      %v760 = vpack.c.b16 %v743, %v742
      %v761 = vpack.c.b16 %v745, %v744
      %762 = vrot.lane.b32.xlu0 %v746, 12
      %v763 = vpop.permute.xlu0 %762
      %764 = vrot.lane.b32.xlu0 %v747, 12
      %v765 = vpop.permute.xlu0 %764
      %766 = vrot.lane.b32.xlu0 %v748, 12
      %v767 = vpop.permute.xlu0 %766
      %768 = vrot.lane.b32.xlu0 %v749, 12
      %v769 = vpop.permute.xlu0 %768
      %770 = vrot.lane.b32.xlu0 %v750, 12
      %v771 = vpop.permute.xlu0 %770
      %772 = vrot.lane.b32.xlu0 %v751, 12
      %v773 = vpop.permute.xlu0 %772
      %774 = vrot.lane.b32.xlu0 %v752, 12
      %v775 = vpop.permute.xlu0 %774
      %776 = vrot.lane.b32.xlu0 %v753, 12
      %v777 = vpop.permute.xlu0 %776
      %778 = vrot.lane.b32.xlu0 %v754, 12
      %v779 = vpop.permute.xlu0 %778
      %780 = vrot.lane.b32.xlu0 %v755, 12
      %v781 = vpop.permute.xlu0 %780
      %782 = vrot.lane.b32.xlu0 %v756, 12
      %v783 = vpop.permute.xlu0 %782
      %784 = vrot.lane.b32.xlu0 %v757, 12
      %v785 = vpop.permute.xlu0 %784
      %786 = vrot.lane.b32.xlu0 %v758, 12
      %v787 = vpop.permute.xlu0 %786
      %788 = vrot.lane.b32.xlu0 %v759, 12
      %v789 = vpop.permute.xlu0 %788
      %790 = vrot.lane.b32.xlu0 %v760, 12
      %v791 = vpop.permute.xlu0 %790
      %792 = vrot.lane.b32.xlu0 %v761, 12
      %v793 = vpop.permute.xlu0 %792
      %v796 = vunpack.c.l.b16 %v220
      %v797 = vunpack.c.l.b16 %v221
      %v798 = vpack.c.b16 %v797, %v796
      %799 = vrot.lane.b32.xlu0 %v699, 24
      %v800 = vpop.permute.xlu0 %799
      %801 = vrot.lane.b32.xlu0 %v700, 24
      %v802 = vpop.permute.xlu0 %801
      %803 = vrot.lane.b32.xlu0 %v701, 24
      %v804 = vpop.permute.xlu0 %803
      %805 = vrot.lane.b32.xlu0 %v702, 24
      %v806 = vpop.permute.xlu0 %805
      %807 = vrot.lane.b32.xlu0 %v703, 24
      %v808 = vpop.permute.xlu0 %807
      %809 = vrot.lane.b32.xlu0 %v704, 24
      %v810 = vpop.permute.xlu0 %809
      %811 = vrot.lane.b32.xlu0 %v705, 24
      %v812 = vpop.permute.xlu0 %811
      %813 = vrot.lane.b32.xlu0 %v706, 24
      %v814 = vpop.permute.xlu0 %813
      %815 = vrot.lane.b32.xlu0 %v707, 24
      %v816 = vpop.permute.xlu0 %815
      %817 = vrot.lane.b32.xlu0 %v708, 24
      %v818 = vpop.permute.xlu0 %817
      %819 = vrot.lane.b32.xlu0 %v709, 24
      %v820 = vpop.permute.xlu0 %819
      %821 = vrot.lane.b32.xlu0 %v710, 24
      %v822 = vpop.permute.xlu0 %821
      %823 = vrot.lane.b32.xlu0 %v711, 24
      %v824 = vpop.permute.xlu0 %823
      %825 = vrot.lane.b32.xlu0 %v712, 24
      %v826 = vpop.permute.xlu0 %825
      %827 = vrot.lane.b32.xlu0 %v713, 24
      %v828 = vpop.permute.xlu0 %827
      %829 = vrot.lane.b32.xlu0 %v798, 24
      %v830 = vpop.permute.xlu0 %829
      %v831 = vunpack.c.l.b16 %v623
      %v832 = vunpack.c.l.b16 %v633
      %v833 = vpack.c.b16 %v832, %v831
      %834 = vrot.lane.b32.xlu0 %v747, 36
      %v835 = vpop.permute.xlu0 %834
      %836 = vrot.lane.b32.xlu0 %v748, 36
      %v837 = vpop.permute.xlu0 %836
      %838 = vrot.lane.b32.xlu0 %v749, 36
      %v839 = vpop.permute.xlu0 %838
      %840 = vrot.lane.b32.xlu0 %v750, 36
      %v841 = vpop.permute.xlu0 %840
      %842 = vrot.lane.b32.xlu0 %v751, 36
      %v843 = vpop.permute.xlu0 %842
      %844 = vrot.lane.b32.xlu0 %v752, 36
      %v845 = vpop.permute.xlu0 %844
      %846 = vrot.lane.b32.xlu0 %v753, 36
      %v847 = vpop.permute.xlu0 %846
      %848 = vrot.lane.b32.xlu0 %v754, 36
      %v849 = vpop.permute.xlu0 %848
      %850 = vrot.lane.b32.xlu0 %v755, 36
      %v851 = vpop.permute.xlu0 %850
      %852 = vrot.lane.b32.xlu0 %v756, 36
      %v853 = vpop.permute.xlu0 %852
      %854 = vrot.lane.b32.xlu0 %v757, 36
      %v855 = vpop.permute.xlu0 %854
      %856 = vrot.lane.b32.xlu0 %v758, 36
      %v857 = vpop.permute.xlu0 %856
      %858 = vrot.lane.b32.xlu0 %v759, 36
      %v859 = vpop.permute.xlu0 %858
      %860 = vrot.lane.b32.xlu0 %v760, 36
      %v861 = vpop.permute.xlu0 %860
      %862 = vrot.lane.b32.xlu0 %v761, 36
      %v863 = vpop.permute.xlu0 %862
      %864 = vrot.lane.b32.xlu0 %v833, 36
      %v865 = vpop.permute.xlu0 %864
      %vm866 = vcmask 97280
      %v869 = vsel %vm866, %v698, %v763
      %v872 = vsel %vm866, %v699, %v765
      %v875 = vsel %vm866, %v700, %v767
      %v878 = vsel %vm866, %v701, %v769
      %v881 = vsel %vm866, %v702, %v771
      %v884 = vsel %vm866, %v703, %v773
      %v887 = vsel %vm866, %v704, %v775
      %v890 = vsel %vm866, %v705, %v777
      %v893 = vsel %vm866, %v706, %v779
      %v896 = vsel %vm866, %v707, %v781
      %v899 = vsel %vm866, %v708, %v783
      %v902 = vsel %vm866, %v709, %v785
      %v905 = vsel %vm866, %v710, %v787
      %v908 = vsel %vm866, %v711, %v789
      %v911 = vsel %vm866, %v712, %v791
      %v914 = vsel %vm866, %v713, %v793
      %vm915 = vcmask 195584
      %v917 = vsel %vm915, %v869, %v800
      %v919 = vsel %vm915, %v872, %v802
      %v921 = vsel %vm915, %v875, %v804
      %v923 = vsel %vm915, %v878, %v806
      %v925 = vsel %vm915, %v881, %v808
      %v927 = vsel %vm915, %v884, %v810
      %v929 = vsel %vm915, %v887, %v812
      %v931 = vsel %vm915, %v890, %v814
      %v933 = vsel %vm915, %v893, %v816
      %v935 = vsel %vm915, %v896, %v818
      %v937 = vsel %vm915, %v899, %v820
      %v939 = vsel %vm915, %v902, %v822
      %v941 = vsel %vm915, %v905, %v824
      %v943 = vsel %vm915, %v908, %v826
      %v945 = vsel %vm915, %v911, %v828
      %v947 = vsel %vm915, %v914, %v830
      %vm948 = vcmask 293888
      %v950 = vsel %vm948, %v917, %v835
      %v952 = vsel %vm948, %v919, %v837
      %v954 = vsel %vm948, %v921, %v839
      %v956 = vsel %vm948, %v923, %v841
      %v958 = vsel %vm948, %v925, %v843
      %v960 = vsel %vm948, %v927, %v845
      %v962 = vsel %vm948, %v929, %v847
      %v964 = vsel %vm948, %v931, %v849
      %v966 = vsel %vm948, %v933, %v851
      %v968 = vsel %vm948, %v935, %v853
      %v970 = vsel %vm948, %v937, %v855
      %v972 = vsel %vm948, %v939, %v857
      %v974 = vsel %vm948, %v941, %v859
      %v976 = vsel %vm948, %v943, %v861
      %v978 = vsel %vm948, %v945, %v863
      %v980 = vsel %vm948, %v947, %v865
      %v981 = vld [vmem:[%s1] sm:$0xf]
      %v982 = vld [vmem:[%s1 + $0x4] sm:$0xf]
      %v983 = vld [vmem:[%s1 + $0x8] sm:$0xf]
      %v984 = vld [vmem:[%s1 + $0xc] sm:$0xf]
      %v985 = vld [vmem:[%s1 + $0x10] sm:$0xf]
      %v986 = vld [vmem:[%s1 + $0x14] sm:$0xf]
      %v987 = vld [vmem:[%s2] sm:$0x1]
      %v989 = vlaneseq
      %v990 = vshrl.u32 %v989, 7
      %v991 = vsub.s32 0, %v990
      %v992 = vrot.slane %v987, %v991
      %v1000 = vunpack.c.l.b16 %v981
      %v1001 = vunpack.c.l.b16 %v982
      %v1002 = vunpack.c.l.b16 %v983
      %v1003 = vunpack.c.l.b16 %v984
      %v1004 = vunpack.c.l.b16 %v985
      %v1005 = vunpack.c.l.b16 %v986
      %v1006 = vpack.c.b16 %v1001, %v1000
      %v1007 = vpack.c.b16 %v1003, %v1002
      %v1008 = vpack.c.b16 %v1005, %v1004
      %vm1012 = vcmask 392192
      %v1013 = vsel %vm1012, %v950, 0
      %v1015 = vsel %vm1012, %v952, 0
      %v1017 = vsel %vm1012, %v954, 0
      %v1019 = vsel %vm1012, %v956, 0
      %v1021 = vsel %vm1012, %v958, 0
      %v1023 = vsel %vm1012, %v960, 0
      %v1025 = vsel %vm1012, %v962, 0
      %v1027 = vsel %vm1012, %v964, 0
      %v1029 = vsel %vm1012, %v966, 0
      %v1031 = vsel %vm1012, %v968, 0
      %v1033 = vsel %vm1012, %v970, 0
      %v1035 = vsel %vm1012, %v972, 0
      %v1037 = vsel %vm1012, %v974, 0
      %v1039 = vsel %vm1012, %v976, 0
      %v1041 = vsel %vm1012, %v978, 0
      %v1043 = vsel %vm1012, %v980, 0
      %1045 = vmatprep.subr.bf16.mxu0 0
      %1046 = vmatpush1.bf16.msra.mxu0 %v1006
      %1047 = vmatprep.subr.bf16.mxu0 0
      %1048 = vmatpush1.bf16.msra.mxu0 %v1007
      %1049 = vmatprep.subr.bf16.mxu0 0
      %1050 = vmatpush1.bf16.msra.mxu0 %v1008
      %1051 = vmatprep.subr.bf16.mxu0 0
      %1052 = vmatpush1.bf16.msra.mxu0 0
      %1053 = vmatprep.subr.bf16.mxu0 0
      %1054 = vmatpush1.bf16.msra.mxu0 0
      %1055 = vmatprep.subr.bf16.mxu0 0
      %1056 = vmatpush1.bf16.msra.mxu0 0
      %1057 = vmatprep.subr.bf16.mxu0 0
      %1058 = vmatpush1.bf16.msra.mxu0 0
      %1059 = vmatprep.subr.bf16.mxu0 0
      %1060 = vmatpush1.bf16.msra.mxu0 0
      %1061 = vmatprep.subr.bf16.mxu0 0
      %1062 = vmatpush1.bf16.msra.mxu0 0
      %1063 = vmatprep.subr.bf16.mxu0 0
      %1064 = vmatpush1.bf16.msra.mxu0 0
      %1065 = vmatprep.subr.bf16.mxu0 0
      %1066 = vmatpush1.bf16.msra.mxu0 0
      %1067 = vmatprep.subr.bf16.mxu0 0
      %1068 = vmatpush1.bf16.msra.mxu0 0
      %1069 = vmatprep.subr.bf16.mxu0 0
      %1070 = vmatpush1.bf16.msra.mxu0 0
      %1071 = vmatprep.subr.bf16.mxu0 0
      %1072 = vmatpush1.bf16.msra.mxu0 0
      %1073 = vmatprep.subr.bf16.mxu0 0
      %1074 = vmatpush1.bf16.msra.mxu0 0
      %1075 = vmatprep.subr.bf16.mxu0 0
      %1076 = vmatpush1.bf16.msra.mxu0 0
      %1077 = vmatprep.mubr.bf16.mxu0 0
      %1078 = vmatmul.mubr.bf16.gmra.mrb[0].mxu0 %v1013
      %v1079 = vpop.f32.mrb[0].mxu0
      %v1080 = vadd.f32 %v992, %v1079
      %v1081 = vpop.f32.mrb[0].mxu0
      %v1082 = vpop.f32.mrb[0].mxu0
      %v1083 = vadd.f32 %v992, %v1082
      %v1084 = vpop.f32.mrb[0].mxu0
      %1085 = vmatprep.mubr.bf16.mxu0 0
      %1086 = vmatmul.mubr.bf16.gmra.mrb[0].mxu0 %v1015
      %v1087 = vpop.f32.mrb[0].mxu0
      %v1088 = vadd.f32 %v992, %v1087
      %v1089 = vpop.f32.mrb[0].mxu0
      %v1090 = vpop.f32.mrb[0].mxu0
      %v1091 = vadd.f32 %v992, %v1090
      %v1092 = vpop.f32.mrb[0].mxu0
      %1093 = vmatprep.mubr.bf16.mxu0 0
      %1094 = vmatmul.mubr.bf16.gmra.mrb[0].mxu0 %v1017
      %v1095 = vpop.f32.mrb[0].mxu0
      %v1096 = vadd.f32 %v992, %v1095
      %v1097 = vpop.f32.mrb[0].mxu0
      %v1098 = vpop.f32.mrb[0].mxu0
      %v1099 = vadd.f32 %v992, %v1098
      %v1100 = vpop.f32.mrb[0].mxu0
      %1101 = vmatprep.mubr.bf16.mxu0 0
      %1102 = vmatmul.mubr.bf16.gmra.mrb[0].mxu0 %v1019
      %v1103 = vpop.f32.mrb[0].mxu0
      %v1104 = vadd.f32 %v992, %v1103
      %v1105 = vpop.f32.mrb[0].mxu0
      %v1106 = vpop.f32.mrb[0].mxu0
      %v1107 = vadd.f32 %v992, %v1106
      %v1108 = vpop.f32.mrb[0].mxu0
      %1109 = vmatprep.mubr.bf16.mxu0 0
      %1110 = vmatmul.mubr.bf16.gmra.mrb[0].mxu0 %v1021
      %v1111 = vpop.f32.mrb[0].mxu0
      %v1112 = vadd.f32 %v992, %v1111
      %v1113 = vpop.f32.mrb[0].mxu0
      %v1114 = vpop.f32.mrb[0].mxu0
      %v1115 = vadd.f32 %v992, %v1114
      %v1116 = vpop.f32.mrb[0].mxu0
      %1117 = vmatprep.mubr.bf16.mxu0 0
      %1118 = vmatmul.mubr.bf16.gmra.mrb[0].mxu0 %v1023
      %v1119 = vpop.f32.mrb[0].mxu0
      %v1120 = vadd.f32 %v992, %v1119
      %v1121 = vpop.f32.mrb[0].mxu0
      %v1122 = vpop.f32.mrb[0].mxu0
      %v1123 = vadd.f32 %v992, %v1122
      %v1124 = vpop.f32.mrb[0].mxu0
      %1125 = vmatprep.mubr.bf16.mxu0 0
      %1126 = vmatmul.mubr.bf16.gmra.mrb[0].mxu0 %v1025
      %v1127 = vpop.f32.mrb[0].mxu0
      %v1128 = vadd.f32 %v992, %v1127
      %v1129 = vpop.f32.mrb[0].mxu0
      %v1130 = vpop.f32.mrb[0].mxu0
      %v1131 = vadd.f32 %v992, %v1130
      %v1132 = vpop.f32.mrb[0].mxu0
      %1133 = vmatprep.mubr.bf16.mxu0 0
      %1134 = vmatmul.mubr.bf16.gmra.mrb[0].mxu0 %v1027
      %v1135 = vpop.f32.mrb[0].mxu0
      %v1136 = vadd.f32 %v992, %v1135
      %v1137 = vpop.f32.mrb[0].mxu0
      %v1138 = vpop.f32.mrb[0].mxu0
      %v1139 = vadd.f32 %v992, %v1138
      %v1140 = vpop.f32.mrb[0].mxu0
      %1141 = vmatprep.mubr.bf16.mxu0 0
      %1142 = vmatmul.mubr.bf16.gmra.mrb[0].mxu0 %v1029
      %v1143 = vpop.f32.mrb[0].mxu0
      %v1144 = vadd.f32 %v992, %v1143
      %v1145 = vpop.f32.mrb[0].mxu0
      %v1146 = vpop.f32.mrb[0].mxu0
      %v1147 = vadd.f32 %v992, %v1146
      %v1148 = vpop.f32.mrb[0].mxu0
      %1149 = vmatprep.mubr.bf16.mxu0 0
      %1150 = vmatmul.mubr.bf16.gmra.mrb[0].mxu0 %v1031
      %v1151 = vpop.f32.mrb[0].mxu0
      %v1152 = vadd.f32 %v992, %v1151
      %v1153 = vpop.f32.mrb[0].mxu0
      %v1154 = vpop.f32.mrb[0].mxu0
      %v1155 = vadd.f32 %v992, %v1154
      %v1156 = vpop.f32.mrb[0].mxu0
      %1157 = vmatprep.mubr.bf16.mxu0 0
      %1158 = vmatmul.mubr.bf16.gmra.mrb[0].mxu0 %v1033
      %v1159 = vpop.f32.mrb[0].mxu0
      %v1160 = vadd.f32 %v992, %v1159
      %v1161 = vpop.f32.mrb[0].mxu0
      %v1162 = vpop.f32.mrb[0].mxu0
      %v1163 = vadd.f32 %v992, %v1162
      %v1164 = vpop.f32.mrb[0].mxu0
      %1165 = vmatprep.mubr.bf16.mxu0 0
      %1166 = vmatmul.mubr.bf16.gmra.mrb[0].mxu0 %v1035
      %v1167 = vpop.f32.mrb[0].mxu0
      %v1168 = vadd.f32 %v992, %v1167
      %v1169 = vpop.f32.mrb[0].mxu0
      %v1170 = vpop.f32.mrb[0].mxu0
      %v1171 = vadd.f32 %v992, %v1170
      %v1172 = vpop.f32.mrb[0].mxu0
      %1173 = vmatprep.mubr.bf16.mxu0 0
      %1174 = vmatmul.mubr.bf16.gmra.mrb[0].mxu0 %v1037
      %v1175 = vpop.f32.mrb[0].mxu0
      %v1176 = vadd.f32 %v992, %v1175
      %v1177 = vpop.f32.mrb[0].mxu0
      %v1178 = vpop.f32.mrb[0].mxu0
      %v1179 = vadd.f32 %v992, %v1178
      %v1180 = vpop.f32.mrb[0].mxu0
      %1181 = vmatprep.mubr.bf16.mxu0 0
      %1182 = vmatmul.mubr.bf16.gmra.mrb[0].mxu0 %v1039
      %v1183 = vpop.f32.mrb[0].mxu0
      %v1184 = vadd.f32 %v992, %v1183
      %v1185 = vpop.f32.mrb[0].mxu0
      %v1186 = vpop.f32.mrb[0].mxu0
      %v1187 = vadd.f32 %v992, %v1186
      %v1188 = vpop.f32.mrb[0].mxu0
      %1189 = vmatprep.mubr.bf16.mxu0 0
      %1190 = vmatmul.mubr.bf16.gmra.mrb[0].mxu0 %v1041
      %v1191 = vpop.f32.mrb[0].mxu0
      %v1192 = vadd.f32 %v992, %v1191
      %v1193 = vpop.f32.mrb[0].mxu0
      %v1194 = vpop.f32.mrb[0].mxu0
      %v1195 = vadd.f32 %v992, %v1194
      %v1196 = vpop.f32.mrb[0].mxu0
      %1197 = vmatprep.mubr.bf16.mxu0 0
      %1198 = vmatmul.mubr.bf16.gmra.mrb[0].mxu0 %v1043
      %v1199 = vpop.f32.mrb[0].mxu0
      %v1200 = vadd.f32 %v992, %v1199
      %v1201 = vpop.f32.mrb[0].mxu0
      %v1202 = vpop.f32.mrb[0].mxu0
      %v1203 = vadd.f32 %v992, %v1202
      %v1204 = vpop.f32.mrb[0].mxu0
      %1205 = vdwg.mxu0
      %vm1206 = vcmp.ge.f32.partialorder %v1080, 0.0
      %vm1207 = vcmp.ge.f32.partialorder %v1083, 0.0
      %vm1208 = vcmp.ge.f32.partialorder %v1088, 0.0
      %vm1209 = vcmp.ge.f32.partialorder %v1091, 0.0
      %vm1210 = vcmp.ge.f32.partialorder %v1096, 0.0
      %vm1211 = vcmp.ge.f32.partialorder %v1099, 0.0
      %vm1212 = vcmp.ge.f32.partialorder %v1104, 0.0
      %vm1213 = vcmp.ge.f32.partialorder %v1107, 0.0
      %vm1214 = vcmp.ge.f32.partialorder %v1112, 0.0
      %vm1215 = vcmp.ge.f32.partialorder %v1115, 0.0
      %vm1216 = vcmp.ge.f32.partialorder %v1120, 0.0
      %vm1217 = vcmp.ge.f32.partialorder %v1123, 0.0
      %vm1218 = vcmp.ge.f32.partialorder %v1128, 0.0
      %vm1219 = vcmp.ge.f32.partialorder %v1131, 0.0
      %vm1220 = vcmp.ge.f32.partialorder %v1136, 0.0
      %vm1221 = vcmp.ge.f32.partialorder %v1139, 0.0
      %vm1222 = vcmp.ge.f32.partialorder %v1144, 0.0
      %vm1223 = vcmp.ge.f32.partialorder %v1147, 0.0
      %vm1224 = vcmp.ge.f32.partialorder %v1152, 0.0
      %vm1225 = vcmp.ge.f32.partialorder %v1155, 0.0
      %vm1226 = vcmp.ge.f32.partialorder %v1160, 0.0
      %vm1227 = vcmp.ge.f32.partialorder %v1163, 0.0
      %vm1228 = vcmp.ge.f32.partialorder %v1168, 0.0
      %vm1229 = vcmp.ge.f32.partialorder %v1171, 0.0
      %vm1230 = vcmp.ge.f32.partialorder %v1176, 0.0
      %vm1231 = vcmp.ge.f32.partialorder %v1179, 0.0
      %vm1232 = vcmp.ge.f32.partialorder %v1184, 0.0
      %vm1233 = vcmp.ge.f32.partialorder %v1187, 0.0
      %vm1234 = vcmp.ge.f32.partialorder %v1192, 0.0
      %vm1235 = vcmp.ge.f32.partialorder %v1195, 0.0
      %vm1236 = vcmp.ge.f32.partialorder %v1200, 0.0
      %vm1237 = vcmp.ge.f32.partialorder %v1203, 0.0
      %v1238 = vmul.f32 %v1080, 0.01
      %v1239 = vmul.f32 %v1083, 0.01
      %v1240 = vmul.f32 %v1088, 0.01
      %v1241 = vmul.f32 %v1091, 0.01
      %v1242 = vmul.f32 %v1096, 0.01
      %v1243 = vmul.f32 %v1099, 0.01
      %v1244 = vmul.f32 %v1104, 0.01
      %v1245 = vmul.f32 %v1107, 0.01
      %v1246 = vmul.f32 %v1112, 0.01
      %v1247 = vmul.f32 %v1115, 0.01
      %v1248 = vmul.f32 %v1120, 0.01
      %v1249 = vmul.f32 %v1123, 0.01
      %v1250 = vmul.f32 %v1128, 0.01
      %v1251 = vmul.f32 %v1131, 0.01
      %v1252 = vmul.f32 %v1136, 0.01
      %v1253 = vmul.f32 %v1139, 0.01
      %v1254 = vmul.f32 %v1144, 0.01
      %v1255 = vmul.f32 %v1147, 0.01
      %v1256 = vmul.f32 %v1152, 0.01
      %v1257 = vmul.f32 %v1155, 0.01
      %v1258 = vmul.f32 %v1160, 0.01
      %v1259 = vmul.f32 %v1163, 0.01
      %v1260 = vmul.f32 %v1168, 0.01
      %v1261 = vmul.f32 %v1171, 0.01
      %v1262 = vmul.f32 %v1176, 0.01
      %v1263 = vmul.f32 %v1179, 0.01
      %v1264 = vmul.f32 %v1184, 0.01
      %v1265 = vmul.f32 %v1187, 0.01
      %v1266 = vmul.f32 %v1192, 0.01
      %v1267 = vmul.f32 %v1195, 0.01
      %v1268 = vmul.f32 %v1200, 0.01
      %v1269 = vmul.f32 %v1203, 0.01
      %v1270 = vsel %vm1206, %v1080, %v1238
      %v1271 = vsel %vm1207, %v1083, %v1239
      %v1272 = vsel %vm1208, %v1088, %v1240
      %v1273 = vsel %vm1209, %v1091, %v1241
      %v1274 = vsel %vm1210, %v1096, %v1242
      %v1275 = vsel %vm1211, %v1099, %v1243
      %v1276 = vsel %vm1212, %v1104, %v1244
      %v1277 = vsel %vm1213, %v1107, %v1245
      %v1278 = vsel %vm1214, %v1112, %v1246
      %v1279 = vsel %vm1215, %v1115, %v1247
      %v1280 = vsel %vm1216, %v1120, %v1248
      %v1281 = vsel %vm1217, %v1123, %v1249
      %v1282 = vsel %vm1218, %v1128, %v1250
      %v1283 = vsel %vm1219, %v1131, %v1251
      %v1284 = vsel %vm1220, %v1136, %v1252
      %v1285 = vsel %vm1221, %v1139, %v1253
      %v1286 = vsel %vm1222, %v1144, %v1254
      %v1287 = vsel %vm1223, %v1147, %v1255
      %v1288 = vsel %vm1224, %v1152, %v1256
      %v1289 = vsel %vm1225, %v1155, %v1257
      %v1290 = vsel %vm1226, %v1160, %v1258
      %v1291 = vsel %vm1227, %v1163, %v1259
      %v1292 = vsel %vm1228, %v1168, %v1260
      %v1293 = vsel %vm1229, %v1171, %v1261
      %v1294 = vsel %vm1230, %v1176, %v1262
      %v1295 = vsel %vm1231, %v1179, %v1263
      %v1296 = vsel %vm1232, %v1184, %v1264
      %v1297 = vsel %vm1233, %v1187, %v1265
      %v1298 = vsel %vm1234, %v1192, %v1266
      %v1299 = vsel %vm1235, %v1195, %v1267
      %v1300 = vsel %vm1236, %v1200, %v1268
      %v1301 = vsel %vm1237, %v1203, %v1269
      %v1302 = vpack.c.bf16 %v1271, %v1270
      %v1303 = vpack.c.bf16 %v1273, %v1272
      %v1304 = vpack.c.bf16 %v1275, %v1274
      %v1305 = vpack.c.bf16 %v1277, %v1276
      %v1306 = vpack.c.bf16 %v1279, %v1278
      %v1307 = vpack.c.bf16 %v1281, %v1280
      %v1308 = vpack.c.bf16 %v1283, %v1282
      %v1309 = vpack.c.bf16 %v1285, %v1284
      %v1310 = vpack.c.bf16 %v1287, %v1286
      %v1311 = vpack.c.bf16 %v1289, %v1288
      %v1312 = vpack.c.bf16 %v1291, %v1290
      %v1313 = vpack.c.bf16 %v1293, %v1292
      %v1314 = vpack.c.bf16 %v1295, %v1294
      %v1315 = vpack.c.bf16 %v1297, %v1296
      %v1316 = vpack.c.bf16 %v1299, %v1298
      %v1317 = vpack.c.bf16 %v1301, %v1300
      %v1334 = vunpack.c.l.b16 %v1302
      %v1335 = vunpack.c.h.b16 %v1302
      %v1336 = vunpack.c.l.b16 %v1303
      %v1337 = vunpack.c.h.b16 %v1303
      %v1338 = vunpack.c.l.b16 %v1304
      %v1339 = vunpack.c.h.b16 %v1304
      %v1340 = vunpack.c.l.b16 %v1305
      %v1341 = vunpack.c.h.b16 %v1305
      %v1342 = vunpack.c.l.b16 %v1306
      %v1343 = vunpack.c.h.b16 %v1306
      %v1344 = vunpack.c.l.b16 %v1307
      %v1345 = vunpack.c.h.b16 %v1307
      %v1346 = vunpack.c.l.b16 %v1308
      %v1347 = vunpack.c.h.b16 %v1308
      %v1348 = vunpack.c.l.b16 %v1309
      %v1349 = vunpack.c.h.b16 %v1309
      %v1350 = vunpack.c.l.b16 %v1310
      %v1351 = vunpack.c.h.b16 %v1310
      %v1352 = vunpack.c.l.b16 %v1311
      %v1353 = vunpack.c.h.b16 %v1311
      %v1354 = vunpack.c.l.b16 %v1312
      %v1355 = vunpack.c.h.b16 %v1312
      %v1356 = vunpack.c.l.b16 %v1313
      %v1357 = vunpack.c.h.b16 %v1313
      %v1358 = vunpack.c.l.b16 %v1314
      %v1359 = vunpack.c.h.b16 %v1314
      %v1360 = vunpack.c.l.b16 %v1315
      %v1361 = vunpack.c.h.b16 %v1315
      %v1362 = vunpack.c.l.b16 %v1316
      %v1363 = vunpack.c.h.b16 %v1316
      %v1364 = vunpack.c.l.b16 %v1317
      %v1365 = vunpack.c.h.b16 %v1317
      %v1366 = vpack.c.b16 %v1334, %v1334
      %v1367 = vpack.c.b16 %v1335, %v1335
      %v1368 = vpack.c.b16 %v1336, %v1336
      %v1369 = vpack.c.b16 %v1337, %v1337
      %v1370 = vpack.c.b16 %v1338, %v1338
      %v1371 = vpack.c.b16 %v1339, %v1339
      %v1372 = vpack.c.b16 %v1340, %v1340
      %v1373 = vpack.c.b16 %v1341, %v1341
      %v1374 = vpack.c.b16 %v1342, %v1342
      %v1375 = vpack.c.b16 %v1343, %v1343
      %v1376 = vpack.c.b16 %v1344, %v1344
      %v1377 = vpack.c.b16 %v1345, %v1345
      %v1378 = vpack.c.b16 %v1346, %v1346
      %v1379 = vpack.c.b16 %v1347, %v1347
      %v1380 = vpack.c.b16 %v1348, %v1348
      %v1381 = vpack.c.b16 %v1349, %v1349
      %v1382 = vpack.c.b16 %v1350, %v1350
      %v1383 = vpack.c.b16 %v1351, %v1351
      %v1384 = vpack.c.b16 %v1352, %v1352
      %v1385 = vpack.c.b16 %v1353, %v1353
      %v1386 = vpack.c.b16 %v1354, %v1354
      %v1387 = vpack.c.b16 %v1355, %v1355
      %v1388 = vpack.c.b16 %v1356, %v1356
      %v1389 = vpack.c.b16 %v1357, %v1357
      %v1390 = vpack.c.b16 %v1358, %v1358
      %v1391 = vpack.c.b16 %v1359, %v1359
      %v1392 = vpack.c.b16 %v1360, %v1360
      %v1393 = vpack.c.b16 %v1361, %v1361
      %v1394 = vpack.c.b16 %v1362, %v1362
      %v1395 = vpack.c.b16 %v1363, %v1363
      %v1396 = vpack.c.b16 %v1364, %v1364
      %v1397 = vpack.c.b16 %v1365, %v1365
      %vm1430 = vcmask 257024
      %1431 = vst.msk [vmem:[%s170] sm:$0xf] %vm1430, %v1366
      %1432 = vst.msk [vmem:[%s170 + $0x4] sm:$0xf] %vm1430, %v1367
      %1433 = vst.msk [vmem:[%s170 + $0x8] sm:$0xf] %vm1430, %v1368
      %1434 = vst.msk [vmem:[%s170 + $0xc] sm:$0xf] %vm1430, %v1369
      %1435 = vst.msk [vmem:[%s170 + $0x10] sm:$0xf] %vm1430, %v1370
      %1436 = vst.msk [vmem:[%s170 + $0x14] sm:$0xf] %vm1430, %v1371
      %1437 = vst.msk [vmem:[%s170 + $0x18] sm:$0xf] %vm1430, %v1372
      %1438 = vst.msk [vmem:[%s170 + $0x1c] sm:$0xf] %vm1430, %v1373
      %1439 = vst.msk [vmem:[%s170 + $0x20] sm:$0xf] %vm1430, %v1374
      %1440 = vst.msk [vmem:[%s170 + $0x24] sm:$0xf] %vm1430, %v1375
      %1441 = vst.msk [vmem:[%s170 + $0x28] sm:$0xf] %vm1430, %v1376
      %1442 = vst.msk [vmem:[%s170 + $0x2c] sm:$0xf] %vm1430, %v1377
      %1443 = vst.msk [vmem:[%s170 + $0x30] sm:$0xf] %vm1430, %v1378
      %1444 = vst.msk [vmem:[%s170 + $0x34] sm:$0xf] %vm1430, %v1379
      %1445 = vst.msk [vmem:[%s170 + $0x38] sm:$0xf] %vm1430, %v1380
      %1446 = vst.msk [vmem:[%s170 + $0x3c] sm:$0xf] %vm1430, %v1381
      %1447 = vst.msk [vmem:[%s170 + $0x40] sm:$0xf] %vm1430, %v1382
      %1448 = vst.msk [vmem:[%s170 + $0x44] sm:$0xf] %vm1430, %v1383
      %1449 = vst.msk [vmem:[%s170 + $0x48] sm:$0xf] %vm1430, %v1384
      %1450 = vst.msk [vmem:[%s170 + $0x4c] sm:$0xf] %vm1430, %v1385
      %1451 = vst.msk [vmem:[%s170 + $0x50] sm:$0xf] %vm1430, %v1386
      %1452 = vst.msk [vmem:[%s170 + $0x54] sm:$0xf] %vm1430, %v1387
      %1453 = vst.msk [vmem:[%s170 + $0x58] sm:$0xf] %vm1430, %v1388
      %1454 = vst.msk [vmem:[%s170 + $0x5c] sm:$0xf] %vm1430, %v1389
      %1455 = vst.msk [vmem:[%s170 + $0x60] sm:$0xf] %vm1430, %v1390
      %1456 = vst.msk [vmem:[%s170 + $0x64] sm:$0xf] %vm1430, %v1391
      %1457 = vst.msk [vmem:[%s170 + $0x68] sm:$0xf] %vm1430, %v1392
      %1458 = vst.msk [vmem:[%s170 + $0x6c] sm:$0xf] %vm1430, %v1393
      %1459 = vst.msk [vmem:[%s170 + $0x70] sm:$0xf] %vm1430, %v1394
      %1460 = vst.msk [vmem:[%s170 + $0x74] sm:$0xf] %vm1430, %v1395
      %1461 = vst.msk [vmem:[%s170 + $0x78] sm:$0xf] %vm1430, %v1396
      %1462 = vst.msk [vmem:[%s170 + $0x7c] sm:$0xf] %vm1430, %v1397
      %p1463 = scmp.lt.s32.totalorder %s14, 1
      %s1464 = scalar_select %p1463, %s14, 1
      %s1465 = smul.addr %s1464, 32
      %s1466 = smul.addr %s1465, 4
      %s1467 = scalar_lea.vmem %s3, %s1466
      // Predicated region
      $region33: #{vqvae_forward.14} parent=31 // pred_check
        %p1468 = pneg %p100
      $region34: #{vqvae_forward.14} parent=31 // pred_check_branch
        %1470 = sbr.rel (%p1468) target = $region36
      $region35: #{vqvae_forward.14} parent=31 // pred_region
        _
      $region36: #{vqvae_forward.14} parent=31 // pred_fallthru
        _
    $region32: #{vqvae_forward.14} parent=5 // pred_fallthru
      _
    %p1471 = scmp.le.s32.totalorder 2, %s9
    // Predicated region
    $region37: #{vqvae_forward.14} parent=5 // pred_check
      %p1472 = pneg %p1471
    $region38: #{vqvae_forward.14} parent=5 // pred_check_branch
      %1474 = sbr.rel (%p1472) target = $region40
    $region39: #{vqvae_forward.14} parent=5 // pred_region
      %s1475 = ssub.s32 %s9, 2
      // Predicated region
      $region41: #{vqvae_forward.14} parent=39 // pred_check
        %p1476 = pneg %p106
      $region42: #{vqvae_forward.14} parent=39 // pred_check_branch
        %1478 = sbr.rel (%p1476) target = $region44
      $region43: #{vqvae_forward.14} parent=39 // pred_region
        %p1479 = scmp.lt.s32.totalorder %s15, 1
        %s1480 = scalar_select %p1479, %s15, 1
        %s1481 = smul.addr %s1480, 32
        %s1482 = smul.addr %s1481, 4
        %s1483 = scalar_lea.vmem %s3, %s1482
      $region44: #{vqvae_forward.14} parent=39 // pred_fallthru
        _
    $region40: #{vqvae_forward.14} parent=5 // pred_fallthru
      _
  $region6: #{vqvae_forward.14} parent=0 // loop_footer
    %s13 = sadd.s32 1, %s9
  $region7: #{vqvae_forward.14} parent=0 // loop_footer_branch
    %8 = sbr.rel target = $region3
  $region8: #{vqvae_forward.14} parent=0 // loop_exit
    _

// kernel: vqvae_forward.15
$region0: #{vqvae_forward.15}
  #allocation0 [shape = 'u32[]', space=smem, size = 0x4, offset = 0x4, fixed_abs, tag = 'smem constant byte address 0x4 - core index']
  #allocation1 [shape = 'u32[144,128]{1,0:T(1,128)}', space=vmem, size = 0x12000, scoped, tag = 'internal scratch']
  %s0 = inlined_call_operand.vmem [shape: bf16[2,9,9,128], index: 0, kind: input, shape index: {}]
  %s1 = inlined_call_operand.vmem [shape: bf16[512,64], index: 1, kind: input, shape index: {}]
  %s2 = inlined_call_operand.vmem [shape: f32[1,64], index: 2, kind: input, shape index: {}]
  %s3 = inlined_call_operand.vmem [shape: bf16[2,64,64], index: 3, kind: output, shape index: {}]
  %s4 = sld [smem:[#allocation0]]
  $region45: #{vqvae_forward.15} parent=0
    _
  %s6 = ssub.s32 1, %s4
  %s7 = scalar_select 0, %s6, %s4
  loop: start=0, step=1, limit=4
  $region2: #{vqvae_forward.15} parent=0 // loop_pre_header
    _
  $region3: #{vqvae_forward.15} parent=0 // loop_header
    %s9 = sphi 0, %s13
    %p10 = scmp.ge.s32.totalorder %s9, 4
    %s19 = sphi 0, %s21
    %s22 = sphi 0, %s19
    %s23 = sphi 0, %s22
    %s39 = sphi 0, %s23
    %s43 = sphi 0, %s43
    %s45 = sphi 0, %s43
    %s46 = sphi 0, %s45
    %s60 = sphi 0, %s46
    %s64 = sphi 0, %s64
    %s66 = sphi 0, %s64
    %s67 = sphi 0, %s66
    %s81 = sphi 0, %s67
    %s87 = sphi 0, %s89
    %s90 = sphi 0, %s87
    %s91 = sphi 0, %s90
    %s107 = sphi 0, %s91
  $region4: #{vqvae_forward.15} parent=0 // loop_header_branch
    %12 = sbr.rel (%p10) target = $region8
  $region5: #{vqvae_forward.15} parent=0 // loop_body
    %s14 = ssub.s32 %s9, 1
    %s15 = ssub.s32 %s9, 2
    %s16 = sadd.s32 %s9, 1
    %s17 = ssub.s32 %s9, %s16
    %p18 = scmp.eq.s32.totalorder %s17, 0
    %s20 = sadd.s32 %s19, 1
    %s21 = scalar_select %p18, %s19, %s20
    %p24 = pneg %p18
    %p25 = scmp.eq.s32.totalorder %s9, 1
    %p26 = por %p24, %p25
    %p27 = scmp.ne.s32.totalorder %s19, %s22
    %p28 = scmp.eq.s32.totalorder %s9, 0
    %p29 = por %p27, %p28
    %p30 = scmp.ne.s32.totalorder %s19, %s22
    %p31 = scmp.eq.s32.totalorder %s14, 1
    %p32 = por %p30, %p31
    %p33 = scmp.ne.s32.totalorder %s22, %s23
    %p34 = scmp.eq.s32.totalorder %s14, 0
    %p35 = por %p33, %p34
    %p36 = scmp.ne.s32.totalorder %s22, %s23
    %p37 = scmp.eq.s32.totalorder %s15, 1
    %p38 = por %p36, %p37
    %p40 = scmp.ne.s32.totalorder %s23, %s39
    %p41 = scmp.eq.s32.totalorder %s15, 0
    %p42 = por %p40, %p41
    %s44 = sadd.s32 %s43, 1
    %p47 = scmp.eq.s32.totalorder %s9, 1
    %p48 = scmp.ne.s32.totalorder %s43, %s45
    %p49 = scmp.eq.s32.totalorder %s9, 0
    %p50 = por %p48, %p49
    %p51 = scmp.ne.s32.totalorder %s43, %s45
    %p52 = scmp.eq.s32.totalorder %s14, 1
    %p53 = por %p51, %p52
    %p54 = scmp.ne.s32.totalorder %s45, %s46
    %p55 = scmp.eq.s32.totalorder %s14, 0
    %p56 = por %p54, %p55
    %p57 = scmp.ne.s32.totalorder %s45, %s46
    %p58 = scmp.eq.s32.totalorder %s15, 1
    %p59 = por %p57, %p58
    %p61 = scmp.ne.s32.totalorder %s46, %s60
    %p62 = scmp.eq.s32.totalorder %s15, 0
    %p63 = por %p61, %p62
    %s65 = sadd.s32 %s64, 1
    %p68 = scmp.eq.s32.totalorder %s9, 1
    %p69 = scmp.ne.s32.totalorder %s64, %s66
    %p70 = scmp.eq.s32.totalorder %s9, 0
    %p71 = por %p69, %p70
    %p72 = scmp.ne.s32.totalorder %s64, %s66
    %p73 = scmp.eq.s32.totalorder %s14, 1
    %p74 = por %p72, %p73
    %p75 = scmp.ne.s32.totalorder %s66, %s67
    %p76 = scmp.eq.s32.totalorder %s14, 0
    %p77 = por %p75, %p76
    %p78 = scmp.ne.s32.totalorder %s66, %s67
    %p79 = scmp.eq.s32.totalorder %s15, 1
    %p80 = por %p78, %p79
    %p82 = scmp.ne.s32.totalorder %s67, %s81
    %p83 = scmp.eq.s32.totalorder %s15, 0
    %p84 = por %p82, %p83
    %s85 = ssub.s32 %s9, %s16
    %p86 = scmp.eq.s32.totalorder %s85, 0
    %s88 = sadd.s32 %s87, 1
    %s89 = scalar_select %p86, %s87, %s88
    %p92 = pneg %p86
    %p93 = scmp.eq.s32.totalorder %s9, 1
    %p94 = por %p92, %p93
    %p95 = scmp.ne.s32.totalorder %s87, %s90
    %p96 = scmp.eq.s32.totalorder %s9, 0
    %p97 = por %p95, %p96
    %p98 = scmp.ne.s32.totalorder %s87, %s90
    %p99 = scmp.eq.s32.totalorder %s14, 1
    %p100 = por %p98, %p99
    %p101 = scmp.ne.s32.totalorder %s90, %s91
    %p102 = scmp.eq.s32.totalorder %s14, 0
    %p103 = por %p101, %p102
    %p104 = scmp.ne.s32.totalorder %s90, %s91
    %p105 = scmp.eq.s32.totalorder %s15, 1
    %p106 = por %p104, %p105
    %p108 = scmp.ne.s32.totalorder %s91, %s107
    %p109 = scmp.eq.s32.totalorder %s15, 0
    %p110 = por %p108, %p109
    %p111 = scmp.le.s32.totalorder 1, %s9
    %p112 = scmp.lt.s32.totalorder %s9, 3
    %p113 = pnand %p111, %p112
    %p114 = pneg %p113
    // Predicated region
    $region9: #{vqvae_forward.15} parent=5 // pred_check
      _
    $region10: #{vqvae_forward.15} parent=5 // pred_check_branch
      %116 = sbr.rel (%p113) target = $region12
    $region11: #{vqvae_forward.15} parent=5 // pred_region
      %s117 = ssub.s32 %s9, 1
      // Predicated region
      $region13: #{vqvae_forward.15} parent=11 // pred_check
        %p118 = pneg %p56
      $region14: #{vqvae_forward.15} parent=11 // pred_check_branch
        %120 = sbr.rel (%p118) target = $region16
      $region15: #{vqvae_forward.15} parent=11 // pred_region
        _
      $region16: #{vqvae_forward.15} parent=11 // pred_fallthru
        _
      // Predicated region
      $region17: #{vqvae_forward.15} parent=11 // pred_check
        %p121 = pneg %p77
      $region18: #{vqvae_forward.15} parent=11 // pred_check_branch
        %123 = sbr.rel (%p121) target = $region20
      $region19: #{vqvae_forward.15} parent=11 // pred_region
        _
      $region20: #{vqvae_forward.15} parent=11 // pred_fallthru
        _
    $region12: #{vqvae_forward.15} parent=5 // pred_fallthru
      _
    %p124 = scmp.lt.s32.totalorder %s9, 2
    // Predicated region
    $region21: #{vqvae_forward.15} parent=5 // pred_check
      %p125 = pneg %p124
    $region22: #{vqvae_forward.15} parent=5 // pred_check_branch
      %127 = sbr.rel (%p125) target = $region24
    $region23: #{vqvae_forward.15} parent=5 // pred_region
      // Predicated region
      $region25: #{vqvae_forward.15} parent=23 // pred_check
        %p128 = pneg %p29
      $region26: #{vqvae_forward.15} parent=23 // pred_check_branch
        %130 = sbr.rel (%p128) target = $region28
      $region27: #{vqvae_forward.15} parent=23 // pred_region
        %p131 = scmp.lt.s32.totalorder %s9, 1
        %s132 = scalar_select %p131, %s9, 1
        %s133 = smul.addr %s132, 18
        %s134 = smul.addr %s133, 4
        %s135 = scalar_lea.vmem %s0, %s134
      $region28: #{vqvae_forward.15} parent=23 // pred_fallthru
        _
    $region24: #{vqvae_forward.15} parent=5 // pred_fallthru
      _
    %p136 = scmp.le.s32.totalorder 1, %s9
    %p137 = scmp.lt.s32.totalorder %s9, 3
    %p138 = pnand %p136, %p137
    %p139 = pneg %p138
    // Predicated region
    $region29: #{vqvae_forward.15} parent=5 // pred_check
      _
    $region30: #{vqvae_forward.15} parent=5 // pred_check_branch
      %141 = sbr.rel (%p138) target = $region32
    $region31: #{vqvae_forward.15} parent=5 // pred_region
      %s142 = ssub.s32 %s9, 1
      %p143 = scmp.lt.s32.totalorder %s14, 1
      %s144 = scalar_select %p143, %s14, 1
      %s145 = smul.addr %s144, 18
      %s146 = smul.addr %s145, 4
      %s147 = scalar_lea.vmem %s0, %s146
      %p148 = pneg %p35
      %p149 = pneg %p32
      %p150 = pneg %p56
      %p151 = pneg %p53
      %p152 = pneg %p77
      %p153 = pneg %p74
      %p154 = pneg %p103
      %p155 = pneg %p100
      %p156 = scmp.lt.s32.totalorder %s14, 1
      %s157 = scalar_select %p156, %s14, 1
      %s158 = smul.addr %s157, 8
      %s159 = smul.addr %s158, 4
      %s160 = scalar_lea.vmem %s3, %s159
      %p161 = scmp.lt.s32.totalorder %s14, 1
      %s162 = scalar_select %p161, %s14, 1
      %s163 = smul.addr %s162, 18
      %s164 = smul.addr %s163, 4
      %s165 = scalar_lea.vmem %s0, %s164
      %p166 = scmp.lt.s32.totalorder %s14, 1
      %s167 = scalar_select %p166, %s14, 1
      %s168 = smul.addr %s167, 8
      %s169 = smul.addr %s168, 4
      %s170 = scalar_lea.vmem %s3, %s169
      %v172 = vld [vmem:[%s165] sm:$0xf]
      %v173 = vld [vmem:[%s165 + $0x4] sm:$0x1]
      %v174 = vld [vmem:[%s165 + $0x8] sm:$0xf]
      %v175 = vld [vmem:[%s165 + $0xc] sm:$0x1]
      %v176 = vld [vmem:[%s165 + $0x10] sm:$0xf]
      %v177 = vld [vmem:[%s165 + $0x14] sm:$0x1]
      %v178 = vld [vmem:[%s165 + $0x18] sm:$0xf]
      %v179 = vld [vmem:[%s165 + $0x1c] sm:$0x1]
      %v180 = vld [vmem:[%s165 + $0x20] sm:$0xf]
      %v181 = vld [vmem:[%s165 + $0x24] sm:$0x1]
      %v182 = vld [vmem:[%s165 + $0x28] sm:$0xf]
      %v183 = vld [vmem:[%s165 + $0x2c] sm:$0x1]
      %v184 = vld [vmem:[%s165 + $0x30] sm:$0xf]
      %v185 = vld [vmem:[%s165 + $0x34] sm:$0x1]
      %v186 = vld [vmem:[%s165 + $0x38] sm:$0xf]
      %v187 = vld [vmem:[%s165 + $0x3c] sm:$0x1]
      %v188 = vld [vmem:[%s165 + $0x40] sm:$0xf]
      %v189 = vld [vmem:[%s165 + $0x44] sm:$0x1]
      %vm190 = vsmask.f32 3328
      %vm191 = vsmask.f32 7440
      %vm192 = vmor %vm190, %vm191
      %v194 = vshrl.u32 %v172, 16
      %v196 = vrot.slane %v194, 4
      %v197 = vshll.u32 %v172, 16
      %v199 = vrot.slane %v197, 5
      %v200 = vor.u32 %v196, %v199
      %v201 = vrot.slane %v200, 4
      %v203 = vshll.u32 %v173, 16
      %v205 = vrot.slane %v203, 5
      %v206 = vsel %vm192, %v201, %v205
      %v208 = vshrl.u32 %v174, 16
      %v210 = vrot.slane %v208, 4
      %v211 = vshll.u32 %v174, 16
      %v213 = vrot.slane %v211, 5
      %v214 = vor.u32 %v210, %v213
      %v215 = vrot.slane %v214, 4
      %v217 = vshll.u32 %v175, 16
      %v219 = vrot.slane %v217, 5
      %v220 = vsel %vm192, %v215, %v219
      %v222 = vshrl.u32 %v176, 16
      %v224 = vrot.slane %v222, 4
      %v225 = vshll.u32 %v176, 16
      %v227 = vrot.slane %v225, 5
      %v228 = vor.u32 %v224, %v227
      %v229 = vrot.slane %v228, 4
      %v231 = vshll.u32 %v177, 16
      %v233 = vrot.slane %v231, 5
      %v234 = vsel %vm192, %v229, %v233
      %v236 = vshrl.u32 %v178, 16
      %v238 = vrot.slane %v236, 4
      %v239 = vshll.u32 %v178, 16
      %v241 = vrot.slane %v239, 5
      %v242 = vor.u32 %v238, %v241
      %v243 = vrot.slane %v242, 4
      %v245 = vshll.u32 %v179, 16
      %v247 = vrot.slane %v245, 5
      %v248 = vsel %vm192, %v243, %v247
      %v250 = vshrl.u32 %v180, 16
      %v252 = vrot.slane %v250, 4
      %v253 = vshll.u32 %v180, 16
      %v255 = vrot.slane %v253, 5
      %v256 = vor.u32 %v252, %v255
      %v257 = vrot.slane %v256, 4
      %v259 = vshll.u32 %v181, 16
      %v261 = vrot.slane %v259, 5
      %v262 = vsel %vm192, %v257, %v261
      %v264 = vshrl.u32 %v182, 16
      %v266 = vrot.slane %v264, 4
      %v267 = vshll.u32 %v182, 16
      %v269 = vrot.slane %v267, 5
      %v270 = vor.u32 %v266, %v269
      %v271 = vrot.slane %v270, 4
      %v273 = vshll.u32 %v183, 16
      %v275 = vrot.slane %v273, 5
      %v276 = vsel %vm192, %v271, %v275
      %v278 = vshrl.u32 %v184, 16
      %v280 = vrot.slane %v278, 4
      %v281 = vshll.u32 %v184, 16
      %v283 = vrot.slane %v281, 5
      %v284 = vor.u32 %v280, %v283
      %v285 = vrot.slane %v284, 4
      %v287 = vshll.u32 %v185, 16
      %v289 = vrot.slane %v287, 5
      %v290 = vsel %vm192, %v285, %v289
      %v292 = vshrl.u32 %v186, 16
      %v294 = vrot.slane %v292, 4
      %v295 = vshll.u32 %v186, 16
      %v297 = vrot.slane %v295, 5
      %v298 = vor.u32 %v294, %v297
      %v299 = vrot.slane %v298, 4
      %v301 = vshll.u32 %v187, 16
      %v303 = vrot.slane %v301, 5
      %v304 = vsel %vm192, %v299, %v303
      %v306 = vshrl.u32 %v188, 16
      %v308 = vrot.slane %v306, 4
      %v309 = vshll.u32 %v188, 16
      %v311 = vrot.slane %v309, 5
      %v312 = vor.u32 %v308, %v311
      %v313 = vrot.slane %v312, 4
      %v315 = vshll.u32 %v189, 16
      %v317 = vrot.slane %v315, 5
      %v318 = vsel %vm192, %v313, %v317
      %v327 = vunpack.c.l.b16 %v172
      %v328 = vunpack.c.l.b16 %v174
      %v329 = vunpack.c.l.b16 %v176
      %v330 = vunpack.c.l.b16 %v178
      %v331 = vunpack.c.l.b16 %v180
      %v332 = vunpack.c.l.b16 %v182
      %v333 = vunpack.c.l.b16 %v184
      %v334 = vunpack.c.l.b16 %v186
      %v335 = vpack.c.b16 %v328, %v327
      %v336 = vpack.c.b16 %v330, %v329
      %v337 = vpack.c.b16 %v332, %v331
      %v338 = vpack.c.b16 %v334, %v333
      %v343 = vunpack.c.l.b16 %v206
      %v344 = vunpack.c.l.b16 %v220
      %v345 = vunpack.c.l.b16 %v234
      %v346 = vunpack.c.l.b16 %v248
      %v347 = vunpack.c.l.b16 %v262
      %v348 = vunpack.c.l.b16 %v276
      %v349 = vunpack.c.l.b16 %v290
      %v350 = vunpack.c.l.b16 %v304
      %v351 = vpack.c.b16 %v344, %v343
      %v352 = vpack.c.b16 %v346, %v345
      %v353 = vpack.c.b16 %v348, %v347
      %v354 = vpack.c.b16 %v350, %v349
      %v360 = vunpack.c.l.b16 %v188
      %v361 = vpack.c.b16 %v329, %v328
      %v362 = vpack.c.b16 %v331, %v330
      %v363 = vpack.c.b16 %v333, %v332
      %v364 = vpack.c.b16 %v360, %v334
      %v369 = vunpack.c.l.b16 %v318
      %v370 = vpack.c.b16 %v345, %v344
      %v371 = vpack.c.b16 %v347, %v346
      %v372 = vpack.c.b16 %v349, %v348
      %v373 = vpack.c.b16 %v369, %v350
      %v378 = vld [vmem:[%s1] sm:$0xf]
      %v379 = vld [vmem:[%s1 + $0x4] sm:$0xf]
      %v380 = vld [vmem:[%s1 + $0x8] sm:$0xf]
      %v381 = vld [vmem:[%s1 + $0xc] sm:$0xf]
      %v382 = vld [vmem:[%s1 + $0x10] sm:$0xf]
      %v383 = vld [vmem:[%s1 + $0x14] sm:$0xf]
      %v384 = vld [vmem:[%s1 + $0x18] sm:$0xf]
      %v385 = vld [vmem:[%s1 + $0x1c] sm:$0xf]
      %v386 = vld [vmem:[%s1 + $0x20] sm:$0xf]
      %v387 = vld [vmem:[%s1 + $0x24] sm:$0xf]
      %v388 = vld [vmem:[%s1 + $0x28] sm:$0xf]
      %v389 = vld [vmem:[%s1 + $0x2c] sm:$0xf]
      %v390 = vld [vmem:[%s1 + $0x30] sm:$0xf]
      %v391 = vld [vmem:[%s1 + $0x34] sm:$0xf]
      %v392 = vld [vmem:[%s1 + $0x38] sm:$0xf]
      %v393 = vld [vmem:[%s1 + $0x3c] sm:$0xf]
      %v394 = vld [vmem:[%s1 + $0x40] sm:$0xf]
      %v395 = vld [vmem:[%s1 + $0x44] sm:$0xf]
      %v396 = vld [vmem:[%s1 + $0x48] sm:$0xf]
      %v397 = vld [vmem:[%s1 + $0x4c] sm:$0xf]
      %v398 = vld [vmem:[%s1 + $0x50] sm:$0xf]
      %v399 = vld [vmem:[%s1 + $0x54] sm:$0xf]
      %v400 = vld [vmem:[%s1 + $0x58] sm:$0xf]
      %v401 = vld [vmem:[%s1 + $0x5c] sm:$0xf]
      %v402 = vld [vmem:[%s1 + $0x60] sm:$0xf]
      %v403 = vld [vmem:[%s1 + $0x64] sm:$0xf]
      %v404 = vld [vmem:[%s1 + $0x68] sm:$0xf]
      %v405 = vld [vmem:[%s1 + $0x6c] sm:$0xf]
      %v406 = vld [vmem:[%s1 + $0x70] sm:$0xf]
      %v407 = vld [vmem:[%s1 + $0x74] sm:$0xf]
      %v408 = vld [vmem:[%s1 + $0x78] sm:$0xf]
      %v409 = vld [vmem:[%s1 + $0x7c] sm:$0xf]
      %v410 = vld [vmem:[%s1 + $0x80] sm:$0xf]
      %v411 = vld [vmem:[%s1 + $0x84] sm:$0xf]
      %v412 = vld [vmem:[%s1 + $0x88] sm:$0xf]
      %v413 = vld [vmem:[%s1 + $0x8c] sm:$0xf]
      %v414 = vld [vmem:[%s1 + $0x90] sm:$0xf]
      %v415 = vld [vmem:[%s1 + $0x94] sm:$0xf]
      %v416 = vld [vmem:[%s1 + $0x98] sm:$0xf]
      %v417 = vld [vmem:[%s1 + $0x9c] sm:$0xf]
      %v418 = vld [vmem:[%s1 + $0xa0] sm:$0xf]
      %v419 = vld [vmem:[%s1 + $0xa4] sm:$0xf]
      %v420 = vld [vmem:[%s1 + $0xa8] sm:$0xf]
      %v421 = vld [vmem:[%s1 + $0xac] sm:$0xf]
      %v422 = vld [vmem:[%s1 + $0xb0] sm:$0xf]
      %v423 = vld [vmem:[%s1 + $0xb4] sm:$0xf]
      %v424 = vld [vmem:[%s1 + $0xb8] sm:$0xf]
      %v425 = vld [vmem:[%s1 + $0xbc] sm:$0xf]
      %v426 = vld [vmem:[%s1 + $0xc0] sm:$0xf]
      %v427 = vld [vmem:[%s1 + $0xc4] sm:$0xf]
      %v428 = vld [vmem:[%s1 + $0xc8] sm:$0xf]
      %v429 = vld [vmem:[%s1 + $0xcc] sm:$0xf]
      %v430 = vld [vmem:[%s1 + $0xd0] sm:$0xf]
      %v431 = vld [vmem:[%s1 + $0xd4] sm:$0xf]
      %v432 = vld [vmem:[%s1 + $0xd8] sm:$0xf]
      %v433 = vld [vmem:[%s1 + $0xdc] sm:$0xf]
      %v434 = vld [vmem:[%s1 + $0xe0] sm:$0xf]
      %v435 = vld [vmem:[%s1 + $0xe4] sm:$0xf]
      %v436 = vld [vmem:[%s1 + $0xe8] sm:$0xf]
      %v437 = vld [vmem:[%s1 + $0xec] sm:$0xf]
      %v438 = vld [vmem:[%s1 + $0xf0] sm:$0xf]
      %v439 = vld [vmem:[%s1 + $0xf4] sm:$0xf]
      %v440 = vld [vmem:[%s1 + $0xf8] sm:$0xf]
      %v441 = vld [vmem:[%s1 + $0xfc] sm:$0xf]
      %v442 = vld [vmem:[%s2] sm:$0x1]
      %v444 = vlaneseq
      %v445 = vshrl.u32 %v444, 7
      %v446 = vsub.s32 0, %v445
      %v447 = vrot.slane %v442, %v446
      %v513 = vunpack.c.l.b16 %v378
      %v514 = vunpack.c.l.b16 %v379
      %v515 = vunpack.c.l.b16 %v380
      %v516 = vunpack.c.l.b16 %v381
      %v517 = vunpack.c.l.b16 %v382
      %v518 = vunpack.c.l.b16 %v383
      %v519 = vunpack.c.l.b16 %v384
      %v520 = vunpack.c.l.b16 %v385
      %v521 = vunpack.c.l.b16 %v386
      %v522 = vunpack.c.l.b16 %v387
      %v523 = vunpack.c.l.b16 %v388
      %v524 = vunpack.c.l.b16 %v389
      %v525 = vunpack.c.l.b16 %v390
      %v526 = vunpack.c.l.b16 %v391
      %v527 = vunpack.c.l.b16 %v392
      %v528 = vunpack.c.l.b16 %v393
      %v529 = vunpack.c.l.b16 %v394
      %v530 = vunpack.c.l.b16 %v395
      %v531 = vunpack.c.l.b16 %v396
      %v532 = vunpack.c.l.b16 %v397
      %v533 = vunpack.c.l.b16 %v398
      %v534 = vunpack.c.l.b16 %v399
      %v535 = vunpack.c.l.b16 %v400
      %v536 = vunpack.c.l.b16 %v401
      %v537 = vunpack.c.l.b16 %v402
      %v538 = vunpack.c.l.b16 %v403
      %v539 = vunpack.c.l.b16 %v404
      %v540 = vunpack.c.l.b16 %v405
      %v541 = vunpack.c.l.b16 %v406
      %v542 = vunpack.c.l.b16 %v407
      %v543 = vunpack.c.l.b16 %v408
      %v544 = vunpack.c.l.b16 %v409
      %v545 = vunpack.c.l.b16 %v410
      %v546 = vunpack.c.l.b16 %v411
      %v547 = vunpack.c.l.b16 %v412
      %v548 = vunpack.c.l.b16 %v413
      %v549 = vunpack.c.l.b16 %v414
      %v550 = vunpack.c.l.b16 %v415
      %v551 = vunpack.c.l.b16 %v416
      %v552 = vunpack.c.l.b16 %v417
      %v553 = vunpack.c.l.b16 %v418
      %v554 = vunpack.c.l.b16 %v419
      %v555 = vunpack.c.l.b16 %v420
      %v556 = vunpack.c.l.b16 %v421
      %v557 = vunpack.c.l.b16 %v422
      %v558 = vunpack.c.l.b16 %v423
      %v559 = vunpack.c.l.b16 %v424
      %v560 = vunpack.c.l.b16 %v425
      %v561 = vunpack.c.l.b16 %v426
      %v562 = vunpack.c.l.b16 %v427
      %v563 = vunpack.c.l.b16 %v428
      %v564 = vunpack.c.l.b16 %v429
      %v565 = vunpack.c.l.b16 %v430
      %v566 = vunpack.c.l.b16 %v431
      %v567 = vunpack.c.l.b16 %v432
      %v568 = vunpack.c.l.b16 %v433
      %v569 = vunpack.c.l.b16 %v434
      %v570 = vunpack.c.l.b16 %v435
      %v571 = vunpack.c.l.b16 %v436
      %v572 = vunpack.c.l.b16 %v437
      %v573 = vunpack.c.l.b16 %v438
      %v574 = vunpack.c.l.b16 %v439
      %v575 = vunpack.c.l.b16 %v440
      %v576 = vunpack.c.l.b16 %v441
      %v577 = vpack.c.b16 %v514, %v513
      %v578 = vpack.c.b16 %v516, %v515
      %v579 = vpack.c.b16 %v518, %v517
      %v580 = vpack.c.b16 %v520, %v519
      %v581 = vpack.c.b16 %v522, %v521
      %v582 = vpack.c.b16 %v524, %v523
      %v583 = vpack.c.b16 %v526, %v525
      %v584 = vpack.c.b16 %v528, %v527
      %v585 = vpack.c.b16 %v530, %v529
      %v586 = vpack.c.b16 %v532, %v531
      %v587 = vpack.c.b16 %v534, %v533
      %v588 = vpack.c.b16 %v536, %v535
      %v589 = vpack.c.b16 %v538, %v537
      %v590 = vpack.c.b16 %v540, %v539
      %v591 = vpack.c.b16 %v542, %v541
      %v592 = vpack.c.b16 %v544, %v543
      %v593 = vpack.c.b16 %v546, %v545
      %v594 = vpack.c.b16 %v548, %v547
      %v595 = vpack.c.b16 %v550, %v549
      %v596 = vpack.c.b16 %v552, %v551
      %v597 = vpack.c.b16 %v554, %v553
      %v598 = vpack.c.b16 %v556, %v555
      %v599 = vpack.c.b16 %v558, %v557
      %v600 = vpack.c.b16 %v560, %v559
      %v601 = vpack.c.b16 %v562, %v561
      %v602 = vpack.c.b16 %v564, %v563
      %v603 = vpack.c.b16 %v566, %v565
      %v604 = vpack.c.b16 %v568, %v567
      %v605 = vpack.c.b16 %v570, %v569
      %v606 = vpack.c.b16 %v572, %v571
      %v607 = vpack.c.b16 %v574, %v573
      %v608 = vpack.c.b16 %v576, %v575
      %641 = vmatprep.subr.bf16.mxu0 0
      %642 = vmatpush1.bf16.msra.mxu0 %v577
      %643 = vmatprep.subr.bf16.mxu0 0
      %644 = vmatpush1.bf16.msra.mxu0 %v578
      %645 = vmatprep.subr.bf16.mxu0 0
      %646 = vmatpush1.bf16.msra.mxu0 %v579
      %647 = vmatprep.subr.bf16.mxu0 0
      %648 = vmatpush1.bf16.msra.mxu0 %v580
      %649 = vmatprep.subr.bf16.mxu0 0
      %650 = vmatpush1.bf16.msra.mxu0 %v581
      %651 = vmatprep.subr.bf16.mxu0 0
      %652 = vmatpush1.bf16.msra.mxu0 %v582
      %653 = vmatprep.subr.bf16.mxu0 0
      %654 = vmatpush1.bf16.msra.mxu0 %v583
      %655 = vmatprep.subr.bf16.mxu0 0
      %656 = vmatpush1.bf16.msra.mxu0 %v584
      %657 = vmatprep.subr.bf16.mxu0 0
      %658 = vmatpush1.bf16.msra.mxu0 %v585
      %659 = vmatprep.subr.bf16.mxu0 0
      %660 = vmatpush1.bf16.msra.mxu0 %v586
      %661 = vmatprep.subr.bf16.mxu0 0
      %662 = vmatpush1.bf16.msra.mxu0 %v587
      %663 = vmatprep.subr.bf16.mxu0 0
      %664 = vmatpush1.bf16.msra.mxu0 %v588
      %665 = vmatprep.subr.bf16.mxu0 0
      %666 = vmatpush1.bf16.msra.mxu0 %v589
      %667 = vmatprep.subr.bf16.mxu0 0
      %668 = vmatpush1.bf16.msra.mxu0 %v590
      %669 = vmatprep.subr.bf16.mxu0 0
      %670 = vmatpush1.bf16.msra.mxu0 %v591
      %671 = vmatprep.subr.bf16.mxu0 0
      %672 = vmatpush1.bf16.msra.mxu0 %v592
      %673 = vmatprep.mubr.bf16.mxu0 %v351
      %674 = vmatmul.mubr.bf16.gmra.mrb[0].mxu0 %v335
      %v675 = vpop.f32.mrb[0].mxu0
      %v676 = vadd.f32 %v447, %v675
      %v677 = vpop.f32.mrb[0].mxu0
      %v678 = vpop.f32.mrb[0].mxu0
      %v679 = vadd.f32 %v447, %v678
      %v680 = vpop.f32.mrb[0].mxu0
      %681 = vmatprep.mubr.bf16.mxu0 %v352
      %682 = vmatmul.mubr.bf16.gmra.mrb[0].mxu0 %v336
      %v683 = vpop.f32.mrb[0].mxu0
      %v684 = vadd.f32 %v447, %v683
      %v685 = vpop.f32.mrb[0].mxu0
      %v686 = vpop.f32.mrb[0].mxu0
      %v687 = vadd.f32 %v447, %v686
      %v688 = vpop.f32.mrb[0].mxu0
      %689 = vmatprep.mubr.bf16.mxu0 %v353
      %690 = vmatmul.mubr.bf16.gmra.mrb[0].mxu0 %v337
      %v691 = vpop.f32.mrb[0].mxu0
      %v692 = vadd.f32 %v447, %v691
      %v693 = vpop.f32.mrb[0].mxu0
      %v694 = vpop.f32.mrb[0].mxu0
      %v695 = vadd.f32 %v447, %v694
      %v696 = vpop.f32.mrb[0].mxu0
      %697 = vmatprep.mubr.bf16.mxu0 %v354
      %698 = vmatmul.mubr.bf16.gmra.mrb[0].mxu0 %v338
      %v699 = vpop.f32.mrb[0].mxu0
      %v700 = vadd.f32 %v447, %v699
      %v701 = vpop.f32.mrb[0].mxu0
      %v702 = vpop.f32.mrb[0].mxu0
      %v703 = vadd.f32 %v447, %v702
      %v704 = vpop.f32.mrb[0].mxu0
      %705 = vdwg.mxu0
      %706 = vmatprep.subr.bf16.mxu0 0
      %707 = vmatpush1.bf16.msra.mxu0 %v593
      %708 = vmatprep.subr.bf16.mxu0 0
      %709 = vmatpush1.bf16.msra.mxu0 %v594
      %710 = vmatprep.subr.bf16.mxu0 0
      %711 = vmatpush1.bf16.msra.mxu0 %v595
      %712 = vmatprep.subr.bf16.mxu0 0
      %713 = vmatpush1.bf16.msra.mxu0 %v596
      %714 = vmatprep.subr.bf16.mxu0 0
      %715 = vmatpush1.bf16.msra.mxu0 %v597
      %716 = vmatprep.subr.bf16.mxu0 0
      %717 = vmatpush1.bf16.msra.mxu0 %v598
      %718 = vmatprep.subr.bf16.mxu0 0
      %719 = vmatpush1.bf16.msra.mxu0 %v599
      %720 = vmatprep.subr.bf16.mxu0 0
      %721 = vmatpush1.bf16.msra.mxu0 %v600
      %722 = vmatprep.subr.bf16.mxu0 0
      %723 = vmatpush1.bf16.msra.mxu0 %v601
      %724 = vmatprep.subr.bf16.mxu0 0
      %725 = vmatpush1.bf16.msra.mxu0 %v602
      %726 = vmatprep.subr.bf16.mxu0 0
      %727 = vmatpush1.bf16.msra.mxu0 %v603
      %728 = vmatprep.subr.bf16.mxu0 0
      %729 = vmatpush1.bf16.msra.mxu0 %v604
      %730 = vmatprep.subr.bf16.mxu0 0
      %731 = vmatpush1.bf16.msra.mxu0 %v605
      %732 = vmatprep.subr.bf16.mxu0 0
      %733 = vmatpush1.bf16.msra.mxu0 %v606
      %734 = vmatprep.subr.bf16.mxu0 0
      %735 = vmatpush1.bf16.msra.mxu0 %v607
      %736 = vmatprep.subr.bf16.mxu0 0
      %737 = vmatpush1.bf16.msra.mxu0 %v608
      %738 = vmatprep.mubr.bf16.mxu0 %v370
      %739 = vmatmul.mubr.bf16.gmra.mrb[0].mxu0 %v361
      %v740 = vpop.f32.mrb[0].mxu0
      %v741 = vadd.f32 %v676, %v740
      %v742 = vpop.f32.mrb[0].mxu0
      %v743 = vpop.f32.mrb[0].mxu0
      %v744 = vadd.f32 %v679, %v743
      %v745 = vpop.f32.mrb[0].mxu0
      %746 = vmatprep.mubr.bf16.mxu0 %v371
      %747 = vmatmul.mubr.bf16.gmra.mrb[0].mxu0 %v362
      %v748 = vpop.f32.mrb[0].mxu0
      %v749 = vadd.f32 %v684, %v748
      %v750 = vpop.f32.mrb[0].mxu0
      %v751 = vpop.f32.mrb[0].mxu0
      %v752 = vadd.f32 %v687, %v751
      %v753 = vpop.f32.mrb[0].mxu0
      %754 = vmatprep.mubr.bf16.mxu0 %v372
      %755 = vmatmul.mubr.bf16.gmra.mrb[0].mxu0 %v363
      %v756 = vpop.f32.mrb[0].mxu0
      %v757 = vadd.f32 %v692, %v756
      %v758 = vpop.f32.mrb[0].mxu0
      %v759 = vpop.f32.mrb[0].mxu0
      %v760 = vadd.f32 %v695, %v759
      %v761 = vpop.f32.mrb[0].mxu0
      %762 = vmatprep.mubr.bf16.mxu0 %v373
      %763 = vmatmul.mubr.bf16.gmra.mrb[0].mxu0 %v364
      %v764 = vpop.f32.mrb[0].mxu0
      %v765 = vadd.f32 %v700, %v764
      %v766 = vpop.f32.mrb[0].mxu0
      %v767 = vpop.f32.mrb[0].mxu0
      %v768 = vadd.f32 %v703, %v767
      %v769 = vpop.f32.mrb[0].mxu0
      %770 = vdwg.mxu0
      %vm771 = vcmp.ge.f32.partialorder %v741, 0.0
      %vm772 = vcmp.ge.f32.partialorder %v744, 0.0
      %vm773 = vcmp.ge.f32.partialorder %v749, 0.0
      %vm774 = vcmp.ge.f32.partialorder %v752, 0.0
      %vm775 = vcmp.ge.f32.partialorder %v757, 0.0
      %vm776 = vcmp.ge.f32.partialorder %v760, 0.0
      %vm777 = vcmp.ge.f32.partialorder %v765, 0.0
      %vm778 = vcmp.ge.f32.partialorder %v768, 0.0
      %v779 = vmul.f32 %v741, 0.01
      %v780 = vmul.f32 %v744, 0.01
      %v781 = vmul.f32 %v749, 0.01
      %v782 = vmul.f32 %v752, 0.01
      %v783 = vmul.f32 %v757, 0.01
      %v784 = vmul.f32 %v760, 0.01
      %v785 = vmul.f32 %v765, 0.01
      %v786 = vmul.f32 %v768, 0.01
      %v787 = vsel %vm771, %v741, %v779
      %v788 = vsel %vm772, %v744, %v780
      %v789 = vsel %vm773, %v749, %v781
      %v790 = vsel %vm774, %v752, %v782
      %v791 = vsel %vm775, %v757, %v783
      %v792 = vsel %vm776, %v760, %v784
      %v793 = vsel %vm777, %v765, %v785
      %v794 = vsel %vm778, %v768, %v786
      %v795 = vpack.c.bf16 %v788, %v787
      %v796 = vpack.c.bf16 %v790, %v789
      %v797 = vpack.c.bf16 %v792, %v791
      %v798 = vpack.c.bf16 %v794, %v793
      %v803 = vunpack.c.l.b16 %v795
      %v804 = vunpack.c.h.b16 %v795
      %v805 = vunpack.c.l.b16 %v796
      %v806 = vunpack.c.h.b16 %v796
      %v807 = vunpack.c.l.b16 %v797
      %v808 = vunpack.c.h.b16 %v797
      %v809 = vunpack.c.l.b16 %v798
      %v810 = vunpack.c.h.b16 %v798
      %v811 = vpack.c.b16 %v803, %v803
      %v812 = vpack.c.b16 %v804, %v804
      %v813 = vpack.c.b16 %v805, %v805
      %v814 = vpack.c.b16 %v806, %v806
      %v815 = vpack.c.b16 %v807, %v807
      %v816 = vpack.c.b16 %v808, %v808
      %v817 = vpack.c.b16 %v809, %v809
      %v818 = vpack.c.b16 %v810, %v810
      %vm827 = vcmask 519168
      %828 = vst.msk [vmem:[%s170] sm:$0xf] %vm827, %v811
      %829 = vst.msk [vmem:[%s170 + $0x4] sm:$0xf] %vm827, %v812
      %830 = vst.msk [vmem:[%s170 + $0x8] sm:$0xf] %vm827, %v813
      %831 = vst.msk [vmem:[%s170 + $0xc] sm:$0xf] %vm827, %v814
      %832 = vst.msk [vmem:[%s170 + $0x10] sm:$0xf] %vm827, %v815
      %833 = vst.msk [vmem:[%s170 + $0x14] sm:$0xf] %vm827, %v816
      %834 = vst.msk [vmem:[%s170 + $0x18] sm:$0xf] %vm827, %v817
      %835 = vst.msk [vmem:[%s170 + $0x1c] sm:$0xf] %vm827, %v818
      %p836 = scmp.lt.s32.totalorder %s14, 1
      %s837 = scalar_select %p836, %s14, 1
      %s838 = smul.addr %s837, 8
      %s839 = smul.addr %s838, 4
      %s840 = scalar_lea.vmem %s3, %s839
      // Predicated region
      $region33: #{vqvae_forward.15} parent=31 // pred_check
        %p841 = pneg %p100
      $region34: #{vqvae_forward.15} parent=31 // pred_check_branch
        %843 = sbr.rel (%p841) target = $region36
      $region35: #{vqvae_forward.15} parent=31 // pred_region
        _
      $region36: #{vqvae_forward.15} parent=31 // pred_fallthru
        _
    $region32: #{vqvae_forward.15} parent=5 // pred_fallthru
      _
    %p844 = scmp.le.s32.totalorder 2, %s9
    // Predicated region
    $region37: #{vqvae_forward.15} parent=5 // pred_check
      %p845 = pneg %p844
    $region38: #{vqvae_forward.15} parent=5 // pred_check_branch
      %847 = sbr.rel (%p845) target = $region40
    $region39: #{vqvae_forward.15} parent=5 // pred_region
      %s848 = ssub.s32 %s9, 2
      // Predicated region
      $region41: #{vqvae_forward.15} parent=39 // pred_check
        %p849 = pneg %p106
      $region42: #{vqvae_forward.15} parent=39 // pred_check_branch
        %851 = sbr.rel (%p849) target = $region44
      $region43: #{vqvae_forward.15} parent=39 // pred_region
        %p852 = scmp.lt.s32.totalorder %s15, 1
        %s853 = scalar_select %p852, %s15, 1
        %s854 = smul.addr %s853, 8
        %s855 = smul.addr %s854, 4
        %s856 = scalar_lea.vmem %s3, %s855
      $region44: #{vqvae_forward.15} parent=39 // pred_fallthru
        _
    $region40: #{vqvae_forward.15} parent=5 // pred_fallthru
      _
  $region6: #{vqvae_forward.15} parent=0 // loop_footer
    %s13 = sadd.s32 1, %s9
  $region7: #{vqvae_forward.15} parent=0 // loop_footer_branch
    %8 = sbr.rel target = $region3
  $region8: #{vqvae_forward.15} parent=0 // loop_exit
    _

// kernel: vqvae_forward.16
$region0: #{vqvae_forward.16}
  #allocation0 [shape = 'u32[]', space=smem, size = 0x4, offset = 0x4, fixed_abs, tag = 'smem constant byte address 0x4 - core index']
  #allocation1 [shape = 'u32[144,128]{1,0:T(1,128)}', space=vmem, size = 0x12000, scoped, tag = 'internal scratch']
  %s0 = inlined_call_operand.vmem [shape: bf16[2,10,10,64], index: 0, kind: input, shape index: {}]
  %s1 = inlined_call_operand.vmem [shape: bf16[576,64], index: 1, kind: input, shape index: {}]
  %s2 = inlined_call_operand.vmem [shape: f32[1,64], index: 2, kind: input, shape index: {}]
  %s3 = inlined_call_operand.vmem [shape: bf16[2,64,64], index: 3, kind: output, shape index: {}]
  %s4 = sld [smem:[#allocation0]]
  $region45: #{vqvae_forward.16} parent=0
    _
  %s6 = ssub.s32 1, %s4
  %s7 = scalar_select 0, %s6, %s4
  loop: start=0, step=1, limit=4
  $region2: #{vqvae_forward.16} parent=0 // loop_pre_header
    _
  $region3: #{vqvae_forward.16} parent=0 // loop_header
    %s9 = sphi 0, %s13
    %p10 = scmp.ge.s32.totalorder %s9, 4
    %s19 = sphi 0, %s21
    %s22 = sphi 0, %s19
    %s23 = sphi 0, %s22
    %s39 = sphi 0, %s23
    %s43 = sphi 0, %s43
    %s45 = sphi 0, %s43
    %s46 = sphi 0, %s45
    %s60 = sphi 0, %s46
    %s64 = sphi 0, %s64
    %s66 = sphi 0, %s64
    %s67 = sphi 0, %s66
    %s81 = sphi 0, %s67
    %s87 = sphi 0, %s89
    %s90 = sphi 0, %s87
    %s91 = sphi 0, %s90
    %s107 = sphi 0, %s91
  $region4: #{vqvae_forward.16} parent=0 // loop_header_branch
    %12 = sbr.rel (%p10) target = $region8
  $region5: #{vqvae_forward.16} parent=0 // loop_body
    %s14 = ssub.s32 %s9, 1
    %s15 = ssub.s32 %s9, 2
    %s16 = sadd.s32 %s9, 1
    %s17 = ssub.s32 %s9, %s16
    %p18 = scmp.eq.s32.totalorder %s17, 0
    %s20 = sadd.s32 %s19, 1
    %s21 = scalar_select %p18, %s19, %s20
    %p24 = pneg %p18
    %p25 = scmp.eq.s32.totalorder %s9, 1
    %p26 = por %p24, %p25
    %p27 = scmp.ne.s32.totalorder %s19, %s22
    %p28 = scmp.eq.s32.totalorder %s9, 0
    %p29 = por %p27, %p28
    %p30 = scmp.ne.s32.totalorder %s19, %s22
    %p31 = scmp.eq.s32.totalorder %s14, 1
    %p32 = por %p30, %p31
    %p33 = scmp.ne.s32.totalorder %s22, %s23
    %p34 = scmp.eq.s32.totalorder %s14, 0
    %p35 = por %p33, %p34
    %p36 = scmp.ne.s32.totalorder %s22, %s23
    %p37 = scmp.eq.s32.totalorder %s15, 1
    %p38 = por %p36, %p37
    %p40 = scmp.ne.s32.totalorder %s23, %s39
    %p41 = scmp.eq.s32.totalorder %s15, 0
    %p42 = por %p40, %p41
    %s44 = sadd.s32 %s43, 1
    %p47 = scmp.eq.s32.totalorder %s9, 1
    %p48 = scmp.ne.s32.totalorder %s43, %s45
    %p49 = scmp.eq.s32.totalorder %s9, 0
    %p50 = por %p48, %p49
    %p51 = scmp.ne.s32.totalorder %s43, %s45
    %p52 = scmp.eq.s32.totalorder %s14, 1
    %p53 = por %p51, %p52
    %p54 = scmp.ne.s32.totalorder %s45, %s46
    %p55 = scmp.eq.s32.totalorder %s14, 0
    %p56 = por %p54, %p55
    %p57 = scmp.ne.s32.totalorder %s45, %s46
    %p58 = scmp.eq.s32.totalorder %s15, 1
    %p59 = por %p57, %p58
    %p61 = scmp.ne.s32.totalorder %s46, %s60
    %p62 = scmp.eq.s32.totalorder %s15, 0
    %p63 = por %p61, %p62
    %s65 = sadd.s32 %s64, 1
    %p68 = scmp.eq.s32.totalorder %s9, 1
    %p69 = scmp.ne.s32.totalorder %s64, %s66
    %p70 = scmp.eq.s32.totalorder %s9, 0
    %p71 = por %p69, %p70
    %p72 = scmp.ne.s32.totalorder %s64, %s66
    %p73 = scmp.eq.s32.totalorder %s14, 1
    %p74 = por %p72, %p73
    %p75 = scmp.ne.s32.totalorder %s66, %s67
    %p76 = scmp.eq.s32.totalorder %s14, 0
    %p77 = por %p75, %p76
    %p78 = scmp.ne.s32.totalorder %s66, %s67
    %p79 = scmp.eq.s32.totalorder %s15, 1
    %p80 = por %p78, %p79
    %p82 = scmp.ne.s32.totalorder %s67, %s81
    %p83 = scmp.eq.s32.totalorder %s15, 0
    %p84 = por %p82, %p83
    %s85 = ssub.s32 %s9, %s16
    %p86 = scmp.eq.s32.totalorder %s85, 0
    %s88 = sadd.s32 %s87, 1
    %s89 = scalar_select %p86, %s87, %s88
    %p92 = pneg %p86
    %p93 = scmp.eq.s32.totalorder %s9, 1
    %p94 = por %p92, %p93
    %p95 = scmp.ne.s32.totalorder %s87, %s90
    %p96 = scmp.eq.s32.totalorder %s9, 0
    %p97 = por %p95, %p96
    %p98 = scmp.ne.s32.totalorder %s87, %s90
    %p99 = scmp.eq.s32.totalorder %s14, 1
    %p100 = por %p98, %p99
    %p101 = scmp.ne.s32.totalorder %s90, %s91
    %p102 = scmp.eq.s32.totalorder %s14, 0
    %p103 = por %p101, %p102
    %p104 = scmp.ne.s32.totalorder %s90, %s91
    %p105 = scmp.eq.s32.totalorder %s15, 1
    %p106 = por %p104, %p105
    %p108 = scmp.ne.s32.totalorder %s91, %s107
    %p109 = scmp.eq.s32.totalorder %s15, 0
    %p110 = por %p108, %p109
    %p111 = scmp.le.s32.totalorder 1, %s9
    %p112 = scmp.lt.s32.totalorder %s9, 3
    %p113 = pnand %p111, %p112
    %p114 = pneg %p113
    // Predicated region
    $region9: #{vqvae_forward.16} parent=5 // pred_check
      _
    $region10: #{vqvae_forward.16} parent=5 // pred_check_branch
      %116 = sbr.rel (%p113) target = $region12
    $region11: #{vqvae_forward.16} parent=5 // pred_region
      %s117 = ssub.s32 %s9, 1
      // Predicated region
      $region13: #{vqvae_forward.16} parent=11 // pred_check
        %p118 = pneg %p56
      $region14: #{vqvae_forward.16} parent=11 // pred_check_branch
        %120 = sbr.rel (%p118) target = $region16
      $region15: #{vqvae_forward.16} parent=11 // pred_region
        _
      $region16: #{vqvae_forward.16} parent=11 // pred_fallthru
        _
      // Predicated region
      $region17: #{vqvae_forward.16} parent=11 // pred_check
        %p121 = pneg %p77
      $region18: #{vqvae_forward.16} parent=11 // pred_check_branch
        %123 = sbr.rel (%p121) target = $region20
      $region19: #{vqvae_forward.16} parent=11 // pred_region
        _
      $region20: #{vqvae_forward.16} parent=11 // pred_fallthru
        _
    $region12: #{vqvae_forward.16} parent=5 // pred_fallthru
      _
    %p124 = scmp.lt.s32.totalorder %s9, 2
    // Predicated region
    $region21: #{vqvae_forward.16} parent=5 // pred_check
      %p125 = pneg %p124
    $region22: #{vqvae_forward.16} parent=5 // pred_check_branch
      %127 = sbr.rel (%p125) target = $region24
    $region23: #{vqvae_forward.16} parent=5 // pred_region
      // Predicated region
      $region25: #{vqvae_forward.16} parent=23 // pred_check
        %p128 = pneg %p29
      $region26: #{vqvae_forward.16} parent=23 // pred_check_branch
        %130 = sbr.rel (%p128) target = $region28
      $region27: #{vqvae_forward.16} parent=23 // pred_region
        %p131 = scmp.lt.s32.totalorder %s9, 1
        %s132 = scalar_select %p131, %s9, 1
        %s133 = smul.addr %s132, 20
        %s134 = smul.addr %s133, 4
        %s135 = scalar_lea.vmem %s0, %s134
      $region28: #{vqvae_forward.16} parent=23 // pred_fallthru
        _
    $region24: #{vqvae_forward.16} parent=5 // pred_fallthru
      _
    %p136 = scmp.le.s32.totalorder 1, %s9
    %p137 = scmp.lt.s32.totalorder %s9, 3
    %p138 = pnand %p136, %p137
    %p139 = pneg %p138
    // Predicated region
    $region29: #{vqvae_forward.16} parent=5 // pred_check
      _
    $region30: #{vqvae_forward.16} parent=5 // pred_check_branch
      %141 = sbr.rel (%p138) target = $region32
    $region31: #{vqvae_forward.16} parent=5 // pred_region
      %s142 = ssub.s32 %s9, 1
      %p143 = scmp.lt.s32.totalorder %s14, 1
      %s144 = scalar_select %p143, %s14, 1
      %s145 = smul.addr %s144, 20
      %s146 = smul.addr %s145, 4
      %s147 = scalar_lea.vmem %s0, %s146
      %p148 = pneg %p35
      %p149 = pneg %p32
      %p150 = pneg %p56
      %p151 = pneg %p53
      %p152 = pneg %p77
      %p153 = pneg %p74
      %p154 = pneg %p103
      %p155 = pneg %p100
      %p156 = scmp.lt.s32.totalorder %s14, 1
      %s157 = scalar_select %p156, %s14, 1
      %s158 = smul.addr %s157, 8
      %s159 = smul.addr %s158, 4
      %s160 = scalar_lea.vmem %s3, %s159
      %p161 = scmp.lt.s32.totalorder %s14, 1
      %s162 = scalar_select %p161, %s14, 1
      %s163 = smul.addr %s162, 20
      %s164 = smul.addr %s163, 4
      %s165 = scalar_lea.vmem %s0, %s164
      %p166 = scmp.lt.s32.totalorder %s14, 1
      %s167 = scalar_select %p166, %s14, 1
      %s168 = smul.addr %s167, 8
      %s169 = smul.addr %s168, 4
      %s170 = scalar_lea.vmem %s3, %s169
      %v172 = vld [vmem:[%s165] sm:$0xf]
      %v173 = vld [vmem:[%s165 + $0x4] sm:$0x1]
      %v174 = vld [vmem:[%s165 + $0x8] sm:$0xf]
      %v175 = vld [vmem:[%s165 + $0xc] sm:$0x1]
      %v176 = vld [vmem:[%s165 + $0x10] sm:$0xf]
      %v177 = vld [vmem:[%s165 + $0x14] sm:$0x1]
      %v178 = vld [vmem:[%s165 + $0x18] sm:$0xf]
      %v179 = vld [vmem:[%s165 + $0x1c] sm:$0x1]
      %v180 = vld [vmem:[%s165 + $0x20] sm:$0xf]
      %v181 = vld [vmem:[%s165 + $0x24] sm:$0x1]
      %v182 = vld [vmem:[%s165 + $0x28] sm:$0xf]
      %v183 = vld [vmem:[%s165 + $0x2c] sm:$0x1]
      %v184 = vld [vmem:[%s165 + $0x30] sm:$0xf]
      %v185 = vld [vmem:[%s165 + $0x34] sm:$0x1]
      %v186 = vld [vmem:[%s165 + $0x38] sm:$0xf]
      %v187 = vld [vmem:[%s165 + $0x3c] sm:$0x1]
      %v188 = vld [vmem:[%s165 + $0x40] sm:$0xf]
      %v189 = vld [vmem:[%s165 + $0x44] sm:$0x1]
      %v190 = vld [vmem:[%s165 + $0x48] sm:$0xf]
      %v191 = vld [vmem:[%s165 + $0x4c] sm:$0x1]
      %vm192 = vsmask.f32 3328
      %vm193 = vsmask.f32 7440
      %vm194 = vmor %vm192, %vm193
      %v196 = vshrl.u32 %v172, 16
      %v198 = vrot.slane %v196, 4
      %v199 = vshll.u32 %v172, 16
      %v201 = vrot.slane %v199, 5
      %v202 = vor.u32 %v198, %v201
      %v203 = vrot.slane %v202, 4
      %v205 = vshll.u32 %v173, 16
      %v207 = vrot.slane %v205, 5
      %v208 = vsel %vm194, %v203, %v207
      %v210 = vshrl.u32 %v174, 16
      %v212 = vrot.slane %v210, 4
      %v213 = vshll.u32 %v174, 16
      %v215 = vrot.slane %v213, 5
      %v216 = vor.u32 %v212, %v215
      %v217 = vrot.slane %v216, 4
      %v219 = vshll.u32 %v175, 16
      %v221 = vrot.slane %v219, 5
      %v222 = vsel %vm194, %v217, %v221
      %v224 = vshrl.u32 %v176, 16
      %v226 = vrot.slane %v224, 4
      %v227 = vshll.u32 %v176, 16
      %v229 = vrot.slane %v227, 5
      %v230 = vor.u32 %v226, %v229
      %v231 = vrot.slane %v230, 4
      %v233 = vshll.u32 %v177, 16
      %v235 = vrot.slane %v233, 5
      %v236 = vsel %vm194, %v231, %v235
      %v238 = vshrl.u32 %v178, 16
      %v240 = vrot.slane %v238, 4
      %v241 = vshll.u32 %v178, 16
      %v243 = vrot.slane %v241, 5
      %v244 = vor.u32 %v240, %v243
      %v245 = vrot.slane %v244, 4
      %v247 = vshll.u32 %v179, 16
      %v249 = vrot.slane %v247, 5
      %v250 = vsel %vm194, %v245, %v249
      %v252 = vshrl.u32 %v180, 16
      %v254 = vrot.slane %v252, 4
      %v255 = vshll.u32 %v180, 16
      %v257 = vrot.slane %v255, 5
      %v258 = vor.u32 %v254, %v257
      %v259 = vrot.slane %v258, 4
      %v261 = vshll.u32 %v181, 16
      %v263 = vrot.slane %v261, 5
      %v264 = vsel %vm194, %v259, %v263
      %v266 = vshrl.u32 %v182, 16
      %v268 = vrot.slane %v266, 4
      %v269 = vshll.u32 %v182, 16
      %v271 = vrot.slane %v269, 5
      %v272 = vor.u32 %v268, %v271
      %v273 = vrot.slane %v272, 4
      %v275 = vshll.u32 %v183, 16
      %v277 = vrot.slane %v275, 5
      %v278 = vsel %vm194, %v273, %v277
      %v280 = vshrl.u32 %v184, 16
      %v282 = vrot.slane %v280, 4
      %v283 = vshll.u32 %v184, 16
      %v285 = vrot.slane %v283, 5
      %v286 = vor.u32 %v282, %v285
      %v287 = vrot.slane %v286, 4
      %v289 = vshll.u32 %v185, 16
      %v291 = vrot.slane %v289, 5
      %v292 = vsel %vm194, %v287, %v291
      %v294 = vshrl.u32 %v186, 16
      %v296 = vrot.slane %v294, 4
      %v297 = vshll.u32 %v186, 16
      %v299 = vrot.slane %v297, 5
      %v300 = vor.u32 %v296, %v299
      %v301 = vrot.slane %v300, 4
      %v303 = vshll.u32 %v187, 16
      %v305 = vrot.slane %v303, 5
      %v306 = vsel %vm194, %v301, %v305
      %vm323 = vcmask 1042432
      %vm324 = vcmask 1046532
      %vm325 = vmor %vm323, %vm324
      %v326 = vrot.slane %v172, 5
      %v327 = vrot.slane %v326, 4
      %v328 = vrot.slane %v173, 5
      %v329 = vsel %vm325, %v327, %v328
      %v330 = vrot.slane %v174, 5
      %v331 = vrot.slane %v330, 4
      %v332 = vrot.slane %v175, 5
      %v333 = vsel %vm325, %v331, %v332
      %v334 = vrot.slane %v176, 5
      %v335 = vrot.slane %v334, 4
      %v336 = vrot.slane %v177, 5
      %v337 = vsel %vm325, %v335, %v336
      %v338 = vrot.slane %v178, 5
      %v339 = vrot.slane %v338, 4
      %v340 = vrot.slane %v179, 5
      %v341 = vsel %vm325, %v339, %v340
      %v342 = vrot.slane %v180, 5
      %v343 = vrot.slane %v342, 4
      %v344 = vrot.slane %v181, 5
      %v345 = vsel %vm325, %v343, %v344
      %v346 = vrot.slane %v182, 5
      %v347 = vrot.slane %v346, 4
      %v348 = vrot.slane %v183, 5
      %v349 = vsel %vm325, %v347, %v348
      %v350 = vrot.slane %v184, 5
      %v351 = vrot.slane %v350, 4
      %v352 = vrot.slane %v185, 5
      %v353 = vsel %vm325, %v351, %v352
      %v354 = vrot.slane %v186, 5
      %v355 = vrot.slane %v354, 4
      %v356 = vrot.slane %v187, 5
      %v357 = vsel %vm325, %v355, %v356
      %v359 = vshrl.u32 %v188, 16
      %v361 = vrot.slane %v359, 4
      %v362 = vshll.u32 %v188, 16
      %v364 = vrot.slane %v362, 5
      %v365 = vor.u32 %v361, %v364
      %v366 = vrot.slane %v365, 4
      %v368 = vshll.u32 %v189, 16
      %v370 = vrot.slane %v368, 5
      %v371 = vsel %vm194, %v366, %v370
      %v374 = vrot.slane %v188, 5
      %v375 = vrot.slane %v374, 4
      %v376 = vrot.slane %v189, 5
      %v377 = vsel %vm325, %v375, %v376
      %v379 = vshrl.u32 %v190, 16
      %v381 = vrot.slane %v379, 4
      %v382 = vshll.u32 %v190, 16
      %v384 = vrot.slane %v382, 5
      %v385 = vor.u32 %v381, %v384
      %v386 = vrot.slane %v385, 4
      %v388 = vshll.u32 %v191, 16
      %v390 = vrot.slane %v388, 5
      %v391 = vsel %vm194, %v386, %v390
      %v394 = vrot.slane %v190, 5
      %v395 = vrot.slane %v394, 4
      %v396 = vrot.slane %v191, 5
      %v397 = vsel %vm325, %v395, %v396
      %v398 = vunpack.c.l.b16 %v172
      %v399 = vunpack.c.l.b16 %v174
      %v400 = vunpack.c.l.b16 %v176
      %v401 = vunpack.c.l.b16 %v178
      %v402 = vunpack.c.l.b16 %v180
      %v403 = vunpack.c.l.b16 %v182
      %v404 = vunpack.c.l.b16 %v184
      %v405 = vunpack.c.l.b16 %v186
      %v406 = vpack.c.b16 %v399, %v398
      %v407 = vpack.c.b16 %v401, %v400
      %v408 = vpack.c.b16 %v403, %v402
      %v409 = vpack.c.b16 %v405, %v404
      %v410 = vunpack.c.l.b16 %v208
      %v411 = vunpack.c.l.b16 %v222
      %v412 = vunpack.c.l.b16 %v236
      %v413 = vunpack.c.l.b16 %v250
      %v414 = vunpack.c.l.b16 %v264
      %v415 = vunpack.c.l.b16 %v278
      %v416 = vunpack.c.l.b16 %v292
      %v417 = vunpack.c.l.b16 %v306
      %v418 = vpack.c.b16 %v411, %v410
      %v419 = vpack.c.b16 %v413, %v412
      %v420 = vpack.c.b16 %v415, %v414
      %v421 = vpack.c.b16 %v417, %v416
      %422 = vrot.lane.b32.xlu0 %v418, 64
      %v423 = vpop.permute.xlu0 %422
      %424 = vrot.lane.b32.xlu0 %v419, 64
      %v425 = vpop.permute.xlu0 %424
      %426 = vrot.lane.b32.xlu0 %v420, 64
      %v427 = vpop.permute.xlu0 %426
      %428 = vrot.lane.b32.xlu0 %v421, 64
      %v429 = vpop.permute.xlu0 %428
      %v430 = vunpack.c.l.b16 %v329
      %v431 = vunpack.c.l.b16 %v333
      %v432 = vunpack.c.l.b16 %v337
      %v433 = vunpack.c.l.b16 %v341
      %v434 = vunpack.c.l.b16 %v345
      %v435 = vunpack.c.l.b16 %v349
      %v436 = vunpack.c.l.b16 %v353
      %v437 = vunpack.c.l.b16 %v357
      %v438 = vpack.c.b16 %v431, %v430
      %v439 = vpack.c.b16 %v433, %v432
      %v440 = vpack.c.b16 %v435, %v434
      %v441 = vpack.c.b16 %v437, %v436
      %v442 = vunpack.c.l.b16 %v188
      %v443 = vpack.c.b16 %v400, %v399
      %v444 = vpack.c.b16 %v402, %v401
      %v445 = vpack.c.b16 %v404, %v403
      %v446 = vpack.c.b16 %v442, %v405
      %447 = vrot.lane.b32.xlu0 %v443, 64
      %v448 = vpop.permute.xlu0 %447
      %449 = vrot.lane.b32.xlu0 %v444, 64
      %v450 = vpop.permute.xlu0 %449
      %451 = vrot.lane.b32.xlu0 %v445, 64
      %v452 = vpop.permute.xlu0 %451
      %453 = vrot.lane.b32.xlu0 %v446, 64
      %v454 = vpop.permute.xlu0 %453
      %v455 = vunpack.c.l.b16 %v371
      %v456 = vpack.c.b16 %v412, %v411
      %v457 = vpack.c.b16 %v414, %v413
      %v458 = vpack.c.b16 %v416, %v415
      %v459 = vpack.c.b16 %v455, %v417
      %v460 = vunpack.c.l.b16 %v377
      %v461 = vpack.c.b16 %v432, %v431
      %v462 = vpack.c.b16 %v434, %v433
      %v463 = vpack.c.b16 %v436, %v435
      %v464 = vpack.c.b16 %v460, %v437
      %465 = vrot.lane.b32.xlu0 %v461, 64
      %v466 = vpop.permute.xlu0 %465
      %467 = vrot.lane.b32.xlu0 %v462, 64
      %v468 = vpop.permute.xlu0 %467
      %469 = vrot.lane.b32.xlu0 %v463, 64
      %v470 = vpop.permute.xlu0 %469
      %471 = vrot.lane.b32.xlu0 %v464, 64
      %v472 = vpop.permute.xlu0 %471
      %v473 = vunpack.c.l.b16 %v190
      %v474 = vpack.c.b16 %v473, %v442
      %v475 = vunpack.c.l.b16 %v391
      %v476 = vpack.c.b16 %v475, %v455
      %477 = vrot.lane.b32.xlu0 %v476, 64
      %v478 = vpop.permute.xlu0 %477
      %v479 = vunpack.c.l.b16 %v397
      %v480 = vpack.c.b16 %v479, %v460
      %vm481 = vcmask 523264
      %v484 = vsel %vm481, %v406, %v423
      %v488 = vsel %vm481, %v407, %v425
      %v492 = vsel %vm481, %v408, %v427
      %v496 = vsel %vm481, %v409, %v429
      %v500 = vsel %vm481, %v438, %v448
      %v504 = vsel %vm481, %v439, %v450
      %v508 = vsel %vm481, %v440, %v452
      %v512 = vsel %vm481, %v441, %v454
      %v516 = vsel %vm481, %v456, %v466
      %v520 = vsel %vm481, %v457, %v468
      %v524 = vsel %vm481, %v458, %v470
      %v528 = vsel %vm481, %v459, %v472
      %v532 = vsel %vm481, %v474, %v478
      %v534 = vld [vmem:[%s1] sm:$0xf]
      %v535 = vld [vmem:[%s1 + $0x4] sm:$0xf]
      %v536 = vld [vmem:[%s1 + $0x8] sm:$0xf]
      %v537 = vld [vmem:[%s1 + $0xc] sm:$0xf]
      %v538 = vld [vmem:[%s1 + $0x10] sm:$0xf]
      %v539 = vld [vmem:[%s1 + $0x14] sm:$0xf]
      %v540 = vld [vmem:[%s1 + $0x18] sm:$0xf]
      %v541 = vld [vmem:[%s1 + $0x1c] sm:$0xf]
      %v542 = vld [vmem:[%s1 + $0x20] sm:$0xf]
      %v543 = vld [vmem:[%s1 + $0x24] sm:$0xf]
      %v544 = vld [vmem:[%s1 + $0x28] sm:$0xf]
      %v545 = vld [vmem:[%s1 + $0x2c] sm:$0xf]
      %v546 = vld [vmem:[%s1 + $0x30] sm:$0xf]
      %v547 = vld [vmem:[%s1 + $0x34] sm:$0xf]
      %v548 = vld [vmem:[%s1 + $0x38] sm:$0xf]
      %v549 = vld [vmem:[%s1 + $0x3c] sm:$0xf]
      %v550 = vld [vmem:[%s1 + $0x40] sm:$0xf]
      %v551 = vld [vmem:[%s1 + $0x44] sm:$0xf]
      %v552 = vld [vmem:[%s1 + $0x48] sm:$0xf]
      %v553 = vld [vmem:[%s1 + $0x4c] sm:$0xf]
      %v554 = vld [vmem:[%s1 + $0x50] sm:$0xf]
      %v555 = vld [vmem:[%s1 + $0x54] sm:$0xf]
      %v556 = vld [vmem:[%s1 + $0x58] sm:$0xf]
      %v557 = vld [vmem:[%s1 + $0x5c] sm:$0xf]
      %v558 = vld [vmem:[%s1 + $0x60] sm:$0xf]
      %v559 = vld [vmem:[%s1 + $0x64] sm:$0xf]
      %v560 = vld [vmem:[%s1 + $0x68] sm:$0xf]
      %v561 = vld [vmem:[%s1 + $0x6c] sm:$0xf]
      %v562 = vld [vmem:[%s1 + $0x70] sm:$0xf]
      %v563 = vld [vmem:[%s1 + $0x74] sm:$0xf]
      %v564 = vld [vmem:[%s1 + $0x78] sm:$0xf]
      %v565 = vld [vmem:[%s1 + $0x7c] sm:$0xf]
      %v566 = vld [vmem:[%s1 + $0x80] sm:$0xf]
      %v567 = vld [vmem:[%s1 + $0x84] sm:$0xf]
      %v568 = vld [vmem:[%s1 + $0x88] sm:$0xf]
      %v569 = vld [vmem:[%s1 + $0x8c] sm:$0xf]
      %v570 = vld [vmem:[%s1 + $0x90] sm:$0xf]
      %v571 = vld [vmem:[%s1 + $0x94] sm:$0xf]
      %v572 = vld [vmem:[%s1 + $0x98] sm:$0xf]
      %v573 = vld [vmem:[%s1 + $0x9c] sm:$0xf]
      %v574 = vld [vmem:[%s1 + $0xa0] sm:$0xf]
      %v575 = vld [vmem:[%s1 + $0xa4] sm:$0xf]
      %v576 = vld [vmem:[%s1 + $0xa8] sm:$0xf]
      %v577 = vld [vmem:[%s1 + $0xac] sm:$0xf]
      %v578 = vld [vmem:[%s1 + $0xb0] sm:$0xf]
      %v579 = vld [vmem:[%s1 + $0xb4] sm:$0xf]
      %v580 = vld [vmem:[%s1 + $0xb8] sm:$0xf]
      %v581 = vld [vmem:[%s1 + $0xbc] sm:$0xf]
      %v582 = vld [vmem:[%s1 + $0xc0] sm:$0xf]
      %v583 = vld [vmem:[%s1 + $0xc4] sm:$0xf]
      %v584 = vld [vmem:[%s1 + $0xc8] sm:$0xf]
      %v585 = vld [vmem:[%s1 + $0xcc] sm:$0xf]
      %v586 = vld [vmem:[%s1 + $0xd0] sm:$0xf]
      %v587 = vld [vmem:[%s1 + $0xd4] sm:$0xf]
      %v588 = vld [vmem:[%s1 + $0xd8] sm:$0xf]
      %v589 = vld [vmem:[%s1 + $0xdc] sm:$0xf]
      %v590 = vld [vmem:[%s1 + $0xe0] sm:$0xf]
      %v591 = vld [vmem:[%s1 + $0xe4] sm:$0xf]
      %v592 = vld [vmem:[%s1 + $0xe8] sm:$0xf]
      %v593 = vld [vmem:[%s1 + $0xec] sm:$0xf]
      %v594 = vld [vmem:[%s1 + $0xf0] sm:$0xf]
      %v595 = vld [vmem:[%s1 + $0xf4] sm:$0xf]
      %v596 = vld [vmem:[%s1 + $0xf8] sm:$0xf]
      %v597 = vld [vmem:[%s1 + $0xfc] sm:$0xf]
      %v598 = vld [vmem:[%s1 + $0x100] sm:$0xf]
      %v599 = vld [vmem:[%s1 + $0x104] sm:$0xf]
      %v600 = vld [vmem:[%s1 + $0x108] sm:$0xf]
      %v601 = vld [vmem:[%s1 + $0x10c] sm:$0xf]
      %v602 = vld [vmem:[%s1 + $0x110] sm:$0xf]
      %v603 = vld [vmem:[%s1 + $0x114] sm:$0xf]
      %v604 = vld [vmem:[%s1 + $0x118] sm:$0xf]
      %v605 = vld [vmem:[%s1 + $0x11c] sm:$0xf]
      %v606 = vld [vmem:[%s2] sm:$0x1]
      %v608 = vlaneseq
      %v609 = vshrl.u32 %v608, 7
      %v610 = vsub.s32 0, %v609
      %v611 = vrot.slane %v606, %v610
      %v685 = vunpack.c.l.b16 %v534
      %v686 = vunpack.c.l.b16 %v535
      %v687 = vunpack.c.l.b16 %v536
      %v688 = vunpack.c.l.b16 %v537
      %v689 = vunpack.c.l.b16 %v538
      %v690 = vunpack.c.l.b16 %v539
      %v691 = vunpack.c.l.b16 %v540
      %v692 = vunpack.c.l.b16 %v541
      %v693 = vunpack.c.l.b16 %v542
      %v694 = vunpack.c.l.b16 %v543
      %v695 = vunpack.c.l.b16 %v544
      %v696 = vunpack.c.l.b16 %v545
      %v697 = vunpack.c.l.b16 %v546
      %v698 = vunpack.c.l.b16 %v547
      %v699 = vunpack.c.l.b16 %v548
      %v700 = vunpack.c.l.b16 %v549
      %v701 = vunpack.c.l.b16 %v550
      %v702 = vunpack.c.l.b16 %v551
      %v703 = vunpack.c.l.b16 %v552
      %v704 = vunpack.c.l.b16 %v553
      %v705 = vunpack.c.l.b16 %v554
      %v706 = vunpack.c.l.b16 %v555
      %v707 = vunpack.c.l.b16 %v556
      %v708 = vunpack.c.l.b16 %v557
      %v709 = vunpack.c.l.b16 %v558
      %v710 = vunpack.c.l.b16 %v559
      %v711 = vunpack.c.l.b16 %v560
      %v712 = vunpack.c.l.b16 %v561
      %v713 = vunpack.c.l.b16 %v562
      %v714 = vunpack.c.l.b16 %v563
      %v715 = vunpack.c.l.b16 %v564
      %v716 = vunpack.c.l.b16 %v565
      %v717 = vunpack.c.l.b16 %v566
      %v718 = vunpack.c.l.b16 %v567
      %v719 = vunpack.c.l.b16 %v568
      %v720 = vunpack.c.l.b16 %v569
      %v721 = vunpack.c.l.b16 %v570
      %v722 = vunpack.c.l.b16 %v571
      %v723 = vunpack.c.l.b16 %v572
      %v724 = vunpack.c.l.b16 %v573
      %v725 = vunpack.c.l.b16 %v574
      %v726 = vunpack.c.l.b16 %v575
      %v727 = vunpack.c.l.b16 %v576
      %v728 = vunpack.c.l.b16 %v577
      %v729 = vunpack.c.l.b16 %v578
      %v730 = vunpack.c.l.b16 %v579
      %v731 = vunpack.c.l.b16 %v580
      %v732 = vunpack.c.l.b16 %v581
      %v733 = vunpack.c.l.b16 %v582
      %v734 = vunpack.c.l.b16 %v583
      %v735 = vunpack.c.l.b16 %v584
      %v736 = vunpack.c.l.b16 %v585
      %v737 = vunpack.c.l.b16 %v586
      %v738 = vunpack.c.l.b16 %v587
      %v739 = vunpack.c.l.b16 %v588
      %v740 = vunpack.c.l.b16 %v589
      %v741 = vunpack.c.l.b16 %v590
      %v742 = vunpack.c.l.b16 %v591
      %v743 = vunpack.c.l.b16 %v592
      %v744 = vunpack.c.l.b16 %v593
      %v745 = vunpack.c.l.b16 %v594
      %v746 = vunpack.c.l.b16 %v595
      %v747 = vunpack.c.l.b16 %v596
      %v748 = vunpack.c.l.b16 %v597
      %v749 = vunpack.c.l.b16 %v598
      %v750 = vunpack.c.l.b16 %v599
      %v751 = vunpack.c.l.b16 %v600
      %v752 = vunpack.c.l.b16 %v601
      %v753 = vunpack.c.l.b16 %v602
      %v754 = vunpack.c.l.b16 %v603
      %v755 = vunpack.c.l.b16 %v604
      %v756 = vunpack.c.l.b16 %v605
      %v757 = vpack.c.b16 %v686, %v685
      %v758 = vpack.c.b16 %v688, %v687
      %v759 = vpack.c.b16 %v690, %v689
      %v760 = vpack.c.b16 %v692, %v691
      %v761 = vpack.c.b16 %v694, %v693
      %v762 = vpack.c.b16 %v696, %v695
      %v763 = vpack.c.b16 %v698, %v697
      %v764 = vpack.c.b16 %v700, %v699
      %v765 = vpack.c.b16 %v702, %v701
      %v766 = vpack.c.b16 %v704, %v703
      %v767 = vpack.c.b16 %v706, %v705
      %v768 = vpack.c.b16 %v708, %v707
      %v769 = vpack.c.b16 %v710, %v709
      %v770 = vpack.c.b16 %v712, %v711
      %v771 = vpack.c.b16 %v714, %v713
      %v772 = vpack.c.b16 %v716, %v715
      %v773 = vpack.c.b16 %v718, %v717
      %v774 = vpack.c.b16 %v720, %v719
      %v775 = vpack.c.b16 %v722, %v721
      %v776 = vpack.c.b16 %v724, %v723
      %v777 = vpack.c.b16 %v726, %v725
      %v778 = vpack.c.b16 %v728, %v727
      %v779 = vpack.c.b16 %v730, %v729
      %v780 = vpack.c.b16 %v732, %v731
      %v781 = vpack.c.b16 %v734, %v733
      %v782 = vpack.c.b16 %v736, %v735
      %v783 = vpack.c.b16 %v738, %v737
      %v784 = vpack.c.b16 %v740, %v739
      %v785 = vpack.c.b16 %v742, %v741
      %v786 = vpack.c.b16 %v744, %v743
      %v787 = vpack.c.b16 %v746, %v745
      %v788 = vpack.c.b16 %v748, %v747
      %v789 = vpack.c.b16 %v750, %v749
      %v790 = vpack.c.b16 %v752, %v751
      %v791 = vpack.c.b16 %v754, %v753
      %v792 = vpack.c.b16 %v756, %v755
      %v829 = vsel %vm481, %v439, 0
      %v831 = vsel %vm481, %v440, 0
      %v833 = vsel %vm481, %v441, 0
      %v836 = vsel %vm481, %v480, 0
      %838 = vmatprep.subr.bf16.mxu0 0
      %839 = vmatpush1.bf16.msra.mxu0 %v757
      %840 = vmatprep.subr.bf16.mxu0 0
      %841 = vmatpush1.bf16.msra.mxu0 %v758
      %842 = vmatprep.subr.bf16.mxu0 0
      %843 = vmatpush1.bf16.msra.mxu0 %v759
      %844 = vmatprep.subr.bf16.mxu0 0
      %845 = vmatpush1.bf16.msra.mxu0 %v760
      %846 = vmatprep.subr.bf16.mxu0 0
      %847 = vmatpush1.bf16.msra.mxu0 %v761
      %848 = vmatprep.subr.bf16.mxu0 0
      %849 = vmatpush1.bf16.msra.mxu0 %v762
      %850 = vmatprep.subr.bf16.mxu0 0
      %851 = vmatpush1.bf16.msra.mxu0 %v763
      %852 = vmatprep.subr.bf16.mxu0 0
      %853 = vmatpush1.bf16.msra.mxu0 %v764
      %854 = vmatprep.subr.bf16.mxu0 0
      %855 = vmatpush1.bf16.msra.mxu0 %v765
      %856 = vmatprep.subr.bf16.mxu0 0
      %857 = vmatpush1.bf16.msra.mxu0 %v766
      %858 = vmatprep.subr.bf16.mxu0 0
      %859 = vmatpush1.bf16.msra.mxu0 %v767
      %860 = vmatprep.subr.bf16.mxu0 0
      %861 = vmatpush1.bf16.msra.mxu0 %v768
      %862 = vmatprep.subr.bf16.mxu0 0
      %863 = vmatpush1.bf16.msra.mxu0 %v769
      %864 = vmatprep.subr.bf16.mxu0 0
      %865 = vmatpush1.bf16.msra.mxu0 %v770
      %866 = vmatprep.subr.bf16.mxu0 0
      %867 = vmatpush1.bf16.msra.mxu0 %v771
      %868 = vmatprep.subr.bf16.mxu0 0
      %869 = vmatpush1.bf16.msra.mxu0 %v772
      %870 = vmatprep.mubr.bf16.mxu0 %v500
      %871 = vmatmul.mubr.bf16.gmra.mrb[0].mxu0 %v484
      %v872 = vpop.f32.mrb[0].mxu0
      %v873 = vadd.f32 %v611, %v872
      %v874 = vpop.f32.mrb[0].mxu0
      %v875 = vpop.f32.mrb[0].mxu0
      %v876 = vadd.f32 %v611, %v875
      %v877 = vpop.f32.mrb[0].mxu0
      %878 = vmatprep.mubr.bf16.mxu0 %v504
      %879 = vmatmul.mubr.bf16.gmra.mrb[0].mxu0 %v488
      %v880 = vpop.f32.mrb[0].mxu0
      %v881 = vadd.f32 %v611, %v880
      %v882 = vpop.f32.mrb[0].mxu0
      %v883 = vpop.f32.mrb[0].mxu0
      %v884 = vadd.f32 %v611, %v883
      %v885 = vpop.f32.mrb[0].mxu0
      %886 = vmatprep.mubr.bf16.mxu0 %v508
      %887 = vmatmul.mubr.bf16.gmra.mrb[0].mxu0 %v492
      %v888 = vpop.f32.mrb[0].mxu0
      %v889 = vadd.f32 %v611, %v888
      %v890 = vpop.f32.mrb[0].mxu0
      %v891 = vpop.f32.mrb[0].mxu0
      %v892 = vadd.f32 %v611, %v891
      %v893 = vpop.f32.mrb[0].mxu0
      %894 = vmatprep.mubr.bf16.mxu0 %v512
      %895 = vmatmul.mubr.bf16.gmra.mrb[0].mxu0 %v496
      %v896 = vpop.f32.mrb[0].mxu0
      %v897 = vadd.f32 %v611, %v896
      %v898 = vpop.f32.mrb[0].mxu0
      %v899 = vpop.f32.mrb[0].mxu0
      %v900 = vadd.f32 %v611, %v899
      %v901 = vpop.f32.mrb[0].mxu0
      %902 = vdwg.mxu0
      %903 = vmatprep.subr.bf16.mxu0 0
      %904 = vmatpush1.bf16.msra.mxu0 %v773
      %905 = vmatprep.subr.bf16.mxu0 0
      %906 = vmatpush1.bf16.msra.mxu0 %v774
      %907 = vmatprep.subr.bf16.mxu0 0
      %908 = vmatpush1.bf16.msra.mxu0 %v775
      %909 = vmatprep.subr.bf16.mxu0 0
      %910 = vmatpush1.bf16.msra.mxu0 %v776
      %911 = vmatprep.subr.bf16.mxu0 0
      %912 = vmatpush1.bf16.msra.mxu0 %v777
      %913 = vmatprep.subr.bf16.mxu0 0
      %914 = vmatpush1.bf16.msra.mxu0 %v778
      %915 = vmatprep.subr.bf16.mxu0 0
      %916 = vmatpush1.bf16.msra.mxu0 %v779
      %917 = vmatprep.subr.bf16.mxu0 0
      %918 = vmatpush1.bf16.msra.mxu0 %v780
      %919 = vmatprep.subr.bf16.mxu0 0
      %920 = vmatpush1.bf16.msra.mxu0 %v781
      %921 = vmatprep.subr.bf16.mxu0 0
      %922 = vmatpush1.bf16.msra.mxu0 %v782
      %923 = vmatprep.subr.bf16.mxu0 0
      %924 = vmatpush1.bf16.msra.mxu0 %v783
      %925 = vmatprep.subr.bf16.mxu0 0
      %926 = vmatpush1.bf16.msra.mxu0 %v784
      %927 = vmatprep.subr.bf16.mxu0 0
      %928 = vmatpush1.bf16.msra.mxu0 %v785
      %929 = vmatprep.subr.bf16.mxu0 0
      %930 = vmatpush1.bf16.msra.mxu0 %v786
      %931 = vmatprep.subr.bf16.mxu0 0
      %932 = vmatpush1.bf16.msra.mxu0 %v787
      %933 = vmatprep.subr.bf16.mxu0 0
      %934 = vmatpush1.bf16.msra.mxu0 %v788
      %935 = vmatprep.mubr.bf16.mxu0 %v488
      %936 = vmatmul.mubr.bf16.gmra.mrb[0].mxu0 %v516
      %v937 = vpop.f32.mrb[0].mxu0
      %v938 = vadd.f32 %v873, %v937
      %v939 = vpop.f32.mrb[0].mxu0
      %v940 = vpop.f32.mrb[0].mxu0
      %v941 = vadd.f32 %v876, %v940
      %v942 = vpop.f32.mrb[0].mxu0
      %943 = vmatprep.mubr.bf16.mxu0 %v492
      %944 = vmatmul.mubr.bf16.gmra.mrb[0].mxu0 %v520
      %v945 = vpop.f32.mrb[0].mxu0
      %v946 = vadd.f32 %v881, %v945
      %v947 = vpop.f32.mrb[0].mxu0
      %v948 = vpop.f32.mrb[0].mxu0
      %v949 = vadd.f32 %v884, %v948
      %v950 = vpop.f32.mrb[0].mxu0
      %951 = vmatprep.mubr.bf16.mxu0 %v496
      %952 = vmatmul.mubr.bf16.gmra.mrb[0].mxu0 %v524
      %v953 = vpop.f32.mrb[0].mxu0
      %v954 = vadd.f32 %v889, %v953
      %v955 = vpop.f32.mrb[0].mxu0
      %v956 = vpop.f32.mrb[0].mxu0
      %v957 = vadd.f32 %v892, %v956
      %v958 = vpop.f32.mrb[0].mxu0
      %959 = vmatprep.mubr.bf16.mxu0 %v532
      %960 = vmatmul.mubr.bf16.gmra.mrb[0].mxu0 %v528
      %v961 = vpop.f32.mrb[0].mxu0
      %v962 = vadd.f32 %v897, %v961
      %v963 = vpop.f32.mrb[0].mxu0
      %v964 = vpop.f32.mrb[0].mxu0
      %v965 = vadd.f32 %v900, %v964
      %v966 = vpop.f32.mrb[0].mxu0
      %967 = vdwg.mxu0
      %968 = vmatprep.subr.bf16.mxu0 0
      %969 = vmatpush1.bf16.msra.mxu0 %v789
      %970 = vmatprep.subr.bf16.mxu0 0
      %971 = vmatpush1.bf16.msra.mxu0 %v790
      %972 = vmatprep.subr.bf16.mxu0 0
      %973 = vmatpush1.bf16.msra.mxu0 %v791
      %974 = vmatprep.subr.bf16.mxu0 0
      %975 = vmatpush1.bf16.msra.mxu0 %v792
      %976 = vmatprep.subr.bf16.mxu0 0
      %977 = vmatpush1.bf16.msra.mxu0 0
      %978 = vmatprep.subr.bf16.mxu0 0
      %979 = vmatpush1.bf16.msra.mxu0 0
      %980 = vmatprep.subr.bf16.mxu0 0
      %981 = vmatpush1.bf16.msra.mxu0 0
      %982 = vmatprep.subr.bf16.mxu0 0
      %983 = vmatpush1.bf16.msra.mxu0 0
      %984 = vmatprep.subr.bf16.mxu0 0
      %985 = vmatpush1.bf16.msra.mxu0 0
      %986 = vmatprep.subr.bf16.mxu0 0
      %987 = vmatpush1.bf16.msra.mxu0 0
      %988 = vmatprep.subr.bf16.mxu0 0
      %989 = vmatpush1.bf16.msra.mxu0 0
      %990 = vmatprep.subr.bf16.mxu0 0
      %991 = vmatpush1.bf16.msra.mxu0 0
      %992 = vmatprep.subr.bf16.mxu0 0
      %993 = vmatpush1.bf16.msra.mxu0 0
      %994 = vmatprep.subr.bf16.mxu0 0
      %995 = vmatpush1.bf16.msra.mxu0 0
      %996 = vmatprep.subr.bf16.mxu0 0
      %997 = vmatpush1.bf16.msra.mxu0 0
      %998 = vmatprep.subr.bf16.mxu0 0
      %999 = vmatpush1.bf16.msra.mxu0 0
      %1000 = vmatprep.mubr.bf16.mxu0 0
      %1001 = vmatmul.mubr.bf16.gmra.mrb[0].mxu0 %v829
      %v1002 = vpop.f32.mrb[0].mxu0
      %v1003 = vadd.f32 %v938, %v1002
      %v1004 = vpop.f32.mrb[0].mxu0
      %v1005 = vpop.f32.mrb[0].mxu0
      %v1006 = vadd.f32 %v941, %v1005
      %v1007 = vpop.f32.mrb[0].mxu0
      %1008 = vmatprep.mubr.bf16.mxu0 0
      %1009 = vmatmul.mubr.bf16.gmra.mrb[0].mxu0 %v831
      %v1010 = vpop.f32.mrb[0].mxu0
      %v1011 = vadd.f32 %v946, %v1010
      %v1012 = vpop.f32.mrb[0].mxu0
      %v1013 = vpop.f32.mrb[0].mxu0
      %v1014 = vadd.f32 %v949, %v1013
      %v1015 = vpop.f32.mrb[0].mxu0
      %1016 = vmatprep.mubr.bf16.mxu0 0
      %1017 = vmatmul.mubr.bf16.gmra.mrb[0].mxu0 %v833
      %v1018 = vpop.f32.mrb[0].mxu0
      %v1019 = vadd.f32 %v954, %v1018
      %v1020 = vpop.f32.mrb[0].mxu0
      %v1021 = vpop.f32.mrb[0].mxu0
      %v1022 = vadd.f32 %v957, %v1021
      %v1023 = vpop.f32.mrb[0].mxu0
      %1024 = vmatprep.mubr.bf16.mxu0 0
      %1025 = vmatmul.mubr.bf16.gmra.mrb[0].mxu0 %v836
      %v1026 = vpop.f32.mrb[0].mxu0
      %v1027 = vadd.f32 %v962, %v1026
      %v1028 = vpop.f32.mrb[0].mxu0
      %v1029 = vpop.f32.mrb[0].mxu0
      %v1030 = vadd.f32 %v965, %v1029
      %v1031 = vpop.f32.mrb[0].mxu0
      %1032 = vdwg.mxu0
      %vm1033 = vcmp.ge.f32.partialorder %v1003, 0.0
      %vm1034 = vcmp.ge.f32.partialorder %v1006, 0.0
      %vm1035 = vcmp.ge.f32.partialorder %v1011, 0.0
      %vm1036 = vcmp.ge.f32.partialorder %v1014, 0.0
      %vm1037 = vcmp.ge.f32.partialorder %v1019, 0.0
      %vm1038 = vcmp.ge.f32.partialorder %v1022, 0.0
      %vm1039 = vcmp.ge.f32.partialorder %v1027, 0.0
      %vm1040 = vcmp.ge.f32.partialorder %v1030, 0.0
      %v1041 = vmul.f32 %v1003, 0.01
      %v1042 = vmul.f32 %v1006, 0.01
      %v1043 = vmul.f32 %v1011, 0.01
      %v1044 = vmul.f32 %v1014, 0.01
      %v1045 = vmul.f32 %v1019, 0.01
      %v1046 = vmul.f32 %v1022, 0.01
      %v1047 = vmul.f32 %v1027, 0.01
      %v1048 = vmul.f32 %v1030, 0.01
      %v1049 = vsel %vm1033, %v1003, %v1041
      %v1050 = vsel %vm1034, %v1006, %v1042
      %v1051 = vsel %vm1035, %v1011, %v1043
      %v1052 = vsel %vm1036, %v1014, %v1044
      %v1053 = vsel %vm1037, %v1019, %v1045
      %v1054 = vsel %vm1038, %v1022, %v1046
      %v1055 = vsel %vm1039, %v1027, %v1047
      %v1056 = vsel %vm1040, %v1030, %v1048
      %v1057 = vpack.c.bf16 %v1050, %v1049
      %v1058 = vpack.c.bf16 %v1052, %v1051
      %v1059 = vpack.c.bf16 %v1054, %v1053
      %v1060 = vpack.c.bf16 %v1056, %v1055
      %v1065 = vunpack.c.l.b16 %v1057
      %v1066 = vunpack.c.h.b16 %v1057
      %v1067 = vunpack.c.l.b16 %v1058
      %v1068 = vunpack.c.h.b16 %v1058
      %v1069 = vunpack.c.l.b16 %v1059
      %v1070 = vunpack.c.h.b16 %v1059
      %v1071 = vunpack.c.l.b16 %v1060
      %v1072 = vunpack.c.h.b16 %v1060
      %v1073 = vpack.c.b16 %v1065, %v1065
      %v1074 = vpack.c.b16 %v1066, %v1066
      %v1075 = vpack.c.b16 %v1067, %v1067
      %v1076 = vpack.c.b16 %v1068, %v1068
      %v1077 = vpack.c.b16 %v1069, %v1069
      %v1078 = vpack.c.b16 %v1070, %v1070
      %v1079 = vpack.c.b16 %v1071, %v1071
      %v1080 = vpack.c.b16 %v1072, %v1072
      %vm1089 = vcmask 519168
      %1090 = vst.msk [vmem:[%s170] sm:$0xf] %vm1089, %v1073
      %1091 = vst.msk [vmem:[%s170 + $0x4] sm:$0xf] %vm1089, %v1074
      %1092 = vst.msk [vmem:[%s170 + $0x8] sm:$0xf] %vm1089, %v1075
      %1093 = vst.msk [vmem:[%s170 + $0xc] sm:$0xf] %vm1089, %v1076
      %1094 = vst.msk [vmem:[%s170 + $0x10] sm:$0xf] %vm1089, %v1077
      %1095 = vst.msk [vmem:[%s170 + $0x14] sm:$0xf] %vm1089, %v1078
      %1096 = vst.msk [vmem:[%s170 + $0x18] sm:$0xf] %vm1089, %v1079
      %1097 = vst.msk [vmem:[%s170 + $0x1c] sm:$0xf] %vm1089, %v1080
      %p1098 = scmp.lt.s32.totalorder %s14, 1
      %s1099 = scalar_select %p1098, %s14, 1
      %s1100 = smul.addr %s1099, 8
      %s1101 = smul.addr %s1100, 4
      %s1102 = scalar_lea.vmem %s3, %s1101
      // Predicated region
      $region33: #{vqvae_forward.16} parent=31 // pred_check
        %p1103 = pneg %p100
      $region34: #{vqvae_forward.16} parent=31 // pred_check_branch
        %1105 = sbr.rel (%p1103) target = $region36
      $region35: #{vqvae_forward.16} parent=31 // pred_region
        _
      $region36: #{vqvae_forward.16} parent=31 // pred_fallthru
        _
    $region32: #{vqvae_forward.16} parent=5 // pred_fallthru
      _
    %p1106 = scmp.le.s32.totalorder 2, %s9
    // Predicated region
    $region37: #{vqvae_forward.16} parent=5 // pred_check
      %p1107 = pneg %p1106
    $region38: #{vqvae_forward.16} parent=5 // pred_check_branch
      %1109 = sbr.rel (%p1107) target = $region40
    $region39: #{vqvae_forward.16} parent=5 // pred_region
      %s1110 = ssub.s32 %s9, 2
      // Predicated region
      $region41: #{vqvae_forward.16} parent=39 // pred_check
        %p1111 = pneg %p106
      $region42: #{vqvae_forward.16} parent=39 // pred_check_branch
        %1113 = sbr.rel (%p1111) target = $region44
      $region43: #{vqvae_forward.16} parent=39 // pred_region
        %p1114 = scmp.lt.s32.totalorder %s15, 1
        %s1115 = scalar_select %p1114, %s15, 1
        %s1116 = smul.addr %s1115, 8
        %s1117 = smul.addr %s1116, 4
        %s1118 = scalar_lea.vmem %s3, %s1117
      $region44: #{vqvae_forward.16} parent=39 // pred_fallthru
        _
    $region40: #{vqvae_forward.16} parent=5 // pred_fallthru
      _
  $region6: #{vqvae_forward.16} parent=0 // loop_footer
    %s13 = sadd.s32 1, %s9
  $region7: #{vqvae_forward.16} parent=0 // loop_footer_branch
    %8 = sbr.rel target = $region3
  $region8: #{vqvae_forward.16} parent=0 // loop_exit
    _

// kernel: vqvae_forward.17
$region0: #{vqvae_forward.17}
  #allocation0 [shape = 'u32[]', space=smem, size = 0x4, offset = 0x4, fixed_abs, tag = 'smem constant byte address 0x4 - core index']
  #allocation1 [shape = 'u32[144,128]{1,0:T(1,128)}', space=vmem, size = 0x12000, scoped, tag = 'internal scratch']
  %s0 = inlined_call_operand.vmem [shape: bf16[2,10,10,64], index: 0, kind: input, shape index: {}]
  %s1 = inlined_call_operand.vmem [shape: bf16[576,64], index: 1, kind: input, shape index: {}]
  %s2 = inlined_call_operand.vmem [shape: bf16[64,64], index: 2, kind: input, shape index: {}]
  %s3 = inlined_call_operand.vmem [shape: bf16[2,64,64], index: 3, kind: output, shape index: {}]
  %s4 = sld [smem:[#allocation0]]
  $region45: #{vqvae_forward.17} parent=0
    _
  %s6 = ssub.s32 1, %s4
  %s7 = scalar_select 0, %s6, %s4
  loop: start=0, step=1, limit=4
  $region2: #{vqvae_forward.17} parent=0 // loop_pre_header
    _
  $region3: #{vqvae_forward.17} parent=0 // loop_header
    %s9 = sphi 0, %s13
    %p10 = scmp.ge.s32.totalorder %s9, 4
    %s19 = sphi 0, %s21
    %s22 = sphi 0, %s19
    %s23 = sphi 0, %s22
    %s39 = sphi 0, %s23
    %s43 = sphi 0, %s43
    %s45 = sphi 0, %s43
    %s46 = sphi 0, %s45
    %s60 = sphi 0, %s46
    %s64 = sphi 0, %s64
    %s66 = sphi 0, %s64
    %s67 = sphi 0, %s66
    %s81 = sphi 0, %s67
    %s87 = sphi 0, %s89
    %s90 = sphi 0, %s87
    %s91 = sphi 0, %s90
    %s107 = sphi 0, %s91
  $region4: #{vqvae_forward.17} parent=0 // loop_header_branch
    %12 = sbr.rel (%p10) target = $region8
  $region5: #{vqvae_forward.17} parent=0 // loop_body
    %s14 = ssub.s32 %s9, 1
    %s15 = ssub.s32 %s9, 2
    %s16 = sadd.s32 %s9, 1
    %s17 = ssub.s32 %s9, %s16
    %p18 = scmp.eq.s32.totalorder %s17, 0
    %s20 = sadd.s32 %s19, 1
    %s21 = scalar_select %p18, %s19, %s20
    %p24 = pneg %p18
    %p25 = scmp.eq.s32.totalorder %s9, 1
    %p26 = por %p24, %p25
    %p27 = scmp.ne.s32.totalorder %s19, %s22
    %p28 = scmp.eq.s32.totalorder %s9, 0
    %p29 = por %p27, %p28
    %p30 = scmp.ne.s32.totalorder %s19, %s22
    %p31 = scmp.eq.s32.totalorder %s14, 1
    %p32 = por %p30, %p31
    %p33 = scmp.ne.s32.totalorder %s22, %s23
    %p34 = scmp.eq.s32.totalorder %s14, 0
    %p35 = por %p33, %p34
    %p36 = scmp.ne.s32.totalorder %s22, %s23
    %p37 = scmp.eq.s32.totalorder %s15, 1
    %p38 = por %p36, %p37
    %p40 = scmp.ne.s32.totalorder %s23, %s39
    %p41 = scmp.eq.s32.totalorder %s15, 0
    %p42 = por %p40, %p41
    %s44 = sadd.s32 %s43, 1
    %p47 = scmp.eq.s32.totalorder %s9, 1
    %p48 = scmp.ne.s32.totalorder %s43, %s45
    %p49 = scmp.eq.s32.totalorder %s9, 0
    %p50 = por %p48, %p49
    %p51 = scmp.ne.s32.totalorder %s43, %s45
    %p52 = scmp.eq.s32.totalorder %s14, 1
    %p53 = por %p51, %p52
    %p54 = scmp.ne.s32.totalorder %s45, %s46
    %p55 = scmp.eq.s32.totalorder %s14, 0
    %p56 = por %p54, %p55
    %p57 = scmp.ne.s32.totalorder %s45, %s46
    %p58 = scmp.eq.s32.totalorder %s15, 1
    %p59 = por %p57, %p58
    %p61 = scmp.ne.s32.totalorder %s46, %s60
    %p62 = scmp.eq.s32.totalorder %s15, 0
    %p63 = por %p61, %p62
    %s65 = sadd.s32 %s64, 1
    %p68 = scmp.eq.s32.totalorder %s9, 1
    %p69 = scmp.ne.s32.totalorder %s64, %s66
    %p70 = scmp.eq.s32.totalorder %s9, 0
    %p71 = por %p69, %p70
    %p72 = scmp.ne.s32.totalorder %s64, %s66
    %p73 = scmp.eq.s32.totalorder %s14, 1
    %p74 = por %p72, %p73
    %p75 = scmp.ne.s32.totalorder %s66, %s67
    %p76 = scmp.eq.s32.totalorder %s14, 0
    %p77 = por %p75, %p76
    %p78 = scmp.ne.s32.totalorder %s66, %s67
    %p79 = scmp.eq.s32.totalorder %s15, 1
    %p80 = por %p78, %p79
    %p82 = scmp.ne.s32.totalorder %s67, %s81
    %p83 = scmp.eq.s32.totalorder %s15, 0
    %p84 = por %p82, %p83
    %s85 = ssub.s32 %s9, %s16
    %p86 = scmp.eq.s32.totalorder %s85, 0
    %s88 = sadd.s32 %s87, 1
    %s89 = scalar_select %p86, %s87, %s88
    %p92 = pneg %p86
    %p93 = scmp.eq.s32.totalorder %s9, 1
    %p94 = por %p92, %p93
    %p95 = scmp.ne.s32.totalorder %s87, %s90
    %p96 = scmp.eq.s32.totalorder %s9, 0
    %p97 = por %p95, %p96
    %p98 = scmp.ne.s32.totalorder %s87, %s90
    %p99 = scmp.eq.s32.totalorder %s14, 1
    %p100 = por %p98, %p99
    %p101 = scmp.ne.s32.totalorder %s90, %s91
    %p102 = scmp.eq.s32.totalorder %s14, 0
    %p103 = por %p101, %p102
    %p104 = scmp.ne.s32.totalorder %s90, %s91
    %p105 = scmp.eq.s32.totalorder %s15, 1
    %p106 = por %p104, %p105
    %p108 = scmp.ne.s32.totalorder %s91, %s107
    %p109 = scmp.eq.s32.totalorder %s15, 0
    %p110 = por %p108, %p109
    %p111 = scmp.le.s32.totalorder 1, %s9
    %p112 = scmp.lt.s32.totalorder %s9, 3
    %p113 = pnand %p111, %p112
    %p114 = pneg %p113
    // Predicated region
    $region9: #{vqvae_forward.17} parent=5 // pred_check
      _
    $region10: #{vqvae_forward.17} parent=5 // pred_check_branch
      %116 = sbr.rel (%p113) target = $region12
    $region11: #{vqvae_forward.17} parent=5 // pred_region
      %s117 = ssub.s32 %s9, 1
      // Predicated region
      $region13: #{vqvae_forward.17} parent=11 // pred_check
        %p118 = pneg %p56
      $region14: #{vqvae_forward.17} parent=11 // pred_check_branch
        %120 = sbr.rel (%p118) target = $region16
      $region15: #{vqvae_forward.17} parent=11 // pred_region
        _
      $region16: #{vqvae_forward.17} parent=11 // pred_fallthru
        _
      // Predicated region
      $region17: #{vqvae_forward.17} parent=11 // pred_check
        %p121 = pneg %p77
      $region18: #{vqvae_forward.17} parent=11 // pred_check_branch
        %123 = sbr.rel (%p121) target = $region20
      $region19: #{vqvae_forward.17} parent=11 // pred_region
        _
      $region20: #{vqvae_forward.17} parent=11 // pred_fallthru
        _
    $region12: #{vqvae_forward.17} parent=5 // pred_fallthru
      _
    %p124 = scmp.lt.s32.totalorder %s9, 2
    // Predicated region
    $region21: #{vqvae_forward.17} parent=5 // pred_check
      %p125 = pneg %p124
    $region22: #{vqvae_forward.17} parent=5 // pred_check_branch
      %127 = sbr.rel (%p125) target = $region24
    $region23: #{vqvae_forward.17} parent=5 // pred_region
      // Predicated region
      $region25: #{vqvae_forward.17} parent=23 // pred_check
        %p128 = pneg %p29
      $region26: #{vqvae_forward.17} parent=23 // pred_check_branch
        %130 = sbr.rel (%p128) target = $region28
      $region27: #{vqvae_forward.17} parent=23 // pred_region
        %p131 = scmp.lt.s32.totalorder %s9, 1
        %s132 = scalar_select %p131, %s9, 1
        %s133 = smul.addr %s132, 20
        %s134 = smul.addr %s133, 4
        %s135 = scalar_lea.vmem %s0, %s134
      $region28: #{vqvae_forward.17} parent=23 // pred_fallthru
        _
    $region24: #{vqvae_forward.17} parent=5 // pred_fallthru
      _
    %p136 = scmp.le.s32.totalorder 1, %s9
    %p137 = scmp.lt.s32.totalorder %s9, 3
    %p138 = pnand %p136, %p137
    %p139 = pneg %p138
    // Predicated region
    $region29: #{vqvae_forward.17} parent=5 // pred_check
      _
    $region30: #{vqvae_forward.17} parent=5 // pred_check_branch
      %141 = sbr.rel (%p138) target = $region32
    $region31: #{vqvae_forward.17} parent=5 // pred_region
      %s142 = ssub.s32 %s9, 1
      %p143 = scmp.lt.s32.totalorder %s14, 1
      %s144 = scalar_select %p143, %s14, 1
      %s145 = smul.addr %s144, 20
      %s146 = smul.addr %s145, 4
      %s147 = scalar_lea.vmem %s0, %s146
      %p148 = pneg %p35
      %p149 = pneg %p32
      %p150 = pneg %p56
      %p151 = pneg %p53
      %p152 = pneg %p77
      %p153 = pneg %p74
      %p154 = pneg %p103
      %p155 = pneg %p100
      %p156 = scmp.lt.s32.totalorder %s14, 1
      %s157 = scalar_select %p156, %s14, 1
      %s158 = smul.addr %s157, 8
      %s159 = smul.addr %s158, 4
      %s160 = scalar_lea.vmem %s3, %s159
      %p161 = scmp.lt.s32.totalorder %s14, 1
      %s162 = scalar_select %p161, %s14, 1
      %s163 = smul.addr %s162, 20
      %s164 = smul.addr %s163, 4
      %s165 = scalar_lea.vmem %s0, %s164
      %p166 = scmp.lt.s32.totalorder %s14, 1
      %s167 = scalar_select %p166, %s14, 1
      %s168 = smul.addr %s167, 8
      %s169 = smul.addr %s168, 4
      %s170 = scalar_lea.vmem %s3, %s169
      %v172 = vld [vmem:[%s165] sm:$0xf]
      %v173 = vld [vmem:[%s165 + $0x4] sm:$0x1]
      %v174 = vld [vmem:[%s165 + $0x8] sm:$0xf]
      %v175 = vld [vmem:[%s165 + $0xc] sm:$0x1]
      %v176 = vld [vmem:[%s165 + $0x10] sm:$0xf]
      %v177 = vld [vmem:[%s165 + $0x14] sm:$0x1]
      %v178 = vld [vmem:[%s165 + $0x18] sm:$0xf]
      %v179 = vld [vmem:[%s165 + $0x1c] sm:$0x1]
      %v180 = vld [vmem:[%s165 + $0x20] sm:$0xf]
      %v181 = vld [vmem:[%s165 + $0x24] sm:$0x1]
      %v182 = vld [vmem:[%s165 + $0x28] sm:$0xf]
      %v183 = vld [vmem:[%s165 + $0x2c] sm:$0x1]
      %v184 = vld [vmem:[%s165 + $0x30] sm:$0xf]
      %v185 = vld [vmem:[%s165 + $0x34] sm:$0x1]
      %v186 = vld [vmem:[%s165 + $0x38] sm:$0xf]
      %v187 = vld [vmem:[%s165 + $0x3c] sm:$0x1]
      %v188 = vld [vmem:[%s165 + $0x40] sm:$0xf]
      %v189 = vld [vmem:[%s165 + $0x44] sm:$0x1]
      %v190 = vld [vmem:[%s165 + $0x48] sm:$0xf]
      %v191 = vld [vmem:[%s165 + $0x4c] sm:$0x1]
      %vm192 = vsmask.f32 3328
      %vm193 = vsmask.f32 7440
      %vm194 = vmor %vm192, %vm193
      %v196 = vshrl.u32 %v172, 16
      %v198 = vrot.slane %v196, 4
      %v199 = vshll.u32 %v172, 16
      %v201 = vrot.slane %v199, 5
      %v202 = vor.u32 %v198, %v201
      %v203 = vrot.slane %v202, 4
      %v205 = vshll.u32 %v173, 16
      %v207 = vrot.slane %v205, 5
      %v208 = vsel %vm194, %v203, %v207
      %v210 = vshrl.u32 %v174, 16
      %v212 = vrot.slane %v210, 4
      %v213 = vshll.u32 %v174, 16
      %v215 = vrot.slane %v213, 5
      %v216 = vor.u32 %v212, %v215
      %v217 = vrot.slane %v216, 4
      %v219 = vshll.u32 %v175, 16
      %v221 = vrot.slane %v219, 5
      %v222 = vsel %vm194, %v217, %v221
      %v224 = vshrl.u32 %v176, 16
      %v226 = vrot.slane %v224, 4
      %v227 = vshll.u32 %v176, 16
      %v229 = vrot.slane %v227, 5
      %v230 = vor.u32 %v226, %v229
      %v231 = vrot.slane %v230, 4
      %v233 = vshll.u32 %v177, 16
      %v235 = vrot.slane %v233, 5
      %v236 = vsel %vm194, %v231, %v235
      %v238 = vshrl.u32 %v178, 16
      %v240 = vrot.slane %v238, 4
      %v241 = vshll.u32 %v178, 16
      %v243 = vrot.slane %v241, 5
      %v244 = vor.u32 %v240, %v243
      %v245 = vrot.slane %v244, 4
      %v247 = vshll.u32 %v179, 16
      %v249 = vrot.slane %v247, 5
      %v250 = vsel %vm194, %v245, %v249
      %v252 = vshrl.u32 %v180, 16
      %v254 = vrot.slane %v252, 4
      %v255 = vshll.u32 %v180, 16
      %v257 = vrot.slane %v255, 5
      %v258 = vor.u32 %v254, %v257
      %v259 = vrot.slane %v258, 4
      %v261 = vshll.u32 %v181, 16
      %v263 = vrot.slane %v261, 5
      %v264 = vsel %vm194, %v259, %v263
      %v266 = vshrl.u32 %v182, 16
      %v268 = vrot.slane %v266, 4
      %v269 = vshll.u32 %v182, 16
      %v271 = vrot.slane %v269, 5
      %v272 = vor.u32 %v268, %v271
      %v273 = vrot.slane %v272, 4
      %v275 = vshll.u32 %v183, 16
      %v277 = vrot.slane %v275, 5
      %v278 = vsel %vm194, %v273, %v277
      %v280 = vshrl.u32 %v184, 16
      %v282 = vrot.slane %v280, 4
      %v283 = vshll.u32 %v184, 16
      %v285 = vrot.slane %v283, 5
      %v286 = vor.u32 %v282, %v285
      %v287 = vrot.slane %v286, 4
      %v289 = vshll.u32 %v185, 16
      %v291 = vrot.slane %v289, 5
      %v292 = vsel %vm194, %v287, %v291
      %v294 = vshrl.u32 %v186, 16
      %v296 = vrot.slane %v294, 4
      %v297 = vshll.u32 %v186, 16
      %v299 = vrot.slane %v297, 5
      %v300 = vor.u32 %v296, %v299
      %v301 = vrot.slane %v300, 4
      %v303 = vshll.u32 %v187, 16
      %v305 = vrot.slane %v303, 5
      %v306 = vsel %vm194, %v301, %v305
      %vm323 = vcmask 1042432
      %vm324 = vcmask 1046532
      %vm325 = vmor %vm323, %vm324
      %v326 = vrot.slane %v172, 5
      %v327 = vrot.slane %v326, 4
      %v328 = vrot.slane %v173, 5
      %v329 = vsel %vm325, %v327, %v328
      %v330 = vrot.slane %v174, 5
      %v331 = vrot.slane %v330, 4
      %v332 = vrot.slane %v175, 5
      %v333 = vsel %vm325, %v331, %v332
      %v334 = vrot.slane %v176, 5
      %v335 = vrot.slane %v334, 4
      %v336 = vrot.slane %v177, 5
      %v337 = vsel %vm325, %v335, %v336
      %v338 = vrot.slane %v178, 5
      %v339 = vrot.slane %v338, 4
      %v340 = vrot.slane %v179, 5
      %v341 = vsel %vm325, %v339, %v340
      %v342 = vrot.slane %v180, 5
      %v343 = vrot.slane %v342, 4
      %v344 = vrot.slane %v181, 5
      %v345 = vsel %vm325, %v343, %v344
      %v346 = vrot.slane %v182, 5
      %v347 = vrot.slane %v346, 4
      %v348 = vrot.slane %v183, 5
      %v349 = vsel %vm325, %v347, %v348
      %v350 = vrot.slane %v184, 5
      %v351 = vrot.slane %v350, 4
      %v352 = vrot.slane %v185, 5
      %v353 = vsel %vm325, %v351, %v352
      %v354 = vrot.slane %v186, 5
      %v355 = vrot.slane %v354, 4
      %v356 = vrot.slane %v187, 5
      %v357 = vsel %vm325, %v355, %v356
      %v359 = vshrl.u32 %v188, 16
      %v361 = vrot.slane %v359, 4
      %v362 = vshll.u32 %v188, 16
      %v364 = vrot.slane %v362, 5
      %v365 = vor.u32 %v361, %v364
      %v366 = vrot.slane %v365, 4
      %v368 = vshll.u32 %v189, 16
      %v370 = vrot.slane %v368, 5
      %v371 = vsel %vm194, %v366, %v370
      %v382 = vrot.slane %v188, 5
      %v383 = vrot.slane %v382, 4
      %v384 = vrot.slane %v189, 5
      %v385 = vsel %vm325, %v383, %v384
      %v387 = vshrl.u32 %v190, 16
      %v389 = vrot.slane %v387, 4
      %v390 = vshll.u32 %v190, 16
      %v392 = vrot.slane %v390, 5
      %v393 = vor.u32 %v389, %v392
      %v394 = vrot.slane %v393, 4
      %v396 = vshll.u32 %v191, 16
      %v398 = vrot.slane %v396, 5
      %v399 = vsel %vm194, %v394, %v398
      %v402 = vrot.slane %v190, 5
      %v403 = vrot.slane %v402, 4
      %v404 = vrot.slane %v191, 5
      %v405 = vsel %vm325, %v403, %v404
      %v406 = vunpack.c.l.b16 %v172
      %v407 = vunpack.c.l.b16 %v174
      %v408 = vunpack.c.l.b16 %v176
      %v409 = vunpack.c.l.b16 %v178
      %v410 = vunpack.c.l.b16 %v180
      %v411 = vunpack.c.l.b16 %v182
      %v412 = vunpack.c.l.b16 %v184
      %v413 = vunpack.c.l.b16 %v186
      %v414 = vpack.c.b16 %v407, %v406
      %v415 = vpack.c.b16 %v409, %v408
      %v416 = vpack.c.b16 %v411, %v410
      %v417 = vpack.c.b16 %v413, %v412
      %v418 = vunpack.c.l.b16 %v208
      %v419 = vunpack.c.l.b16 %v222
      %v420 = vunpack.c.l.b16 %v236
      %v421 = vunpack.c.l.b16 %v250
      %v422 = vunpack.c.l.b16 %v264
      %v423 = vunpack.c.l.b16 %v278
      %v424 = vunpack.c.l.b16 %v292
      %v425 = vunpack.c.l.b16 %v306
      %v426 = vpack.c.b16 %v419, %v418
      %v427 = vpack.c.b16 %v421, %v420
      %v428 = vpack.c.b16 %v423, %v422
      %v429 = vpack.c.b16 %v425, %v424
      %430 = vrot.lane.b32.xlu0 %v426, 64
      %v431 = vpop.permute.xlu0 %430
      %432 = vrot.lane.b32.xlu0 %v427, 64
      %v433 = vpop.permute.xlu0 %432
      %434 = vrot.lane.b32.xlu0 %v428, 64
      %v435 = vpop.permute.xlu0 %434
      %436 = vrot.lane.b32.xlu0 %v429, 64
      %v437 = vpop.permute.xlu0 %436
      %v438 = vunpack.c.l.b16 %v329
      %v439 = vunpack.c.l.b16 %v333
      %v440 = vunpack.c.l.b16 %v337
      %v441 = vunpack.c.l.b16 %v341
      %v442 = vunpack.c.l.b16 %v345
      %v443 = vunpack.c.l.b16 %v349
      %v444 = vunpack.c.l.b16 %v353
      %v445 = vunpack.c.l.b16 %v357
      %v446 = vpack.c.b16 %v439, %v438
      %v447 = vpack.c.b16 %v441, %v440
      %v448 = vpack.c.b16 %v443, %v442
      %v449 = vpack.c.b16 %v445, %v444
      %v450 = vunpack.c.l.b16 %v188
      %v451 = vpack.c.b16 %v408, %v407
      %v452 = vpack.c.b16 %v410, %v409
      %v453 = vpack.c.b16 %v412, %v411
      %v454 = vpack.c.b16 %v450, %v413
      %455 = vrot.lane.b32.xlu0 %v451, 64
      %v456 = vpop.permute.xlu0 %455
      %457 = vrot.lane.b32.xlu0 %v452, 64
      %v458 = vpop.permute.xlu0 %457
      %459 = vrot.lane.b32.xlu0 %v453, 64
      %v460 = vpop.permute.xlu0 %459
      %461 = vrot.lane.b32.xlu0 %v454, 64
      %v462 = vpop.permute.xlu0 %461
      %v463 = vunpack.c.l.b16 %v371
      %v464 = vpack.c.b16 %v420, %v419
      %v465 = vpack.c.b16 %v422, %v421
      %v466 = vpack.c.b16 %v424, %v423
      %v467 = vpack.c.b16 %v463, %v425
      %v468 = vunpack.c.l.b16 %v385
      %v469 = vpack.c.b16 %v440, %v439
      %v470 = vpack.c.b16 %v442, %v441
      %v471 = vpack.c.b16 %v444, %v443
      %v472 = vpack.c.b16 %v468, %v445
      %473 = vrot.lane.b32.xlu0 %v469, 64
      %v474 = vpop.permute.xlu0 %473
      %475 = vrot.lane.b32.xlu0 %v470, 64
      %v476 = vpop.permute.xlu0 %475
      %477 = vrot.lane.b32.xlu0 %v471, 64
      %v478 = vpop.permute.xlu0 %477
      %479 = vrot.lane.b32.xlu0 %v472, 64
      %v480 = vpop.permute.xlu0 %479
      %v481 = vunpack.c.l.b16 %v190
      %v482 = vpack.c.b16 %v481, %v450
      %v483 = vunpack.c.l.b16 %v399
      %v484 = vpack.c.b16 %v483, %v463
      %485 = vrot.lane.b32.xlu0 %v484, 64
      %v486 = vpop.permute.xlu0 %485
      %v487 = vunpack.c.l.b16 %v405
      %v488 = vpack.c.b16 %v487, %v468
      %vm489 = vcmask 523264
      %v492 = vsel %vm489, %v414, %v431
      %v496 = vsel %vm489, %v415, %v433
      %v500 = vsel %vm489, %v416, %v435
      %v504 = vsel %vm489, %v417, %v437
      %v508 = vsel %vm489, %v446, %v456
      %v512 = vsel %vm489, %v447, %v458
      %v516 = vsel %vm489, %v448, %v460
      %v520 = vsel %vm489, %v449, %v462
      %v524 = vsel %vm489, %v464, %v474
      %v528 = vsel %vm489, %v465, %v476
      %v532 = vsel %vm489, %v466, %v478
      %v536 = vsel %vm489, %v467, %v480
      %v540 = vsel %vm489, %v482, %v486
      %v542 = vld [vmem:[%s1] sm:$0xf]
      %v543 = vld [vmem:[%s1 + $0x4] sm:$0xf]
      %v544 = vld [vmem:[%s1 + $0x8] sm:$0xf]
      %v545 = vld [vmem:[%s1 + $0xc] sm:$0xf]
      %v546 = vld [vmem:[%s1 + $0x10] sm:$0xf]
      %v547 = vld [vmem:[%s1 + $0x14] sm:$0xf]
      %v548 = vld [vmem:[%s1 + $0x18] sm:$0xf]
      %v549 = vld [vmem:[%s1 + $0x1c] sm:$0xf]
      %v550 = vld [vmem:[%s1 + $0x20] sm:$0xf]
      %v551 = vld [vmem:[%s1 + $0x24] sm:$0xf]
      %v552 = vld [vmem:[%s1 + $0x28] sm:$0xf]
      %v553 = vld [vmem:[%s1 + $0x2c] sm:$0xf]
      %v554 = vld [vmem:[%s1 + $0x30] sm:$0xf]
      %v555 = vld [vmem:[%s1 + $0x34] sm:$0xf]
      %v556 = vld [vmem:[%s1 + $0x38] sm:$0xf]
      %v557 = vld [vmem:[%s1 + $0x3c] sm:$0xf]
      %v558 = vld [vmem:[%s1 + $0x40] sm:$0xf]
      %v559 = vld [vmem:[%s1 + $0x44] sm:$0xf]
      %v560 = vld [vmem:[%s1 + $0x48] sm:$0xf]
      %v561 = vld [vmem:[%s1 + $0x4c] sm:$0xf]
      %v562 = vld [vmem:[%s1 + $0x50] sm:$0xf]
      %v563 = vld [vmem:[%s1 + $0x54] sm:$0xf]
      %v564 = vld [vmem:[%s1 + $0x58] sm:$0xf]
      %v565 = vld [vmem:[%s1 + $0x5c] sm:$0xf]
      %v566 = vld [vmem:[%s1 + $0x60] sm:$0xf]
      %v567 = vld [vmem:[%s1 + $0x64] sm:$0xf]
      %v568 = vld [vmem:[%s1 + $0x68] sm:$0xf]
      %v569 = vld [vmem:[%s1 + $0x6c] sm:$0xf]
      %v570 = vld [vmem:[%s1 + $0x70] sm:$0xf]
      %v571 = vld [vmem:[%s1 + $0x74] sm:$0xf]
      %v572 = vld [vmem:[%s1 + $0x78] sm:$0xf]
      %v573 = vld [vmem:[%s1 + $0x7c] sm:$0xf]
      %v574 = vld [vmem:[%s1 + $0x80] sm:$0xf]
      %v575 = vld [vmem:[%s1 + $0x84] sm:$0xf]
      %v576 = vld [vmem:[%s1 + $0x88] sm:$0xf]
      %v577 = vld [vmem:[%s1 + $0x8c] sm:$0xf]
      %v578 = vld [vmem:[%s1 + $0x90] sm:$0xf]
      %v579 = vld [vmem:[%s1 + $0x94] sm:$0xf]
      %v580 = vld [vmem:[%s1 + $0x98] sm:$0xf]
      %v581 = vld [vmem:[%s1 + $0x9c] sm:$0xf]
      %v582 = vld [vmem:[%s1 + $0xa0] sm:$0xf]
      %v583 = vld [vmem:[%s1 + $0xa4] sm:$0xf]
      %v584 = vld [vmem:[%s1 + $0xa8] sm:$0xf]
      %v585 = vld [vmem:[%s1 + $0xac] sm:$0xf]
      %v586 = vld [vmem:[%s1 + $0xb0] sm:$0xf]
      %v587 = vld [vmem:[%s1 + $0xb4] sm:$0xf]
      %v588 = vld [vmem:[%s1 + $0xb8] sm:$0xf]
      %v589 = vld [vmem:[%s1 + $0xbc] sm:$0xf]
      %v590 = vld [vmem:[%s1 + $0xc0] sm:$0xf]
      %v591 = vld [vmem:[%s1 + $0xc4] sm:$0xf]
      %v592 = vld [vmem:[%s1 + $0xc8] sm:$0xf]
      %v593 = vld [vmem:[%s1 + $0xcc] sm:$0xf]
      %v594 = vld [vmem:[%s1 + $0xd0] sm:$0xf]
      %v595 = vld [vmem:[%s1 + $0xd4] sm:$0xf]
      %v596 = vld [vmem:[%s1 + $0xd8] sm:$0xf]
      %v597 = vld [vmem:[%s1 + $0xdc] sm:$0xf]
      %v598 = vld [vmem:[%s1 + $0xe0] sm:$0xf]
      %v599 = vld [vmem:[%s1 + $0xe4] sm:$0xf]
      %v600 = vld [vmem:[%s1 + $0xe8] sm:$0xf]
      %v601 = vld [vmem:[%s1 + $0xec] sm:$0xf]
      %v602 = vld [vmem:[%s1 + $0xf0] sm:$0xf]
      %v603 = vld [vmem:[%s1 + $0xf4] sm:$0xf]
      %v604 = vld [vmem:[%s1 + $0xf8] sm:$0xf]
      %v605 = vld [vmem:[%s1 + $0xfc] sm:$0xf]
      %v606 = vld [vmem:[%s1 + $0x100] sm:$0xf]
      %v607 = vld [vmem:[%s1 + $0x104] sm:$0xf]
      %v608 = vld [vmem:[%s1 + $0x108] sm:$0xf]
      %v609 = vld [vmem:[%s1 + $0x10c] sm:$0xf]
      %v610 = vld [vmem:[%s1 + $0x110] sm:$0xf]
      %v611 = vld [vmem:[%s1 + $0x114] sm:$0xf]
      %v612 = vld [vmem:[%s1 + $0x118] sm:$0xf]
      %v613 = vld [vmem:[%s1 + $0x11c] sm:$0xf]
      %v686 = vunpack.c.l.b16 %v542
      %v687 = vunpack.c.l.b16 %v543
      %v688 = vunpack.c.l.b16 %v544
      %v689 = vunpack.c.l.b16 %v545
      %v690 = vunpack.c.l.b16 %v546
      %v691 = vunpack.c.l.b16 %v547
      %v692 = vunpack.c.l.b16 %v548
      %v693 = vunpack.c.l.b16 %v549
      %v694 = vunpack.c.l.b16 %v550
      %v695 = vunpack.c.l.b16 %v551
      %v696 = vunpack.c.l.b16 %v552
      %v697 = vunpack.c.l.b16 %v553
      %v698 = vunpack.c.l.b16 %v554
      %v699 = vunpack.c.l.b16 %v555
      %v700 = vunpack.c.l.b16 %v556
      %v701 = vunpack.c.l.b16 %v557
      %v702 = vunpack.c.l.b16 %v558
      %v703 = vunpack.c.l.b16 %v559
      %v704 = vunpack.c.l.b16 %v560
      %v705 = vunpack.c.l.b16 %v561
      %v706 = vunpack.c.l.b16 %v562
      %v707 = vunpack.c.l.b16 %v563
      %v708 = vunpack.c.l.b16 %v564
      %v709 = vunpack.c.l.b16 %v565
      %v710 = vunpack.c.l.b16 %v566
      %v711 = vunpack.c.l.b16 %v567
      %v712 = vunpack.c.l.b16 %v568
      %v713 = vunpack.c.l.b16 %v569
      %v714 = vunpack.c.l.b16 %v570
      %v715 = vunpack.c.l.b16 %v571
      %v716 = vunpack.c.l.b16 %v572
      %v717 = vunpack.c.l.b16 %v573
      %v718 = vunpack.c.l.b16 %v574
      %v719 = vunpack.c.l.b16 %v575
      %v720 = vunpack.c.l.b16 %v576
      %v721 = vunpack.c.l.b16 %v577
      %v722 = vunpack.c.l.b16 %v578
      %v723 = vunpack.c.l.b16 %v579
      %v724 = vunpack.c.l.b16 %v580
      %v725 = vunpack.c.l.b16 %v581
      %v726 = vunpack.c.l.b16 %v582
      %v727 = vunpack.c.l.b16 %v583
      %v728 = vunpack.c.l.b16 %v584
      %v729 = vunpack.c.l.b16 %v585
      %v730 = vunpack.c.l.b16 %v586
      %v731 = vunpack.c.l.b16 %v587
      %v732 = vunpack.c.l.b16 %v588
      %v733 = vunpack.c.l.b16 %v589
      %v734 = vunpack.c.l.b16 %v590
      %v735 = vunpack.c.l.b16 %v591
      %v736 = vunpack.c.l.b16 %v592
      %v737 = vunpack.c.l.b16 %v593
      %v738 = vunpack.c.l.b16 %v594
      %v739 = vunpack.c.l.b16 %v595
      %v740 = vunpack.c.l.b16 %v596
      %v741 = vunpack.c.l.b16 %v597
      %v742 = vunpack.c.l.b16 %v598
      %v743 = vunpack.c.l.b16 %v599
      %v744 = vunpack.c.l.b16 %v600
      %v745 = vunpack.c.l.b16 %v601
      %v746 = vunpack.c.l.b16 %v602
      %v747 = vunpack.c.l.b16 %v603
      %v748 = vunpack.c.l.b16 %v604
      %v749 = vunpack.c.l.b16 %v605
      %v750 = vunpack.c.l.b16 %v606
      %v751 = vunpack.c.l.b16 %v607
      %v752 = vunpack.c.l.b16 %v608
      %v753 = vunpack.c.l.b16 %v609
      %v754 = vunpack.c.l.b16 %v610
      %v755 = vunpack.c.l.b16 %v611
      %v756 = vunpack.c.l.b16 %v612
      %v757 = vunpack.c.l.b16 %v613
      %v758 = vpack.c.b16 %v687, %v686
      %v759 = vpack.c.b16 %v689, %v688
      %v760 = vpack.c.b16 %v691, %v690
      %v761 = vpack.c.b16 %v693, %v692
      %v762 = vpack.c.b16 %v695, %v694
      %v763 = vpack.c.b16 %v697, %v696
      %v764 = vpack.c.b16 %v699, %v698
      %v765 = vpack.c.b16 %v701, %v700
      %v766 = vpack.c.b16 %v703, %v702
      %v767 = vpack.c.b16 %v705, %v704
      %v768 = vpack.c.b16 %v707, %v706
      %v769 = vpack.c.b16 %v709, %v708
      %v770 = vpack.c.b16 %v711, %v710
      %v771 = vpack.c.b16 %v713, %v712
      %v772 = vpack.c.b16 %v715, %v714
      %v773 = vpack.c.b16 %v717, %v716
      %v774 = vpack.c.b16 %v719, %v718
      %v775 = vpack.c.b16 %v721, %v720
      %v776 = vpack.c.b16 %v723, %v722
      %v777 = vpack.c.b16 %v725, %v724
      %v778 = vpack.c.b16 %v727, %v726
      %v779 = vpack.c.b16 %v729, %v728
      %v780 = vpack.c.b16 %v731, %v730
      %v781 = vpack.c.b16 %v733, %v732
      %v782 = vpack.c.b16 %v735, %v734
      %v783 = vpack.c.b16 %v737, %v736
      %v784 = vpack.c.b16 %v739, %v738
      %v785 = vpack.c.b16 %v741, %v740
      %v786 = vpack.c.b16 %v743, %v742
      %v787 = vpack.c.b16 %v745, %v744
      %v788 = vpack.c.b16 %v747, %v746
      %v789 = vpack.c.b16 %v749, %v748
      %v790 = vpack.c.b16 %v751, %v750
      %v791 = vpack.c.b16 %v753, %v752
      %v792 = vpack.c.b16 %v755, %v754
      %v793 = vpack.c.b16 %v757, %v756
      %v830 = vsel %vm489, %v447, 0
      %v832 = vsel %vm489, %v448, 0
      %v834 = vsel %vm489, %v449, 0
      %v837 = vsel %vm489, %v488, 0
      %839 = vmatprep.subr.bf16.mxu0 0
      %840 = vmatpush1.bf16.msra.mxu0 %v758
      %841 = vmatprep.subr.bf16.mxu0 0
      %842 = vmatpush1.bf16.msra.mxu0 %v759
      %843 = vmatprep.subr.bf16.mxu0 0
      %844 = vmatpush1.bf16.msra.mxu0 %v760
      %845 = vmatprep.subr.bf16.mxu0 0
      %846 = vmatpush1.bf16.msra.mxu0 %v761
      %847 = vmatprep.subr.bf16.mxu0 0
      %848 = vmatpush1.bf16.msra.mxu0 %v762
      %849 = vmatprep.subr.bf16.mxu0 0
      %850 = vmatpush1.bf16.msra.mxu0 %v763
      %851 = vmatprep.subr.bf16.mxu0 0
      %852 = vmatpush1.bf16.msra.mxu0 %v764
      %853 = vmatprep.subr.bf16.mxu0 0
      %854 = vmatpush1.bf16.msra.mxu0 %v765
      %855 = vmatprep.subr.bf16.mxu0 0
      %856 = vmatpush1.bf16.msra.mxu0 %v766
      %857 = vmatprep.subr.bf16.mxu0 0
      %858 = vmatpush1.bf16.msra.mxu0 %v767
      %859 = vmatprep.subr.bf16.mxu0 0
      %860 = vmatpush1.bf16.msra.mxu0 %v768
      %861 = vmatprep.subr.bf16.mxu0 0
      %862 = vmatpush1.bf16.msra.mxu0 %v769
      %863 = vmatprep.subr.bf16.mxu0 0
      %864 = vmatpush1.bf16.msra.mxu0 %v770
      %865 = vmatprep.subr.bf16.mxu0 0
      %866 = vmatpush1.bf16.msra.mxu0 %v771
      %867 = vmatprep.subr.bf16.mxu0 0
      %868 = vmatpush1.bf16.msra.mxu0 %v772
      %869 = vmatprep.subr.bf16.mxu0 0
      %870 = vmatpush1.bf16.msra.mxu0 %v773
      %871 = vmatprep.mubr.bf16.mxu0 %v508
      %872 = vmatmul.mubr.bf16.gmra.mrb[0].mxu0 %v492
      %v873 = vpop.f32.mrb[0].mxu0
      %v874 = vadd.f32 0.0, %v873
      %v875 = vpop.f32.mrb[0].mxu0
      %v876 = vpop.f32.mrb[0].mxu0
      %v877 = vadd.f32 0.0, %v876
      %v878 = vpop.f32.mrb[0].mxu0
      %879 = vmatprep.mubr.bf16.mxu0 %v512
      %880 = vmatmul.mubr.bf16.gmra.mrb[0].mxu0 %v496
      %v881 = vpop.f32.mrb[0].mxu0
      %v882 = vadd.f32 0.0, %v881
      %v883 = vpop.f32.mrb[0].mxu0
      %v884 = vpop.f32.mrb[0].mxu0
      %v885 = vadd.f32 0.0, %v884
      %v886 = vpop.f32.mrb[0].mxu0
      %887 = vmatprep.mubr.bf16.mxu0 %v516
      %888 = vmatmul.mubr.bf16.gmra.mrb[0].mxu0 %v500
      %v889 = vpop.f32.mrb[0].mxu0
      %v890 = vadd.f32 0.0, %v889
      %v891 = vpop.f32.mrb[0].mxu0
      %v892 = vpop.f32.mrb[0].mxu0
      %v893 = vadd.f32 0.0, %v892
      %v894 = vpop.f32.mrb[0].mxu0
      %895 = vmatprep.mubr.bf16.mxu0 %v520
      %896 = vmatmul.mubr.bf16.gmra.mrb[0].mxu0 %v504
      %v897 = vpop.f32.mrb[0].mxu0
      %v898 = vadd.f32 0.0, %v897
      %v899 = vpop.f32.mrb[0].mxu0
      %v900 = vpop.f32.mrb[0].mxu0
      %v901 = vadd.f32 0.0, %v900
      %v902 = vpop.f32.mrb[0].mxu0
      %903 = vdwg.mxu0
      %904 = vmatprep.subr.bf16.mxu0 0
      %905 = vmatpush1.bf16.msra.mxu0 %v774
      %906 = vmatprep.subr.bf16.mxu0 0
      %907 = vmatpush1.bf16.msra.mxu0 %v775
      %908 = vmatprep.subr.bf16.mxu0 0
      %909 = vmatpush1.bf16.msra.mxu0 %v776
      %910 = vmatprep.subr.bf16.mxu0 0
      %911 = vmatpush1.bf16.msra.mxu0 %v777
      %912 = vmatprep.subr.bf16.mxu0 0
      %913 = vmatpush1.bf16.msra.mxu0 %v778
      %914 = vmatprep.subr.bf16.mxu0 0
      %915 = vmatpush1.bf16.msra.mxu0 %v779
      %916 = vmatprep.subr.bf16.mxu0 0
      %917 = vmatpush1.bf16.msra.mxu0 %v780
      %918 = vmatprep.subr.bf16.mxu0 0
      %919 = vmatpush1.bf16.msra.mxu0 %v781
      %920 = vmatprep.subr.bf16.mxu0 0
      %921 = vmatpush1.bf16.msra.mxu0 %v782
      %922 = vmatprep.subr.bf16.mxu0 0
      %923 = vmatpush1.bf16.msra.mxu0 %v783
      %924 = vmatprep.subr.bf16.mxu0 0
      %925 = vmatpush1.bf16.msra.mxu0 %v784
      %926 = vmatprep.subr.bf16.mxu0 0
      %927 = vmatpush1.bf16.msra.mxu0 %v785
      %928 = vmatprep.subr.bf16.mxu0 0
      %929 = vmatpush1.bf16.msra.mxu0 %v786
      %930 = vmatprep.subr.bf16.mxu0 0
      %931 = vmatpush1.bf16.msra.mxu0 %v787
      %932 = vmatprep.subr.bf16.mxu0 0
      %933 = vmatpush1.bf16.msra.mxu0 %v788
      %934 = vmatprep.subr.bf16.mxu0 0
      %935 = vmatpush1.bf16.msra.mxu0 %v789
      %936 = vmatprep.mubr.bf16.mxu0 %v496
      %937 = vmatmul.mubr.bf16.gmra.mrb[0].mxu0 %v524
      %v938 = vpop.f32.mrb[0].mxu0
      %v939 = vadd.f32 %v874, %v938
      %v940 = vpop.f32.mrb[0].mxu0
      %v941 = vpop.f32.mrb[0].mxu0
      %v942 = vadd.f32 %v877, %v941
      %v943 = vpop.f32.mrb[0].mxu0
      %944 = vmatprep.mubr.bf16.mxu0 %v500
      %945 = vmatmul.mubr.bf16.gmra.mrb[0].mxu0 %v528
      %v946 = vpop.f32.mrb[0].mxu0
      %v947 = vadd.f32 %v882, %v946
      %v948 = vpop.f32.mrb[0].mxu0
      %v949 = vpop.f32.mrb[0].mxu0
      %v950 = vadd.f32 %v885, %v949
      %v951 = vpop.f32.mrb[0].mxu0
      %952 = vmatprep.mubr.bf16.mxu0 %v504
      %953 = vmatmul.mubr.bf16.gmra.mrb[0].mxu0 %v532
      %v954 = vpop.f32.mrb[0].mxu0
      %v955 = vadd.f32 %v890, %v954
      %v956 = vpop.f32.mrb[0].mxu0
      %v957 = vpop.f32.mrb[0].mxu0
      %v958 = vadd.f32 %v893, %v957
      %v959 = vpop.f32.mrb[0].mxu0
      %960 = vmatprep.mubr.bf16.mxu0 %v540
      %961 = vmatmul.mubr.bf16.gmra.mrb[0].mxu0 %v536
      %v962 = vpop.f32.mrb[0].mxu0
      %v963 = vadd.f32 %v898, %v962
      %v964 = vpop.f32.mrb[0].mxu0
      %v965 = vpop.f32.mrb[0].mxu0
      %v966 = vadd.f32 %v901, %v965
      %v967 = vpop.f32.mrb[0].mxu0
      %968 = vdwg.mxu0
      %969 = vmatprep.subr.bf16.mxu0 0
      %970 = vmatpush1.bf16.msra.mxu0 %v790
      %971 = vmatprep.subr.bf16.mxu0 0
      %972 = vmatpush1.bf16.msra.mxu0 %v791
      %973 = vmatprep.subr.bf16.mxu0 0
      %974 = vmatpush1.bf16.msra.mxu0 %v792
      %975 = vmatprep.subr.bf16.mxu0 0
      %976 = vmatpush1.bf16.msra.mxu0 %v793
      %977 = vmatprep.subr.bf16.mxu0 0
      %978 = vmatpush1.bf16.msra.mxu0 0
      %979 = vmatprep.subr.bf16.mxu0 0
      %980 = vmatpush1.bf16.msra.mxu0 0
      %981 = vmatprep.subr.bf16.mxu0 0
      %982 = vmatpush1.bf16.msra.mxu0 0
      %983 = vmatprep.subr.bf16.mxu0 0
      %984 = vmatpush1.bf16.msra.mxu0 0
      %985 = vmatprep.subr.bf16.mxu0 0
      %986 = vmatpush1.bf16.msra.mxu0 0
      %987 = vmatprep.subr.bf16.mxu0 0
      %988 = vmatpush1.bf16.msra.mxu0 0
      %989 = vmatprep.subr.bf16.mxu0 0
      %990 = vmatpush1.bf16.msra.mxu0 0
      %991 = vmatprep.subr.bf16.mxu0 0
      %992 = vmatpush1.bf16.msra.mxu0 0
      %993 = vmatprep.subr.bf16.mxu0 0
      %994 = vmatpush1.bf16.msra.mxu0 0
      %995 = vmatprep.subr.bf16.mxu0 0
      %996 = vmatpush1.bf16.msra.mxu0 0
      %997 = vmatprep.subr.bf16.mxu0 0
      %998 = vmatpush1.bf16.msra.mxu0 0
      %999 = vmatprep.subr.bf16.mxu0 0
      %1000 = vmatpush1.bf16.msra.mxu0 0
      %1001 = vmatprep.mubr.bf16.mxu0 0
      %1002 = vmatmul.mubr.bf16.gmra.mrb[0].mxu0 %v830
      %v1003 = vpop.f32.mrb[0].mxu0
      %v1004 = vadd.f32 %v939, %v1003
      %v1005 = vpop.f32.mrb[0].mxu0
      %v1006 = vpop.f32.mrb[0].mxu0
      %v1007 = vadd.f32 %v942, %v1006
      %v1008 = vpop.f32.mrb[0].mxu0
      %1009 = vmatprep.mubr.bf16.mxu0 0
      %1010 = vmatmul.mubr.bf16.gmra.mrb[0].mxu0 %v832
      %v1011 = vpop.f32.mrb[0].mxu0
      %v1012 = vadd.f32 %v947, %v1011
      %v1013 = vpop.f32.mrb[0].mxu0
      %v1014 = vpop.f32.mrb[0].mxu0
      %v1015 = vadd.f32 %v950, %v1014
      %v1016 = vpop.f32.mrb[0].mxu0
      %1017 = vmatprep.mubr.bf16.mxu0 0
      %1018 = vmatmul.mubr.bf16.gmra.mrb[0].mxu0 %v834
      %v1019 = vpop.f32.mrb[0].mxu0
      %v1020 = vadd.f32 %v955, %v1019
      %v1021 = vpop.f32.mrb[0].mxu0
      %v1022 = vpop.f32.mrb[0].mxu0
      %v1023 = vadd.f32 %v958, %v1022
      %v1024 = vpop.f32.mrb[0].mxu0
      %1025 = vmatprep.mubr.bf16.mxu0 0
      %1026 = vmatmul.mubr.bf16.gmra.mrb[0].mxu0 %v837
      %v1027 = vpop.f32.mrb[0].mxu0
      %v1028 = vadd.f32 %v963, %v1027
      %v1029 = vpop.f32.mrb[0].mxu0
      %v1030 = vpop.f32.mrb[0].mxu0
      %v1031 = vadd.f32 %v966, %v1030
      %v1032 = vpop.f32.mrb[0].mxu0
      %1033 = vdwg.mxu0
      %v1034 = vmax.f32 %v1004, 0.0
      %v1035 = vmax.f32 %v1007, 0.0
      %v1036 = vmax.f32 %v1012, 0.0
      %v1037 = vmax.f32 %v1015, 0.0
      %v1038 = vmax.f32 %v1020, 0.0
      %v1039 = vmax.f32 %v1023, 0.0
      %v1040 = vmax.f32 %v1028, 0.0
      %v1041 = vmax.f32 %v1031, 0.0
      %v1042 = vpack.c.bf16 %v1035, %v1034
      %v1043 = vpack.c.bf16 %v1037, %v1036
      %v1044 = vpack.c.bf16 %v1039, %v1038
      %v1045 = vpack.c.bf16 %v1041, %v1040
      %v1046 = vld [vmem:[%s2] sm:$0xf]
      %v1047 = vld [vmem:[%s2 + $0x4] sm:$0xf]
      %v1048 = vld [vmem:[%s2 + $0x8] sm:$0xf]
      %v1049 = vld [vmem:[%s2 + $0xc] sm:$0xf]
      %v1050 = vld [vmem:[%s2 + $0x10] sm:$0xf]
      %v1051 = vld [vmem:[%s2 + $0x14] sm:$0xf]
      %v1052 = vld [vmem:[%s2 + $0x18] sm:$0xf]
      %v1053 = vld [vmem:[%s2 + $0x1c] sm:$0xf]
      %v1062 = vunpack.c.l.b16 %v1046
      %v1063 = vunpack.c.l.b16 %v1047
      %v1064 = vunpack.c.l.b16 %v1048
      %v1065 = vunpack.c.l.b16 %v1049
      %v1066 = vunpack.c.l.b16 %v1050
      %v1067 = vunpack.c.l.b16 %v1051
      %v1068 = vunpack.c.l.b16 %v1052
      %v1069 = vunpack.c.l.b16 %v1053
      %v1070 = vpack.c.b16 %v1063, %v1062
      %v1071 = vpack.c.b16 %v1065, %v1064
      %v1072 = vpack.c.b16 %v1067, %v1066
      %v1073 = vpack.c.b16 %v1069, %v1068
      %v1079 = vsel %vm489, %v1042, 0
      %v1082 = vsel %vm489, %v1043, 0
      %v1085 = vsel %vm489, %v1044, 0
      %v1088 = vsel %vm489, %v1045, 0
      %1090 = vmatprep.subr.bf16.mxu0 0
      %1091 = vmatpush1.bf16.msra.mxu0 %v1070
      %1092 = vmatprep.subr.bf16.mxu0 0
      %1093 = vmatpush1.bf16.msra.mxu0 %v1071
      %1094 = vmatprep.subr.bf16.mxu0 0
      %1095 = vmatpush1.bf16.msra.mxu0 %v1072
      %1096 = vmatprep.subr.bf16.mxu0 0
      %1097 = vmatpush1.bf16.msra.mxu0 %v1073
      %1098 = vmatprep.subr.bf16.mxu0 0
      %1099 = vmatpush1.bf16.msra.mxu0 0
      %1100 = vmatprep.subr.bf16.mxu0 0
      %1101 = vmatpush1.bf16.msra.mxu0 0
      %1102 = vmatprep.subr.bf16.mxu0 0
      %1103 = vmatpush1.bf16.msra.mxu0 0
      %1104 = vmatprep.subr.bf16.mxu0 0
      %1105 = vmatpush1.bf16.msra.mxu0 0
      %1106 = vmatprep.subr.bf16.mxu0 0
      %1107 = vmatpush1.bf16.msra.mxu0 0
      %1108 = vmatprep.subr.bf16.mxu0 0
      %1109 = vmatpush1.bf16.msra.mxu0 0
      %1110 = vmatprep.subr.bf16.mxu0 0
      %1111 = vmatpush1.bf16.msra.mxu0 0
      %1112 = vmatprep.subr.bf16.mxu0 0
      %1113 = vmatpush1.bf16.msra.mxu0 0
      %1114 = vmatprep.subr.bf16.mxu0 0
      %1115 = vmatpush1.bf16.msra.mxu0 0
      %1116 = vmatprep.subr.bf16.mxu0 0
      %1117 = vmatpush1.bf16.msra.mxu0 0
      %1118 = vmatprep.subr.bf16.mxu0 0
      %1119 = vmatpush1.bf16.msra.mxu0 0
      %1120 = vmatprep.subr.bf16.mxu0 0
      %1121 = vmatpush1.bf16.msra.mxu0 0
      %1122 = vmatprep.mubr.bf16.mxu0 0
      %1123 = vmatmul.mubr.bf16.gmra.mrb[0].mxu0 %v1079
      %v1124 = vpop.f32.mrb[0].mxu0
      %v1125 = vadd.f32 0.0, %v1124
      %v1126 = vpop.f32.mrb[0].mxu0
      %v1127 = vpop.f32.mrb[0].mxu0
      %v1128 = vadd.f32 0.0, %v1127
      %v1129 = vpop.f32.mrb[0].mxu0
      %1130 = vmatprep.mubr.bf16.mxu0 0
      %1131 = vmatmul.mubr.bf16.gmra.mrb[0].mxu0 %v1082
      %v1132 = vpop.f32.mrb[0].mxu0
      %v1133 = vadd.f32 0.0, %v1132
      %v1134 = vpop.f32.mrb[0].mxu0
      %v1135 = vpop.f32.mrb[0].mxu0
      %v1136 = vadd.f32 0.0, %v1135
      %v1137 = vpop.f32.mrb[0].mxu0
      %1138 = vmatprep.mubr.bf16.mxu0 0
      %1139 = vmatmul.mubr.bf16.gmra.mrb[0].mxu0 %v1085
      %v1140 = vpop.f32.mrb[0].mxu0
      %v1141 = vadd.f32 0.0, %v1140
      %v1142 = vpop.f32.mrb[0].mxu0
      %v1143 = vpop.f32.mrb[0].mxu0
      %v1144 = vadd.f32 0.0, %v1143
      %v1145 = vpop.f32.mrb[0].mxu0
      %1146 = vmatprep.mubr.bf16.mxu0 0
      %1147 = vmatmul.mubr.bf16.gmra.mrb[0].mxu0 %v1088
      %v1148 = vpop.f32.mrb[0].mxu0
      %v1149 = vadd.f32 0.0, %v1148
      %v1150 = vpop.f32.mrb[0].mxu0
      %v1151 = vpop.f32.mrb[0].mxu0
      %v1152 = vadd.f32 0.0, %v1151
      %v1153 = vpop.f32.mrb[0].mxu0
      %1154 = vdwg.mxu0
      %v1155 = vunpack.c.l.bf16 %v222
      %v1156 = vunpack.c.l.bf16 %v236
      %v1157 = vunpack.c.l.bf16 %v250
      %v1158 = vunpack.c.l.bf16 %v264
      %v1159 = vunpack.c.l.bf16 %v278
      %v1160 = vunpack.c.l.bf16 %v292
      %v1161 = vunpack.c.l.bf16 %v306
      %v1162 = vunpack.c.l.bf16 %v371
      %v1163 = vadd.f32 %v1155, %v1125
      %v1164 = vadd.f32 %v1156, %v1128
      %v1165 = vadd.f32 %v1157, %v1133
      %v1166 = vadd.f32 %v1158, %v1136
      %v1167 = vadd.f32 %v1159, %v1141
      %v1168 = vadd.f32 %v1160, %v1144
      %v1169 = vadd.f32 %v1161, %v1149
      %v1170 = vadd.f32 %v1162, %v1152
      %v1171 = vpack.c.bf16 %v1164, %v1163
      %v1172 = vpack.c.bf16 %v1166, %v1165
      %v1173 = vpack.c.bf16 %v1168, %v1167
      %v1174 = vpack.c.bf16 %v1170, %v1169
      %v1179 = vunpack.c.l.b16 %v1171
      %v1180 = vunpack.c.h.b16 %v1171
      %v1181 = vunpack.c.l.b16 %v1172
      %v1182 = vunpack.c.h.b16 %v1172
      %v1183 = vunpack.c.l.b16 %v1173
      %v1184 = vunpack.c.h.b16 %v1173
      %v1185 = vunpack.c.l.b16 %v1174
      %v1186 = vunpack.c.h.b16 %v1174
      %v1187 = vpack.c.b16 %v1179, %v1179
      %v1188 = vpack.c.b16 %v1180, %v1180
      %v1189 = vpack.c.b16 %v1181, %v1181
      %v1190 = vpack.c.b16 %v1182, %v1182
      %v1191 = vpack.c.b16 %v1183, %v1183
      %v1192 = vpack.c.b16 %v1184, %v1184
      %v1193 = vpack.c.b16 %v1185, %v1185
      %v1194 = vpack.c.b16 %v1186, %v1186
      %vm1203 = vcmask 519168
      %1204 = vst.msk [vmem:[%s170] sm:$0xf] %vm1203, %v1187
      %1205 = vst.msk [vmem:[%s170 + $0x4] sm:$0xf] %vm1203, %v1188
      %1206 = vst.msk [vmem:[%s170 + $0x8] sm:$0xf] %vm1203, %v1189
      %1207 = vst.msk [vmem:[%s170 + $0xc] sm:$0xf] %vm1203, %v1190
      %1208 = vst.msk [vmem:[%s170 + $0x10] sm:$0xf] %vm1203, %v1191
      %1209 = vst.msk [vmem:[%s170 + $0x14] sm:$0xf] %vm1203, %v1192
      %1210 = vst.msk [vmem:[%s170 + $0x18] sm:$0xf] %vm1203, %v1193
      %1211 = vst.msk [vmem:[%s170 + $0x1c] sm:$0xf] %vm1203, %v1194
      %p1212 = scmp.lt.s32.totalorder %s14, 1
      %s1213 = scalar_select %p1212, %s14, 1
      %s1214 = smul.addr %s1213, 8
      %s1215 = smul.addr %s1214, 4
      %s1216 = scalar_lea.vmem %s3, %s1215
      // Predicated region
      $region33: #{vqvae_forward.17} parent=31 // pred_check
        %p1217 = pneg %p100
      $region34: #{vqvae_forward.17} parent=31 // pred_check_branch
        %1219 = sbr.rel (%p1217) target = $region36
      $region35: #{vqvae_forward.17} parent=31 // pred_region
        _
      $region36: #{vqvae_forward.17} parent=31 // pred_fallthru
        _
    $region32: #{vqvae_forward.17} parent=5 // pred_fallthru
      _
    %p1220 = scmp.le.s32.totalorder 2, %s9
    // Predicated region
    $region37: #{vqvae_forward.17} parent=5 // pred_check
      %p1221 = pneg %p1220
    $region38: #{vqvae_forward.17} parent=5 // pred_check_branch
      %1223 = sbr.rel (%p1221) target = $region40
    $region39: #{vqvae_forward.17} parent=5 // pred_region
      %s1224 = ssub.s32 %s9, 2
      // Predicated region
      $region41: #{vqvae_forward.17} parent=39 // pred_check
        %p1225 = pneg %p106
      $region42: #{vqvae_forward.17} parent=39 // pred_check_branch
        %1227 = sbr.rel (%p1225) target = $region44
      $region43: #{vqvae_forward.17} parent=39 // pred_region
        %p1228 = scmp.lt.s32.totalorder %s15, 1
        %s1229 = scalar_select %p1228, %s15, 1
        %s1230 = smul.addr %s1229, 8
        %s1231 = smul.addr %s1230, 4
        %s1232 = scalar_lea.vmem %s3, %s1231
      $region44: #{vqvae_forward.17} parent=39 // pred_fallthru
        _
    $region40: #{vqvae_forward.17} parent=5 // pred_fallthru
      _
  $region6: #{vqvae_forward.17} parent=0 // loop_footer
    %s13 = sadd.s32 1, %s9
  $region7: #{vqvae_forward.17} parent=0 // loop_footer_branch
    %8 = sbr.rel target = $region3
  $region8: #{vqvae_forward.17} parent=0 // loop_exit
    _

// kernel: vqvae_forward.19
$region0: #{vqvae_forward.19}
  #allocation0 [shape = 'u32[]', space=smem, size = 0x4, offset = 0x4, fixed_abs, tag = 'smem constant byte address 0x4 - core index']
  #allocation1 [shape = 'u32[144,128]{1,0:T(1,128)}', space=vmem, size = 0x12000, scoped, tag = 'internal scratch']
  %s0 = inlined_call_operand.vmem [shape: bf16[2,10,10,64], index: 0, kind: input, shape index: {}]
  %s1 = inlined_call_operand.vmem [shape: bf16[576,64], index: 1, kind: input, shape index: {}]
  %s2 = inlined_call_operand.vmem [shape: bf16[64,64], index: 2, kind: input, shape index: {}]
  %s3 = inlined_call_operand.vmem [shape: bf16[2,64,64], index: 3, kind: output, shape index: {}]
  %s4 = sld [smem:[#allocation0]]
  $region45: #{vqvae_forward.19} parent=0
    _
  %s6 = ssub.s32 1, %s4
  %s7 = scalar_select 0, %s6, %s4
  loop: start=0, step=1, limit=4
  $region2: #{vqvae_forward.19} parent=0 // loop_pre_header
    _
  $region3: #{vqvae_forward.19} parent=0 // loop_header
    %s9 = sphi 0, %s13
    %p10 = scmp.ge.s32.totalorder %s9, 4
    %s19 = sphi 0, %s21
    %s22 = sphi 0, %s19
    %s23 = sphi 0, %s22
    %s39 = sphi 0, %s23
    %s43 = sphi 0, %s43
    %s45 = sphi 0, %s43
    %s46 = sphi 0, %s45
    %s60 = sphi 0, %s46
    %s64 = sphi 0, %s64
    %s66 = sphi 0, %s64
    %s67 = sphi 0, %s66
    %s81 = sphi 0, %s67
    %s87 = sphi 0, %s89
    %s90 = sphi 0, %s87
    %s91 = sphi 0, %s90
    %s107 = sphi 0, %s91
  $region4: #{vqvae_forward.19} parent=0 // loop_header_branch
    %12 = sbr.rel (%p10) target = $region8
  $region5: #{vqvae_forward.19} parent=0 // loop_body
    %s14 = ssub.s32 %s9, 1
    %s15 = ssub.s32 %s9, 2
    %s16 = sadd.s32 %s9, 1
    %s17 = ssub.s32 %s9, %s16
    %p18 = scmp.eq.s32.totalorder %s17, 0
    %s20 = sadd.s32 %s19, 1
    %s21 = scalar_select %p18, %s19, %s20
    %p24 = pneg %p18
    %p25 = scmp.eq.s32.totalorder %s9, 1
    %p26 = por %p24, %p25
    %p27 = scmp.ne.s32.totalorder %s19, %s22
    %p28 = scmp.eq.s32.totalorder %s9, 0
    %p29 = por %p27, %p28
    %p30 = scmp.ne.s32.totalorder %s19, %s22
    %p31 = scmp.eq.s32.totalorder %s14, 1
    %p32 = por %p30, %p31
    %p33 = scmp.ne.s32.totalorder %s22, %s23
    %p34 = scmp.eq.s32.totalorder %s14, 0
    %p35 = por %p33, %p34
    %p36 = scmp.ne.s32.totalorder %s22, %s23
    %p37 = scmp.eq.s32.totalorder %s15, 1
    %p38 = por %p36, %p37
    %p40 = scmp.ne.s32.totalorder %s23, %s39
    %p41 = scmp.eq.s32.totalorder %s15, 0
    %p42 = por %p40, %p41
    %s44 = sadd.s32 %s43, 1
    %p47 = scmp.eq.s32.totalorder %s9, 1
    %p48 = scmp.ne.s32.totalorder %s43, %s45
    %p49 = scmp.eq.s32.totalorder %s9, 0
    %p50 = por %p48, %p49
    %p51 = scmp.ne.s32.totalorder %s43, %s45
    %p52 = scmp.eq.s32.totalorder %s14, 1
    %p53 = por %p51, %p52
    %p54 = scmp.ne.s32.totalorder %s45, %s46
    %p55 = scmp.eq.s32.totalorder %s14, 0
    %p56 = por %p54, %p55
    %p57 = scmp.ne.s32.totalorder %s45, %s46
    %p58 = scmp.eq.s32.totalorder %s15, 1
    %p59 = por %p57, %p58
    %p61 = scmp.ne.s32.totalorder %s46, %s60
    %p62 = scmp.eq.s32.totalorder %s15, 0
    %p63 = por %p61, %p62
    %s65 = sadd.s32 %s64, 1
    %p68 = scmp.eq.s32.totalorder %s9, 1
    %p69 = scmp.ne.s32.totalorder %s64, %s66
    %p70 = scmp.eq.s32.totalorder %s9, 0
    %p71 = por %p69, %p70
    %p72 = scmp.ne.s32.totalorder %s64, %s66
    %p73 = scmp.eq.s32.totalorder %s14, 1
    %p74 = por %p72, %p73
    %p75 = scmp.ne.s32.totalorder %s66, %s67
    %p76 = scmp.eq.s32.totalorder %s14, 0
    %p77 = por %p75, %p76
    %p78 = scmp.ne.s32.totalorder %s66, %s67
    %p79 = scmp.eq.s32.totalorder %s15, 1
    %p80 = por %p78, %p79
    %p82 = scmp.ne.s32.totalorder %s67, %s81
    %p83 = scmp.eq.s32.totalorder %s15, 0
    %p84 = por %p82, %p83
    %s85 = ssub.s32 %s9, %s16
    %p86 = scmp.eq.s32.totalorder %s85, 0
    %s88 = sadd.s32 %s87, 1
    %s89 = scalar_select %p86, %s87, %s88
    %p92 = pneg %p86
    %p93 = scmp.eq.s32.totalorder %s9, 1
    %p94 = por %p92, %p93
    %p95 = scmp.ne.s32.totalorder %s87, %s90
    %p96 = scmp.eq.s32.totalorder %s9, 0
    %p97 = por %p95, %p96
    %p98 = scmp.ne.s32.totalorder %s87, %s90
    %p99 = scmp.eq.s32.totalorder %s14, 1
    %p100 = por %p98, %p99
    %p101 = scmp.ne.s32.totalorder %s90, %s91
    %p102 = scmp.eq.s32.totalorder %s14, 0
    %p103 = por %p101, %p102
    %p104 = scmp.ne.s32.totalorder %s90, %s91
    %p105 = scmp.eq.s32.totalorder %s15, 1
    %p106 = por %p104, %p105
    %p108 = scmp.ne.s32.totalorder %s91, %s107
    %p109 = scmp.eq.s32.totalorder %s15, 0
    %p110 = por %p108, %p109
    %p111 = scmp.le.s32.totalorder 1, %s9
    %p112 = scmp.lt.s32.totalorder %s9, 3
    %p113 = pnand %p111, %p112
    %p114 = pneg %p113
    // Predicated region
    $region9: #{vqvae_forward.19} parent=5 // pred_check
      _
    $region10: #{vqvae_forward.19} parent=5 // pred_check_branch
      %116 = sbr.rel (%p113) target = $region12
    $region11: #{vqvae_forward.19} parent=5 // pred_region
      %s117 = ssub.s32 %s9, 1
      // Predicated region
      $region13: #{vqvae_forward.19} parent=11 // pred_check
        %p118 = pneg %p56
      $region14: #{vqvae_forward.19} parent=11 // pred_check_branch
        %120 = sbr.rel (%p118) target = $region16
      $region15: #{vqvae_forward.19} parent=11 // pred_region
        _
      $region16: #{vqvae_forward.19} parent=11 // pred_fallthru
        _
      // Predicated region
      $region17: #{vqvae_forward.19} parent=11 // pred_check
        %p121 = pneg %p77
      $region18: #{vqvae_forward.19} parent=11 // pred_check_branch
        %123 = sbr.rel (%p121) target = $region20
      $region19: #{vqvae_forward.19} parent=11 // pred_region
        _
      $region20: #{vqvae_forward.19} parent=11 // pred_fallthru
        _
    $region12: #{vqvae_forward.19} parent=5 // pred_fallthru
      _
    %p124 = scmp.lt.s32.totalorder %s9, 2
    // Predicated region
    $region21: #{vqvae_forward.19} parent=5 // pred_check
      %p125 = pneg %p124
    $region22: #{vqvae_forward.19} parent=5 // pred_check_branch
      %127 = sbr.rel (%p125) target = $region24
    $region23: #{vqvae_forward.19} parent=5 // pred_region
      // Predicated region
      $region25: #{vqvae_forward.19} parent=23 // pred_check
        %p128 = pneg %p29
      $region26: #{vqvae_forward.19} parent=23 // pred_check_branch
        %130 = sbr.rel (%p128) target = $region28
      $region27: #{vqvae_forward.19} parent=23 // pred_region
        %p131 = scmp.lt.s32.totalorder %s9, 1
        %s132 = scalar_select %p131, %s9, 1
        %s133 = smul.addr %s132, 20
        %s134 = smul.addr %s133, 4
        %s135 = scalar_lea.vmem %s0, %s134
      $region28: #{vqvae_forward.19} parent=23 // pred_fallthru
        _
    $region24: #{vqvae_forward.19} parent=5 // pred_fallthru
      _
    %p136 = scmp.le.s32.totalorder 1, %s9
    %p137 = scmp.lt.s32.totalorder %s9, 3
    %p138 = pnand %p136, %p137
    %p139 = pneg %p138
    // Predicated region
    $region29: #{vqvae_forward.19} parent=5 // pred_check
      _
    $region30: #{vqvae_forward.19} parent=5 // pred_check_branch
      %141 = sbr.rel (%p138) target = $region32
    $region31: #{vqvae_forward.19} parent=5 // pred_region
      %s142 = ssub.s32 %s9, 1
      %p143 = scmp.lt.s32.totalorder %s14, 1
      %s144 = scalar_select %p143, %s14, 1
      %s145 = smul.addr %s144, 20
      %s146 = smul.addr %s145, 4
      %s147 = scalar_lea.vmem %s0, %s146
      %p148 = pneg %p35
      %p149 = pneg %p32
      %p150 = pneg %p56
      %p151 = pneg %p53
      %p152 = pneg %p77
      %p153 = pneg %p74
      %p154 = pneg %p103
      %p155 = pneg %p100
      %p156 = scmp.lt.s32.totalorder %s14, 1
      %s157 = scalar_select %p156, %s14, 1
      %s158 = smul.addr %s157, 8
      %s159 = smul.addr %s158, 4
      %s160 = scalar_lea.vmem %s3, %s159
      %p161 = scmp.lt.s32.totalorder %s14, 1
      %s162 = scalar_select %p161, %s14, 1
      %s163 = smul.addr %s162, 20
      %s164 = smul.addr %s163, 4
      %s165 = scalar_lea.vmem %s0, %s164
      %p166 = scmp.lt.s32.totalorder %s14, 1
      %s167 = scalar_select %p166, %s14, 1
      %s168 = smul.addr %s167, 8
      %s169 = smul.addr %s168, 4
      %s170 = scalar_lea.vmem %s3, %s169
      %v172 = vld [vmem:[%s165] sm:$0xf]
      %v173 = vld [vmem:[%s165 + $0x4] sm:$0x1]
      %v174 = vld [vmem:[%s165 + $0x8] sm:$0xf]
      %v175 = vld [vmem:[%s165 + $0xc] sm:$0x1]
      %v176 = vld [vmem:[%s165 + $0x10] sm:$0xf]
      %v177 = vld [vmem:[%s165 + $0x14] sm:$0x1]
      %v178 = vld [vmem:[%s165 + $0x18] sm:$0xf]
      %v179 = vld [vmem:[%s165 + $0x1c] sm:$0x1]
      %v180 = vld [vmem:[%s165 + $0x20] sm:$0xf]
      %v181 = vld [vmem:[%s165 + $0x24] sm:$0x1]
      %v182 = vld [vmem:[%s165 + $0x28] sm:$0xf]
      %v183 = vld [vmem:[%s165 + $0x2c] sm:$0x1]
      %v184 = vld [vmem:[%s165 + $0x30] sm:$0xf]
      %v185 = vld [vmem:[%s165 + $0x34] sm:$0x1]
      %v186 = vld [vmem:[%s165 + $0x38] sm:$0xf]
      %v187 = vld [vmem:[%s165 + $0x3c] sm:$0x1]
      %v188 = vld [vmem:[%s165 + $0x40] sm:$0xf]
      %v189 = vld [vmem:[%s165 + $0x44] sm:$0x1]
      %v190 = vld [vmem:[%s165 + $0x48] sm:$0xf]
      %v191 = vld [vmem:[%s165 + $0x4c] sm:$0x1]
      %vm192 = vsmask.f32 3328
      %vm193 = vsmask.f32 7440
      %vm194 = vmor %vm192, %vm193
      %v196 = vshrl.u32 %v172, 16
      %v198 = vrot.slane %v196, 4
      %v199 = vshll.u32 %v172, 16
      %v201 = vrot.slane %v199, 5
      %v202 = vor.u32 %v198, %v201
      %v203 = vrot.slane %v202, 4
      %v205 = vshll.u32 %v173, 16
      %v207 = vrot.slane %v205, 5
      %v208 = vsel %vm194, %v203, %v207
      %v210 = vshrl.u32 %v174, 16
      %v212 = vrot.slane %v210, 4
      %v213 = vshll.u32 %v174, 16
      %v215 = vrot.slane %v213, 5
      %v216 = vor.u32 %v212, %v215
      %v217 = vrot.slane %v216, 4
      %v219 = vshll.u32 %v175, 16
      %v221 = vrot.slane %v219, 5
      %v222 = vsel %vm194, %v217, %v221
      %v224 = vshrl.u32 %v176, 16
      %v226 = vrot.slane %v224, 4
      %v227 = vshll.u32 %v176, 16
      %v229 = vrot.slane %v227, 5
      %v230 = vor.u32 %v226, %v229
      %v231 = vrot.slane %v230, 4
      %v233 = vshll.u32 %v177, 16
      %v235 = vrot.slane %v233, 5
      %v236 = vsel %vm194, %v231, %v235
      %v238 = vshrl.u32 %v178, 16
      %v240 = vrot.slane %v238, 4
      %v241 = vshll.u32 %v178, 16
      %v243 = vrot.slane %v241, 5
      %v244 = vor.u32 %v240, %v243
      %v245 = vrot.slane %v244, 4
      %v247 = vshll.u32 %v179, 16
      %v249 = vrot.slane %v247, 5
      %v250 = vsel %vm194, %v245, %v249
      %v252 = vshrl.u32 %v180, 16
      %v254 = vrot.slane %v252, 4
      %v255 = vshll.u32 %v180, 16
      %v257 = vrot.slane %v255, 5
      %v258 = vor.u32 %v254, %v257
      %v259 = vrot.slane %v258, 4
      %v261 = vshll.u32 %v181, 16
      %v263 = vrot.slane %v261, 5
      %v264 = vsel %vm194, %v259, %v263
      %v266 = vshrl.u32 %v182, 16
      %v268 = vrot.slane %v266, 4
      %v269 = vshll.u32 %v182, 16
      %v271 = vrot.slane %v269, 5
      %v272 = vor.u32 %v268, %v271
      %v273 = vrot.slane %v272, 4
      %v275 = vshll.u32 %v183, 16
      %v277 = vrot.slane %v275, 5
      %v278 = vsel %vm194, %v273, %v277
      %v280 = vshrl.u32 %v184, 16
      %v282 = vrot.slane %v280, 4
      %v283 = vshll.u32 %v184, 16
      %v285 = vrot.slane %v283, 5
      %v286 = vor.u32 %v282, %v285
      %v287 = vrot.slane %v286, 4
      %v289 = vshll.u32 %v185, 16
      %v291 = vrot.slane %v289, 5
      %v292 = vsel %vm194, %v287, %v291
      %v294 = vshrl.u32 %v186, 16
      %v296 = vrot.slane %v294, 4
      %v297 = vshll.u32 %v186, 16
      %v299 = vrot.slane %v297, 5
      %v300 = vor.u32 %v296, %v299
      %v301 = vrot.slane %v300, 4
      %v303 = vshll.u32 %v187, 16
      %v305 = vrot.slane %v303, 5
      %v306 = vsel %vm194, %v301, %v305
      %vm323 = vcmask 1042432
      %vm324 = vcmask 1046532
      %vm325 = vmor %vm323, %vm324
      %v326 = vrot.slane %v172, 5
      %v327 = vrot.slane %v326, 4
      %v328 = vrot.slane %v173, 5
      %v329 = vsel %vm325, %v327, %v328
      %v330 = vrot.slane %v174, 5
      %v331 = vrot.slane %v330, 4
      %v332 = vrot.slane %v175, 5
      %v333 = vsel %vm325, %v331, %v332
      %v334 = vrot.slane %v176, 5
      %v335 = vrot.slane %v334, 4
      %v336 = vrot.slane %v177, 5
      %v337 = vsel %vm325, %v335, %v336
      %v338 = vrot.slane %v178, 5
      %v339 = vrot.slane %v338, 4
      %v340 = vrot.slane %v179, 5
      %v341 = vsel %vm325, %v339, %v340
      %v342 = vrot.slane %v180, 5
      %v343 = vrot.slane %v342, 4
      %v344 = vrot.slane %v181, 5
      %v345 = vsel %vm325, %v343, %v344
      %v346 = vrot.slane %v182, 5
      %v347 = vrot.slane %v346, 4
      %v348 = vrot.slane %v183, 5
      %v349 = vsel %vm325, %v347, %v348
      %v350 = vrot.slane %v184, 5
      %v351 = vrot.slane %v350, 4
      %v352 = vrot.slane %v185, 5
      %v353 = vsel %vm325, %v351, %v352
      %v354 = vrot.slane %v186, 5
      %v355 = vrot.slane %v354, 4
      %v356 = vrot.slane %v187, 5
      %v357 = vsel %vm325, %v355, %v356
      %v359 = vshrl.u32 %v188, 16
      %v361 = vrot.slane %v359, 4
      %v362 = vshll.u32 %v188, 16
      %v364 = vrot.slane %v362, 5
      %v365 = vor.u32 %v361, %v364
      %v366 = vrot.slane %v365, 4
      %v368 = vshll.u32 %v189, 16
      %v370 = vrot.slane %v368, 5
      %v371 = vsel %vm194, %v366, %v370
      %v382 = vrot.slane %v188, 5
      %v383 = vrot.slane %v382, 4
      %v384 = vrot.slane %v189, 5
      %v385 = vsel %vm325, %v383, %v384
      %v387 = vshrl.u32 %v190, 16
      %v389 = vrot.slane %v387, 4
      %v390 = vshll.u32 %v190, 16
      %v392 = vrot.slane %v390, 5
      %v393 = vor.u32 %v389, %v392
      %v394 = vrot.slane %v393, 4
      %v396 = vshll.u32 %v191, 16
      %v398 = vrot.slane %v396, 5
      %v399 = vsel %vm194, %v394, %v398
      %v402 = vrot.slane %v190, 5
      %v403 = vrot.slane %v402, 4
      %v404 = vrot.slane %v191, 5
      %v405 = vsel %vm325, %v403, %v404
      %v406 = vunpack.c.l.b16 %v172
      %v407 = vunpack.c.l.b16 %v174
      %v408 = vunpack.c.l.b16 %v176
      %v409 = vunpack.c.l.b16 %v178
      %v410 = vunpack.c.l.b16 %v180
      %v411 = vunpack.c.l.b16 %v182
      %v412 = vunpack.c.l.b16 %v184
      %v413 = vunpack.c.l.b16 %v186
      %v414 = vpack.c.b16 %v407, %v406
      %v415 = vpack.c.b16 %v409, %v408
      %v416 = vpack.c.b16 %v411, %v410
      %v417 = vpack.c.b16 %v413, %v412
      %v418 = vunpack.c.l.b16 %v208
      %v419 = vunpack.c.l.b16 %v222
      %v420 = vunpack.c.l.b16 %v236
      %v421 = vunpack.c.l.b16 %v250
      %v422 = vunpack.c.l.b16 %v264
      %v423 = vunpack.c.l.b16 %v278
      %v424 = vunpack.c.l.b16 %v292
      %v425 = vunpack.c.l.b16 %v306
      %v426 = vpack.c.b16 %v419, %v418
      %v427 = vpack.c.b16 %v421, %v420
      %v428 = vpack.c.b16 %v423, %v422
      %v429 = vpack.c.b16 %v425, %v424
      %430 = vrot.lane.b32.xlu0 %v426, 64
      %v431 = vpop.permute.xlu0 %430
      %432 = vrot.lane.b32.xlu0 %v427, 64
      %v433 = vpop.permute.xlu0 %432
      %434 = vrot.lane.b32.xlu0 %v428, 64
      %v435 = vpop.permute.xlu0 %434
      %436 = vrot.lane.b32.xlu0 %v429, 64
      %v437 = vpop.permute.xlu0 %436
      %v438 = vunpack.c.l.b16 %v329
      %v439 = vunpack.c.l.b16 %v333
      %v440 = vunpack.c.l.b16 %v337
      %v441 = vunpack.c.l.b16 %v341
      %v442 = vunpack.c.l.b16 %v345
      %v443 = vunpack.c.l.b16 %v349
      %v444 = vunpack.c.l.b16 %v353
      %v445 = vunpack.c.l.b16 %v357
      %v446 = vpack.c.b16 %v439, %v438
      %v447 = vpack.c.b16 %v441, %v440
      %v448 = vpack.c.b16 %v443, %v442
      %v449 = vpack.c.b16 %v445, %v444
      %v450 = vunpack.c.l.b16 %v188
      %v451 = vpack.c.b16 %v408, %v407
      %v452 = vpack.c.b16 %v410, %v409
      %v453 = vpack.c.b16 %v412, %v411
      %v454 = vpack.c.b16 %v450, %v413
      %455 = vrot.lane.b32.xlu0 %v451, 64
      %v456 = vpop.permute.xlu0 %455
      %457 = vrot.lane.b32.xlu0 %v452, 64
      %v458 = vpop.permute.xlu0 %457
      %459 = vrot.lane.b32.xlu0 %v453, 64
      %v460 = vpop.permute.xlu0 %459
      %461 = vrot.lane.b32.xlu0 %v454, 64
      %v462 = vpop.permute.xlu0 %461
      %v463 = vunpack.c.l.b16 %v371
      %v464 = vpack.c.b16 %v420, %v419
      %v465 = vpack.c.b16 %v422, %v421
      %v466 = vpack.c.b16 %v424, %v423
      %v467 = vpack.c.b16 %v463, %v425
      %v468 = vunpack.c.l.b16 %v385
      %v469 = vpack.c.b16 %v440, %v439
      %v470 = vpack.c.b16 %v442, %v441
      %v471 = vpack.c.b16 %v444, %v443
      %v472 = vpack.c.b16 %v468, %v445
      %473 = vrot.lane.b32.xlu0 %v469, 64
      %v474 = vpop.permute.xlu0 %473
      %475 = vrot.lane.b32.xlu0 %v470, 64
      %v476 = vpop.permute.xlu0 %475
      %477 = vrot.lane.b32.xlu0 %v471, 64
      %v478 = vpop.permute.xlu0 %477
      %479 = vrot.lane.b32.xlu0 %v472, 64
      %v480 = vpop.permute.xlu0 %479
      %v481 = vunpack.c.l.b16 %v190
      %v482 = vpack.c.b16 %v481, %v450
      %v483 = vunpack.c.l.b16 %v399
      %v484 = vpack.c.b16 %v483, %v463
      %485 = vrot.lane.b32.xlu0 %v484, 64
      %v486 = vpop.permute.xlu0 %485
      %v487 = vunpack.c.l.b16 %v405
      %v488 = vpack.c.b16 %v487, %v468
      %vm489 = vcmask 523264
      %v492 = vsel %vm489, %v414, %v431
      %v496 = vsel %vm489, %v415, %v433
      %v500 = vsel %vm489, %v416, %v435
      %v504 = vsel %vm489, %v417, %v437
      %v508 = vsel %vm489, %v446, %v456
      %v512 = vsel %vm489, %v447, %v458
      %v516 = vsel %vm489, %v448, %v460
      %v520 = vsel %vm489, %v449, %v462
      %v524 = vsel %vm489, %v464, %v474
      %v528 = vsel %vm489, %v465, %v476
      %v532 = vsel %vm489, %v466, %v478
      %v536 = vsel %vm489, %v467, %v480
      %v540 = vsel %vm489, %v482, %v486
      %v542 = vld [vmem:[%s1] sm:$0xf]
      %v543 = vld [vmem:[%s1 + $0x4] sm:$0xf]
      %v544 = vld [vmem:[%s1 + $0x8] sm:$0xf]
      %v545 = vld [vmem:[%s1 + $0xc] sm:$0xf]
      %v546 = vld [vmem:[%s1 + $0x10] sm:$0xf]
      %v547 = vld [vmem:[%s1 + $0x14] sm:$0xf]
      %v548 = vld [vmem:[%s1 + $0x18] sm:$0xf]
      %v549 = vld [vmem:[%s1 + $0x1c] sm:$0xf]
      %v550 = vld [vmem:[%s1 + $0x20] sm:$0xf]
      %v551 = vld [vmem:[%s1 + $0x24] sm:$0xf]
      %v552 = vld [vmem:[%s1 + $0x28] sm:$0xf]
      %v553 = vld [vmem:[%s1 + $0x2c] sm:$0xf]
      %v554 = vld [vmem:[%s1 + $0x30] sm:$0xf]
      %v555 = vld [vmem:[%s1 + $0x34] sm:$0xf]
      %v556 = vld [vmem:[%s1 + $0x38] sm:$0xf]
      %v557 = vld [vmem:[%s1 + $0x3c] sm:$0xf]
      %v558 = vld [vmem:[%s1 + $0x40] sm:$0xf]
      %v559 = vld [vmem:[%s1 + $0x44] sm:$0xf]
      %v560 = vld [vmem:[%s1 + $0x48] sm:$0xf]
      %v561 = vld [vmem:[%s1 + $0x4c] sm:$0xf]
      %v562 = vld [vmem:[%s1 + $0x50] sm:$0xf]
      %v563 = vld [vmem:[%s1 + $0x54] sm:$0xf]
      %v564 = vld [vmem:[%s1 + $0x58] sm:$0xf]
      %v565 = vld [vmem:[%s1 + $0x5c] sm:$0xf]
      %v566 = vld [vmem:[%s1 + $0x60] sm:$0xf]
      %v567 = vld [vmem:[%s1 + $0x64] sm:$0xf]
      %v568 = vld [vmem:[%s1 + $0x68] sm:$0xf]
      %v569 = vld [vmem:[%s1 + $0x6c] sm:$0xf]
      %v570 = vld [vmem:[%s1 + $0x70] sm:$0xf]
      %v571 = vld [vmem:[%s1 + $0x74] sm:$0xf]
      %v572 = vld [vmem:[%s1 + $0x78] sm:$0xf]
      %v573 = vld [vmem:[%s1 + $0x7c] sm:$0xf]
      %v574 = vld [vmem:[%s1 + $0x80] sm:$0xf]
      %v575 = vld [vmem:[%s1 + $0x84] sm:$0xf]
      %v576 = vld [vmem:[%s1 + $0x88] sm:$0xf]
      %v577 = vld [vmem:[%s1 + $0x8c] sm:$0xf]
      %v578 = vld [vmem:[%s1 + $0x90] sm:$0xf]
      %v579 = vld [vmem:[%s1 + $0x94] sm:$0xf]
      %v580 = vld [vmem:[%s1 + $0x98] sm:$0xf]
      %v581 = vld [vmem:[%s1 + $0x9c] sm:$0xf]
      %v582 = vld [vmem:[%s1 + $0xa0] sm:$0xf]
      %v583 = vld [vmem:[%s1 + $0xa4] sm:$0xf]
      %v584 = vld [vmem:[%s1 + $0xa8] sm:$0xf]
      %v585 = vld [vmem:[%s1 + $0xac] sm:$0xf]
      %v586 = vld [vmem:[%s1 + $0xb0] sm:$0xf]
      %v587 = vld [vmem:[%s1 + $0xb4] sm:$0xf]
      %v588 = vld [vmem:[%s1 + $0xb8] sm:$0xf]
      %v589 = vld [vmem:[%s1 + $0xbc] sm:$0xf]
      %v590 = vld [vmem:[%s1 + $0xc0] sm:$0xf]
      %v591 = vld [vmem:[%s1 + $0xc4] sm:$0xf]
      %v592 = vld [vmem:[%s1 + $0xc8] sm:$0xf]
      %v593 = vld [vmem:[%s1 + $0xcc] sm:$0xf]
      %v594 = vld [vmem:[%s1 + $0xd0] sm:$0xf]
      %v595 = vld [vmem:[%s1 + $0xd4] sm:$0xf]
      %v596 = vld [vmem:[%s1 + $0xd8] sm:$0xf]
      %v597 = vld [vmem:[%s1 + $0xdc] sm:$0xf]
      %v598 = vld [vmem:[%s1 + $0xe0] sm:$0xf]
      %v599 = vld [vmem:[%s1 + $0xe4] sm:$0xf]
      %v600 = vld [vmem:[%s1 + $0xe8] sm:$0xf]
      %v601 = vld [vmem:[%s1 + $0xec] sm:$0xf]
      %v602 = vld [vmem:[%s1 + $0xf0] sm:$0xf]
      %v603 = vld [vmem:[%s1 + $0xf4] sm:$0xf]
      %v604 = vld [vmem:[%s1 + $0xf8] sm:$0xf]
      %v605 = vld [vmem:[%s1 + $0xfc] sm:$0xf]
      %v606 = vld [vmem:[%s1 + $0x100] sm:$0xf]
      %v607 = vld [vmem:[%s1 + $0x104] sm:$0xf]
      %v608 = vld [vmem:[%s1 + $0x108] sm:$0xf]
      %v609 = vld [vmem:[%s1 + $0x10c] sm:$0xf]
      %v610 = vld [vmem:[%s1 + $0x110] sm:$0xf]
      %v611 = vld [vmem:[%s1 + $0x114] sm:$0xf]
      %v612 = vld [vmem:[%s1 + $0x118] sm:$0xf]
      %v613 = vld [vmem:[%s1 + $0x11c] sm:$0xf]
      %v686 = vunpack.c.l.b16 %v542
      %v687 = vunpack.c.l.b16 %v543
      %v688 = vunpack.c.l.b16 %v544
      %v689 = vunpack.c.l.b16 %v545
      %v690 = vunpack.c.l.b16 %v546
      %v691 = vunpack.c.l.b16 %v547
      %v692 = vunpack.c.l.b16 %v548
      %v693 = vunpack.c.l.b16 %v549
      %v694 = vunpack.c.l.b16 %v550
      %v695 = vunpack.c.l.b16 %v551
      %v696 = vunpack.c.l.b16 %v552
      %v697 = vunpack.c.l.b16 %v553
      %v698 = vunpack.c.l.b16 %v554
      %v699 = vunpack.c.l.b16 %v555
      %v700 = vunpack.c.l.b16 %v556
      %v701 = vunpack.c.l.b16 %v557
      %v702 = vunpack.c.l.b16 %v558
      %v703 = vunpack.c.l.b16 %v559
      %v704 = vunpack.c.l.b16 %v560
      %v705 = vunpack.c.l.b16 %v561
      %v706 = vunpack.c.l.b16 %v562
      %v707 = vunpack.c.l.b16 %v563
      %v708 = vunpack.c.l.b16 %v564
      %v709 = vunpack.c.l.b16 %v565
      %v710 = vunpack.c.l.b16 %v566
      %v711 = vunpack.c.l.b16 %v567
      %v712 = vunpack.c.l.b16 %v568
      %v713 = vunpack.c.l.b16 %v569
      %v714 = vunpack.c.l.b16 %v570
      %v715 = vunpack.c.l.b16 %v571
      %v716 = vunpack.c.l.b16 %v572
      %v717 = vunpack.c.l.b16 %v573
      %v718 = vunpack.c.l.b16 %v574
      %v719 = vunpack.c.l.b16 %v575
      %v720 = vunpack.c.l.b16 %v576
      %v721 = vunpack.c.l.b16 %v577
      %v722 = vunpack.c.l.b16 %v578
      %v723 = vunpack.c.l.b16 %v579
      %v724 = vunpack.c.l.b16 %v580
      %v725 = vunpack.c.l.b16 %v581
      %v726 = vunpack.c.l.b16 %v582
      %v727 = vunpack.c.l.b16 %v583
      %v728 = vunpack.c.l.b16 %v584
      %v729 = vunpack.c.l.b16 %v585
      %v730 = vunpack.c.l.b16 %v586
      %v731 = vunpack.c.l.b16 %v587
      %v732 = vunpack.c.l.b16 %v588
      %v733 = vunpack.c.l.b16 %v589
      %v734 = vunpack.c.l.b16 %v590
      %v735 = vunpack.c.l.b16 %v591
      %v736 = vunpack.c.l.b16 %v592
      %v737 = vunpack.c.l.b16 %v593
      %v738 = vunpack.c.l.b16 %v594
      %v739 = vunpack.c.l.b16 %v595
      %v740 = vunpack.c.l.b16 %v596
      %v741 = vunpack.c.l.b16 %v597
      %v742 = vunpack.c.l.b16 %v598
      %v743 = vunpack.c.l.b16 %v599
      %v744 = vunpack.c.l.b16 %v600
      %v745 = vunpack.c.l.b16 %v601
      %v746 = vunpack.c.l.b16 %v602
      %v747 = vunpack.c.l.b16 %v603
      %v748 = vunpack.c.l.b16 %v604
      %v749 = vunpack.c.l.b16 %v605
      %v750 = vunpack.c.l.b16 %v606
      %v751 = vunpack.c.l.b16 %v607
      %v752 = vunpack.c.l.b16 %v608
      %v753 = vunpack.c.l.b16 %v609
      %v754 = vunpack.c.l.b16 %v610
      %v755 = vunpack.c.l.b16 %v611
      %v756 = vunpack.c.l.b16 %v612
      %v757 = vunpack.c.l.b16 %v613
      %v758 = vpack.c.b16 %v687, %v686
      %v759 = vpack.c.b16 %v689, %v688
      %v760 = vpack.c.b16 %v691, %v690
      %v761 = vpack.c.b16 %v693, %v692
      %v762 = vpack.c.b16 %v695, %v694
      %v763 = vpack.c.b16 %v697, %v696
      %v764 = vpack.c.b16 %v699, %v698
      %v765 = vpack.c.b16 %v701, %v700
      %v766 = vpack.c.b16 %v703, %v702
      %v767 = vpack.c.b16 %v705, %v704
      %v768 = vpack.c.b16 %v707, %v706
      %v769 = vpack.c.b16 %v709, %v708
      %v770 = vpack.c.b16 %v711, %v710
      %v771 = vpack.c.b16 %v713, %v712
      %v772 = vpack.c.b16 %v715, %v714
      %v773 = vpack.c.b16 %v717, %v716
      %v774 = vpack.c.b16 %v719, %v718
      %v775 = vpack.c.b16 %v721, %v720
      %v776 = vpack.c.b16 %v723, %v722
      %v777 = vpack.c.b16 %v725, %v724
      %v778 = vpack.c.b16 %v727, %v726
      %v779 = vpack.c.b16 %v729, %v728
      %v780 = vpack.c.b16 %v731, %v730
      %v781 = vpack.c.b16 %v733, %v732
      %v782 = vpack.c.b16 %v735, %v734
      %v783 = vpack.c.b16 %v737, %v736
      %v784 = vpack.c.b16 %v739, %v738
      %v785 = vpack.c.b16 %v741, %v740
      %v786 = vpack.c.b16 %v743, %v742
      %v787 = vpack.c.b16 %v745, %v744
      %v788 = vpack.c.b16 %v747, %v746
      %v789 = vpack.c.b16 %v749, %v748
      %v790 = vpack.c.b16 %v751, %v750
      %v791 = vpack.c.b16 %v753, %v752
      %v792 = vpack.c.b16 %v755, %v754
      %v793 = vpack.c.b16 %v757, %v756
      %v830 = vsel %vm489, %v447, 0
      %v832 = vsel %vm489, %v448, 0
      %v834 = vsel %vm489, %v449, 0
      %v837 = vsel %vm489, %v488, 0
      %839 = vmatprep.subr.bf16.mxu0 0
      %840 = vmatpush1.bf16.msra.mxu0 %v758
      %841 = vmatprep.subr.bf16.mxu0 0
      %842 = vmatpush1.bf16.msra.mxu0 %v759
      %843 = vmatprep.subr.bf16.mxu0 0
      %844 = vmatpush1.bf16.msra.mxu0 %v760
      %845 = vmatprep.subr.bf16.mxu0 0
      %846 = vmatpush1.bf16.msra.mxu0 %v761
      %847 = vmatprep.subr.bf16.mxu0 0
      %848 = vmatpush1.bf16.msra.mxu0 %v762
      %849 = vmatprep.subr.bf16.mxu0 0
      %850 = vmatpush1.bf16.msra.mxu0 %v763
      %851 = vmatprep.subr.bf16.mxu0 0
      %852 = vmatpush1.bf16.msra.mxu0 %v764
      %853 = vmatprep.subr.bf16.mxu0 0
      %854 = vmatpush1.bf16.msra.mxu0 %v765
      %855 = vmatprep.subr.bf16.mxu0 0
      %856 = vmatpush1.bf16.msra.mxu0 %v766
      %857 = vmatprep.subr.bf16.mxu0 0
      %858 = vmatpush1.bf16.msra.mxu0 %v767
      %859 = vmatprep.subr.bf16.mxu0 0
      %860 = vmatpush1.bf16.msra.mxu0 %v768
      %861 = vmatprep.subr.bf16.mxu0 0
      %862 = vmatpush1.bf16.msra.mxu0 %v769
      %863 = vmatprep.subr.bf16.mxu0 0
      %864 = vmatpush1.bf16.msra.mxu0 %v770
      %865 = vmatprep.subr.bf16.mxu0 0
      %866 = vmatpush1.bf16.msra.mxu0 %v771
      %867 = vmatprep.subr.bf16.mxu0 0
      %868 = vmatpush1.bf16.msra.mxu0 %v772
      %869 = vmatprep.subr.bf16.mxu0 0
      %870 = vmatpush1.bf16.msra.mxu0 %v773
      %871 = vmatprep.mubr.bf16.mxu0 %v508
      %872 = vmatmul.mubr.bf16.gmra.mrb[0].mxu0 %v492
      %v873 = vpop.f32.mrb[0].mxu0
      %v874 = vadd.f32 0.0, %v873
      %v875 = vpop.f32.mrb[0].mxu0
      %v876 = vpop.f32.mrb[0].mxu0
      %v877 = vadd.f32 0.0, %v876
      %v878 = vpop.f32.mrb[0].mxu0
      %879 = vmatprep.mubr.bf16.mxu0 %v512
      %880 = vmatmul.mubr.bf16.gmra.mrb[0].mxu0 %v496
      %v881 = vpop.f32.mrb[0].mxu0
      %v882 = vadd.f32 0.0, %v881
      %v883 = vpop.f32.mrb[0].mxu0
      %v884 = vpop.f32.mrb[0].mxu0
      %v885 = vadd.f32 0.0, %v884
      %v886 = vpop.f32.mrb[0].mxu0
      %887 = vmatprep.mubr.bf16.mxu0 %v516
      %888 = vmatmul.mubr.bf16.gmra.mrb[0].mxu0 %v500
      %v889 = vpop.f32.mrb[0].mxu0
      %v890 = vadd.f32 0.0, %v889
      %v891 = vpop.f32.mrb[0].mxu0
      %v892 = vpop.f32.mrb[0].mxu0
      %v893 = vadd.f32 0.0, %v892
      %v894 = vpop.f32.mrb[0].mxu0
      %895 = vmatprep.mubr.bf16.mxu0 %v520
      %896 = vmatmul.mubr.bf16.gmra.mrb[0].mxu0 %v504
      %v897 = vpop.f32.mrb[0].mxu0
      %v898 = vadd.f32 0.0, %v897
      %v899 = vpop.f32.mrb[0].mxu0
      %v900 = vpop.f32.mrb[0].mxu0
      %v901 = vadd.f32 0.0, %v900
      %v902 = vpop.f32.mrb[0].mxu0
      %903 = vdwg.mxu0
      %904 = vmatprep.subr.bf16.mxu0 0
      %905 = vmatpush1.bf16.msra.mxu0 %v774
      %906 = vmatprep.subr.bf16.mxu0 0
      %907 = vmatpush1.bf16.msra.mxu0 %v775
      %908 = vmatprep.subr.bf16.mxu0 0
      %909 = vmatpush1.bf16.msra.mxu0 %v776
      %910 = vmatprep.subr.bf16.mxu0 0
      %911 = vmatpush1.bf16.msra.mxu0 %v777
      %912 = vmatprep.subr.bf16.mxu0 0
      %913 = vmatpush1.bf16.msra.mxu0 %v778
      %914 = vmatprep.subr.bf16.mxu0 0
      %915 = vmatpush1.bf16.msra.mxu0 %v779
      %916 = vmatprep.subr.bf16.mxu0 0
      %917 = vmatpush1.bf16.msra.mxu0 %v780
      %918 = vmatprep.subr.bf16.mxu0 0
      %919 = vmatpush1.bf16.msra.mxu0 %v781
      %920 = vmatprep.subr.bf16.mxu0 0
      %921 = vmatpush1.bf16.msra.mxu0 %v782
      %922 = vmatprep.subr.bf16.mxu0 0
      %923 = vmatpush1.bf16.msra.mxu0 %v783
      %924 = vmatprep.subr.bf16.mxu0 0
      %925 = vmatpush1.bf16.msra.mxu0 %v784
      %926 = vmatprep.subr.bf16.mxu0 0
      %927 = vmatpush1.bf16.msra.mxu0 %v785
      %928 = vmatprep.subr.bf16.mxu0 0
      %929 = vmatpush1.bf16.msra.mxu0 %v786
      %930 = vmatprep.subr.bf16.mxu0 0
      %931 = vmatpush1.bf16.msra.mxu0 %v787
      %932 = vmatprep.subr.bf16.mxu0 0
      %933 = vmatpush1.bf16.msra.mxu0 %v788
      %934 = vmatprep.subr.bf16.mxu0 0
      %935 = vmatpush1.bf16.msra.mxu0 %v789
      %936 = vmatprep.mubr.bf16.mxu0 %v496
      %937 = vmatmul.mubr.bf16.gmra.mrb[0].mxu0 %v524
      %v938 = vpop.f32.mrb[0].mxu0
      %v939 = vadd.f32 %v874, %v938
      %v940 = vpop.f32.mrb[0].mxu0
      %v941 = vpop.f32.mrb[0].mxu0
      %v942 = vadd.f32 %v877, %v941
      %v943 = vpop.f32.mrb[0].mxu0
      %944 = vmatprep.mubr.bf16.mxu0 %v500
      %945 = vmatmul.mubr.bf16.gmra.mrb[0].mxu0 %v528
      %v946 = vpop.f32.mrb[0].mxu0
      %v947 = vadd.f32 %v882, %v946
      %v948 = vpop.f32.mrb[0].mxu0
      %v949 = vpop.f32.mrb[0].mxu0
      %v950 = vadd.f32 %v885, %v949
      %v951 = vpop.f32.mrb[0].mxu0
      %952 = vmatprep.mubr.bf16.mxu0 %v504
      %953 = vmatmul.mubr.bf16.gmra.mrb[0].mxu0 %v532
      %v954 = vpop.f32.mrb[0].mxu0
      %v955 = vadd.f32 %v890, %v954
      %v956 = vpop.f32.mrb[0].mxu0
      %v957 = vpop.f32.mrb[0].mxu0
      %v958 = vadd.f32 %v893, %v957
      %v959 = vpop.f32.mrb[0].mxu0
      %960 = vmatprep.mubr.bf16.mxu0 %v540
      %961 = vmatmul.mubr.bf16.gmra.mrb[0].mxu0 %v536
      %v962 = vpop.f32.mrb[0].mxu0
      %v963 = vadd.f32 %v898, %v962
      %v964 = vpop.f32.mrb[0].mxu0
      %v965 = vpop.f32.mrb[0].mxu0
      %v966 = vadd.f32 %v901, %v965
      %v967 = vpop.f32.mrb[0].mxu0
      %968 = vdwg.mxu0
      %969 = vmatprep.subr.bf16.mxu0 0
      %970 = vmatpush1.bf16.msra.mxu0 %v790
      %971 = vmatprep.subr.bf16.mxu0 0
      %972 = vmatpush1.bf16.msra.mxu0 %v791
      %973 = vmatprep.subr.bf16.mxu0 0
      %974 = vmatpush1.bf16.msra.mxu0 %v792
      %975 = vmatprep.subr.bf16.mxu0 0
      %976 = vmatpush1.bf16.msra.mxu0 %v793
      %977 = vmatprep.subr.bf16.mxu0 0
      %978 = vmatpush1.bf16.msra.mxu0 0
      %979 = vmatprep.subr.bf16.mxu0 0
      %980 = vmatpush1.bf16.msra.mxu0 0
      %981 = vmatprep.subr.bf16.mxu0 0
      %982 = vmatpush1.bf16.msra.mxu0 0
      %983 = vmatprep.subr.bf16.mxu0 0
      %984 = vmatpush1.bf16.msra.mxu0 0
      %985 = vmatprep.subr.bf16.mxu0 0
      %986 = vmatpush1.bf16.msra.mxu0 0
      %987 = vmatprep.subr.bf16.mxu0 0
      %988 = vmatpush1.bf16.msra.mxu0 0
      %989 = vmatprep.subr.bf16.mxu0 0
      %990 = vmatpush1.bf16.msra.mxu0 0
      %991 = vmatprep.subr.bf16.mxu0 0
      %992 = vmatpush1.bf16.msra.mxu0 0
      %993 = vmatprep.subr.bf16.mxu0 0
      %994 = vmatpush1.bf16.msra.mxu0 0
      %995 = vmatprep.subr.bf16.mxu0 0
      %996 = vmatpush1.bf16.msra.mxu0 0
      %997 = vmatprep.subr.bf16.mxu0 0
      %998 = vmatpush1.bf16.msra.mxu0 0
      %999 = vmatprep.subr.bf16.mxu0 0
      %1000 = vmatpush1.bf16.msra.mxu0 0
      %1001 = vmatprep.mubr.bf16.mxu0 0
      %1002 = vmatmul.mubr.bf16.gmra.mrb[0].mxu0 %v830
      %v1003 = vpop.f32.mrb[0].mxu0
      %v1004 = vadd.f32 %v939, %v1003
      %v1005 = vpop.f32.mrb[0].mxu0
      %v1006 = vpop.f32.mrb[0].mxu0
      %v1007 = vadd.f32 %v942, %v1006
      %v1008 = vpop.f32.mrb[0].mxu0
      %1009 = vmatprep.mubr.bf16.mxu0 0
      %1010 = vmatmul.mubr.bf16.gmra.mrb[0].mxu0 %v832
      %v1011 = vpop.f32.mrb[0].mxu0
      %v1012 = vadd.f32 %v947, %v1011
      %v1013 = vpop.f32.mrb[0].mxu0
      %v1014 = vpop.f32.mrb[0].mxu0
      %v1015 = vadd.f32 %v950, %v1014
      %v1016 = vpop.f32.mrb[0].mxu0
      %1017 = vmatprep.mubr.bf16.mxu0 0
      %1018 = vmatmul.mubr.bf16.gmra.mrb[0].mxu0 %v834
      %v1019 = vpop.f32.mrb[0].mxu0
      %v1020 = vadd.f32 %v955, %v1019
      %v1021 = vpop.f32.mrb[0].mxu0
      %v1022 = vpop.f32.mrb[0].mxu0
      %v1023 = vadd.f32 %v958, %v1022
      %v1024 = vpop.f32.mrb[0].mxu0
      %1025 = vmatprep.mubr.bf16.mxu0 0
      %1026 = vmatmul.mubr.bf16.gmra.mrb[0].mxu0 %v837
      %v1027 = vpop.f32.mrb[0].mxu0
      %v1028 = vadd.f32 %v963, %v1027
      %v1029 = vpop.f32.mrb[0].mxu0
      %v1030 = vpop.f32.mrb[0].mxu0
      %v1031 = vadd.f32 %v966, %v1030
      %v1032 = vpop.f32.mrb[0].mxu0
      %1033 = vdwg.mxu0
      %v1034 = vmax.f32 %v1004, 0.0
      %v1035 = vmax.f32 %v1007, 0.0
      %v1036 = vmax.f32 %v1012, 0.0
      %v1037 = vmax.f32 %v1015, 0.0
      %v1038 = vmax.f32 %v1020, 0.0
      %v1039 = vmax.f32 %v1023, 0.0
      %v1040 = vmax.f32 %v1028, 0.0
      %v1041 = vmax.f32 %v1031, 0.0
      %v1042 = vpack.c.bf16 %v1035, %v1034
      %v1043 = vpack.c.bf16 %v1037, %v1036
      %v1044 = vpack.c.bf16 %v1039, %v1038
      %v1045 = vpack.c.bf16 %v1041, %v1040
      %v1046 = vld [vmem:[%s2] sm:$0xf]
      %v1047 = vld [vmem:[%s2 + $0x4] sm:$0xf]
      %v1048 = vld [vmem:[%s2 + $0x8] sm:$0xf]
      %v1049 = vld [vmem:[%s2 + $0xc] sm:$0xf]
      %v1050 = vld [vmem:[%s2 + $0x10] sm:$0xf]
      %v1051 = vld [vmem:[%s2 + $0x14] sm:$0xf]
      %v1052 = vld [vmem:[%s2 + $0x18] sm:$0xf]
      %v1053 = vld [vmem:[%s2 + $0x1c] sm:$0xf]
      %v1062 = vunpack.c.l.b16 %v1046
      %v1063 = vunpack.c.l.b16 %v1047
      %v1064 = vunpack.c.l.b16 %v1048
      %v1065 = vunpack.c.l.b16 %v1049
      %v1066 = vunpack.c.l.b16 %v1050
      %v1067 = vunpack.c.l.b16 %v1051
      %v1068 = vunpack.c.l.b16 %v1052
      %v1069 = vunpack.c.l.b16 %v1053
      %v1070 = vpack.c.b16 %v1063, %v1062
      %v1071 = vpack.c.b16 %v1065, %v1064
      %v1072 = vpack.c.b16 %v1067, %v1066
      %v1073 = vpack.c.b16 %v1069, %v1068
      %v1079 = vsel %vm489, %v1042, 0
      %v1082 = vsel %vm489, %v1043, 0
      %v1085 = vsel %vm489, %v1044, 0
      %v1088 = vsel %vm489, %v1045, 0
      %1090 = vmatprep.subr.bf16.mxu0 0
      %1091 = vmatpush1.bf16.msra.mxu0 %v1070
      %1092 = vmatprep.subr.bf16.mxu0 0
      %1093 = vmatpush1.bf16.msra.mxu0 %v1071
      %1094 = vmatprep.subr.bf16.mxu0 0
      %1095 = vmatpush1.bf16.msra.mxu0 %v1072
      %1096 = vmatprep.subr.bf16.mxu0 0
      %1097 = vmatpush1.bf16.msra.mxu0 %v1073
      %1098 = vmatprep.subr.bf16.mxu0 0
      %1099 = vmatpush1.bf16.msra.mxu0 0
      %1100 = vmatprep.subr.bf16.mxu0 0
      %1101 = vmatpush1.bf16.msra.mxu0 0
      %1102 = vmatprep.subr.bf16.mxu0 0
      %1103 = vmatpush1.bf16.msra.mxu0 0
      %1104 = vmatprep.subr.bf16.mxu0 0
      %1105 = vmatpush1.bf16.msra.mxu0 0
      %1106 = vmatprep.subr.bf16.mxu0 0
      %1107 = vmatpush1.bf16.msra.mxu0 0
      %1108 = vmatprep.subr.bf16.mxu0 0
      %1109 = vmatpush1.bf16.msra.mxu0 0
      %1110 = vmatprep.subr.bf16.mxu0 0
      %1111 = vmatpush1.bf16.msra.mxu0 0
      %1112 = vmatprep.subr.bf16.mxu0 0
      %1113 = vmatpush1.bf16.msra.mxu0 0
      %1114 = vmatprep.subr.bf16.mxu0 0
      %1115 = vmatpush1.bf16.msra.mxu0 0
      %1116 = vmatprep.subr.bf16.mxu0 0
      %1117 = vmatpush1.bf16.msra.mxu0 0
      %1118 = vmatprep.subr.bf16.mxu0 0
      %1119 = vmatpush1.bf16.msra.mxu0 0
      %1120 = vmatprep.subr.bf16.mxu0 0
      %1121 = vmatpush1.bf16.msra.mxu0 0
      %1122 = vmatprep.mubr.bf16.mxu0 0
      %1123 = vmatmul.mubr.bf16.gmra.mrb[0].mxu0 %v1079
      %v1124 = vpop.f32.mrb[0].mxu0
      %v1125 = vadd.f32 0.0, %v1124
      %v1126 = vpop.f32.mrb[0].mxu0
      %v1127 = vpop.f32.mrb[0].mxu0
      %v1128 = vadd.f32 0.0, %v1127
      %v1129 = vpop.f32.mrb[0].mxu0
      %1130 = vmatprep.mubr.bf16.mxu0 0
      %1131 = vmatmul.mubr.bf16.gmra.mrb[0].mxu0 %v1082
      %v1132 = vpop.f32.mrb[0].mxu0
      %v1133 = vadd.f32 0.0, %v1132
      %v1134 = vpop.f32.mrb[0].mxu0
      %v1135 = vpop.f32.mrb[0].mxu0
      %v1136 = vadd.f32 0.0, %v1135
      %v1137 = vpop.f32.mrb[0].mxu0
      %1138 = vmatprep.mubr.bf16.mxu0 0
      %1139 = vmatmul.mubr.bf16.gmra.mrb[0].mxu0 %v1085
      %v1140 = vpop.f32.mrb[0].mxu0
      %v1141 = vadd.f32 0.0, %v1140
      %v1142 = vpop.f32.mrb[0].mxu0
      %v1143 = vpop.f32.mrb[0].mxu0
      %v1144 = vadd.f32 0.0, %v1143
      %v1145 = vpop.f32.mrb[0].mxu0
      %1146 = vmatprep.mubr.bf16.mxu0 0
      %1147 = vmatmul.mubr.bf16.gmra.mrb[0].mxu0 %v1088
      %v1148 = vpop.f32.mrb[0].mxu0
      %v1149 = vadd.f32 0.0, %v1148
      %v1150 = vpop.f32.mrb[0].mxu0
      %v1151 = vpop.f32.mrb[0].mxu0
      %v1152 = vadd.f32 0.0, %v1151
      %v1153 = vpop.f32.mrb[0].mxu0
      %1154 = vdwg.mxu0
      %v1155 = vunpack.c.l.bf16 %v222
      %v1156 = vunpack.c.l.bf16 %v236
      %v1157 = vunpack.c.l.bf16 %v250
      %v1158 = vunpack.c.l.bf16 %v264
      %v1159 = vunpack.c.l.bf16 %v278
      %v1160 = vunpack.c.l.bf16 %v292
      %v1161 = vunpack.c.l.bf16 %v306
      %v1162 = vunpack.c.l.bf16 %v371
      %v1163 = vadd.f32 %v1155, %v1125
      %v1164 = vadd.f32 %v1156, %v1128
      %v1165 = vadd.f32 %v1157, %v1133
      %v1166 = vadd.f32 %v1158, %v1136
      %v1167 = vadd.f32 %v1159, %v1141
      %v1168 = vadd.f32 %v1160, %v1144
      %v1169 = vadd.f32 %v1161, %v1149
      %v1170 = vadd.f32 %v1162, %v1152
      %vm1171 = vcmp.ge.f32.partialorder %v1163, 0.0
      %vm1172 = vcmp.ge.f32.partialorder %v1164, 0.0
      %vm1173 = vcmp.ge.f32.partialorder %v1165, 0.0
      %vm1174 = vcmp.ge.f32.partialorder %v1166, 0.0
      %vm1175 = vcmp.ge.f32.partialorder %v1167, 0.0
      %vm1176 = vcmp.ge.f32.partialorder %v1168, 0.0
      %vm1177 = vcmp.ge.f32.partialorder %v1169, 0.0
      %vm1178 = vcmp.ge.f32.partialorder %v1170, 0.0
      %v1179 = vmul.f32 %v1163, 0.01
      %v1180 = vmul.f32 %v1164, 0.01
      %v1181 = vmul.f32 %v1165, 0.01
      %v1182 = vmul.f32 %v1166, 0.01
      %v1183 = vmul.f32 %v1167, 0.01
      %v1184 = vmul.f32 %v1168, 0.01
      %v1185 = vmul.f32 %v1169, 0.01
      %v1186 = vmul.f32 %v1170, 0.01
      %v1187 = vsel %vm1171, %v1163, %v1179
      %v1188 = vsel %vm1172, %v1164, %v1180
      %v1189 = vsel %vm1173, %v1165, %v1181
      %v1190 = vsel %vm1174, %v1166, %v1182
      %v1191 = vsel %vm1175, %v1167, %v1183
      %v1192 = vsel %vm1176, %v1168, %v1184
      %v1193 = vsel %vm1177, %v1169, %v1185
      %v1194 = vsel %vm1178, %v1170, %v1186
      %v1195 = vpack.c.bf16 %v1188, %v1187
      %v1196 = vpack.c.bf16 %v1190, %v1189
      %v1197 = vpack.c.bf16 %v1192, %v1191
      %v1198 = vpack.c.bf16 %v1194, %v1193
      %v1203 = vunpack.c.l.b16 %v1195
      %v1204 = vunpack.c.h.b16 %v1195
      %v1205 = vunpack.c.l.b16 %v1196
      %v1206 = vunpack.c.h.b16 %v1196
      %v1207 = vunpack.c.l.b16 %v1197
      %v1208 = vunpack.c.h.b16 %v1197
      %v1209 = vunpack.c.l.b16 %v1198
      %v1210 = vunpack.c.h.b16 %v1198
      %v1211 = vpack.c.b16 %v1203, %v1203
      %v1212 = vpack.c.b16 %v1204, %v1204
      %v1213 = vpack.c.b16 %v1205, %v1205
      %v1214 = vpack.c.b16 %v1206, %v1206
      %v1215 = vpack.c.b16 %v1207, %v1207
      %v1216 = vpack.c.b16 %v1208, %v1208
      %v1217 = vpack.c.b16 %v1209, %v1209
      %v1218 = vpack.c.b16 %v1210, %v1210
      %vm1227 = vcmask 519168
      %1228 = vst.msk [vmem:[%s170] sm:$0xf] %vm1227, %v1211
      %1229 = vst.msk [vmem:[%s170 + $0x4] sm:$0xf] %vm1227, %v1212
      %1230 = vst.msk [vmem:[%s170 + $0x8] sm:$0xf] %vm1227, %v1213
      %1231 = vst.msk [vmem:[%s170 + $0xc] sm:$0xf] %vm1227, %v1214
      %1232 = vst.msk [vmem:[%s170 + $0x10] sm:$0xf] %vm1227, %v1215
      %1233 = vst.msk [vmem:[%s170 + $0x14] sm:$0xf] %vm1227, %v1216
      %1234 = vst.msk [vmem:[%s170 + $0x18] sm:$0xf] %vm1227, %v1217
      %1235 = vst.msk [vmem:[%s170 + $0x1c] sm:$0xf] %vm1227, %v1218
      %p1236 = scmp.lt.s32.totalorder %s14, 1
      %s1237 = scalar_select %p1236, %s14, 1
      %s1238 = smul.addr %s1237, 8
      %s1239 = smul.addr %s1238, 4
      %s1240 = scalar_lea.vmem %s3, %s1239
      // Predicated region
      $region33: #{vqvae_forward.19} parent=31 // pred_check
        %p1241 = pneg %p100
      $region34: #{vqvae_forward.19} parent=31 // pred_check_branch
        %1243 = sbr.rel (%p1241) target = $region36
      $region35: #{vqvae_forward.19} parent=31 // pred_region
        _
      $region36: #{vqvae_forward.19} parent=31 // pred_fallthru
        _
    $region32: #{vqvae_forward.19} parent=5 // pred_fallthru
      _
    %p1244 = scmp.le.s32.totalorder 2, %s9
    // Predicated region
    $region37: #{vqvae_forward.19} parent=5 // pred_check
      %p1245 = pneg %p1244
    $region38: #{vqvae_forward.19} parent=5 // pred_check_branch
      %1247 = sbr.rel (%p1245) target = $region40
    $region39: #{vqvae_forward.19} parent=5 // pred_region
      %s1248 = ssub.s32 %s9, 2
      // Predicated region
      $region41: #{vqvae_forward.19} parent=39 // pred_check
        %p1249 = pneg %p106
      $region42: #{vqvae_forward.19} parent=39 // pred_check_branch
        %1251 = sbr.rel (%p1249) target = $region44
      $region43: #{vqvae_forward.19} parent=39 // pred_region
        %p1252 = scmp.lt.s32.totalorder %s15, 1
        %s1253 = scalar_select %p1252, %s15, 1
        %s1254 = smul.addr %s1253, 8
        %s1255 = smul.addr %s1254, 4
        %s1256 = scalar_lea.vmem %s3, %s1255
      $region44: #{vqvae_forward.19} parent=39 // pred_fallthru
        _
    $region40: #{vqvae_forward.19} parent=5 // pred_fallthru
      _
  $region6: #{vqvae_forward.19} parent=0 // loop_footer
    %s13 = sadd.s32 1, %s9
  $region7: #{vqvae_forward.19} parent=0 // loop_footer_branch
    %8 = sbr.rel target = $region3
  $region8: #{vqvae_forward.19} parent=0 // loop_exit
    _

// kernel: vqvae_forward.20
$region0: #{vqvae_forward.20}
  #allocation0 [shape = 'u32[]', space=smem, size = 0x4, offset = 0x4, fixed_abs, tag = 'smem constant byte address 0x4 - core index']
  #allocation1 [shape = 'u32[144,128]{1,0:T(1,128)}', space=vmem, size = 0x12000, scoped, tag = 'internal scratch']
  %s0 = inlined_call_operand.vmem [shape: bf16[128,64], index: 0, kind: input, shape index: {}]
  %s1 = inlined_call_operand.vmem [shape: bf16[64,64], index: 1, kind: input, shape index: {}]
  %s2 = inlined_call_operand.vmem [shape: f32[1,64], index: 2, kind: input, shape index: {}]
  %s3 = inlined_call_operand.vmem [shape: f32[128,64], index: 3, kind: output, shape index: {}]
  %s4 = sld [smem:[#allocation0]]
  $region22: #{vqvae_forward.20} parent=0
    _
  %s6 = ssub.s32 1, %s4
  %s7 = scalar_select 0, %s6, %s4
  // Predicated region
  $region2: #{vqvae_forward.20} parent=0 // pred_check
    _
  $region3: #{vqvae_forward.20} parent=0 // pred_check_branch
    %9 = sbr.rel (0) target = $region5
  $region4: #{vqvae_forward.20} parent=0 // pred_region
    _
  $region5: #{vqvae_forward.20} parent=0 // pred_fallthru
    _
  // Predicated region
  $region6: #{vqvae_forward.20} parent=0 // pred_check
    _
  $region7: #{vqvae_forward.20} parent=0 // pred_check_branch
    %11 = sbr.rel (0) target = $region9
  $region8: #{vqvae_forward.20} parent=0 // pred_region
    _
  $region9: #{vqvae_forward.20} parent=0 // pred_fallthru
    _
  // Predicated region
  $region10: #{vqvae_forward.20} parent=0 // pred_check
    _
  $region11: #{vqvae_forward.20} parent=0 // pred_check_branch
    %13 = sbr.rel (0) target = $region13
  $region12: #{vqvae_forward.20} parent=0 // pred_region
    _
  $region13: #{vqvae_forward.20} parent=0 // pred_fallthru
    _
  %v15 = vld [vmem:[%s0] sm:$0xf]
  %v16 = vld [vmem:[%s0 + $0x4] sm:$0xf]
  %v17 = vld [vmem:[%s0 + $0x8] sm:$0xf]
  %v18 = vld [vmem:[%s0 + $0xc] sm:$0xf]
  %v19 = vld [vmem:[%s0 + $0x10] sm:$0xf]
  %v20 = vld [vmem:[%s0 + $0x14] sm:$0xf]
  %v21 = vld [vmem:[%s0 + $0x18] sm:$0xf]
  %v22 = vld [vmem:[%s0 + $0x1c] sm:$0xf]
  %v23 = vld [vmem:[%s0 + $0x20] sm:$0xf]
  %v24 = vld [vmem:[%s0 + $0x24] sm:$0xf]
  %v25 = vld [vmem:[%s0 + $0x28] sm:$0xf]
  %v26 = vld [vmem:[%s0 + $0x2c] sm:$0xf]
  %v27 = vld [vmem:[%s0 + $0x30] sm:$0xf]
  %v28 = vld [vmem:[%s0 + $0x34] sm:$0xf]
  %v29 = vld [vmem:[%s0 + $0x38] sm:$0xf]
  %v30 = vld [vmem:[%s0 + $0x3c] sm:$0xf]
  %v31 = vld [vmem:[%s1] sm:$0xf]
  %v32 = vld [vmem:[%s1 + $0x4] sm:$0xf]
  %v33 = vld [vmem:[%s1 + $0x8] sm:$0xf]
  %v34 = vld [vmem:[%s1 + $0xc] sm:$0xf]
  %v35 = vld [vmem:[%s1 + $0x10] sm:$0xf]
  %v36 = vld [vmem:[%s1 + $0x14] sm:$0xf]
  %v37 = vld [vmem:[%s1 + $0x18] sm:$0xf]
  %v38 = vld [vmem:[%s1 + $0x1c] sm:$0xf]
  %v39 = vld [vmem:[%s2] sm:$0x1]
  %v41 = vlaneseq
  %v42 = vshrl.u32 %v41, 7
  %v43 = vsub.s32 0, %v42
  %v44 = vrot.slane %v39, %v43
  %v62 = vunpack.c.l.b16 %v15
  %v63 = vunpack.c.l.b16 %v16
  %v64 = vunpack.c.l.b16 %v17
  %v65 = vunpack.c.l.b16 %v18
  %v66 = vunpack.c.l.b16 %v19
  %v67 = vunpack.c.l.b16 %v20
  %v68 = vunpack.c.l.b16 %v21
  %v69 = vunpack.c.l.b16 %v22
  %v70 = vunpack.c.l.b16 %v23
  %v71 = vunpack.c.l.b16 %v24
  %v72 = vunpack.c.l.b16 %v25
  %v73 = vunpack.c.l.b16 %v26
  %v74 = vunpack.c.l.b16 %v27
  %v75 = vunpack.c.l.b16 %v28
  %v76 = vunpack.c.l.b16 %v29
  %v77 = vunpack.c.l.b16 %v30
  %v78 = vpack.c.b16 %v63, %v62
  %v79 = vpack.c.b16 %v65, %v64
  %v80 = vpack.c.b16 %v67, %v66
  %v81 = vpack.c.b16 %v69, %v68
  %v82 = vpack.c.b16 %v71, %v70
  %v83 = vpack.c.b16 %v73, %v72
  %v84 = vpack.c.b16 %v75, %v74
  %v85 = vpack.c.b16 %v77, %v76
  %v94 = vunpack.c.l.b16 %v31
  %v95 = vunpack.c.l.b16 %v32
  %v96 = vunpack.c.l.b16 %v33
  %v97 = vunpack.c.l.b16 %v34
  %v98 = vunpack.c.l.b16 %v35
  %v99 = vunpack.c.l.b16 %v36
  %v100 = vunpack.c.l.b16 %v37
  %v101 = vunpack.c.l.b16 %v38
  %v102 = vpack.c.b16 %v95, %v94
  %v103 = vpack.c.b16 %v97, %v96
  %v104 = vpack.c.b16 %v99, %v98
  %v105 = vpack.c.b16 %v101, %v100
  %vm110 = vcmask 523264
  %v112 = vsel %vm110, %v78, 0
  %v115 = vsel %vm110, %v79, 0
  %v118 = vsel %vm110, %v80, 0
  %v121 = vsel %vm110, %v81, 0
  %v124 = vsel %vm110, %v82, 0
  %v127 = vsel %vm110, %v83, 0
  %v130 = vsel %vm110, %v84, 0
  %v133 = vsel %vm110, %v85, 0
  %135 = vmatprep.subr.bf16.mxu0 0
  %136 = vmatpush1.bf16.msra.mxu0 %v102
  %137 = vmatprep.subr.bf16.mxu0 0
  %138 = vmatpush1.bf16.msra.mxu0 %v103
  %139 = vmatprep.subr.bf16.mxu0 0
  %140 = vmatpush1.bf16.msra.mxu0 %v104
  %141 = vmatprep.subr.bf16.mxu0 0
  %142 = vmatpush1.bf16.msra.mxu0 %v105
  %143 = vmatprep.subr.bf16.mxu0 0
  %144 = vmatpush1.bf16.msra.mxu0 0
  %145 = vmatprep.subr.bf16.mxu0 0
  %146 = vmatpush1.bf16.msra.mxu0 0
  %147 = vmatprep.subr.bf16.mxu0 0
  %148 = vmatpush1.bf16.msra.mxu0 0
  %149 = vmatprep.subr.bf16.mxu0 0
  %150 = vmatpush1.bf16.msra.mxu0 0
  %151 = vmatprep.subr.bf16.mxu0 0
  %152 = vmatpush1.bf16.msra.mxu0 0
  %153 = vmatprep.subr.bf16.mxu0 0
  %154 = vmatpush1.bf16.msra.mxu0 0
  %155 = vmatprep.subr.bf16.mxu0 0
  %156 = vmatpush1.bf16.msra.mxu0 0
  %157 = vmatprep.subr.bf16.mxu0 0
  %158 = vmatpush1.bf16.msra.mxu0 0
  %159 = vmatprep.subr.bf16.mxu0 0
  %160 = vmatpush1.bf16.msra.mxu0 0
  %161 = vmatprep.subr.bf16.mxu0 0
  %162 = vmatpush1.bf16.msra.mxu0 0
  %163 = vmatprep.subr.bf16.mxu0 0
  %164 = vmatpush1.bf16.msra.mxu0 0
  %165 = vmatprep.subr.bf16.mxu0 0
  %166 = vmatpush1.bf16.msra.mxu0 0
  %167 = vmatprep.mubr.bf16.mxu0 0
  %168 = vmatmul.mubr.bf16.gmra.mrb[0].mxu0 %v112
  %v169 = vpop.f32.mrb[0].mxu0
  %v170 = vadd.f32 %v44, %v169
  %v171 = vpop.f32.mrb[0].mxu0
  %v172 = vpop.f32.mrb[0].mxu0
  %v173 = vadd.f32 %v44, %v172
  %v174 = vpop.f32.mrb[0].mxu0
  %175 = vmatprep.mubr.bf16.mxu0 0
  %176 = vmatmul.mubr.bf16.gmra.mrb[0].mxu0 %v115
  %v177 = vpop.f32.mrb[0].mxu0
  %v178 = vadd.f32 %v44, %v177
  %v179 = vpop.f32.mrb[0].mxu0
  %v180 = vpop.f32.mrb[0].mxu0
  %v181 = vadd.f32 %v44, %v180
  %v182 = vpop.f32.mrb[0].mxu0
  %183 = vmatprep.mubr.bf16.mxu0 0
  %184 = vmatmul.mubr.bf16.gmra.mrb[0].mxu0 %v118
  %v185 = vpop.f32.mrb[0].mxu0
  %v186 = vadd.f32 %v44, %v185
  %v187 = vpop.f32.mrb[0].mxu0
  %v188 = vpop.f32.mrb[0].mxu0
  %v189 = vadd.f32 %v44, %v188
  %v190 = vpop.f32.mrb[0].mxu0
  %191 = vmatprep.mubr.bf16.mxu0 0
  %192 = vmatmul.mubr.bf16.gmra.mrb[0].mxu0 %v121
  %v193 = vpop.f32.mrb[0].mxu0
  %v194 = vadd.f32 %v44, %v193
  %v195 = vpop.f32.mrb[0].mxu0
  %v196 = vpop.f32.mrb[0].mxu0
  %v197 = vadd.f32 %v44, %v196
  %v198 = vpop.f32.mrb[0].mxu0
  %199 = vmatprep.mubr.bf16.mxu0 0
  %200 = vmatmul.mubr.bf16.gmra.mrb[0].mxu0 %v124
  %v201 = vpop.f32.mrb[0].mxu0
  %v202 = vadd.f32 %v44, %v201
  %v203 = vpop.f32.mrb[0].mxu0
  %v204 = vpop.f32.mrb[0].mxu0
  %v205 = vadd.f32 %v44, %v204
  %v206 = vpop.f32.mrb[0].mxu0
  %207 = vmatprep.mubr.bf16.mxu0 0
  %208 = vmatmul.mubr.bf16.gmra.mrb[0].mxu0 %v127
  %v209 = vpop.f32.mrb[0].mxu0
  %v210 = vadd.f32 %v44, %v209
  %v211 = vpop.f32.mrb[0].mxu0
  %v212 = vpop.f32.mrb[0].mxu0
  %v213 = vadd.f32 %v44, %v212
  %v214 = vpop.f32.mrb[0].mxu0
  %215 = vmatprep.mubr.bf16.mxu0 0
  %216 = vmatmul.mubr.bf16.gmra.mrb[0].mxu0 %v130
  %v217 = vpop.f32.mrb[0].mxu0
  %v218 = vadd.f32 %v44, %v217
  %v219 = vpop.f32.mrb[0].mxu0
  %v220 = vpop.f32.mrb[0].mxu0
  %v221 = vadd.f32 %v44, %v220
  %v222 = vpop.f32.mrb[0].mxu0
  %223 = vmatprep.mubr.bf16.mxu0 0
  %224 = vmatmul.mubr.bf16.gmra.mrb[0].mxu0 %v133
  %v225 = vpop.f32.mrb[0].mxu0
  %v226 = vadd.f32 %v44, %v225
  %v227 = vpop.f32.mrb[0].mxu0
  %v228 = vpop.f32.mrb[0].mxu0
  %v229 = vadd.f32 %v44, %v228
  %v230 = vpop.f32.mrb[0].mxu0
  %231 = vdwg.mxu0
  %vm232 = vcmp.ge.f32.partialorder %v170, 0.0
  %vm233 = vcmp.ge.f32.partialorder %v173, 0.0
  %vm234 = vcmp.ge.f32.partialorder %v178, 0.0
  %vm235 = vcmp.ge.f32.partialorder %v181, 0.0
  %vm236 = vcmp.ge.f32.partialorder %v186, 0.0
  %vm237 = vcmp.ge.f32.partialorder %v189, 0.0
  %vm238 = vcmp.ge.f32.partialorder %v194, 0.0
  %vm239 = vcmp.ge.f32.partialorder %v197, 0.0
  %vm240 = vcmp.ge.f32.partialorder %v202, 0.0
  %vm241 = vcmp.ge.f32.partialorder %v205, 0.0
  %vm242 = vcmp.ge.f32.partialorder %v210, 0.0
  %vm243 = vcmp.ge.f32.partialorder %v213, 0.0
  %vm244 = vcmp.ge.f32.partialorder %v218, 0.0
  %vm245 = vcmp.ge.f32.partialorder %v221, 0.0
  %vm246 = vcmp.ge.f32.partialorder %v226, 0.0
  %vm247 = vcmp.ge.f32.partialorder %v229, 0.0
  %v248 = vmul.f32 %v170, 0.01
  %v249 = vmul.f32 %v173, 0.01
  %v250 = vmul.f32 %v178, 0.01
  %v251 = vmul.f32 %v181, 0.01
  %v252 = vmul.f32 %v186, 0.01
  %v253 = vmul.f32 %v189, 0.01
  %v254 = vmul.f32 %v194, 0.01
  %v255 = vmul.f32 %v197, 0.01
  %v256 = vmul.f32 %v202, 0.01
  %v257 = vmul.f32 %v205, 0.01
  %v258 = vmul.f32 %v210, 0.01
  %v259 = vmul.f32 %v213, 0.01
  %v260 = vmul.f32 %v218, 0.01
  %v261 = vmul.f32 %v221, 0.01
  %v262 = vmul.f32 %v226, 0.01
  %v263 = vmul.f32 %v229, 0.01
  %v264 = vsel %vm232, %v170, %v248
  %v265 = vsel %vm233, %v173, %v249
  %v266 = vsel %vm234, %v178, %v250
  %v267 = vsel %vm235, %v181, %v251
  %v268 = vsel %vm236, %v186, %v252
  %v269 = vsel %vm237, %v189, %v253
  %v270 = vsel %vm238, %v194, %v254
  %v271 = vsel %vm239, %v197, %v255
  %v272 = vsel %vm240, %v202, %v256
  %v273 = vsel %vm241, %v205, %v257
  %v274 = vsel %vm242, %v210, %v258
  %v275 = vsel %vm243, %v213, %v259
  %v276 = vsel %vm244, %v218, %v260
  %v277 = vsel %vm245, %v221, %v261
  %v278 = vsel %vm246, %v226, %v262
  %v279 = vsel %vm247, %v229, %v263
  %280 = vst.msk [vmem:[%s3] sm:$0xff] %vm110, %v264
  %281 = vst.msk [vmem:[%s3 + $0x8] sm:$0xff] %vm110, %v265
  %282 = vst.msk [vmem:[%s3 + $0x10] sm:$0xff] %vm110, %v266
  %283 = vst.msk [vmem:[%s3 + $0x18] sm:$0xff] %vm110, %v267
  %284 = vst.msk [vmem:[%s3 + $0x20] sm:$0xff] %vm110, %v268
  %285 = vst.msk [vmem:[%s3 + $0x28] sm:$0xff] %vm110, %v269
  %286 = vst.msk [vmem:[%s3 + $0x30] sm:$0xff] %vm110, %v270
  %287 = vst.msk [vmem:[%s3 + $0x38] sm:$0xff] %vm110, %v271
  %288 = vst.msk [vmem:[%s3 + $0x40] sm:$0xff] %vm110, %v272
  %289 = vst.msk [vmem:[%s3 + $0x48] sm:$0xff] %vm110, %v273
  %290 = vst.msk [vmem:[%s3 + $0x50] sm:$0xff] %vm110, %v274
  %291 = vst.msk [vmem:[%s3 + $0x58] sm:$0xff] %vm110, %v275
  %292 = vst.msk [vmem:[%s3 + $0x60] sm:$0xff] %vm110, %v276
  %293 = vst.msk [vmem:[%s3 + $0x68] sm:$0xff] %vm110, %v277
  %294 = vst.msk [vmem:[%s3 + $0x70] sm:$0xff] %vm110, %v278
  %295 = vst.msk [vmem:[%s3 + $0x78] sm:$0xff] %vm110, %v279
  // Predicated region
  $region14: #{vqvae_forward.20} parent=0 // pred_check
    _
  $region15: #{vqvae_forward.20} parent=0 // pred_check_branch
    %297 = sbr.rel (0) target = $region17
  $region16: #{vqvae_forward.20} parent=0 // pred_region
    _
  $region17: #{vqvae_forward.20} parent=0 // pred_fallthru
    _
  // Predicated region
  $region18: #{vqvae_forward.20} parent=0 // pred_check
    _
  $region19: #{vqvae_forward.20} parent=0 // pred_check_branch
    %299 = sbr.rel (0) target = $region21
  $region20: #{vqvae_forward.20} parent=0 // pred_region
    _
  $region21: #{vqvae_forward.20} parent=0 // pred_fallthru
    _

// kernel: vqvae_forward.21
$region0: #{vqvae_forward.21}
  #allocation0 [shape = 'u32[]', space=smem, size = 0x4, offset = 0x4, fixed_abs, tag = 'smem constant byte address 0x4 - core index']
  #allocation1 [shape = 'u32[144,128]{1,0:T(1,128)}', space=vmem, size = 0x12000, scoped, tag = 'internal scratch']
  %s0 = inlined_call_operand.vmem [shape: f32[128,64], index: 0, kind: input, shape index: {}]
  %s1 = inlined_call_operand.vmem [shape: f32[128,64], index: 1, kind: input, shape index: {}]
  %s2 = inlined_call_operand.vmem [shape: f32[1,128], index: 2, kind: input, shape index: {}]
  %s3 = inlined_call_operand.vmem [shape: f32[128,64], index: 3, kind: output, shape index: {0}]
  %s4 = inlined_call_operand.hbm [shape: f32[1,1], index: 4, kind: output, shape index: {1}]
  %5 = xla_tuple %s3, %s4
  %s6 = sld [smem:[#allocation0]]
  $region30: #{vqvae_forward.21} parent=0
    _
  %s8 = ssub.s32 1, %s6
  %s9 = scalar_select 0, %s8, %s6
  $region1: #{vqvae_forward.21} parent=0
    #allocation2 [shape = 'u8[512]{0}', space=smem, size = 0x200, scoped, tag = 'output window, operand 1, single buffered']
    #allocation3 [shape = 's32[1]{0}', space=sflag, size = 0x4, scoped, tag = 'scoped memory for vqvae_forward.21']
    %10 = vsyncpa [#allocation3], 0
    // Predicated region
    $region2: #{vqvae_forward.21} parent=1 // pred_check
      _
    $region3: #{vqvae_forward.21} parent=1 // pred_check_branch
      %12 = sbr.rel (0) target = $region5
    $region4: #{vqvae_forward.21} parent=1 // pred_region
      _
    $region5: #{vqvae_forward.21} parent=1 // pred_fallthru
      _
    // Predicated region
    $region6: #{vqvae_forward.21} parent=1 // pred_check
      _
    $region7: #{vqvae_forward.21} parent=1 // pred_check_branch
      %14 = sbr.rel (0) target = $region9
    $region8: #{vqvae_forward.21} parent=1 // pred_region
      _
    $region9: #{vqvae_forward.21} parent=1 // pred_fallthru
      _
    // Predicated region
    $region10: #{vqvae_forward.21} parent=1 // pred_check
      _
    $region11: #{vqvae_forward.21} parent=1 // pred_check_branch
      %16 = sbr.rel (0) target = $region13
    $region12: #{vqvae_forward.21} parent=1 // pred_region
      _
    $region13: #{vqvae_forward.21} parent=1 // pred_fallthru
      _
    %v18 = vld [vmem:[%s0] sm:$0xff]
    %v19 = vld [vmem:[%s0 + $0x8] sm:$0xff]
    %v20 = vld [vmem:[%s0 + $0x10] sm:$0xff]
    %v21 = vld [vmem:[%s0 + $0x18] sm:$0xff]
    %v22 = vld [vmem:[%s0 + $0x20] sm:$0xff]
    %v23 = vld [vmem:[%s0 + $0x28] sm:$0xff]
    %v24 = vld [vmem:[%s0 + $0x30] sm:$0xff]
    %v25 = vld [vmem:[%s0 + $0x38] sm:$0xff]
    %v26 = vld [vmem:[%s0 + $0x40] sm:$0xff]
    %v27 = vld [vmem:[%s0 + $0x48] sm:$0xff]
    %v28 = vld [vmem:[%s0 + $0x50] sm:$0xff]
    %v29 = vld [vmem:[%s0 + $0x58] sm:$0xff]
    %v30 = vld [vmem:[%s0 + $0x60] sm:$0xff]
    %v31 = vld [vmem:[%s0 + $0x68] sm:$0xff]
    %v32 = vld [vmem:[%s0 + $0x70] sm:$0xff]
    %v33 = vld [vmem:[%s0 + $0x78] sm:$0xff]
    %v34 = vld [vmem:[%s1] sm:$0xff]
    %v35 = vld [vmem:[%s1 + $0x8] sm:$0xff]
    %v36 = vld [vmem:[%s1 + $0x10] sm:$0xff]
    %v37 = vld [vmem:[%s1 + $0x18] sm:$0xff]
    %v38 = vld [vmem:[%s1 + $0x20] sm:$0xff]
    %v39 = vld [vmem:[%s1 + $0x28] sm:$0xff]
    %v40 = vld [vmem:[%s1 + $0x30] sm:$0xff]
    %v41 = vld [vmem:[%s1 + $0x38] sm:$0xff]
    %v42 = vld [vmem:[%s1 + $0x40] sm:$0xff]
    %v43 = vld [vmem:[%s1 + $0x48] sm:$0xff]
    %v44 = vld [vmem:[%s1 + $0x50] sm:$0xff]
    %v45 = vld [vmem:[%s1 + $0x58] sm:$0xff]
    %v46 = vld [vmem:[%s1 + $0x60] sm:$0xff]
    %v47 = vld [vmem:[%s1 + $0x68] sm:$0xff]
    %v48 = vld [vmem:[%s1 + $0x70] sm:$0xff]
    %v49 = vld [vmem:[%s1 + $0x78] sm:$0xff]
    %v50 = vpack.c.bf16 %v19, %v18
    %v51 = vpack.c.bf16 %v21, %v20
    %v52 = vpack.c.bf16 %v23, %v22
    %v53 = vpack.c.bf16 %v25, %v24
    %v54 = vpack.c.bf16 %v27, %v26
    %v55 = vpack.c.bf16 %v29, %v28
    %v56 = vpack.c.bf16 %v31, %v30
    %v57 = vpack.c.bf16 %v33, %v32
    %v58 = vpack.c.bf16 %v35, %v34
    %v59 = vpack.c.bf16 %v37, %v36
    %v60 = vpack.c.bf16 %v39, %v38
    %v61 = vpack.c.bf16 %v41, %v40
    %v62 = vpack.c.bf16 %v43, %v42
    %v63 = vpack.c.bf16 %v45, %v44
    %v64 = vpack.c.bf16 %v47, %v46
    %v65 = vpack.c.bf16 %v49, %v48
    %vm66 = vcmask 523264
    %v68 = vsel %vm66, %v50, 0
    %v71 = vsel %vm66, %v51, 0
    %v74 = vsel %vm66, %v52, 0
    %v77 = vsel %vm66, %v53, 0
    %v80 = vsel %vm66, %v54, 0
    %v83 = vsel %vm66, %v55, 0
    %v86 = vsel %vm66, %v56, 0
    %v89 = vsel %vm66, %v57, 0
    %v92 = vsel %vm66, %v58, 0
    %v95 = vsel %vm66, %v59, 0
    %v98 = vsel %vm66, %v60, 0
    %v101 = vsel %vm66, %v61, 0
    %v104 = vsel %vm66, %v62, 0
    %v107 = vsel %vm66, %v63, 0
    %v110 = vsel %vm66, %v64, 0
    %v113 = vsel %vm66, %v65, 0
    %115 = vmatprep.subr.bf16.mxu0 0
    %116 = vmatpush1.bf16.xpose.msra.mxu0 %v92
    %117 = vmatprep.subr.bf16.mxu0 0
    %118 = vmatpush1.bf16.xpose.msra.mxu0 %v95
    %119 = vmatprep.subr.bf16.mxu0 0
    %120 = vmatpush1.bf16.xpose.msra.mxu0 %v98
    %121 = vmatprep.subr.bf16.mxu0 0
    %122 = vmatpush1.bf16.xpose.msra.mxu0 %v101
    %123 = vmatprep.subr.bf16.mxu0 0
    %124 = vmatpush1.bf16.xpose.msra.mxu0 %v104
    %125 = vmatprep.subr.bf16.mxu0 0
    %126 = vmatpush1.bf16.xpose.msra.mxu0 %v107
    %127 = vmatprep.subr.bf16.mxu0 0
    %128 = vmatpush1.bf16.xpose.msra.mxu0 %v110
    %129 = vmatprep.subr.bf16.mxu0 0
    %130 = vmatpush1.bf16.xpose.msra.mxu0 %v113
    %131 = vmatprep.subr.bf16.mxu0 0
    %132 = vmatpush1.bf16.xpose.msra.mxu0 0
    %133 = vmatprep.subr.bf16.mxu0 0
    %134 = vmatpush1.bf16.xpose.msra.mxu0 0
    %135 = vmatprep.subr.bf16.mxu0 0
    %136 = vmatpush1.bf16.xpose.msra.mxu0 0
    %137 = vmatprep.subr.bf16.mxu0 0
    %138 = vmatpush1.bf16.xpose.msra.mxu0 0
    %139 = vmatprep.subr.bf16.mxu0 0
    %140 = vmatpush1.bf16.xpose.msra.mxu0 0
    %141 = vmatprep.subr.bf16.mxu0 0
    %142 = vmatpush1.bf16.xpose.msra.mxu0 0
    %143 = vmatprep.subr.bf16.mxu0 0
    %144 = vmatpush1.bf16.xpose.msra.mxu0 0
    %145 = vmatprep.subr.bf16.mxu0 0
    %146 = vmatpush1.bf16.xpose.msra.mxu0 0
    %147 = vmatprep.mubr.bf16.mxu0 0
    %148 = vmatmul.mubr.bf16.gmra.mrb[0].mxu0 %v68
    %v149 = vpop.f32.mrb[0].mxu0
    %v150 = vadd.f32 0.0, %v149
    %v151 = vpop.f32.mrb[0].mxu0
    %v152 = vpop.f32.mrb[0].mxu0
    %v153 = vadd.f32 0.0, %v152
    %v154 = vpop.f32.mrb[0].mxu0
    %155 = vmatprep.mubr.bf16.mxu0 0
    %156 = vmatmul.mubr.bf16.gmra.mrb[0].mxu0 %v71
    %v157 = vpop.f32.mrb[0].mxu0
    %v158 = vadd.f32 0.0, %v157
    %v159 = vpop.f32.mrb[0].mxu0
    %v160 = vpop.f32.mrb[0].mxu0
    %v161 = vadd.f32 0.0, %v160
    %v162 = vpop.f32.mrb[0].mxu0
    %163 = vmatprep.mubr.bf16.mxu0 0
    %164 = vmatmul.mubr.bf16.gmra.mrb[0].mxu0 %v74
    %v165 = vpop.f32.mrb[0].mxu0
    %v166 = vadd.f32 0.0, %v165
    %v167 = vpop.f32.mrb[0].mxu0
    %v168 = vpop.f32.mrb[0].mxu0
    %v169 = vadd.f32 0.0, %v168
    %v170 = vpop.f32.mrb[0].mxu0
    %171 = vmatprep.mubr.bf16.mxu0 0
    %172 = vmatmul.mubr.bf16.gmra.mrb[0].mxu0 %v77
    %v173 = vpop.f32.mrb[0].mxu0
    %v174 = vadd.f32 0.0, %v173
    %v175 = vpop.f32.mrb[0].mxu0
    %v176 = vpop.f32.mrb[0].mxu0
    %v177 = vadd.f32 0.0, %v176
    %v178 = vpop.f32.mrb[0].mxu0
    %179 = vmatprep.mubr.bf16.mxu0 0
    %180 = vmatmul.mubr.bf16.gmra.mrb[0].mxu0 %v80
    %v181 = vpop.f32.mrb[0].mxu0
    %v182 = vadd.f32 0.0, %v181
    %v183 = vpop.f32.mrb[0].mxu0
    %v184 = vpop.f32.mrb[0].mxu0
    %v185 = vadd.f32 0.0, %v184
    %v186 = vpop.f32.mrb[0].mxu0
    %187 = vmatprep.mubr.bf16.mxu0 0
    %188 = vmatmul.mubr.bf16.gmra.mrb[0].mxu0 %v83
    %v189 = vpop.f32.mrb[0].mxu0
    %v190 = vadd.f32 0.0, %v189
    %v191 = vpop.f32.mrb[0].mxu0
    %v192 = vpop.f32.mrb[0].mxu0
    %v193 = vadd.f32 0.0, %v192
    %v194 = vpop.f32.mrb[0].mxu0
    %195 = vmatprep.mubr.bf16.mxu0 0
    %196 = vmatmul.mubr.bf16.gmra.mrb[0].mxu0 %v86
    %v197 = vpop.f32.mrb[0].mxu0
    %v198 = vadd.f32 0.0, %v197
    %v199 = vpop.f32.mrb[0].mxu0
    %v200 = vpop.f32.mrb[0].mxu0
    %v201 = vadd.f32 0.0, %v200
    %v202 = vpop.f32.mrb[0].mxu0
    %203 = vmatprep.mubr.bf16.mxu0 0
    %204 = vmatmul.mubr.bf16.gmra.mrb[0].mxu0 %v89
    %v205 = vpop.f32.mrb[0].mxu0
    %v206 = vadd.f32 0.0, %v205
    %v207 = vpop.f32.mrb[0].mxu0
    %v208 = vpop.f32.mrb[0].mxu0
    %v209 = vadd.f32 0.0, %v208
    %v210 = vpop.f32.mrb[0].mxu0
    %211 = vdwg.mxu0
    %v212 = vmul.f32 %v18, %v18
    %v213 = vmul.f32 %v19, %v19
    %v214 = vmul.f32 %v20, %v20
    %v215 = vmul.f32 %v21, %v21
    %v216 = vmul.f32 %v22, %v22
    %v217 = vmul.f32 %v23, %v23
    %v218 = vmul.f32 %v24, %v24
    %v219 = vmul.f32 %v25, %v25
    %v220 = vmul.f32 %v26, %v26
    %v221 = vmul.f32 %v27, %v27
    %v222 = vmul.f32 %v28, %v28
    %v223 = vmul.f32 %v29, %v29
    %v224 = vmul.f32 %v30, %v30
    %v225 = vmul.f32 %v31, %v31
    %v226 = vmul.f32 %v32, %v32
    %v227 = vmul.f32 %v33, %v33
    %v228 = vsel %vm66, %v212, 0.0
    %229 = vadd.xlane.f32.xlu0 %v228
    %v230 = vpop.xlane.xlu0 %229
    %v231 = vsel %vm66, %v213, 0.0
    %232 = vadd.xlane.f32.xlu0 %v231
    %v233 = vpop.xlane.xlu0 %232
    %v234 = vsel %vm66, %v214, 0.0
    %235 = vadd.xlane.f32.xlu0 %v234
    %v236 = vpop.xlane.xlu0 %235
    %v237 = vsel %vm66, %v215, 0.0
    %238 = vadd.xlane.f32.xlu0 %v237
    %v239 = vpop.xlane.xlu0 %238
    %v240 = vsel %vm66, %v216, 0.0
    %241 = vadd.xlane.f32.xlu0 %v240
    %v242 = vpop.xlane.xlu0 %241
    %v243 = vsel %vm66, %v217, 0.0
    %244 = vadd.xlane.f32.xlu0 %v243
    %v245 = vpop.xlane.xlu0 %244
    %v246 = vsel %vm66, %v218, 0.0
    %247 = vadd.xlane.f32.xlu0 %v246
    %v248 = vpop.xlane.xlu0 %247
    %v249 = vsel %vm66, %v219, 0.0
    %250 = vadd.xlane.f32.xlu0 %v249
    %v251 = vpop.xlane.xlu0 %250
    %v252 = vsel %vm66, %v220, 0.0
    %253 = vadd.xlane.f32.xlu0 %v252
    %v254 = vpop.xlane.xlu0 %253
    %v255 = vsel %vm66, %v221, 0.0
    %256 = vadd.xlane.f32.xlu0 %v255
    %v257 = vpop.xlane.xlu0 %256
    %v258 = vsel %vm66, %v222, 0.0
    %259 = vadd.xlane.f32.xlu0 %v258
    %v260 = vpop.xlane.xlu0 %259
    %v261 = vsel %vm66, %v223, 0.0
    %262 = vadd.xlane.f32.xlu0 %v261
    %v263 = vpop.xlane.xlu0 %262
    %v264 = vsel %vm66, %v224, 0.0
    %265 = vadd.xlane.f32.xlu0 %v264
    %v266 = vpop.xlane.xlu0 %265
    %v267 = vsel %vm66, %v225, 0.0
    %268 = vadd.xlane.f32.xlu0 %v267
    %v269 = vpop.xlane.xlu0 %268
    %v270 = vsel %vm66, %v226, 0.0
    %271 = vadd.xlane.f32.xlu0 %v270
    %v272 = vpop.xlane.xlu0 %271
    %v273 = vsel %vm66, %v227, 0.0
    %274 = vadd.xlane.f32.xlu0 %v273
    %v275 = vpop.xlane.xlu0 %274
    %v276 = vld [vmem:[%s2] sm:$0x1]
    %v278 = vlaneseq
    %v279 = vshrl.u32 %v278, 7
    %v280 = vsub.s32 0, %v279
    %v281 = vrot.slane %v276, %v280
    %v283 = vadd.f32 %v230, %v281
    %v284 = vadd.f32 %v233, %v281
    %v285 = vadd.f32 %v236, %v281
    %v286 = vadd.f32 %v239, %v281
    %v287 = vadd.f32 %v242, %v281
    %v288 = vadd.f32 %v245, %v281
    %v289 = vadd.f32 %v248, %v281
    %v290 = vadd.f32 %v251, %v281
    %v291 = vadd.f32 %v254, %v281
    %v292 = vadd.f32 %v257, %v281
    %v293 = vadd.f32 %v260, %v281
    %v294 = vadd.f32 %v263, %v281
    %v295 = vadd.f32 %v266, %v281
    %v296 = vadd.f32 %v269, %v281
    %v297 = vadd.f32 %v272, %v281
    %v298 = vadd.f32 %v275, %v281
    %v299 = vmul.f32 %v150, 2.0
    %v300 = vmul.f32 %v153, 2.0
    %v301 = vmul.f32 %v158, 2.0
    %v302 = vmul.f32 %v161, 2.0
    %v303 = vmul.f32 %v166, 2.0
    %v304 = vmul.f32 %v169, 2.0
    %v305 = vmul.f32 %v174, 2.0
    %v306 = vmul.f32 %v177, 2.0
    %v307 = vmul.f32 %v182, 2.0
    %v308 = vmul.f32 %v185, 2.0
    %v309 = vmul.f32 %v190, 2.0
    %v310 = vmul.f32 %v193, 2.0
    %v311 = vmul.f32 %v198, 2.0
    %v312 = vmul.f32 %v201, 2.0
    %v313 = vmul.f32 %v206, 2.0
    %v314 = vmul.f32 %v209, 2.0
    %v315 = vsub.f32 %v283, %v299
    %v316 = vsub.f32 %v284, %v300
    %v317 = vsub.f32 %v285, %v301
    %v318 = vsub.f32 %v286, %v302
    %v319 = vsub.f32 %v287, %v303
    %v320 = vsub.f32 %v288, %v304
    %v321 = vsub.f32 %v289, %v305
    %v322 = vsub.f32 %v290, %v306
    %v323 = vsub.f32 %v291, %v307
    %v324 = vsub.f32 %v292, %v308
    %v325 = vsub.f32 %v293, %v309
    %v326 = vsub.f32 %v294, %v310
    %v327 = vsub.f32 %v295, %v311
    %v328 = vsub.f32 %v296, %v312
    %v329 = vsub.f32 %v297, %v313
    %v330 = vsub.f32 %v298, %v314
    %v331 = vlaneseq
    %v332 = vand.u32 %v331, 127
    %333 = vmin.xlane.f32.xlu0 %v315
    %v334 = vpop.xlane.xlu0 %333
    %335 = vmin.xlane.f32.xlu0 %v316
    %v336 = vpop.xlane.xlu0 %335
    %337 = vmin.xlane.f32.xlu0 %v317
    %v338 = vpop.xlane.xlu0 %337
    %339 = vmin.xlane.f32.xlu0 %v318
    %v340 = vpop.xlane.xlu0 %339
    %341 = vmin.xlane.f32.xlu0 %v319
    %v342 = vpop.xlane.xlu0 %341
    %343 = vmin.xlane.f32.xlu0 %v320
    %v344 = vpop.xlane.xlu0 %343
    %345 = vmin.xlane.f32.xlu0 %v321
    %v346 = vpop.xlane.xlu0 %345
    %347 = vmin.xlane.f32.xlu0 %v322
    %v348 = vpop.xlane.xlu0 %347
    %349 = vmin.xlane.f32.xlu0 %v323
    %v350 = vpop.xlane.xlu0 %349
    %351 = vmin.xlane.f32.xlu0 %v324
    %v352 = vpop.xlane.xlu0 %351
    %353 = vmin.xlane.f32.xlu0 %v325
    %v354 = vpop.xlane.xlu0 %353
    %355 = vmin.xlane.f32.xlu0 %v326
    %v356 = vpop.xlane.xlu0 %355
    %357 = vmin.xlane.f32.xlu0 %v327
    %v358 = vpop.xlane.xlu0 %357
    %359 = vmin.xlane.f32.xlu0 %v328
    %v360 = vpop.xlane.xlu0 %359
    %361 = vmin.xlane.f32.xlu0 %v329
    %v362 = vpop.xlane.xlu0 %361
    %363 = vmin.xlane.f32.xlu0 %v330
    %v364 = vpop.xlane.xlu0 %363
    %vm365 = vcmp.eq.f32.partialorder %v315, %v334
    %vm366 = vcmp.eq.f32.partialorder %v316, %v336
    %vm367 = vcmp.eq.f32.partialorder %v317, %v338
    %vm368 = vcmp.eq.f32.partialorder %v318, %v340
    %vm369 = vcmp.eq.f32.partialorder %v319, %v342
    %vm370 = vcmp.eq.f32.partialorder %v320, %v344
    %vm371 = vcmp.eq.f32.partialorder %v321, %v346
    %vm372 = vcmp.eq.f32.partialorder %v322, %v348
    %vm373 = vcmp.eq.f32.partialorder %v323, %v350
    %vm374 = vcmp.eq.f32.partialorder %v324, %v352
    %vm375 = vcmp.eq.f32.partialorder %v325, %v354
    %vm376 = vcmp.eq.f32.partialorder %v326, %v356
    %vm377 = vcmp.eq.f32.partialorder %v327, %v358
    %vm378 = vcmp.eq.f32.partialorder %v328, %v360
    %vm379 = vcmp.eq.f32.partialorder %v329, %v362
    %vm380 = vcmp.eq.f32.partialorder %v330, %v364
    %v381 = vsel %vm365, %v332, 128
    %v382 = vsel %vm366, %v332, 128
    %v383 = vsel %vm367, %v332, 128
    %v384 = vsel %vm368, %v332, 128
    %v385 = vsel %vm369, %v332, 128
    %v386 = vsel %vm370, %v332, 128
    %v387 = vsel %vm371, %v332, 128
    %v388 = vsel %vm372, %v332, 128
    %v389 = vsel %vm373, %v332, 128
    %v390 = vsel %vm374, %v332, 128
    %v391 = vsel %vm375, %v332, 128
    %v392 = vsel %vm376, %v332, 128
    %v393 = vsel %vm377, %v332, 128
    %v394 = vsel %vm378, %v332, 128
    %v395 = vsel %vm379, %v332, 128
    %v396 = vsel %vm380, %v332, 128
    %v397 = vand.u32 %v381, 65535
    %v398 = vshra.s32 %v381, 16
    %v399 = vcvt.s32.f32 %v397
    %v400 = vcvt.s32.f32 %v398
    %401 = vmin.xlane.f32.xlu0 %v400
    %v402 = vpop.xlane.xlu0 %401
    %vm403 = vcmp.eq.f32.partialorder %v400, %v402
    %v404 = vsel %vm403, %v399, inf
    %405 = vmin.xlane.f32.xlu0 %v404
    %v406 = vpop.xlane.xlu0 %405
    %v407 = vcvt.f32.s32 %v406
    %v408 = vcvt.f32.s32 %v402
    %v409 = vshll.u32 %v408, 16
    %v410 = vadd.s32 %v409, %v407
    %v411 = vand.u32 %v382, 65535
    %v412 = vshra.s32 %v382, 16
    %v413 = vcvt.s32.f32 %v411
    %v414 = vcvt.s32.f32 %v412
    %415 = vmin.xlane.f32.xlu0 %v414
    %v416 = vpop.xlane.xlu0 %415
    %vm417 = vcmp.eq.f32.partialorder %v414, %v416
    %v418 = vsel %vm417, %v413, inf
    %419 = vmin.xlane.f32.xlu0 %v418
    %v420 = vpop.xlane.xlu0 %419
    %v421 = vcvt.f32.s32 %v420
    %v422 = vcvt.f32.s32 %v416
    %v423 = vshll.u32 %v422, 16
    %v424 = vadd.s32 %v423, %v421
    %v425 = vand.u32 %v383, 65535
    %v426 = vshra.s32 %v383, 16
    %v427 = vcvt.s32.f32 %v425
    %v428 = vcvt.s32.f32 %v426
    %429 = vmin.xlane.f32.xlu0 %v428
    %v430 = vpop.xlane.xlu0 %429
    %vm431 = vcmp.eq.f32.partialorder %v428, %v430
    %v432 = vsel %vm431, %v427, inf
    %433 = vmin.xlane.f32.xlu0 %v432
    %v434 = vpop.xlane.xlu0 %433
    %v435 = vcvt.f32.s32 %v434
    %v436 = vcvt.f32.s32 %v430
    %v437 = vshll.u32 %v436, 16
    %v438 = vadd.s32 %v437, %v435
    %v439 = vand.u32 %v384, 65535
    %v440 = vshra.s32 %v384, 16
    %v441 = vcvt.s32.f32 %v439
    %v442 = vcvt.s32.f32 %v440
    %443 = vmin.xlane.f32.xlu0 %v442
    %v444 = vpop.xlane.xlu0 %443
    %vm445 = vcmp.eq.f32.partialorder %v442, %v444
    %v446 = vsel %vm445, %v441, inf
    %447 = vmin.xlane.f32.xlu0 %v446
    %v448 = vpop.xlane.xlu0 %447
    %v449 = vcvt.f32.s32 %v448
    %v450 = vcvt.f32.s32 %v444
    %v451 = vshll.u32 %v450, 16
    %v452 = vadd.s32 %v451, %v449
    %v453 = vand.u32 %v385, 65535
    %v454 = vshra.s32 %v385, 16
    %v455 = vcvt.s32.f32 %v453
    %v456 = vcvt.s32.f32 %v454
    %457 = vmin.xlane.f32.xlu0 %v456
    %v458 = vpop.xlane.xlu0 %457
    %vm459 = vcmp.eq.f32.partialorder %v456, %v458
    %v460 = vsel %vm459, %v455, inf
    %461 = vmin.xlane.f32.xlu0 %v460
    %v462 = vpop.xlane.xlu0 %461
    %v463 = vcvt.f32.s32 %v462
    %v464 = vcvt.f32.s32 %v458
    %v465 = vshll.u32 %v464, 16
    %v466 = vadd.s32 %v465, %v463
    %v467 = vand.u32 %v386, 65535
    %v468 = vshra.s32 %v386, 16
    %v469 = vcvt.s32.f32 %v467
    %v470 = vcvt.s32.f32 %v468
    %471 = vmin.xlane.f32.xlu0 %v470
    %v472 = vpop.xlane.xlu0 %471
    %vm473 = vcmp.eq.f32.partialorder %v470, %v472
    %v474 = vsel %vm473, %v469, inf
    %475 = vmin.xlane.f32.xlu0 %v474
    %v476 = vpop.xlane.xlu0 %475
    %v477 = vcvt.f32.s32 %v476
    %v478 = vcvt.f32.s32 %v472
    %v479 = vshll.u32 %v478, 16
    %v480 = vadd.s32 %v479, %v477
    %v481 = vand.u32 %v387, 65535
    %v482 = vshra.s32 %v387, 16
    %v483 = vcvt.s32.f32 %v481
    %v484 = vcvt.s32.f32 %v482
    %485 = vmin.xlane.f32.xlu0 %v484
    %v486 = vpop.xlane.xlu0 %485
    %vm487 = vcmp.eq.f32.partialorder %v484, %v486
    %v488 = vsel %vm487, %v483, inf
    %489 = vmin.xlane.f32.xlu0 %v488
    %v490 = vpop.xlane.xlu0 %489
    %v491 = vcvt.f32.s32 %v490
    %v492 = vcvt.f32.s32 %v486
    %v493 = vshll.u32 %v492, 16
    %v494 = vadd.s32 %v493, %v491
    %v495 = vand.u32 %v388, 65535
    %v496 = vshra.s32 %v388, 16
    %v497 = vcvt.s32.f32 %v495
    %v498 = vcvt.s32.f32 %v496
    %499 = vmin.xlane.f32.xlu0 %v498
    %v500 = vpop.xlane.xlu0 %499
    %vm501 = vcmp.eq.f32.partialorder %v498, %v500
    %v502 = vsel %vm501, %v497, inf
    %503 = vmin.xlane.f32.xlu0 %v502
    %v504 = vpop.xlane.xlu0 %503
    %v505 = vcvt.f32.s32 %v504
    %v506 = vcvt.f32.s32 %v500
    %v507 = vshll.u32 %v506, 16
    %v508 = vadd.s32 %v507, %v505
    %v509 = vand.u32 %v389, 65535
    %v510 = vshra.s32 %v389, 16
    %v511 = vcvt.s32.f32 %v509
    %v512 = vcvt.s32.f32 %v510
    %513 = vmin.xlane.f32.xlu0 %v512
    %v514 = vpop.xlane.xlu0 %513
    %vm515 = vcmp.eq.f32.partialorder %v512, %v514
    %v516 = vsel %vm515, %v511, inf
    %517 = vmin.xlane.f32.xlu0 %v516
    %v518 = vpop.xlane.xlu0 %517
    %v519 = vcvt.f32.s32 %v518
    %v520 = vcvt.f32.s32 %v514
    %v521 = vshll.u32 %v520, 16
    %v522 = vadd.s32 %v521, %v519
    %v523 = vand.u32 %v390, 65535
    %v524 = vshra.s32 %v390, 16
    %v525 = vcvt.s32.f32 %v523
    %v526 = vcvt.s32.f32 %v524
    %527 = vmin.xlane.f32.xlu0 %v526
    %v528 = vpop.xlane.xlu0 %527
    %vm529 = vcmp.eq.f32.partialorder %v526, %v528
    %v530 = vsel %vm529, %v525, inf
    %531 = vmin.xlane.f32.xlu0 %v530
    %v532 = vpop.xlane.xlu0 %531
    %v533 = vcvt.f32.s32 %v532
    %v534 = vcvt.f32.s32 %v528
    %v535 = vshll.u32 %v534, 16
    %v536 = vadd.s32 %v535, %v533
    %v537 = vand.u32 %v391, 65535
    %v538 = vshra.s32 %v391, 16
    %v539 = vcvt.s32.f32 %v537
    %v540 = vcvt.s32.f32 %v538
    %541 = vmin.xlane.f32.xlu0 %v540
    %v542 = vpop.xlane.xlu0 %541
    %vm543 = vcmp.eq.f32.partialorder %v540, %v542
    %v544 = vsel %vm543, %v539, inf
    %545 = vmin.xlane.f32.xlu0 %v544
    %v546 = vpop.xlane.xlu0 %545
    %v547 = vcvt.f32.s32 %v546
    %v548 = vcvt.f32.s32 %v542
    %v549 = vshll.u32 %v548, 16
    %v550 = vadd.s32 %v549, %v547
    %v551 = vand.u32 %v392, 65535
    %v552 = vshra.s32 %v392, 16
    %v553 = vcvt.s32.f32 %v551
    %v554 = vcvt.s32.f32 %v552
    %555 = vmin.xlane.f32.xlu0 %v554
    %v556 = vpop.xlane.xlu0 %555
    %vm557 = vcmp.eq.f32.partialorder %v554, %v556
    %v558 = vsel %vm557, %v553, inf
    %559 = vmin.xlane.f32.xlu0 %v558
    %v560 = vpop.xlane.xlu0 %559
    %v561 = vcvt.f32.s32 %v560
    %v562 = vcvt.f32.s32 %v556
    %v563 = vshll.u32 %v562, 16
    %v564 = vadd.s32 %v563, %v561
    %v565 = vand.u32 %v393, 65535
    %v566 = vshra.s32 %v393, 16
    %v567 = vcvt.s32.f32 %v565
    %v568 = vcvt.s32.f32 %v566
    %569 = vmin.xlane.f32.xlu0 %v568
    %v570 = vpop.xlane.xlu0 %569
    %vm571 = vcmp.eq.f32.partialorder %v568, %v570
    %v572 = vsel %vm571, %v567, inf
    %573 = vmin.xlane.f32.xlu0 %v572
    %v574 = vpop.xlane.xlu0 %573
    %v575 = vcvt.f32.s32 %v574
    %v576 = vcvt.f32.s32 %v570
    %v577 = vshll.u32 %v576, 16
    %v578 = vadd.s32 %v577, %v575
    %v579 = vand.u32 %v394, 65535
    %v580 = vshra.s32 %v394, 16
    %v581 = vcvt.s32.f32 %v579
    %v582 = vcvt.s32.f32 %v580
    %583 = vmin.xlane.f32.xlu0 %v582
    %v584 = vpop.xlane.xlu0 %583
    %vm585 = vcmp.eq.f32.partialorder %v582, %v584
    %v586 = vsel %vm585, %v581, inf
    %587 = vmin.xlane.f32.xlu0 %v586
    %v588 = vpop.xlane.xlu0 %587
    %v589 = vcvt.f32.s32 %v588
    %v590 = vcvt.f32.s32 %v584
    %v591 = vshll.u32 %v590, 16
    %v592 = vadd.s32 %v591, %v589
    %v593 = vand.u32 %v395, 65535
    %v594 = vshra.s32 %v395, 16
    %v595 = vcvt.s32.f32 %v593
    %v596 = vcvt.s32.f32 %v594
    %597 = vmin.xlane.f32.xlu0 %v596
    %v598 = vpop.xlane.xlu0 %597
    %vm599 = vcmp.eq.f32.partialorder %v596, %v598
    %v600 = vsel %vm599, %v595, inf
    %601 = vmin.xlane.f32.xlu0 %v600
    %v602 = vpop.xlane.xlu0 %601
    %v603 = vcvt.f32.s32 %v602
    %v604 = vcvt.f32.s32 %v598
    %v605 = vshll.u32 %v604, 16
    %v606 = vadd.s32 %v605, %v603
    %v607 = vand.u32 %v396, 65535
    %v608 = vshra.s32 %v396, 16
    %v609 = vcvt.s32.f32 %v607
    %v610 = vcvt.s32.f32 %v608
    %611 = vmin.xlane.f32.xlu0 %v610
    %v612 = vpop.xlane.xlu0 %611
    %vm613 = vcmp.eq.f32.partialorder %v610, %v612
    %v614 = vsel %vm613, %v609, inf
    %615 = vmin.xlane.f32.xlu0 %v614
    %v616 = vpop.xlane.xlu0 %615
    %v617 = vcvt.f32.s32 %v616
    %v618 = vcvt.f32.s32 %v612
    %v619 = vshll.u32 %v618, 16
    %v620 = vadd.s32 %v619, %v617
    %vm621 = vcmp.eq.s32.totalorder %v332, %v410
    %vm622 = vcmp.eq.s32.totalorder %v332, %v424
    %vm623 = vcmp.eq.s32.totalorder %v332, %v438
    %vm624 = vcmp.eq.s32.totalorder %v332, %v452
    %vm625 = vcmp.eq.s32.totalorder %v332, %v466
    %vm626 = vcmp.eq.s32.totalorder %v332, %v480
    %vm627 = vcmp.eq.s32.totalorder %v332, %v494
    %vm628 = vcmp.eq.s32.totalorder %v332, %v508
    %vm629 = vcmp.eq.s32.totalorder %v332, %v522
    %vm630 = vcmp.eq.s32.totalorder %v332, %v536
    %vm631 = vcmp.eq.s32.totalorder %v332, %v550
    %vm632 = vcmp.eq.s32.totalorder %v332, %v564
    %vm633 = vcmp.eq.s32.totalorder %v332, %v578
    %vm634 = vcmp.eq.s32.totalorder %v332, %v592
    %vm635 = vcmp.eq.s32.totalorder %v332, %v606
    %vm636 = vcmp.eq.s32.totalorder %v332, %v620
    %v637 = vsel %vm621, 1, 0
    %v638 = vsel %vm622, 1, 0
    %v639 = vsel %vm623, 1, 0
    %v640 = vsel %vm624, 1, 0
    %v641 = vsel %vm625, 1, 0
    %v642 = vsel %vm626, 1, 0
    %v643 = vsel %vm627, 1, 0
    %v644 = vsel %vm628, 1, 0
    %v645 = vsel %vm629, 1, 0
    %v646 = vsel %vm630, 1, 0
    %v647 = vsel %vm631, 1, 0
    %v648 = vsel %vm632, 1, 0
    %v649 = vsel %vm633, 1, 0
    %v650 = vsel %vm634, 1, 0
    %v651 = vsel %vm635, 1, 0
    %v652 = vsel %vm636, 1, 0
    %v653 = vcvt.s32.f32 %v637
    %v654 = vcvt.s32.f32 %v638
    %v655 = vcvt.s32.f32 %v639
    %v656 = vcvt.s32.f32 %v640
    %v657 = vcvt.s32.f32 %v641
    %v658 = vcvt.s32.f32 %v642
    %v659 = vcvt.s32.f32 %v643
    %v660 = vcvt.s32.f32 %v644
    %v661 = vcvt.s32.f32 %v645
    %v662 = vcvt.s32.f32 %v646
    %v663 = vcvt.s32.f32 %v647
    %v664 = vcvt.s32.f32 %v648
    %v665 = vcvt.s32.f32 %v649
    %v666 = vcvt.s32.f32 %v650
    %v667 = vcvt.s32.f32 %v651
    %v668 = vcvt.s32.f32 %v652
    %669 = vmatprep.subr.mxu0 0.0
    %670 = vmatpush1.msra.mxu0 %v34
    %671 = vmatprep.subr.mxu0 0.0
    %672 = vmatpush1.msra.mxu0 %v35
    %673 = vmatprep.subr.mxu0 0.0
    %674 = vmatpush1.msra.mxu0 %v36
    %675 = vmatprep.subr.mxu0 0.0
    %676 = vmatpush1.msra.mxu0 %v37
    %677 = vmatprep.subr.mxu0 0.0
    %678 = vmatpush1.msra.mxu0 %v38
    %679 = vmatprep.subr.mxu0 0.0
    %680 = vmatpush1.msra.mxu0 %v39
    %681 = vmatprep.subr.mxu0 0.0
    %682 = vmatpush1.msra.mxu0 %v40
    %683 = vmatprep.subr.mxu0 0.0
    %684 = vmatpush1.msra.mxu0 %v41
    %685 = vmatprep.subr.mxu0 0.0
    %686 = vmatpush1.msra.mxu0 %v42
    %687 = vmatprep.subr.mxu0 0.0
    %688 = vmatpush1.msra.mxu0 %v43
    %689 = vmatprep.subr.mxu0 0.0
    %690 = vmatpush1.msra.mxu0 %v44
    %691 = vmatprep.subr.mxu0 0.0
    %692 = vmatpush1.msra.mxu0 %v45
    %693 = vmatprep.subr.mxu0 0.0
    %694 = vmatpush1.msra.mxu0 %v46
    %695 = vmatprep.subr.mxu0 0.0
    %696 = vmatpush1.msra.mxu0 %v47
    %697 = vmatprep.subr.mxu0 0.0
    %698 = vmatpush1.msra.mxu0 %v48
    %699 = vmatprep.subr.mxu0 0.0
    %700 = vmatpush1.msra.mxu0 %v49
    %701 = vmatprep.subr.mxu0 0.0
    %702 = vmatpush1.msra.mxu0 0.0
    %703 = vmatprep.subr.mxu0 0.0
    %704 = vmatpush1.msra.mxu0 0.0
    %705 = vmatprep.subr.mxu0 0.0
    %706 = vmatpush1.msra.mxu0 0.0
    %707 = vmatprep.subr.mxu0 0.0
    %708 = vmatpush1.msra.mxu0 0.0
    %709 = vmatprep.subr.mxu0 0.0
    %710 = vmatpush1.msra.mxu0 0.0
    %711 = vmatprep.subr.mxu0 0.0
    %712 = vmatpush1.msra.mxu0 0.0
    %713 = vmatprep.subr.mxu0 0.0
    %714 = vmatpush1.msra.mxu0 0.0
    %715 = vmatprep.subr.mxu0 0.0
    %716 = vmatpush1.msra.mxu0 0.0
    %717 = vmatprep.subr.mxu0 0.0
    %718 = vmatpush1.msra.mxu0 0.0
    %719 = vmatprep.subr.mxu0 0.0
    %720 = vmatpush1.msra.mxu0 0.0
    %721 = vmatprep.subr.mxu0 0.0
    %722 = vmatpush1.msra.mxu0 0.0
    %723 = vmatprep.subr.mxu0 0.0
    %724 = vmatpush1.msra.mxu0 0.0
    %725 = vmatprep.subr.mxu0 0.0
    %726 = vmatpush1.msra.mxu0 0.0
    %727 = vmatprep.subr.mxu0 0.0
    %728 = vmatpush1.msra.mxu0 0.0
    %729 = vmatprep.subr.mxu0 0.0
    %730 = vmatpush1.msra.mxu0 0.0
    %731 = vmatprep.subr.mxu0 0.0
    %732 = vmatpush1.msra.mxu0 0.0
    %733 = vmatprep.mubr.f32.mxu0 0.0
    %734 = vmatmul.mubr.f32.gmra.mrb[0].mxu0 %v653
    %v735 = vpop.f32.mrb[0].mxu0
    %v736 = vadd.f32 0.0, %v735
    %v737 = vpop.f32.mrb[0].mxu0
    %738 = vmatprep.mubr.f32.mxu0 0.0
    %739 = vmatmul.mubr.f32.gmra.mrb[0].mxu0 %v654
    %v740 = vpop.f32.mrb[0].mxu0
    %v741 = vadd.f32 0.0, %v740
    %v742 = vpop.f32.mrb[0].mxu0
    %743 = vmatprep.mubr.f32.mxu0 0.0
    %744 = vmatmul.mubr.f32.gmra.mrb[0].mxu0 %v655
    %v745 = vpop.f32.mrb[0].mxu0
    %v746 = vadd.f32 0.0, %v745
    %v747 = vpop.f32.mrb[0].mxu0
    %748 = vmatprep.mubr.f32.mxu0 0.0
    %749 = vmatmul.mubr.f32.gmra.mrb[0].mxu0 %v656
    %v750 = vpop.f32.mrb[0].mxu0
    %v751 = vadd.f32 0.0, %v750
    %v752 = vpop.f32.mrb[0].mxu0
    %753 = vmatprep.mubr.f32.mxu0 0.0
    %754 = vmatmul.mubr.f32.gmra.mrb[0].mxu0 %v657
    %v755 = vpop.f32.mrb[0].mxu0
    %v756 = vadd.f32 0.0, %v755
    %v757 = vpop.f32.mrb[0].mxu0
    %758 = vmatprep.mubr.f32.mxu0 0.0
    %759 = vmatmul.mubr.f32.gmra.mrb[0].mxu0 %v658
    %v760 = vpop.f32.mrb[0].mxu0
    %v761 = vadd.f32 0.0, %v760
    %v762 = vpop.f32.mrb[0].mxu0
    %763 = vmatprep.mubr.f32.mxu0 0.0
    %764 = vmatmul.mubr.f32.gmra.mrb[0].mxu0 %v659
    %v765 = vpop.f32.mrb[0].mxu0
    %v766 = vadd.f32 0.0, %v765
    %v767 = vpop.f32.mrb[0].mxu0
    %768 = vmatprep.mubr.f32.mxu0 0.0
    %769 = vmatmul.mubr.f32.gmra.mrb[0].mxu0 %v660
    %v770 = vpop.f32.mrb[0].mxu0
    %v771 = vadd.f32 0.0, %v770
    %v772 = vpop.f32.mrb[0].mxu0
    %773 = vmatprep.mubr.f32.mxu0 0.0
    %774 = vmatmul.mubr.f32.gmra.mrb[0].mxu0 %v661
    %v775 = vpop.f32.mrb[0].mxu0
    %v776 = vadd.f32 0.0, %v775
    %v777 = vpop.f32.mrb[0].mxu0
    %778 = vmatprep.mubr.f32.mxu0 0.0
    %779 = vmatmul.mubr.f32.gmra.mrb[0].mxu0 %v662
    %v780 = vpop.f32.mrb[0].mxu0
    %v781 = vadd.f32 0.0, %v780
    %v782 = vpop.f32.mrb[0].mxu0
    %783 = vmatprep.mubr.f32.mxu0 0.0
    %784 = vmatmul.mubr.f32.gmra.mrb[0].mxu0 %v663
    %v785 = vpop.f32.mrb[0].mxu0
    %v786 = vadd.f32 0.0, %v785
    %v787 = vpop.f32.mrb[0].mxu0
    %788 = vmatprep.mubr.f32.mxu0 0.0
    %789 = vmatmul.mubr.f32.gmra.mrb[0].mxu0 %v664
    %v790 = vpop.f32.mrb[0].mxu0
    %v791 = vadd.f32 0.0, %v790
    %v792 = vpop.f32.mrb[0].mxu0
    %793 = vmatprep.mubr.f32.mxu0 0.0
    %794 = vmatmul.mubr.f32.gmra.mrb[0].mxu0 %v665
    %v795 = vpop.f32.mrb[0].mxu0
    %v796 = vadd.f32 0.0, %v795
    %v797 = vpop.f32.mrb[0].mxu0
    %798 = vmatprep.mubr.f32.mxu0 0.0
    %799 = vmatmul.mubr.f32.gmra.mrb[0].mxu0 %v666
    %v800 = vpop.f32.mrb[0].mxu0
    %v801 = vadd.f32 0.0, %v800
    %v802 = vpop.f32.mrb[0].mxu0
    %803 = vmatprep.mubr.f32.mxu0 0.0
    %804 = vmatmul.mubr.f32.gmra.mrb[0].mxu0 %v667
    %v805 = vpop.f32.mrb[0].mxu0
    %v806 = vadd.f32 0.0, %v805
    %v807 = vpop.f32.mrb[0].mxu0
    %808 = vmatprep.mubr.f32.mxu0 0.0
    %809 = vmatmul.mubr.f32.gmra.mrb[0].mxu0 %v668
    %v810 = vpop.f32.mrb[0].mxu0
    %v811 = vadd.f32 0.0, %v810
    %v812 = vpop.f32.mrb[0].mxu0
    %813 = vdwg.mxu0
    %814 = vst.msk [vmem:[%s3] sm:$0xff] %vm66, %v736
    %815 = vst.msk [vmem:[%s3 + $0x8] sm:$0xff] %vm66, %v741
    %816 = vst.msk [vmem:[%s3 + $0x10] sm:$0xff] %vm66, %v746
    %817 = vst.msk [vmem:[%s3 + $0x18] sm:$0xff] %vm66, %v751
    %818 = vst.msk [vmem:[%s3 + $0x20] sm:$0xff] %vm66, %v756
    %819 = vst.msk [vmem:[%s3 + $0x28] sm:$0xff] %vm66, %v761
    %820 = vst.msk [vmem:[%s3 + $0x30] sm:$0xff] %vm66, %v766
    %821 = vst.msk [vmem:[%s3 + $0x38] sm:$0xff] %vm66, %v771
    %822 = vst.msk [vmem:[%s3 + $0x40] sm:$0xff] %vm66, %v776
    %823 = vst.msk [vmem:[%s3 + $0x48] sm:$0xff] %vm66, %v781
    %824 = vst.msk [vmem:[%s3 + $0x50] sm:$0xff] %vm66, %v786
    %825 = vst.msk [vmem:[%s3 + $0x58] sm:$0xff] %vm66, %v791
    %826 = vst.msk [vmem:[%s3 + $0x60] sm:$0xff] %vm66, %v796
    %827 = vst.msk [vmem:[%s3 + $0x68] sm:$0xff] %vm66, %v801
    %828 = vst.msk [vmem:[%s3 + $0x70] sm:$0xff] %vm66, %v806
    %829 = vst.msk [vmem:[%s3 + $0x78] sm:$0xff] %vm66, %v811
    %v830 = vlaneseq
    %v831 = vshrl.u32 %v830, 7
    %v832 = vadd.s32 %v831, 8
    %v833 = vadd.s32 %v831, 16
    %v834 = vadd.s32 %v831, 24
    %v835 = vadd.s32 %v831, 32
    %v836 = vadd.s32 %v831, 40
    %v837 = vadd.s32 %v831, 48
    %v838 = vadd.s32 %v831, 56
    %v839 = vadd.s32 %v831, 64
    %v840 = vadd.s32 %v831, 72
    %v841 = vadd.s32 %v831, 80
    %v842 = vadd.s32 %v831, 88
    %v843 = vadd.s32 %v831, 96
    %v844 = vadd.s32 %v831, 104
    %v845 = vadd.s32 %v831, 112
    %v846 = vadd.s32 %v831, 120
    %s847 = smul.u32 0, 128
    %v848 = vstv %s847
    %v849 = vadd.s32 %v831, %v848
    %v850 = vadd.s32 %v832, %v848
    %v851 = vadd.s32 %v833, %v848
    %v852 = vadd.s32 %v834, %v848
    %v853 = vadd.s32 %v835, %v848
    %v854 = vadd.s32 %v836, %v848
    %v855 = vadd.s32 %v837, %v848
    %v856 = vadd.s32 %v838, %v848
    %v857 = vadd.s32 %v839, %v848
    %v858 = vadd.s32 %v840, %v848
    %v859 = vadd.s32 %v841, %v848
    %v860 = vadd.s32 %v842, %v848
    %v861 = vadd.s32 %v843, %v848
    %v862 = vadd.s32 %v844, %v848
    %v863 = vadd.s32 %v845, %v848
    %v864 = vadd.s32 %v846, %v848
    %vm865 = vcmp.lt.s32.totalorder %v849, 128
    %vm866 = vcmp.lt.s32.totalorder %v850, 128
    %vm867 = vcmp.lt.s32.totalorder %v851, 128
    %vm868 = vcmp.lt.s32.totalorder %v852, 128
    %vm869 = vcmp.lt.s32.totalorder %v853, 128
    %vm870 = vcmp.lt.s32.totalorder %v854, 128
    %vm871 = vcmp.lt.s32.totalorder %v855, 128
    %vm872 = vcmp.lt.s32.totalorder %v856, 128
    %vm873 = vcmp.lt.s32.totalorder %v857, 128
    %vm874 = vcmp.lt.s32.totalorder %v858, 128
    %vm875 = vcmp.lt.s32.totalorder %v859, 128
    %vm876 = vcmp.lt.s32.totalorder %v860, 128
    %vm877 = vcmp.lt.s32.totalorder %v861, 128
    %vm878 = vcmp.lt.s32.totalorder %v862, 128
    %vm879 = vcmp.lt.s32.totalorder %v863, 128
    %vm880 = vcmp.lt.s32.totalorder %v864, 128
    %v881 = vsub.f32 %v736, %v18
    %v882 = vsub.f32 %v741, %v19
    %v883 = vsub.f32 %v746, %v20
    %v884 = vsub.f32 %v751, %v21
    %v885 = vsub.f32 %v756, %v22
    %v886 = vsub.f32 %v761, %v23
    %v887 = vsub.f32 %v766, %v24
    %v888 = vsub.f32 %v771, %v25
    %v889 = vsub.f32 %v776, %v26
    %v890 = vsub.f32 %v781, %v27
    %v891 = vsub.f32 %v786, %v28
    %v892 = vsub.f32 %v791, %v29
    %v893 = vsub.f32 %v796, %v30
    %v894 = vsub.f32 %v801, %v31
    %v895 = vsub.f32 %v806, %v32
    %v896 = vsub.f32 %v811, %v33
    %v897 = vsel %vm865, %v881, 0.0
    %v898 = vsel %vm866, %v882, 0.0
    %v899 = vsel %vm867, %v883, 0.0
    %v900 = vsel %vm868, %v884, 0.0
    %v901 = vsel %vm869, %v885, 0.0
    %v902 = vsel %vm870, %v886, 0.0
    %v903 = vsel %vm871, %v887, 0.0
    %v904 = vsel %vm872, %v888, 0.0
    %v905 = vsel %vm873, %v889, 0.0
    %v906 = vsel %vm874, %v890, 0.0
    %v907 = vsel %vm875, %v891, 0.0
    %v908 = vsel %vm876, %v892, 0.0
    %v909 = vsel %vm877, %v893, 0.0
    %v910 = vsel %vm878, %v894, 0.0
    %v911 = vsel %vm879, %v895, 0.0
    %v912 = vsel %vm880, %v896, 0.0
    %v913 = vmul.f32 %v897, %v897
    %v914 = vmul.f32 %v898, %v898
    %v915 = vmul.f32 %v899, %v899
    %v916 = vmul.f32 %v900, %v900
    %v917 = vmul.f32 %v901, %v901
    %v918 = vmul.f32 %v902, %v902
    %v919 = vmul.f32 %v903, %v903
    %v920 = vmul.f32 %v904, %v904
    %v921 = vmul.f32 %v905, %v905
    %v922 = vmul.f32 %v906, %v906
    %v923 = vmul.f32 %v907, %v907
    %v924 = vmul.f32 %v908, %v908
    %v925 = vmul.f32 %v909, %v909
    %v926 = vmul.f32 %v910, %v910
    %v927 = vmul.f32 %v911, %v911
    %v928 = vmul.f32 %v912, %v912
    %v929 = vsel %vm66, %v913, 0.0
    %v930 = vsel %vm66, %v914, 0.0
    %v931 = vadd.f32 %v929, %v930
    %v932 = vsel %vm66, %v915, 0.0
    %v933 = vadd.f32 %v931, %v932
    %v934 = vsel %vm66, %v916, 0.0
    %v935 = vadd.f32 %v933, %v934
    %v936 = vsel %vm66, %v917, 0.0
    %v937 = vadd.f32 %v935, %v936
    %v938 = vsel %vm66, %v918, 0.0
    %v939 = vadd.f32 %v937, %v938
    %v940 = vsel %vm66, %v919, 0.0
    %v941 = vadd.f32 %v939, %v940
    %v942 = vsel %vm66, %v920, 0.0
    %v943 = vadd.f32 %v941, %v942
    %v944 = vsel %vm66, %v921, 0.0
    %v945 = vadd.f32 %v943, %v944
    %v946 = vsel %vm66, %v922, 0.0
    %v947 = vadd.f32 %v945, %v946
    %v948 = vsel %vm66, %v923, 0.0
    %v949 = vadd.f32 %v947, %v948
    %v950 = vsel %vm66, %v924, 0.0
    %v951 = vadd.f32 %v949, %v950
    %v952 = vsel %vm66, %v925, 0.0
    %v953 = vadd.f32 %v951, %v952
    %v954 = vsel %vm66, %v926, 0.0
    %v955 = vadd.f32 %v953, %v954
    %v956 = vsel %vm66, %v927, 0.0
    %v957 = vadd.f32 %v955, %v956
    %v958 = vsel %vm66, %v928, 0.0
    %v959 = vadd.f32 %v957, %v958
    %960 = vadd.xlane.f32.xlu0 %v959
    %v961 = vpop.xlane.xlu0 %960
    %v962 = vrot.slane %v961, 4
    %v963 = vadd.f32 %v961, %v962
    %v964 = vrot.slane %v963, 2
    %v965 = vadd.f32 %v963, %v964
    %v966 = vrot.slane %v965, 1
    %v967 = vadd.f32 %v965, %v966
    %s968 = vtos %v967
    %s969 = scalar_lea.smem [#allocation2], 0
    %970 = sst [smem:[%s969]] %s968
    // Predicated region
    $region14: #{vqvae_forward.21} parent=1 // pred_check
      _
    $region15: #{vqvae_forward.21} parent=1 // pred_check_branch
      %972 = sbr.rel (0) target = $region17
    $region16: #{vqvae_forward.21} parent=1 // pred_region
      _
    $region17: #{vqvae_forward.21} parent=1 // pred_fallthru
      _
    // Predicated region
    $region18: #{vqvae_forward.21} parent=1 // pred_check
      _
    $region19: #{vqvae_forward.21} parent=1 // pred_check_branch
      %974 = sbr.rel (0) target = $region21
    $region20: #{vqvae_forward.21} parent=1 // pred_region
      %s976 = ssub.s32 16, 16
      %977 = vsyncadd [#allocation3], %s976
      %980 = dma.smem_to_hbm [#allocation2], 16, %s4, [#allocation3]
    $region21: #{vqvae_forward.21} parent=1 // pred_fallthru
      _
    // Predicated region
    $region22: #{vqvae_forward.21} parent=1 // pred_check
      _
    $region23: #{vqvae_forward.21} parent=1 // pred_check_branch
      %982 = sbr.rel (0) target = $region25
    $region24: #{vqvae_forward.21} parent=1 // pred_region
      _
    $region25: #{vqvae_forward.21} parent=1 // pred_fallthru
      _
    // Predicated region
    $region26: #{vqvae_forward.21} parent=1 // pred_check
      _
    $region27: #{vqvae_forward.21} parent=1 // pred_check_branch
      %984 = sbr.rel (0) target = $region29
    $region28: #{vqvae_forward.21} parent=1 // pred_region
      %985 = dma.done [#allocation3], 16
    $region29: #{vqvae_forward.21} parent=1 // pred_fallthru
      _
    %986 = sfence
    %987 = vsyncpa [#allocation3], 1

// kernel: vqvae_forward.26
$region0: #{vqvae_forward.26}
  #allocation0 [shape = 'u32[]', space=smem, size = 0x4, offset = 0x4, fixed_abs, tag = 'smem constant byte address 0x4 - core index']
  #allocation1 [shape = 'u32[144,128]{1,0:T(1,128)}', space=vmem, size = 0x12000, scoped, tag = 'internal scratch']
  %s0 = inlined_call_operand.vmem [shape: bf16[2,10,10,64], index: 0, kind: input, shape index: {}]
  %s1 = inlined_call_operand.vmem [shape: bf16[4,256,32], index: 1, kind: input, shape index: {}]
  %s2 = inlined_call_operand.vmem [shape: f32[1,32], index: 2, kind: input, shape index: {}]
  %s3 = inlined_call_operand.vmem [shape: bf16[2,8,2,8,64], index: 3, kind: output, shape index: {}]
  %s4 = sld [smem:[#allocation0]]
  $region45: #{vqvae_forward.26} parent=0
    _
  %s6 = ssub.s32 1, %s4
  %s7 = scalar_select 0, %s6, %s4
  loop: start=0, step=1, limit=4
  $region2: #{vqvae_forward.26} parent=0 // loop_pre_header
    _
  $region3: #{vqvae_forward.26} parent=0 // loop_header
    %s9 = sphi 0, %s13
    %p10 = scmp.ge.s32.totalorder %s9, 4
    %s19 = sphi 0, %s21
    %s22 = sphi 0, %s19
    %s23 = sphi 0, %s22
    %s39 = sphi 0, %s23
    %s43 = sphi 0, %s43
    %s45 = sphi 0, %s43
    %s46 = sphi 0, %s45
    %s60 = sphi 0, %s46
    %s64 = sphi 0, %s64
    %s66 = sphi 0, %s64
    %s67 = sphi 0, %s66
    %s81 = sphi 0, %s67
    %s87 = sphi 0, %s89
    %s90 = sphi 0, %s87
    %s91 = sphi 0, %s90
    %s107 = sphi 0, %s91
  $region4: #{vqvae_forward.26} parent=0 // loop_header_branch
    %12 = sbr.rel (%p10) target = $region8
  $region5: #{vqvae_forward.26} parent=0 // loop_body
    %s14 = ssub.s32 %s9, 1
    %s15 = ssub.s32 %s9, 2
    %s16 = sadd.s32 %s9, 1
    %s17 = ssub.s32 %s9, %s16
    %p18 = scmp.eq.s32.totalorder %s17, 0
    %s20 = sadd.s32 %s19, 1
    %s21 = scalar_select %p18, %s19, %s20
    %p24 = pneg %p18
    %p25 = scmp.eq.s32.totalorder %s9, 1
    %p26 = por %p24, %p25
    %p27 = scmp.ne.s32.totalorder %s19, %s22
    %p28 = scmp.eq.s32.totalorder %s9, 0
    %p29 = por %p27, %p28
    %p30 = scmp.ne.s32.totalorder %s19, %s22
    %p31 = scmp.eq.s32.totalorder %s14, 1
    %p32 = por %p30, %p31
    %p33 = scmp.ne.s32.totalorder %s22, %s23
    %p34 = scmp.eq.s32.totalorder %s14, 0
    %p35 = por %p33, %p34
    %p36 = scmp.ne.s32.totalorder %s22, %s23
    %p37 = scmp.eq.s32.totalorder %s15, 1
    %p38 = por %p36, %p37
    %p40 = scmp.ne.s32.totalorder %s23, %s39
    %p41 = scmp.eq.s32.totalorder %s15, 0
    %p42 = por %p40, %p41
    %s44 = sadd.s32 %s43, 1
    %p47 = scmp.eq.s32.totalorder %s9, 1
    %p48 = scmp.ne.s32.totalorder %s43, %s45
    %p49 = scmp.eq.s32.totalorder %s9, 0
    %p50 = por %p48, %p49
    %p51 = scmp.ne.s32.totalorder %s43, %s45
    %p52 = scmp.eq.s32.totalorder %s14, 1
    %p53 = por %p51, %p52
    %p54 = scmp.ne.s32.totalorder %s45, %s46
    %p55 = scmp.eq.s32.totalorder %s14, 0
    %p56 = por %p54, %p55
    %p57 = scmp.ne.s32.totalorder %s45, %s46
    %p58 = scmp.eq.s32.totalorder %s15, 1
    %p59 = por %p57, %p58
    %p61 = scmp.ne.s32.totalorder %s46, %s60
    %p62 = scmp.eq.s32.totalorder %s15, 0
    %p63 = por %p61, %p62
    %s65 = sadd.s32 %s64, 1
    %p68 = scmp.eq.s32.totalorder %s9, 1
    %p69 = scmp.ne.s32.totalorder %s64, %s66
    %p70 = scmp.eq.s32.totalorder %s9, 0
    %p71 = por %p69, %p70
    %p72 = scmp.ne.s32.totalorder %s64, %s66
    %p73 = scmp.eq.s32.totalorder %s14, 1
    %p74 = por %p72, %p73
    %p75 = scmp.ne.s32.totalorder %s66, %s67
    %p76 = scmp.eq.s32.totalorder %s14, 0
    %p77 = por %p75, %p76
    %p78 = scmp.ne.s32.totalorder %s66, %s67
    %p79 = scmp.eq.s32.totalorder %s15, 1
    %p80 = por %p78, %p79
    %p82 = scmp.ne.s32.totalorder %s67, %s81
    %p83 = scmp.eq.s32.totalorder %s15, 0
    %p84 = por %p82, %p83
    %s85 = ssub.s32 %s9, %s16
    %p86 = scmp.eq.s32.totalorder %s85, 0
    %s88 = sadd.s32 %s87, 1
    %s89 = scalar_select %p86, %s87, %s88
    %p92 = pneg %p86
    %p93 = scmp.eq.s32.totalorder %s9, 1
    %p94 = por %p92, %p93
    %p95 = scmp.ne.s32.totalorder %s87, %s90
    %p96 = scmp.eq.s32.totalorder %s9, 0
    %p97 = por %p95, %p96
    %p98 = scmp.ne.s32.totalorder %s87, %s90
    %p99 = scmp.eq.s32.totalorder %s14, 1
    %p100 = por %p98, %p99
    %p101 = scmp.ne.s32.totalorder %s90, %s91
    %p102 = scmp.eq.s32.totalorder %s14, 0
    %p103 = por %p101, %p102
    %p104 = scmp.ne.s32.totalorder %s90, %s91
    %p105 = scmp.eq.s32.totalorder %s15, 1
    %p106 = por %p104, %p105
    %p108 = scmp.ne.s32.totalorder %s91, %s107
    %p109 = scmp.eq.s32.totalorder %s15, 0
    %p110 = por %p108, %p109
    %p111 = scmp.le.s32.totalorder 1, %s9
    %p112 = scmp.lt.s32.totalorder %s9, 3
    %p113 = pnand %p111, %p112
    %p114 = pneg %p113
    // Predicated region
    $region9: #{vqvae_forward.26} parent=5 // pred_check
      _
    $region10: #{vqvae_forward.26} parent=5 // pred_check_branch
      %116 = sbr.rel (%p113) target = $region12
    $region11: #{vqvae_forward.26} parent=5 // pred_region
      %s117 = ssub.s32 %s9, 1
      // Predicated region
      $region13: #{vqvae_forward.26} parent=11 // pred_check
        %p118 = pneg %p56
      $region14: #{vqvae_forward.26} parent=11 // pred_check_branch
        %120 = sbr.rel (%p118) target = $region16
      $region15: #{vqvae_forward.26} parent=11 // pred_region
        _
      $region16: #{vqvae_forward.26} parent=11 // pred_fallthru
        _
      // Predicated region
      $region17: #{vqvae_forward.26} parent=11 // pred_check
        %p121 = pneg %p77
      $region18: #{vqvae_forward.26} parent=11 // pred_check_branch
        %123 = sbr.rel (%p121) target = $region20
      $region19: #{vqvae_forward.26} parent=11 // pred_region
        _
      $region20: #{vqvae_forward.26} parent=11 // pred_fallthru
        _
    $region12: #{vqvae_forward.26} parent=5 // pred_fallthru
      _
    %p124 = scmp.lt.s32.totalorder %s9, 2
    // Predicated region
    $region21: #{vqvae_forward.26} parent=5 // pred_check
      %p125 = pneg %p124
    $region22: #{vqvae_forward.26} parent=5 // pred_check_branch
      %127 = sbr.rel (%p125) target = $region24
    $region23: #{vqvae_forward.26} parent=5 // pred_region
      // Predicated region
      $region25: #{vqvae_forward.26} parent=23 // pred_check
        %p128 = pneg %p29
      $region26: #{vqvae_forward.26} parent=23 // pred_check_branch
        %130 = sbr.rel (%p128) target = $region28
      $region27: #{vqvae_forward.26} parent=23 // pred_region
        %p131 = scmp.lt.s32.totalorder %s9, 1
        %s132 = scalar_select %p131, %s9, 1
        %s133 = smul.addr %s132, 20
        %s134 = smul.addr %s133, 4
        %s135 = scalar_lea.vmem %s0, %s134
      $region28: #{vqvae_forward.26} parent=23 // pred_fallthru
        _
    $region24: #{vqvae_forward.26} parent=5 // pred_fallthru
      _
    %p136 = scmp.le.s32.totalorder 1, %s9
    %p137 = scmp.lt.s32.totalorder %s9, 3
    %p138 = pnand %p136, %p137
    %p139 = pneg %p138
    // Predicated region
    $region29: #{vqvae_forward.26} parent=5 // pred_check
      _
    $region30: #{vqvae_forward.26} parent=5 // pred_check_branch
      %141 = sbr.rel (%p138) target = $region32
    $region31: #{vqvae_forward.26} parent=5 // pred_region
      %s142 = ssub.s32 %s9, 1
      %p143 = scmp.lt.s32.totalorder %s14, 1
      %s144 = scalar_select %p143, %s14, 1
      %s145 = smul.addr %s144, 20
      %s146 = smul.addr %s145, 4
      %s147 = scalar_lea.vmem %s0, %s146
      %p148 = pneg %p35
      %p149 = pneg %p32
      %p150 = pneg %p56
      %p151 = pneg %p53
      %p152 = pneg %p77
      %p153 = pneg %p74
      %p154 = pneg %p103
      %p155 = pneg %p100
      %p156 = scmp.lt.s32.totalorder %s14, 1
      %s157 = scalar_select %p156, %s14, 1
      %s158 = smul.addr %s157, 16
      %s159 = smul.addr %s158, 4
      %s160 = scalar_lea.vmem %s3, %s159
      %p161 = scmp.lt.s32.totalorder %s14, 1
      %s162 = scalar_select %p161, %s14, 1
      %s163 = smul.addr %s162, 20
      %s164 = smul.addr %s163, 4
      %s165 = scalar_lea.vmem %s0, %s164
      %p166 = scmp.lt.s32.totalorder %s14, 1
      %s167 = scalar_select %p166, %s14, 1
      %s168 = smul.addr %s167, 16
      %s169 = smul.addr %s168, 4
      %s170 = scalar_lea.vmem %s3, %s169
      %v172 = vld [vmem:[%s165] sm:$0xf]
      %v173 = vld [vmem:[%s165 + $0x4] sm:$0x1]
      %v174 = vld [vmem:[%s165 + $0x8] sm:$0xf]
      %v175 = vld [vmem:[%s165 + $0xc] sm:$0x1]
      %v176 = vld [vmem:[%s165 + $0x10] sm:$0xf]
      %v177 = vld [vmem:[%s165 + $0x14] sm:$0x1]
      %v178 = vld [vmem:[%s165 + $0x18] sm:$0xf]
      %v179 = vld [vmem:[%s165 + $0x1c] sm:$0x1]
      %v180 = vld [vmem:[%s165 + $0x20] sm:$0xf]
      %v181 = vld [vmem:[%s165 + $0x24] sm:$0x1]
      %v182 = vld [vmem:[%s165 + $0x28] sm:$0xf]
      %v183 = vld [vmem:[%s165 + $0x2c] sm:$0x1]
      %v184 = vld [vmem:[%s165 + $0x30] sm:$0xf]
      %v185 = vld [vmem:[%s165 + $0x34] sm:$0x1]
      %v186 = vld [vmem:[%s165 + $0x38] sm:$0xf]
      %v187 = vld [vmem:[%s165 + $0x3c] sm:$0x1]
      %v188 = vld [vmem:[%s165 + $0x40] sm:$0xf]
      %v189 = vld [vmem:[%s165 + $0x44] sm:$0x1]
      %v190 = vld [vmem:[%s165 + $0x48] sm:$0xf]
      %v191 = vld [vmem:[%s165 + $0x4c] sm:$0x1]
      %vm192 = vsmask.f32 3328
      %vm193 = vsmask.f32 7440
      %vm194 = vmor %vm192, %vm193
      %v196 = vshrl.u32 %v172, 16
      %v198 = vrot.slane %v196, 4
      %v199 = vshll.u32 %v172, 16
      %v201 = vrot.slane %v199, 5
      %v202 = vor.u32 %v198, %v201
      %v203 = vrot.slane %v202, 4
      %v205 = vshll.u32 %v173, 16
      %v207 = vrot.slane %v205, 5
      %v208 = vsel %vm194, %v203, %v207
      %v210 = vshrl.u32 %v174, 16
      %v212 = vrot.slane %v210, 4
      %v213 = vshll.u32 %v174, 16
      %v215 = vrot.slane %v213, 5
      %v216 = vor.u32 %v212, %v215
      %v217 = vrot.slane %v216, 4
      %v219 = vshll.u32 %v175, 16
      %v221 = vrot.slane %v219, 5
      %v222 = vsel %vm194, %v217, %v221
      %v224 = vshrl.u32 %v176, 16
      %v226 = vrot.slane %v224, 4
      %v227 = vshll.u32 %v176, 16
      %v229 = vrot.slane %v227, 5
      %v230 = vor.u32 %v226, %v229
      %v231 = vrot.slane %v230, 4
      %v233 = vshll.u32 %v177, 16
      %v235 = vrot.slane %v233, 5
      %v236 = vsel %vm194, %v231, %v235
      %v238 = vshrl.u32 %v178, 16
      %v240 = vrot.slane %v238, 4
      %v241 = vshll.u32 %v178, 16
      %v243 = vrot.slane %v241, 5
      %v244 = vor.u32 %v240, %v243
      %v245 = vrot.slane %v244, 4
      %v247 = vshll.u32 %v179, 16
      %v249 = vrot.slane %v247, 5
      %v250 = vsel %vm194, %v245, %v249
      %v252 = vshrl.u32 %v180, 16
      %v254 = vrot.slane %v252, 4
      %v255 = vshll.u32 %v180, 16
      %v257 = vrot.slane %v255, 5
      %v258 = vor.u32 %v254, %v257
      %v259 = vrot.slane %v258, 4
      %v261 = vshll.u32 %v181, 16
      %v263 = vrot.slane %v261, 5
      %v264 = vsel %vm194, %v259, %v263
      %v266 = vshrl.u32 %v182, 16
      %v268 = vrot.slane %v266, 4
      %v269 = vshll.u32 %v182, 16
      %v271 = vrot.slane %v269, 5
      %v272 = vor.u32 %v268, %v271
      %v273 = vrot.slane %v272, 4
      %v275 = vshll.u32 %v183, 16
      %v277 = vrot.slane %v275, 5
      %v278 = vsel %vm194, %v273, %v277
      %v280 = vshrl.u32 %v184, 16
      %v282 = vrot.slane %v280, 4
      %v283 = vshll.u32 %v184, 16
      %v285 = vrot.slane %v283, 5
      %v286 = vor.u32 %v282, %v285
      %v287 = vrot.slane %v286, 4
      %v289 = vshll.u32 %v185, 16
      %v291 = vrot.slane %v289, 5
      %v292 = vsel %vm194, %v287, %v291
      %v294 = vshrl.u32 %v186, 16
      %v296 = vrot.slane %v294, 4
      %v297 = vshll.u32 %v186, 16
      %v299 = vrot.slane %v297, 5
      %v300 = vor.u32 %v296, %v299
      %v301 = vrot.slane %v300, 4
      %v303 = vshll.u32 %v187, 16
      %v305 = vrot.slane %v303, 5
      %v306 = vsel %vm194, %v301, %v305
      %v308 = vshrl.u32 %v188, 16
      %v310 = vrot.slane %v308, 4
      %v311 = vshll.u32 %v188, 16
      %v313 = vrot.slane %v311, 5
      %v314 = vor.u32 %v310, %v313
      %v315 = vrot.slane %v314, 4
      %v317 = vshll.u32 %v189, 16
      %v319 = vrot.slane %v317, 5
      %v320 = vsel %vm194, %v315, %v319
      %v329 = vunpack.c.l.b16 %v172
      %v330 = vunpack.c.l.b16 %v174
      %v331 = vunpack.c.l.b16 %v176
      %v332 = vunpack.c.l.b16 %v178
      %v333 = vunpack.c.l.b16 %v180
      %v334 = vunpack.c.l.b16 %v182
      %v335 = vunpack.c.l.b16 %v184
      %v336 = vunpack.c.l.b16 %v186
      %v337 = vpack.c.b16 %v330, %v329
      %v338 = vpack.c.b16 %v332, %v331
      %v339 = vpack.c.b16 %v334, %v333
      %v340 = vpack.c.b16 %v336, %v335
      %v341 = vunpack.c.l.b16 %v208
      %v342 = vunpack.c.l.b16 %v222
      %v343 = vunpack.c.l.b16 %v236
      %v344 = vunpack.c.l.b16 %v250
      %v345 = vunpack.c.l.b16 %v264
      %v346 = vunpack.c.l.b16 %v278
      %v347 = vunpack.c.l.b16 %v292
      %v348 = vunpack.c.l.b16 %v306
      %v349 = vpack.c.b16 %v342, %v341
      %v350 = vpack.c.b16 %v344, %v343
      %v351 = vpack.c.b16 %v346, %v345
      %v352 = vpack.c.b16 %v348, %v347
      %353 = vrot.lane.b32.xlu0 %v349, 64
      %v354 = vpop.permute.xlu0 %353
      %355 = vrot.lane.b32.xlu0 %v350, 64
      %v356 = vpop.permute.xlu0 %355
      %357 = vrot.lane.b32.xlu0 %v351, 64
      %v358 = vpop.permute.xlu0 %357
      %359 = vrot.lane.b32.xlu0 %v352, 64
      %v360 = vpop.permute.xlu0 %359
      %v362 = vunpack.c.l.b16 %v188
      %v363 = vpack.c.b16 %v331, %v330
      %v364 = vpack.c.b16 %v333, %v332
      %v365 = vpack.c.b16 %v335, %v334
      %v366 = vpack.c.b16 %v362, %v336
      %v367 = vunpack.c.l.b16 %v320
      %v368 = vpack.c.b16 %v343, %v342
      %v369 = vpack.c.b16 %v345, %v344
      %v370 = vpack.c.b16 %v347, %v346
      %v371 = vpack.c.b16 %v367, %v348
      %372 = vrot.lane.b32.xlu0 %v368, 64
      %v373 = vpop.permute.xlu0 %372
      %374 = vrot.lane.b32.xlu0 %v369, 64
      %v375 = vpop.permute.xlu0 %374
      %376 = vrot.lane.b32.xlu0 %v370, 64
      %v377 = vpop.permute.xlu0 %376
      %378 = vrot.lane.b32.xlu0 %v371, 64
      %v379 = vpop.permute.xlu0 %378
      %vm380 = vcmask 523264
      %v383 = vsel %vm380, %v337, %v354
      %v387 = vsel %vm380, %v338, %v356
      %v391 = vsel %vm380, %v339, %v358
      %v395 = vsel %vm380, %v340, %v360
      %v399 = vsel %vm380, %v363, %v373
      %v403 = vsel %vm380, %v364, %v375
      %v407 = vsel %vm380, %v365, %v377
      %v411 = vsel %vm380, %v366, %v379
      %v413 = vld [vmem:[%s1] sm:$0xf]
      %v414 = vld [vmem:[%s1 + $0x4] sm:$0xf]
      %v415 = vld [vmem:[%s1 + $0x8] sm:$0xf]
      %v416 = vld [vmem:[%s1 + $0xc] sm:$0xf]
      %v417 = vld [vmem:[%s1 + $0x10] sm:$0xf]
      %v418 = vld [vmem:[%s1 + $0x14] sm:$0xf]
      %v419 = vld [vmem:[%s1 + $0x18] sm:$0xf]
      %v420 = vld [vmem:[%s1 + $0x1c] sm:$0xf]
      %v421 = vld [vmem:[%s1 + $0x20] sm:$0xf]
      %v422 = vld [vmem:[%s1 + $0x24] sm:$0xf]
      %v423 = vld [vmem:[%s1 + $0x28] sm:$0xf]
      %v424 = vld [vmem:[%s1 + $0x2c] sm:$0xf]
      %v425 = vld [vmem:[%s1 + $0x30] sm:$0xf]
      %v426 = vld [vmem:[%s1 + $0x34] sm:$0xf]
      %v427 = vld [vmem:[%s1 + $0x38] sm:$0xf]
      %v428 = vld [vmem:[%s1 + $0x3c] sm:$0xf]
      %v429 = vld [vmem:[%s1 + $0x40] sm:$0xf]
      %v430 = vld [vmem:[%s1 + $0x44] sm:$0xf]
      %v431 = vld [vmem:[%s1 + $0x48] sm:$0xf]
      %v432 = vld [vmem:[%s1 + $0x4c] sm:$0xf]
      %v433 = vld [vmem:[%s1 + $0x50] sm:$0xf]
      %v434 = vld [vmem:[%s1 + $0x54] sm:$0xf]
      %v435 = vld [vmem:[%s1 + $0x58] sm:$0xf]
      %v436 = vld [vmem:[%s1 + $0x5c] sm:$0xf]
      %v437 = vld [vmem:[%s1 + $0x60] sm:$0xf]
      %v438 = vld [vmem:[%s1 + $0x64] sm:$0xf]
      %v439 = vld [vmem:[%s1 + $0x68] sm:$0xf]
      %v440 = vld [vmem:[%s1 + $0x6c] sm:$0xf]
      %v441 = vld [vmem:[%s1 + $0x70] sm:$0xf]
      %v442 = vld [vmem:[%s1 + $0x74] sm:$0xf]
      %v443 = vld [vmem:[%s1 + $0x78] sm:$0xf]
      %v444 = vld [vmem:[%s1 + $0x7c] sm:$0xf]
      %v445 = vld [vmem:[%s2] sm:$0x1]
      %v447 = vlaneseq
      %v448 = vshrl.u32 %v447, 7
      %v449 = vsub.s32 0, %v448
      %v450 = vrot.slane %v445, %v449
      %v484 = vunpack.c.l.b16 %v413
      %v485 = vunpack.c.l.b16 %v414
      %v486 = vunpack.c.l.b16 %v415
      %v487 = vunpack.c.l.b16 %v416
      %v488 = vunpack.c.l.b16 %v417
      %v489 = vunpack.c.l.b16 %v418
      %v490 = vunpack.c.l.b16 %v419
      %v491 = vunpack.c.l.b16 %v420
      %v492 = vunpack.c.l.b16 %v421
      %v493 = vunpack.c.l.b16 %v422
      %v494 = vunpack.c.l.b16 %v423
      %v495 = vunpack.c.l.b16 %v424
      %v496 = vunpack.c.l.b16 %v425
      %v497 = vunpack.c.l.b16 %v426
      %v498 = vunpack.c.l.b16 %v427
      %v499 = vunpack.c.l.b16 %v428
      %v500 = vunpack.c.l.b16 %v429
      %v501 = vunpack.c.l.b16 %v430
      %v502 = vunpack.c.l.b16 %v431
      %v503 = vunpack.c.l.b16 %v432
      %v504 = vunpack.c.l.b16 %v433
      %v505 = vunpack.c.l.b16 %v434
      %v506 = vunpack.c.l.b16 %v435
      %v507 = vunpack.c.l.b16 %v436
      %v508 = vunpack.c.l.b16 %v437
      %v509 = vunpack.c.l.b16 %v438
      %v510 = vunpack.c.l.b16 %v439
      %v511 = vunpack.c.l.b16 %v440
      %v512 = vunpack.c.l.b16 %v441
      %v513 = vunpack.c.l.b16 %v442
      %v514 = vunpack.c.l.b16 %v443
      %v515 = vunpack.c.l.b16 %v444
      %v516 = vpack.c.b16 %v485, %v484
      %v517 = vpack.c.b16 %v487, %v486
      %v518 = vpack.c.b16 %v489, %v488
      %v519 = vpack.c.b16 %v491, %v490
      %v520 = vpack.c.b16 %v493, %v492
      %v521 = vpack.c.b16 %v495, %v494
      %v522 = vpack.c.b16 %v497, %v496
      %v523 = vpack.c.b16 %v499, %v498
      %v524 = vpack.c.b16 %v501, %v500
      %v525 = vpack.c.b16 %v503, %v502
      %v526 = vpack.c.b16 %v505, %v504
      %v527 = vpack.c.b16 %v507, %v506
      %v528 = vpack.c.b16 %v509, %v508
      %v529 = vpack.c.b16 %v511, %v510
      %v530 = vpack.c.b16 %v513, %v512
      %v531 = vpack.c.b16 %v515, %v514
      %548 = vmatprep.subr.bf16.mxu0 0
      %549 = vmatpush1.bf16.msra.mxu0 %v516
      %550 = vmatprep.subr.bf16.mxu0 0
      %551 = vmatpush1.bf16.msra.mxu0 %v517
      %552 = vmatprep.subr.bf16.mxu0 0
      %553 = vmatpush1.bf16.msra.mxu0 %v518
      %554 = vmatprep.subr.bf16.mxu0 0
      %555 = vmatpush1.bf16.msra.mxu0 %v519
      %556 = vmatprep.subr.bf16.mxu0 0
      %557 = vmatpush1.bf16.msra.mxu0 %v520
      %558 = vmatprep.subr.bf16.mxu0 0
      %559 = vmatpush1.bf16.msra.mxu0 %v521
      %560 = vmatprep.subr.bf16.mxu0 0
      %561 = vmatpush1.bf16.msra.mxu0 %v522
      %562 = vmatprep.subr.bf16.mxu0 0
      %563 = vmatpush1.bf16.msra.mxu0 %v523
      %564 = vmatprep.subr.bf16.mxu0 0
      %565 = vmatpush1.bf16.msra.mxu0 %v524
      %566 = vmatprep.subr.bf16.mxu0 0
      %567 = vmatpush1.bf16.msra.mxu0 %v525
      %568 = vmatprep.subr.bf16.mxu0 0
      %569 = vmatpush1.bf16.msra.mxu0 %v526
      %570 = vmatprep.subr.bf16.mxu0 0
      %571 = vmatpush1.bf16.msra.mxu0 %v527
      %572 = vmatprep.subr.bf16.mxu0 0
      %573 = vmatpush1.bf16.msra.mxu0 %v528
      %574 = vmatprep.subr.bf16.mxu0 0
      %575 = vmatpush1.bf16.msra.mxu0 %v529
      %576 = vmatprep.subr.bf16.mxu0 0
      %577 = vmatpush1.bf16.msra.mxu0 %v530
      %578 = vmatprep.subr.bf16.mxu0 0
      %579 = vmatpush1.bf16.msra.mxu0 %v531
      %580 = vmatprep.mubr.bf16.mxu0 %v399
      %581 = vmatmul.mubr.bf16.gmra.mrb[0].mxu0 %v383
      %v582 = vpop.f32.mrb[0].mxu0
      %v583 = vadd.f32 %v450, %v582
      %v584 = vpop.f32.mrb[0].mxu0
      %v585 = vpop.f32.mrb[0].mxu0
      %v586 = vadd.f32 %v450, %v585
      %v587 = vpop.f32.mrb[0].mxu0
      %588 = vmatprep.mubr.bf16.mxu0 %v403
      %589 = vmatmul.mubr.bf16.gmra.mrb[0].mxu0 %v387
      %v590 = vpop.f32.mrb[0].mxu0
      %v591 = vadd.f32 %v450, %v590
      %v592 = vpop.f32.mrb[0].mxu0
      %v593 = vpop.f32.mrb[0].mxu0
      %v594 = vadd.f32 %v450, %v593
      %v595 = vpop.f32.mrb[0].mxu0
      %596 = vmatprep.mubr.bf16.mxu0 %v407
      %597 = vmatmul.mubr.bf16.gmra.mrb[0].mxu0 %v391
      %v598 = vpop.f32.mrb[0].mxu0
      %v599 = vadd.f32 %v450, %v598
      %v600 = vpop.f32.mrb[0].mxu0
      %v601 = vpop.f32.mrb[0].mxu0
      %v602 = vadd.f32 %v450, %v601
      %v603 = vpop.f32.mrb[0].mxu0
      %604 = vmatprep.mubr.bf16.mxu0 %v411
      %605 = vmatmul.mubr.bf16.gmra.mrb[0].mxu0 %v395
      %v606 = vpop.f32.mrb[0].mxu0
      %v607 = vadd.f32 %v450, %v606
      %v608 = vpop.f32.mrb[0].mxu0
      %v609 = vpop.f32.mrb[0].mxu0
      %v610 = vadd.f32 %v450, %v609
      %v611 = vpop.f32.mrb[0].mxu0
      %612 = vdwg.mxu0
      %vm613 = vcmp.ge.f32.partialorder %v583, 0.0
      %vm614 = vcmp.ge.f32.partialorder %v586, 0.0
      %vm615 = vcmp.ge.f32.partialorder %v591, 0.0
      %vm616 = vcmp.ge.f32.partialorder %v594, 0.0
      %vm617 = vcmp.ge.f32.partialorder %v599, 0.0
      %vm618 = vcmp.ge.f32.partialorder %v602, 0.0
      %vm619 = vcmp.ge.f32.partialorder %v607, 0.0
      %vm620 = vcmp.ge.f32.partialorder %v610, 0.0
      %v621 = vmul.f32 %v583, 0.01
      %v622 = vmul.f32 %v586, 0.01
      %v623 = vmul.f32 %v591, 0.01
      %v624 = vmul.f32 %v594, 0.01
      %v625 = vmul.f32 %v599, 0.01
      %v626 = vmul.f32 %v602, 0.01
      %v627 = vmul.f32 %v607, 0.01
      %v628 = vmul.f32 %v610, 0.01
      %v629 = vsel %vm613, %v583, %v621
      %v630 = vsel %vm614, %v586, %v622
      %v631 = vsel %vm615, %v591, %v623
      %v632 = vsel %vm616, %v594, %v624
      %v633 = vsel %vm617, %v599, %v625
      %v634 = vsel %vm618, %v602, %v626
      %v635 = vsel %vm619, %v607, %v627
      %v636 = vsel %vm620, %v610, %v628
      %vm645 = vcmask 1042432
      %vm646 = vcmask 1046532
      %vm647 = vmor %vm645, %vm646
      %v648 = vrot.slane %v172, 5
      %v649 = vrot.slane %v648, 4
      %v650 = vrot.slane %v173, 5
      %v651 = vsel %vm647, %v649, %v650
      %v652 = vrot.slane %v174, 5
      %v653 = vrot.slane %v652, 4
      %v654 = vrot.slane %v175, 5
      %v655 = vsel %vm647, %v653, %v654
      %v656 = vrot.slane %v176, 5
      %v657 = vrot.slane %v656, 4
      %v658 = vrot.slane %v177, 5
      %v659 = vsel %vm647, %v657, %v658
      %v660 = vrot.slane %v178, 5
      %v661 = vrot.slane %v660, 4
      %v662 = vrot.slane %v179, 5
      %v663 = vsel %vm647, %v661, %v662
      %v664 = vrot.slane %v180, 5
      %v665 = vrot.slane %v664, 4
      %v666 = vrot.slane %v181, 5
      %v667 = vsel %vm647, %v665, %v666
      %v668 = vrot.slane %v182, 5
      %v669 = vrot.slane %v668, 4
      %v670 = vrot.slane %v183, 5
      %v671 = vsel %vm647, %v669, %v670
      %v672 = vrot.slane %v184, 5
      %v673 = vrot.slane %v672, 4
      %v674 = vrot.slane %v185, 5
      %v675 = vsel %vm647, %v673, %v674
      %v676 = vrot.slane %v186, 5
      %v677 = vrot.slane %v676, 4
      %v678 = vrot.slane %v187, 5
      %v679 = vsel %vm647, %v677, %v678
      %v681 = vrot.slane %v188, 5
      %v682 = vrot.slane %v681, 4
      %v683 = vrot.slane %v189, 5
      %v684 = vsel %vm647, %v682, %v683
      %v685 = vunpack.c.l.b16 %v651
      %v686 = vunpack.c.l.b16 %v655
      %v687 = vunpack.c.l.b16 %v659
      %v688 = vunpack.c.l.b16 %v663
      %v689 = vunpack.c.l.b16 %v667
      %v690 = vunpack.c.l.b16 %v671
      %v691 = vunpack.c.l.b16 %v675
      %v692 = vunpack.c.l.b16 %v679
      %v693 = vpack.c.b16 %v686, %v685
      %v694 = vpack.c.b16 %v688, %v687
      %v695 = vpack.c.b16 %v690, %v689
      %v696 = vpack.c.b16 %v692, %v691
      %697 = vrot.lane.b32.xlu0 %v693, 64
      %v698 = vpop.permute.xlu0 %697
      %699 = vrot.lane.b32.xlu0 %v694, 64
      %v700 = vpop.permute.xlu0 %699
      %701 = vrot.lane.b32.xlu0 %v695, 64
      %v702 = vpop.permute.xlu0 %701
      %703 = vrot.lane.b32.xlu0 %v696, 64
      %v704 = vpop.permute.xlu0 %703
      %v705 = vunpack.c.l.b16 %v684
      %v706 = vpack.c.b16 %v687, %v686
      %v707 = vpack.c.b16 %v689, %v688
      %v708 = vpack.c.b16 %v691, %v690
      %v709 = vpack.c.b16 %v705, %v692
      %710 = vrot.lane.b32.xlu0 %v706, 64
      %v711 = vpop.permute.xlu0 %710
      %712 = vrot.lane.b32.xlu0 %v707, 64
      %v713 = vpop.permute.xlu0 %712
      %714 = vrot.lane.b32.xlu0 %v708, 64
      %v715 = vpop.permute.xlu0 %714
      %716 = vrot.lane.b32.xlu0 %v709, 64
      %v717 = vpop.permute.xlu0 %716
      %v720 = vsel %vm380, %v349, %v698
      %v724 = vsel %vm380, %v350, %v700
      %v728 = vsel %vm380, %v351, %v702
      %v732 = vsel %vm380, %v352, %v704
      %v736 = vsel %vm380, %v368, %v711
      %v740 = vsel %vm380, %v369, %v713
      %v744 = vsel %vm380, %v370, %v715
      %v748 = vsel %vm380, %v371, %v717
      %s750 = scalar_lea.vmem %s1, 128
      %v751 = vld [vmem:[%s750] sm:$0xf]
      %v752 = vld [vmem:[%s750 + $0x4] sm:$0xf]
      %v753 = vld [vmem:[%s750 + $0x8] sm:$0xf]
      %v754 = vld [vmem:[%s750 + $0xc] sm:$0xf]
      %v755 = vld [vmem:[%s750 + $0x10] sm:$0xf]
      %v756 = vld [vmem:[%s750 + $0x14] sm:$0xf]
      %v757 = vld [vmem:[%s750 + $0x18] sm:$0xf]
      %v758 = vld [vmem:[%s750 + $0x1c] sm:$0xf]
      %v759 = vld [vmem:[%s750 + $0x20] sm:$0xf]
      %v760 = vld [vmem:[%s750 + $0x24] sm:$0xf]
      %v761 = vld [vmem:[%s750 + $0x28] sm:$0xf]
      %v762 = vld [vmem:[%s750 + $0x2c] sm:$0xf]
      %v763 = vld [vmem:[%s750 + $0x30] sm:$0xf]
      %v764 = vld [vmem:[%s750 + $0x34] sm:$0xf]
      %v765 = vld [vmem:[%s750 + $0x38] sm:$0xf]
      %v766 = vld [vmem:[%s750 + $0x3c] sm:$0xf]
      %v767 = vld [vmem:[%s750 + $0x40] sm:$0xf]
      %v768 = vld [vmem:[%s750 + $0x44] sm:$0xf]
      %v769 = vld [vmem:[%s750 + $0x48] sm:$0xf]
      %v770 = vld [vmem:[%s750 + $0x4c] sm:$0xf]
      %v771 = vld [vmem:[%s750 + $0x50] sm:$0xf]
      %v772 = vld [vmem:[%s750 + $0x54] sm:$0xf]
      %v773 = vld [vmem:[%s750 + $0x58] sm:$0xf]
      %v774 = vld [vmem:[%s750 + $0x5c] sm:$0xf]
      %v775 = vld [vmem:[%s750 + $0x60] sm:$0xf]
      %v776 = vld [vmem:[%s750 + $0x64] sm:$0xf]
      %v777 = vld [vmem:[%s750 + $0x68] sm:$0xf]
      %v778 = vld [vmem:[%s750 + $0x6c] sm:$0xf]
      %v779 = vld [vmem:[%s750 + $0x70] sm:$0xf]
      %v780 = vld [vmem:[%s750 + $0x74] sm:$0xf]
      %v781 = vld [vmem:[%s750 + $0x78] sm:$0xf]
      %v782 = vld [vmem:[%s750 + $0x7c] sm:$0xf]
      %v815 = vunpack.c.l.b16 %v751
      %v816 = vunpack.c.l.b16 %v752
      %v817 = vunpack.c.l.b16 %v753
      %v818 = vunpack.c.l.b16 %v754
      %v819 = vunpack.c.l.b16 %v755
      %v820 = vunpack.c.l.b16 %v756
      %v821 = vunpack.c.l.b16 %v757
      %v822 = vunpack.c.l.b16 %v758
      %v823 = vunpack.c.l.b16 %v759
      %v824 = vunpack.c.l.b16 %v760
      %v825 = vunpack.c.l.b16 %v761
      %v826 = vunpack.c.l.b16 %v762
      %v827 = vunpack.c.l.b16 %v763
      %v828 = vunpack.c.l.b16 %v764
      %v829 = vunpack.c.l.b16 %v765
      %v830 = vunpack.c.l.b16 %v766
      %v831 = vunpack.c.l.b16 %v767
      %v832 = vunpack.c.l.b16 %v768
      %v833 = vunpack.c.l.b16 %v769
      %v834 = vunpack.c.l.b16 %v770
      %v835 = vunpack.c.l.b16 %v771
      %v836 = vunpack.c.l.b16 %v772
      %v837 = vunpack.c.l.b16 %v773
      %v838 = vunpack.c.l.b16 %v774
      %v839 = vunpack.c.l.b16 %v775
      %v840 = vunpack.c.l.b16 %v776
      %v841 = vunpack.c.l.b16 %v777
      %v842 = vunpack.c.l.b16 %v778
      %v843 = vunpack.c.l.b16 %v779
      %v844 = vunpack.c.l.b16 %v780
      %v845 = vunpack.c.l.b16 %v781
      %v846 = vunpack.c.l.b16 %v782
      %v847 = vpack.c.b16 %v816, %v815
      %v848 = vpack.c.b16 %v818, %v817
      %v849 = vpack.c.b16 %v820, %v819
      %v850 = vpack.c.b16 %v822, %v821
      %v851 = vpack.c.b16 %v824, %v823
      %v852 = vpack.c.b16 %v826, %v825
      %v853 = vpack.c.b16 %v828, %v827
      %v854 = vpack.c.b16 %v830, %v829
      %v855 = vpack.c.b16 %v832, %v831
      %v856 = vpack.c.b16 %v834, %v833
      %v857 = vpack.c.b16 %v836, %v835
      %v858 = vpack.c.b16 %v838, %v837
      %v859 = vpack.c.b16 %v840, %v839
      %v860 = vpack.c.b16 %v842, %v841
      %v861 = vpack.c.b16 %v844, %v843
      %v862 = vpack.c.b16 %v846, %v845
      %879 = vmatprep.subr.bf16.mxu0 0
      %880 = vmatpush1.bf16.msra.mxu0 %v847
      %881 = vmatprep.subr.bf16.mxu0 0
      %882 = vmatpush1.bf16.msra.mxu0 %v848
      %883 = vmatprep.subr.bf16.mxu0 0
      %884 = vmatpush1.bf16.msra.mxu0 %v849
      %885 = vmatprep.subr.bf16.mxu0 0
      %886 = vmatpush1.bf16.msra.mxu0 %v850
      %887 = vmatprep.subr.bf16.mxu0 0
      %888 = vmatpush1.bf16.msra.mxu0 %v851
      %889 = vmatprep.subr.bf16.mxu0 0
      %890 = vmatpush1.bf16.msra.mxu0 %v852
      %891 = vmatprep.subr.bf16.mxu0 0
      %892 = vmatpush1.bf16.msra.mxu0 %v853
      %893 = vmatprep.subr.bf16.mxu0 0
      %894 = vmatpush1.bf16.msra.mxu0 %v854
      %895 = vmatprep.subr.bf16.mxu0 0
      %896 = vmatpush1.bf16.msra.mxu0 %v855
      %897 = vmatprep.subr.bf16.mxu0 0
      %898 = vmatpush1.bf16.msra.mxu0 %v856
      %899 = vmatprep.subr.bf16.mxu0 0
      %900 = vmatpush1.bf16.msra.mxu0 %v857
      %901 = vmatprep.subr.bf16.mxu0 0
      %902 = vmatpush1.bf16.msra.mxu0 %v858
      %903 = vmatprep.subr.bf16.mxu0 0
      %904 = vmatpush1.bf16.msra.mxu0 %v859
      %905 = vmatprep.subr.bf16.mxu0 0
      %906 = vmatpush1.bf16.msra.mxu0 %v860
      %907 = vmatprep.subr.bf16.mxu0 0
      %908 = vmatpush1.bf16.msra.mxu0 %v861
      %909 = vmatprep.subr.bf16.mxu0 0
      %910 = vmatpush1.bf16.msra.mxu0 %v862
      %911 = vmatprep.mubr.bf16.mxu0 %v736
      %912 = vmatmul.mubr.bf16.gmra.mrb[0].mxu0 %v720
      %v913 = vpop.f32.mrb[0].mxu0
      %v914 = vadd.f32 %v450, %v913
      %v915 = vpop.f32.mrb[0].mxu0
      %v916 = vpop.f32.mrb[0].mxu0
      %v917 = vadd.f32 %v450, %v916
      %v918 = vpop.f32.mrb[0].mxu0
      %919 = vmatprep.mubr.bf16.mxu0 %v740
      %920 = vmatmul.mubr.bf16.gmra.mrb[0].mxu0 %v724
      %v921 = vpop.f32.mrb[0].mxu0
      %v922 = vadd.f32 %v450, %v921
      %v923 = vpop.f32.mrb[0].mxu0
      %v924 = vpop.f32.mrb[0].mxu0
      %v925 = vadd.f32 %v450, %v924
      %v926 = vpop.f32.mrb[0].mxu0
      %927 = vmatprep.mubr.bf16.mxu0 %v744
      %928 = vmatmul.mubr.bf16.gmra.mrb[0].mxu0 %v728
      %v929 = vpop.f32.mrb[0].mxu0
      %v930 = vadd.f32 %v450, %v929
      %v931 = vpop.f32.mrb[0].mxu0
      %v932 = vpop.f32.mrb[0].mxu0
      %v933 = vadd.f32 %v450, %v932
      %v934 = vpop.f32.mrb[0].mxu0
      %935 = vmatprep.mubr.bf16.mxu0 %v748
      %936 = vmatmul.mubr.bf16.gmra.mrb[0].mxu0 %v732
      %v937 = vpop.f32.mrb[0].mxu0
      %v938 = vadd.f32 %v450, %v937
      %v939 = vpop.f32.mrb[0].mxu0
      %v940 = vpop.f32.mrb[0].mxu0
      %v941 = vadd.f32 %v450, %v940
      %v942 = vpop.f32.mrb[0].mxu0
      %943 = vdwg.mxu0
      %vm944 = vcmp.ge.f32.partialorder %v914, 0.0
      %vm945 = vcmp.ge.f32.partialorder %v917, 0.0
      %vm946 = vcmp.ge.f32.partialorder %v922, 0.0
      %vm947 = vcmp.ge.f32.partialorder %v925, 0.0
      %vm948 = vcmp.ge.f32.partialorder %v930, 0.0
      %vm949 = vcmp.ge.f32.partialorder %v933, 0.0
      %vm950 = vcmp.ge.f32.partialorder %v938, 0.0
      %vm951 = vcmp.ge.f32.partialorder %v941, 0.0
      %v952 = vmul.f32 %v914, 0.01
      %v953 = vmul.f32 %v917, 0.01
      %v954 = vmul.f32 %v922, 0.01
      %v955 = vmul.f32 %v925, 0.01
      %v956 = vmul.f32 %v930, 0.01
      %v957 = vmul.f32 %v933, 0.01
      %v958 = vmul.f32 %v938, 0.01
      %v959 = vmul.f32 %v941, 0.01
      %v960 = vsel %vm944, %v914, %v952
      %v961 = vsel %vm945, %v917, %v953
      %v962 = vsel %vm946, %v922, %v954
      %v963 = vsel %vm947, %v925, %v955
      %v964 = vsel %vm948, %v930, %v956
      %v965 = vsel %vm949, %v933, %v957
      %v966 = vsel %vm950, %v938, %v958
      %v967 = vsel %vm951, %v941, %v959
      %976 = vrot.lane.b32.xlu0 %v960, 32
      %v977 = vpop.permute.xlu0 %976
      %978 = vrot.lane.b32.xlu0 %v961, 32
      %v979 = vpop.permute.xlu0 %978
      %980 = vrot.lane.b32.xlu0 %v962, 32
      %v981 = vpop.permute.xlu0 %980
      %982 = vrot.lane.b32.xlu0 %v963, 32
      %v983 = vpop.permute.xlu0 %982
      %984 = vrot.lane.b32.xlu0 %v964, 32
      %v985 = vpop.permute.xlu0 %984
      %986 = vrot.lane.b32.xlu0 %v965, 32
      %v987 = vpop.permute.xlu0 %986
      %988 = vrot.lane.b32.xlu0 %v966, 32
      %v989 = vpop.permute.xlu0 %988
      %990 = vrot.lane.b32.xlu0 %v967, 32
      %v991 = vpop.permute.xlu0 %990
      %vm1000 = vcmask 261120
      %v1001 = vsel %vm1000, %v629, %v977
      %v1002 = vsel %vm1000, %v630, %v979
      %v1003 = vsel %vm1000, %v631, %v981
      %v1004 = vsel %vm1000, %v632, %v983
      %v1005 = vsel %vm1000, %v633, %v985
      %v1006 = vsel %vm1000, %v634, %v987
      %v1007 = vsel %vm1000, %v635, %v989
      %v1008 = vsel %vm1000, %v636, %v991
      %v1010 = vshrl.u32 %v190, 16
      %v1012 = vrot.slane %v1010, 4
      %v1013 = vshll.u32 %v190, 16
      %v1015 = vrot.slane %v1013, 5
      %v1016 = vor.u32 %v1012, %v1015
      %v1017 = vrot.slane %v1016, 4
      %v1019 = vshll.u32 %v191, 16
      %v1021 = vrot.slane %v1019, 5
      %v1022 = vsel %vm194, %v1017, %v1021
      %v1024 = vunpack.c.l.b16 %v190
      %v1025 = vpack.c.b16 %v1024, %v362
      %v1026 = vunpack.c.l.b16 %v1022
      %v1027 = vpack.c.b16 %v1026, %v367
      %1028 = vrot.lane.b32.xlu0 %v1027, 64
      %v1029 = vpop.permute.xlu0 %1028
      %v1032 = vsel %vm380, %v1025, %v1029
      %s1034 = scalar_lea.vmem %s1, 256
      %v1035 = vld [vmem:[%s1034] sm:$0xf]
      %v1036 = vld [vmem:[%s1034 + $0x4] sm:$0xf]
      %v1037 = vld [vmem:[%s1034 + $0x8] sm:$0xf]
      %v1038 = vld [vmem:[%s1034 + $0xc] sm:$0xf]
      %v1039 = vld [vmem:[%s1034 + $0x10] sm:$0xf]
      %v1040 = vld [vmem:[%s1034 + $0x14] sm:$0xf]
      %v1041 = vld [vmem:[%s1034 + $0x18] sm:$0xf]
      %v1042 = vld [vmem:[%s1034 + $0x1c] sm:$0xf]
      %v1043 = vld [vmem:[%s1034 + $0x20] sm:$0xf]
      %v1044 = vld [vmem:[%s1034 + $0x24] sm:$0xf]
      %v1045 = vld [vmem:[%s1034 + $0x28] sm:$0xf]
      %v1046 = vld [vmem:[%s1034 + $0x2c] sm:$0xf]
      %v1047 = vld [vmem:[%s1034 + $0x30] sm:$0xf]
      %v1048 = vld [vmem:[%s1034 + $0x34] sm:$0xf]
      %v1049 = vld [vmem:[%s1034 + $0x38] sm:$0xf]
      %v1050 = vld [vmem:[%s1034 + $0x3c] sm:$0xf]
      %v1051 = vld [vmem:[%s1034 + $0x40] sm:$0xf]
      %v1052 = vld [vmem:[%s1034 + $0x44] sm:$0xf]
      %v1053 = vld [vmem:[%s1034 + $0x48] sm:$0xf]
      %v1054 = vld [vmem:[%s1034 + $0x4c] sm:$0xf]
      %v1055 = vld [vmem:[%s1034 + $0x50] sm:$0xf]
      %v1056 = vld [vmem:[%s1034 + $0x54] sm:$0xf]
      %v1057 = vld [vmem:[%s1034 + $0x58] sm:$0xf]
      %v1058 = vld [vmem:[%s1034 + $0x5c] sm:$0xf]
      %v1059 = vld [vmem:[%s1034 + $0x60] sm:$0xf]
      %v1060 = vld [vmem:[%s1034 + $0x64] sm:$0xf]
      %v1061 = vld [vmem:[%s1034 + $0x68] sm:$0xf]
      %v1062 = vld [vmem:[%s1034 + $0x6c] sm:$0xf]
      %v1063 = vld [vmem:[%s1034 + $0x70] sm:$0xf]
      %v1064 = vld [vmem:[%s1034 + $0x74] sm:$0xf]
      %v1065 = vld [vmem:[%s1034 + $0x78] sm:$0xf]
      %v1066 = vld [vmem:[%s1034 + $0x7c] sm:$0xf]
      %v1099 = vunpack.c.l.b16 %v1035
      %v1100 = vunpack.c.l.b16 %v1036
      %v1101 = vunpack.c.l.b16 %v1037
      %v1102 = vunpack.c.l.b16 %v1038
      %v1103 = vunpack.c.l.b16 %v1039
      %v1104 = vunpack.c.l.b16 %v1040
      %v1105 = vunpack.c.l.b16 %v1041
      %v1106 = vunpack.c.l.b16 %v1042
      %v1107 = vunpack.c.l.b16 %v1043
      %v1108 = vunpack.c.l.b16 %v1044
      %v1109 = vunpack.c.l.b16 %v1045
      %v1110 = vunpack.c.l.b16 %v1046
      %v1111 = vunpack.c.l.b16 %v1047
      %v1112 = vunpack.c.l.b16 %v1048
      %v1113 = vunpack.c.l.b16 %v1049
      %v1114 = vunpack.c.l.b16 %v1050
      %v1115 = vunpack.c.l.b16 %v1051
      %v1116 = vunpack.c.l.b16 %v1052
      %v1117 = vunpack.c.l.b16 %v1053
      %v1118 = vunpack.c.l.b16 %v1054
      %v1119 = vunpack.c.l.b16 %v1055
      %v1120 = vunpack.c.l.b16 %v1056
      %v1121 = vunpack.c.l.b16 %v1057
      %v1122 = vunpack.c.l.b16 %v1058
      %v1123 = vunpack.c.l.b16 %v1059
      %v1124 = vunpack.c.l.b16 %v1060
      %v1125 = vunpack.c.l.b16 %v1061
      %v1126 = vunpack.c.l.b16 %v1062
      %v1127 = vunpack.c.l.b16 %v1063
      %v1128 = vunpack.c.l.b16 %v1064
      %v1129 = vunpack.c.l.b16 %v1065
      %v1130 = vunpack.c.l.b16 %v1066
      %v1131 = vpack.c.b16 %v1100, %v1099
      %v1132 = vpack.c.b16 %v1102, %v1101
      %v1133 = vpack.c.b16 %v1104, %v1103
      %v1134 = vpack.c.b16 %v1106, %v1105
      %v1135 = vpack.c.b16 %v1108, %v1107
      %v1136 = vpack.c.b16 %v1110, %v1109
      %v1137 = vpack.c.b16 %v1112, %v1111
      %v1138 = vpack.c.b16 %v1114, %v1113
      %v1139 = vpack.c.b16 %v1116, %v1115
      %v1140 = vpack.c.b16 %v1118, %v1117
      %v1141 = vpack.c.b16 %v1120, %v1119
      %v1142 = vpack.c.b16 %v1122, %v1121
      %v1143 = vpack.c.b16 %v1124, %v1123
      %v1144 = vpack.c.b16 %v1126, %v1125
      %v1145 = vpack.c.b16 %v1128, %v1127
      %v1146 = vpack.c.b16 %v1130, %v1129
      %1163 = vmatprep.subr.bf16.mxu0 0
      %1164 = vmatpush1.bf16.msra.mxu0 %v1131
      %1165 = vmatprep.subr.bf16.mxu0 0
      %1166 = vmatpush1.bf16.msra.mxu0 %v1132
      %1167 = vmatprep.subr.bf16.mxu0 0
      %1168 = vmatpush1.bf16.msra.mxu0 %v1133
      %1169 = vmatprep.subr.bf16.mxu0 0
      %1170 = vmatpush1.bf16.msra.mxu0 %v1134
      %1171 = vmatprep.subr.bf16.mxu0 0
      %1172 = vmatpush1.bf16.msra.mxu0 %v1135
      %1173 = vmatprep.subr.bf16.mxu0 0
      %1174 = vmatpush1.bf16.msra.mxu0 %v1136
      %1175 = vmatprep.subr.bf16.mxu0 0
      %1176 = vmatpush1.bf16.msra.mxu0 %v1137
      %1177 = vmatprep.subr.bf16.mxu0 0
      %1178 = vmatpush1.bf16.msra.mxu0 %v1138
      %1179 = vmatprep.subr.bf16.mxu0 0
      %1180 = vmatpush1.bf16.msra.mxu0 %v1139
      %1181 = vmatprep.subr.bf16.mxu0 0
      %1182 = vmatpush1.bf16.msra.mxu0 %v1140
      %1183 = vmatprep.subr.bf16.mxu0 0
      %1184 = vmatpush1.bf16.msra.mxu0 %v1141
      %1185 = vmatprep.subr.bf16.mxu0 0
      %1186 = vmatpush1.bf16.msra.mxu0 %v1142
      %1187 = vmatprep.subr.bf16.mxu0 0
      %1188 = vmatpush1.bf16.msra.mxu0 %v1143
      %1189 = vmatprep.subr.bf16.mxu0 0
      %1190 = vmatpush1.bf16.msra.mxu0 %v1144
      %1191 = vmatprep.subr.bf16.mxu0 0
      %1192 = vmatpush1.bf16.msra.mxu0 %v1145
      %1193 = vmatprep.subr.bf16.mxu0 0
      %1194 = vmatpush1.bf16.msra.mxu0 %v1146
      %1195 = vmatprep.mubr.bf16.mxu0 %v387
      %1196 = vmatmul.mubr.bf16.gmra.mrb[0].mxu0 %v399
      %v1197 = vpop.f32.mrb[0].mxu0
      %v1198 = vadd.f32 %v450, %v1197
      %v1199 = vpop.f32.mrb[0].mxu0
      %v1200 = vpop.f32.mrb[0].mxu0
      %v1201 = vadd.f32 %v450, %v1200
      %v1202 = vpop.f32.mrb[0].mxu0
      %1203 = vmatprep.mubr.bf16.mxu0 %v391
      %1204 = vmatmul.mubr.bf16.gmra.mrb[0].mxu0 %v403
      %v1205 = vpop.f32.mrb[0].mxu0
      %v1206 = vadd.f32 %v450, %v1205
      %v1207 = vpop.f32.mrb[0].mxu0
      %v1208 = vpop.f32.mrb[0].mxu0
      %v1209 = vadd.f32 %v450, %v1208
      %v1210 = vpop.f32.mrb[0].mxu0
      %1211 = vmatprep.mubr.bf16.mxu0 %v395
      %1212 = vmatmul.mubr.bf16.gmra.mrb[0].mxu0 %v407
      %v1213 = vpop.f32.mrb[0].mxu0
      %v1214 = vadd.f32 %v450, %v1213
      %v1215 = vpop.f32.mrb[0].mxu0
      %v1216 = vpop.f32.mrb[0].mxu0
      %v1217 = vadd.f32 %v450, %v1216
      %v1218 = vpop.f32.mrb[0].mxu0
      %1219 = vmatprep.mubr.bf16.mxu0 %v1032
      %1220 = vmatmul.mubr.bf16.gmra.mrb[0].mxu0 %v411
      %v1221 = vpop.f32.mrb[0].mxu0
      %v1222 = vadd.f32 %v450, %v1221
      %v1223 = vpop.f32.mrb[0].mxu0
      %v1224 = vpop.f32.mrb[0].mxu0
      %v1225 = vadd.f32 %v450, %v1224
      %v1226 = vpop.f32.mrb[0].mxu0
      %1227 = vdwg.mxu0
      %vm1228 = vcmp.ge.f32.partialorder %v1198, 0.0
      %vm1229 = vcmp.ge.f32.partialorder %v1201, 0.0
      %vm1230 = vcmp.ge.f32.partialorder %v1206, 0.0
      %vm1231 = vcmp.ge.f32.partialorder %v1209, 0.0
      %vm1232 = vcmp.ge.f32.partialorder %v1214, 0.0
      %vm1233 = vcmp.ge.f32.partialorder %v1217, 0.0
      %vm1234 = vcmp.ge.f32.partialorder %v1222, 0.0
      %vm1235 = vcmp.ge.f32.partialorder %v1225, 0.0
      %v1236 = vmul.f32 %v1198, 0.01
      %v1237 = vmul.f32 %v1201, 0.01
      %v1238 = vmul.f32 %v1206, 0.01
      %v1239 = vmul.f32 %v1209, 0.01
      %v1240 = vmul.f32 %v1214, 0.01
      %v1241 = vmul.f32 %v1217, 0.01
      %v1242 = vmul.f32 %v1222, 0.01
      %v1243 = vmul.f32 %v1225, 0.01
      %v1244 = vsel %vm1228, %v1198, %v1236
      %v1245 = vsel %vm1229, %v1201, %v1237
      %v1246 = vsel %vm1230, %v1206, %v1238
      %v1247 = vsel %vm1231, %v1209, %v1239
      %v1248 = vsel %vm1232, %v1214, %v1240
      %v1249 = vsel %vm1233, %v1217, %v1241
      %v1250 = vsel %vm1234, %v1222, %v1242
      %v1251 = vsel %vm1235, %v1225, %v1243
      %v1253 = vrot.slane %v190, 5
      %v1254 = vrot.slane %v1253, 4
      %v1255 = vrot.slane %v191, 5
      %v1256 = vsel %vm647, %v1254, %v1255
      %v1257 = vunpack.c.l.b16 %v1256
      %v1258 = vpack.c.b16 %v1257, %v705
      %1259 = vrot.lane.b32.xlu0 %v1258, 64
      %v1260 = vpop.permute.xlu0 %1259
      %v1263 = vsel %vm380, %v1027, %v1260
      %s1265 = scalar_lea.vmem %s1, 384
      %v1266 = vld [vmem:[%s1265] sm:$0xf]
      %v1267 = vld [vmem:[%s1265 + $0x4] sm:$0xf]
      %v1268 = vld [vmem:[%s1265 + $0x8] sm:$0xf]
      %v1269 = vld [vmem:[%s1265 + $0xc] sm:$0xf]
      %v1270 = vld [vmem:[%s1265 + $0x10] sm:$0xf]
      %v1271 = vld [vmem:[%s1265 + $0x14] sm:$0xf]
      %v1272 = vld [vmem:[%s1265 + $0x18] sm:$0xf]
      %v1273 = vld [vmem:[%s1265 + $0x1c] sm:$0xf]
      %v1274 = vld [vmem:[%s1265 + $0x20] sm:$0xf]
      %v1275 = vld [vmem:[%s1265 + $0x24] sm:$0xf]
      %v1276 = vld [vmem:[%s1265 + $0x28] sm:$0xf]
      %v1277 = vld [vmem:[%s1265 + $0x2c] sm:$0xf]
      %v1278 = vld [vmem:[%s1265 + $0x30] sm:$0xf]
      %v1279 = vld [vmem:[%s1265 + $0x34] sm:$0xf]
      %v1280 = vld [vmem:[%s1265 + $0x38] sm:$0xf]
      %v1281 = vld [vmem:[%s1265 + $0x3c] sm:$0xf]
      %v1282 = vld [vmem:[%s1265 + $0x40] sm:$0xf]
      %v1283 = vld [vmem:[%s1265 + $0x44] sm:$0xf]
      %v1284 = vld [vmem:[%s1265 + $0x48] sm:$0xf]
      %v1285 = vld [vmem:[%s1265 + $0x4c] sm:$0xf]
      %v1286 = vld [vmem:[%s1265 + $0x50] sm:$0xf]
      %v1287 = vld [vmem:[%s1265 + $0x54] sm:$0xf]
      %v1288 = vld [vmem:[%s1265 + $0x58] sm:$0xf]
      %v1289 = vld [vmem:[%s1265 + $0x5c] sm:$0xf]
      %v1290 = vld [vmem:[%s1265 + $0x60] sm:$0xf]
      %v1291 = vld [vmem:[%s1265 + $0x64] sm:$0xf]
      %v1292 = vld [vmem:[%s1265 + $0x68] sm:$0xf]
      %v1293 = vld [vmem:[%s1265 + $0x6c] sm:$0xf]
      %v1294 = vld [vmem:[%s1265 + $0x70] sm:$0xf]
      %v1295 = vld [vmem:[%s1265 + $0x74] sm:$0xf]
      %v1296 = vld [vmem:[%s1265 + $0x78] sm:$0xf]
      %v1297 = vld [vmem:[%s1265 + $0x7c] sm:$0xf]
      %v1330 = vunpack.c.l.b16 %v1266
      %v1331 = vunpack.c.l.b16 %v1267
      %v1332 = vunpack.c.l.b16 %v1268
      %v1333 = vunpack.c.l.b16 %v1269
      %v1334 = vunpack.c.l.b16 %v1270
      %v1335 = vunpack.c.l.b16 %v1271
      %v1336 = vunpack.c.l.b16 %v1272
      %v1337 = vunpack.c.l.b16 %v1273
      %v1338 = vunpack.c.l.b16 %v1274
      %v1339 = vunpack.c.l.b16 %v1275
      %v1340 = vunpack.c.l.b16 %v1276
      %v1341 = vunpack.c.l.b16 %v1277
      %v1342 = vunpack.c.l.b16 %v1278
      %v1343 = vunpack.c.l.b16 %v1279
      %v1344 = vunpack.c.l.b16 %v1280
      %v1345 = vunpack.c.l.b16 %v1281
      %v1346 = vunpack.c.l.b16 %v1282
      %v1347 = vunpack.c.l.b16 %v1283
      %v1348 = vunpack.c.l.b16 %v1284
      %v1349 = vunpack.c.l.b16 %v1285
      %v1350 = vunpack.c.l.b16 %v1286
      %v1351 = vunpack.c.l.b16 %v1287
      %v1352 = vunpack.c.l.b16 %v1288
      %v1353 = vunpack.c.l.b16 %v1289
      %v1354 = vunpack.c.l.b16 %v1290
      %v1355 = vunpack.c.l.b16 %v1291
      %v1356 = vunpack.c.l.b16 %v1292
      %v1357 = vunpack.c.l.b16 %v1293
      %v1358 = vunpack.c.l.b16 %v1294
      %v1359 = vunpack.c.l.b16 %v1295
      %v1360 = vunpack.c.l.b16 %v1296
      %v1361 = vunpack.c.l.b16 %v1297
      %v1362 = vpack.c.b16 %v1331, %v1330
      %v1363 = vpack.c.b16 %v1333, %v1332
      %v1364 = vpack.c.b16 %v1335, %v1334
      %v1365 = vpack.c.b16 %v1337, %v1336
      %v1366 = vpack.c.b16 %v1339, %v1338
      %v1367 = vpack.c.b16 %v1341, %v1340
      %v1368 = vpack.c.b16 %v1343, %v1342
      %v1369 = vpack.c.b16 %v1345, %v1344
      %v1370 = vpack.c.b16 %v1347, %v1346
      %v1371 = vpack.c.b16 %v1349, %v1348
      %v1372 = vpack.c.b16 %v1351, %v1350
      %v1373 = vpack.c.b16 %v1353, %v1352
      %v1374 = vpack.c.b16 %v1355, %v1354
      %v1375 = vpack.c.b16 %v1357, %v1356
      %v1376 = vpack.c.b16 %v1359, %v1358
      %v1377 = vpack.c.b16 %v1361, %v1360
      %1394 = vmatprep.subr.bf16.mxu0 0
      %1395 = vmatpush1.bf16.msra.mxu0 %v1362
      %1396 = vmatprep.subr.bf16.mxu0 0
      %1397 = vmatpush1.bf16.msra.mxu0 %v1363
      %1398 = vmatprep.subr.bf16.mxu0 0
      %1399 = vmatpush1.bf16.msra.mxu0 %v1364
      %1400 = vmatprep.subr.bf16.mxu0 0
      %1401 = vmatpush1.bf16.msra.mxu0 %v1365
      %1402 = vmatprep.subr.bf16.mxu0 0
      %1403 = vmatpush1.bf16.msra.mxu0 %v1366
      %1404 = vmatprep.subr.bf16.mxu0 0
      %1405 = vmatpush1.bf16.msra.mxu0 %v1367
      %1406 = vmatprep.subr.bf16.mxu0 0
      %1407 = vmatpush1.bf16.msra.mxu0 %v1368
      %1408 = vmatprep.subr.bf16.mxu0 0
      %1409 = vmatpush1.bf16.msra.mxu0 %v1369
      %1410 = vmatprep.subr.bf16.mxu0 0
      %1411 = vmatpush1.bf16.msra.mxu0 %v1370
      %1412 = vmatprep.subr.bf16.mxu0 0
      %1413 = vmatpush1.bf16.msra.mxu0 %v1371
      %1414 = vmatprep.subr.bf16.mxu0 0
      %1415 = vmatpush1.bf16.msra.mxu0 %v1372
      %1416 = vmatprep.subr.bf16.mxu0 0
      %1417 = vmatpush1.bf16.msra.mxu0 %v1373
      %1418 = vmatprep.subr.bf16.mxu0 0
      %1419 = vmatpush1.bf16.msra.mxu0 %v1374
      %1420 = vmatprep.subr.bf16.mxu0 0
      %1421 = vmatpush1.bf16.msra.mxu0 %v1375
      %1422 = vmatprep.subr.bf16.mxu0 0
      %1423 = vmatpush1.bf16.msra.mxu0 %v1376
      %1424 = vmatprep.subr.bf16.mxu0 0
      %1425 = vmatpush1.bf16.msra.mxu0 %v1377
      %1426 = vmatprep.mubr.bf16.mxu0 %v724
      %1427 = vmatmul.mubr.bf16.gmra.mrb[0].mxu0 %v736
      %v1428 = vpop.f32.mrb[0].mxu0
      %v1429 = vadd.f32 %v450, %v1428
      %v1430 = vpop.f32.mrb[0].mxu0
      %v1431 = vpop.f32.mrb[0].mxu0
      %v1432 = vadd.f32 %v450, %v1431
      %v1433 = vpop.f32.mrb[0].mxu0
      %1434 = vmatprep.mubr.bf16.mxu0 %v728
      %1435 = vmatmul.mubr.bf16.gmra.mrb[0].mxu0 %v740
      %v1436 = vpop.f32.mrb[0].mxu0
      %v1437 = vadd.f32 %v450, %v1436
      %v1438 = vpop.f32.mrb[0].mxu0
      %v1439 = vpop.f32.mrb[0].mxu0
      %v1440 = vadd.f32 %v450, %v1439
      %v1441 = vpop.f32.mrb[0].mxu0
      %1442 = vmatprep.mubr.bf16.mxu0 %v732
      %1443 = vmatmul.mubr.bf16.gmra.mrb[0].mxu0 %v744
      %v1444 = vpop.f32.mrb[0].mxu0
      %v1445 = vadd.f32 %v450, %v1444
      %v1446 = vpop.f32.mrb[0].mxu0
      %v1447 = vpop.f32.mrb[0].mxu0
      %v1448 = vadd.f32 %v450, %v1447
      %v1449 = vpop.f32.mrb[0].mxu0
      %1450 = vmatprep.mubr.bf16.mxu0 %v1263
      %1451 = vmatmul.mubr.bf16.gmra.mrb[0].mxu0 %v748
      %v1452 = vpop.f32.mrb[0].mxu0
      %v1453 = vadd.f32 %v450, %v1452
      %v1454 = vpop.f32.mrb[0].mxu0
      %v1455 = vpop.f32.mrb[0].mxu0
      %v1456 = vadd.f32 %v450, %v1455
      %v1457 = vpop.f32.mrb[0].mxu0
      %1458 = vdwg.mxu0
      %vm1459 = vcmp.ge.f32.partialorder %v1429, 0.0
      %vm1460 = vcmp.ge.f32.partialorder %v1432, 0.0
      %vm1461 = vcmp.ge.f32.partialorder %v1437, 0.0
      %vm1462 = vcmp.ge.f32.partialorder %v1440, 0.0
      %vm1463 = vcmp.ge.f32.partialorder %v1445, 0.0
      %vm1464 = vcmp.ge.f32.partialorder %v1448, 0.0
      %vm1465 = vcmp.ge.f32.partialorder %v1453, 0.0
      %vm1466 = vcmp.ge.f32.partialorder %v1456, 0.0
      %v1467 = vmul.f32 %v1429, 0.01
      %v1468 = vmul.f32 %v1432, 0.01
      %v1469 = vmul.f32 %v1437, 0.01
      %v1470 = vmul.f32 %v1440, 0.01
      %v1471 = vmul.f32 %v1445, 0.01
      %v1472 = vmul.f32 %v1448, 0.01
      %v1473 = vmul.f32 %v1453, 0.01
      %v1474 = vmul.f32 %v1456, 0.01
      %v1475 = vsel %vm1459, %v1429, %v1467
      %v1476 = vsel %vm1460, %v1432, %v1468
      %v1477 = vsel %vm1461, %v1437, %v1469
      %v1478 = vsel %vm1462, %v1440, %v1470
      %v1479 = vsel %vm1463, %v1445, %v1471
      %v1480 = vsel %vm1464, %v1448, %v1472
      %v1481 = vsel %vm1465, %v1453, %v1473
      %v1482 = vsel %vm1466, %v1456, %v1474
      %1491 = vrot.lane.b32.xlu0 %v1475, 32
      %v1492 = vpop.permute.xlu0 %1491
      %1493 = vrot.lane.b32.xlu0 %v1476, 32
      %v1494 = vpop.permute.xlu0 %1493
      %1495 = vrot.lane.b32.xlu0 %v1477, 32
      %v1496 = vpop.permute.xlu0 %1495
      %1497 = vrot.lane.b32.xlu0 %v1478, 32
      %v1498 = vpop.permute.xlu0 %1497
      %1499 = vrot.lane.b32.xlu0 %v1479, 32
      %v1500 = vpop.permute.xlu0 %1499
      %1501 = vrot.lane.b32.xlu0 %v1480, 32
      %v1502 = vpop.permute.xlu0 %1501
      %1503 = vrot.lane.b32.xlu0 %v1481, 32
      %v1504 = vpop.permute.xlu0 %1503
      %1505 = vrot.lane.b32.xlu0 %v1482, 32
      %v1506 = vpop.permute.xlu0 %1505
      %v1515 = vsel %vm1000, %v1244, %v1492
      %v1516 = vsel %vm1000, %v1245, %v1494
      %v1517 = vsel %vm1000, %v1246, %v1496
      %v1518 = vsel %vm1000, %v1247, %v1498
      %v1519 = vsel %vm1000, %v1248, %v1500
      %v1520 = vsel %vm1000, %v1249, %v1502
      %v1521 = vsel %vm1000, %v1250, %v1504
      %v1522 = vsel %vm1000, %v1251, %v1506
      %v1523 = vpack.c.bf16 %v1001, %v1001
      %v1524 = vpack.c.bf16 %v1515, %v1515
      %v1525 = vpack.c.bf16 %v1002, %v1002
      %v1526 = vpack.c.bf16 %v1516, %v1516
      %v1527 = vpack.c.bf16 %v1003, %v1003
      %v1528 = vpack.c.bf16 %v1517, %v1517
      %v1529 = vpack.c.bf16 %v1004, %v1004
      %v1530 = vpack.c.bf16 %v1518, %v1518
      %v1531 = vpack.c.bf16 %v1005, %v1005
      %v1532 = vpack.c.bf16 %v1519, %v1519
      %v1533 = vpack.c.bf16 %v1006, %v1006
      %v1534 = vpack.c.bf16 %v1520, %v1520
      %v1535 = vpack.c.bf16 %v1007, %v1007
      %v1536 = vpack.c.bf16 %v1521, %v1521
      %v1537 = vpack.c.bf16 %v1008, %v1008
      %v1538 = vpack.c.bf16 %v1522, %v1522
      %vm1539 = vcmask 519168
      %1540 = vst.msk [vmem:[%s170] sm:$0xf] %vm1539, %v1523
      %1541 = vst.msk [vmem:[%s170 + $0x4] sm:$0xf] %vm1539, %v1524
      %1542 = vst.msk [vmem:[%s170 + $0x8] sm:$0xf] %vm1539, %v1525
      %1543 = vst.msk [vmem:[%s170 + $0xc] sm:$0xf] %vm1539, %v1526
      %1544 = vst.msk [vmem:[%s170 + $0x10] sm:$0xf] %vm1539, %v1527
      %1545 = vst.msk [vmem:[%s170 + $0x14] sm:$0xf] %vm1539, %v1528
      %1546 = vst.msk [vmem:[%s170 + $0x18] sm:$0xf] %vm1539, %v1529
      %1547 = vst.msk [vmem:[%s170 + $0x1c] sm:$0xf] %vm1539, %v1530
      %1548 = vst.msk [vmem:[%s170 + $0x20] sm:$0xf] %vm1539, %v1531
      %1549 = vst.msk [vmem:[%s170 + $0x24] sm:$0xf] %vm1539, %v1532
      %1550 = vst.msk [vmem:[%s170 + $0x28] sm:$0xf] %vm1539, %v1533
      %1551 = vst.msk [vmem:[%s170 + $0x2c] sm:$0xf] %vm1539, %v1534
      %1552 = vst.msk [vmem:[%s170 + $0x30] sm:$0xf] %vm1539, %v1535
      %1553 = vst.msk [vmem:[%s170 + $0x34] sm:$0xf] %vm1539, %v1536
      %1554 = vst.msk [vmem:[%s170 + $0x38] sm:$0xf] %vm1539, %v1537
      %1555 = vst.msk [vmem:[%s170 + $0x3c] sm:$0xf] %vm1539, %v1538
      %p1556 = scmp.lt.s32.totalorder %s14, 1
      %s1557 = scalar_select %p1556, %s14, 1
      %s1558 = smul.addr %s1557, 16
      %s1559 = smul.addr %s1558, 4
      %s1560 = scalar_lea.vmem %s3, %s1559
      // Predicated region
      $region33: #{vqvae_forward.26} parent=31 // pred_check
        %p1561 = pneg %p100
      $region34: #{vqvae_forward.26} parent=31 // pred_check_branch
        %1563 = sbr.rel (%p1561) target = $region36
      $region35: #{vqvae_forward.26} parent=31 // pred_region
        _
      $region36: #{vqvae_forward.26} parent=31 // pred_fallthru
        _
    $region32: #{vqvae_forward.26} parent=5 // pred_fallthru
      _
    %p1564 = scmp.le.s32.totalorder 2, %s9
    // Predicated region
    $region37: #{vqvae_forward.26} parent=5 // pred_check
      %p1565 = pneg %p1564
    $region38: #{vqvae_forward.26} parent=5 // pred_check_branch
      %1567 = sbr.rel (%p1565) target = $region40
    $region39: #{vqvae_forward.26} parent=5 // pred_region
      %s1568 = ssub.s32 %s9, 2
      // Predicated region
      $region41: #{vqvae_forward.26} parent=39 // pred_check
        %p1569 = pneg %p106
      $region42: #{vqvae_forward.26} parent=39 // pred_check_branch
        %1571 = sbr.rel (%p1569) target = $region44
      $region43: #{vqvae_forward.26} parent=39 // pred_region
        %p1572 = scmp.lt.s32.totalorder %s15, 1
        %s1573 = scalar_select %p1572, %s15, 1
        %s1574 = smul.addr %s1573, 16
        %s1575 = smul.addr %s1574, 4
        %s1576 = scalar_lea.vmem %s3, %s1575
      $region44: #{vqvae_forward.26} parent=39 // pred_fallthru
        _
    $region40: #{vqvae_forward.26} parent=5 // pred_fallthru
      _
  $region6: #{vqvae_forward.26} parent=0 // loop_footer
    %s13 = sadd.s32 1, %s9
  $region7: #{vqvae_forward.26} parent=0 // loop_footer_branch
    %8 = sbr.rel target = $region3
  $region8: #{vqvae_forward.26} parent=0 // loop_exit
    _

// kernel: vqvae_forward.27
$region0: #{vqvae_forward.27}
  #allocation0 [shape = 'u32[]', space=smem, size = 0x4, offset = 0x4, fixed_abs, tag = 'smem constant byte address 0x4 - core index']
  #allocation1 [shape = 'u32[144,128]{1,0:T(1,128)}', space=vmem, size = 0x12000, scoped, tag = 'internal scratch']
  %s0 = inlined_call_operand.vmem [shape: bf16[2,18,18,32], index: 0, kind: input, shape index: {}]
  %s1 = inlined_call_operand.vmem [shape: bf16[4,128,3], index: 1, kind: input, shape index: {}]
  %s2 = inlined_call_operand.vmem [shape: f32[1,3], index: 2, kind: input, shape index: {}]
  %s3 = inlined_call_operand.vmem [shape: f32[2,16,2,16,6], index: 3, kind: output, shape index: {}]
  %s4 = sld [smem:[#allocation0]]
  $region45: #{vqvae_forward.27} parent=0
    _
  %s6 = ssub.s32 1, %s4
  %s7 = scalar_select 0, %s6, %s4
  loop: start=0, step=1, limit=4
  $region2: #{vqvae_forward.27} parent=0 // loop_pre_header
    _
  $region3: #{vqvae_forward.27} parent=0 // loop_header
    %s9 = sphi 0, %s13
    %p10 = scmp.ge.s32.totalorder %s9, 4
    %s19 = sphi 0, %s21
    %s22 = sphi 0, %s19
    %s23 = sphi 0, %s22
    %s39 = sphi 0, %s23
    %s43 = sphi 0, %s43
    %s45 = sphi 0, %s43
    %s46 = sphi 0, %s45
    %s60 = sphi 0, %s46
    %s64 = sphi 0, %s64
    %s66 = sphi 0, %s64
    %s67 = sphi 0, %s66
    %s81 = sphi 0, %s67
    %s87 = sphi 0, %s89
    %s90 = sphi 0, %s87
    %s91 = sphi 0, %s90
    %s107 = sphi 0, %s91
  $region4: #{vqvae_forward.27} parent=0 // loop_header_branch
    %12 = sbr.rel (%p10) target = $region8
  $region5: #{vqvae_forward.27} parent=0 // loop_body
    %s14 = ssub.s32 %s9, 1
    %s15 = ssub.s32 %s9, 2
    %s16 = sadd.s32 %s9, 1
    %s17 = ssub.s32 %s9, %s16
    %p18 = scmp.eq.s32.totalorder %s17, 0
    %s20 = sadd.s32 %s19, 1
    %s21 = scalar_select %p18, %s19, %s20
    %p24 = pneg %p18
    %p25 = scmp.eq.s32.totalorder %s9, 1
    %p26 = por %p24, %p25
    %p27 = scmp.ne.s32.totalorder %s19, %s22
    %p28 = scmp.eq.s32.totalorder %s9, 0
    %p29 = por %p27, %p28
    %p30 = scmp.ne.s32.totalorder %s19, %s22
    %p31 = scmp.eq.s32.totalorder %s14, 1
    %p32 = por %p30, %p31
    %p33 = scmp.ne.s32.totalorder %s22, %s23
    %p34 = scmp.eq.s32.totalorder %s14, 0
    %p35 = por %p33, %p34
    %p36 = scmp.ne.s32.totalorder %s22, %s23
    %p37 = scmp.eq.s32.totalorder %s15, 1
    %p38 = por %p36, %p37
    %p40 = scmp.ne.s32.totalorder %s23, %s39
    %p41 = scmp.eq.s32.totalorder %s15, 0
    %p42 = por %p40, %p41
    %s44 = sadd.s32 %s43, 1
    %p47 = scmp.eq.s32.totalorder %s9, 1
    %p48 = scmp.ne.s32.totalorder %s43, %s45
    %p49 = scmp.eq.s32.totalorder %s9, 0
    %p50 = por %p48, %p49
    %p51 = scmp.ne.s32.totalorder %s43, %s45
    %p52 = scmp.eq.s32.totalorder %s14, 1
    %p53 = por %p51, %p52
    %p54 = scmp.ne.s32.totalorder %s45, %s46
    %p55 = scmp.eq.s32.totalorder %s14, 0
    %p56 = por %p54, %p55
    %p57 = scmp.ne.s32.totalorder %s45, %s46
    %p58 = scmp.eq.s32.totalorder %s15, 1
    %p59 = por %p57, %p58
    %p61 = scmp.ne.s32.totalorder %s46, %s60
    %p62 = scmp.eq.s32.totalorder %s15, 0
    %p63 = por %p61, %p62
    %s65 = sadd.s32 %s64, 1
    %p68 = scmp.eq.s32.totalorder %s9, 1
    %p69 = scmp.ne.s32.totalorder %s64, %s66
    %p70 = scmp.eq.s32.totalorder %s9, 0
    %p71 = por %p69, %p70
    %p72 = scmp.ne.s32.totalorder %s64, %s66
    %p73 = scmp.eq.s32.totalorder %s14, 1
    %p74 = por %p72, %p73
    %p75 = scmp.ne.s32.totalorder %s66, %s67
    %p76 = scmp.eq.s32.totalorder %s14, 0
    %p77 = por %p75, %p76
    %p78 = scmp.ne.s32.totalorder %s66, %s67
    %p79 = scmp.eq.s32.totalorder %s15, 1
    %p80 = por %p78, %p79
    %p82 = scmp.ne.s32.totalorder %s67, %s81
    %p83 = scmp.eq.s32.totalorder %s15, 0
    %p84 = por %p82, %p83
    %s85 = ssub.s32 %s9, %s16
    %p86 = scmp.eq.s32.totalorder %s85, 0
    %s88 = sadd.s32 %s87, 1
    %s89 = scalar_select %p86, %s87, %s88
    %p92 = pneg %p86
    %p93 = scmp.eq.s32.totalorder %s9, 1
    %p94 = por %p92, %p93
    %p95 = scmp.ne.s32.totalorder %s87, %s90
    %p96 = scmp.eq.s32.totalorder %s9, 0
    %p97 = por %p95, %p96
    %p98 = scmp.ne.s32.totalorder %s87, %s90
    %p99 = scmp.eq.s32.totalorder %s14, 1
    %p100 = por %p98, %p99
    %p101 = scmp.ne.s32.totalorder %s90, %s91
    %p102 = scmp.eq.s32.totalorder %s14, 0
    %p103 = por %p101, %p102
    %p104 = scmp.ne.s32.totalorder %s90, %s91
    %p105 = scmp.eq.s32.totalorder %s15, 1
    %p106 = por %p104, %p105
    %p108 = scmp.ne.s32.totalorder %s91, %s107
    %p109 = scmp.eq.s32.totalorder %s15, 0
    %p110 = por %p108, %p109
    %p111 = scmp.le.s32.totalorder 1, %s9
    %p112 = scmp.lt.s32.totalorder %s9, 3
    %p113 = pnand %p111, %p112
    %p114 = pneg %p113
    // Predicated region
    $region9: #{vqvae_forward.27} parent=5 // pred_check
      _
    $region10: #{vqvae_forward.27} parent=5 // pred_check_branch
      %116 = sbr.rel (%p113) target = $region12
    $region11: #{vqvae_forward.27} parent=5 // pred_region
      %s117 = ssub.s32 %s9, 1
      // Predicated region
      $region13: #{vqvae_forward.27} parent=11 // pred_check
        %p118 = pneg %p56
      $region14: #{vqvae_forward.27} parent=11 // pred_check_branch
        %120 = sbr.rel (%p118) target = $region16
      $region15: #{vqvae_forward.27} parent=11 // pred_region
        _
      $region16: #{vqvae_forward.27} parent=11 // pred_fallthru
        _
      // Predicated region
      $region17: #{vqvae_forward.27} parent=11 // pred_check
        %p121 = pneg %p77
      $region18: #{vqvae_forward.27} parent=11 // pred_check_branch
        %123 = sbr.rel (%p121) target = $region20
      $region19: #{vqvae_forward.27} parent=11 // pred_region
        _
      $region20: #{vqvae_forward.27} parent=11 // pred_fallthru
        _
    $region12: #{vqvae_forward.27} parent=5 // pred_fallthru
      _
    %p124 = scmp.lt.s32.totalorder %s9, 2
    // Predicated region
    $region21: #{vqvae_forward.27} parent=5 // pred_check
      %p125 = pneg %p124
    $region22: #{vqvae_forward.27} parent=5 // pred_check_branch
      %127 = sbr.rel (%p125) target = $region24
    $region23: #{vqvae_forward.27} parent=5 // pred_region
      // Predicated region
      $region25: #{vqvae_forward.27} parent=23 // pred_check
        %p128 = pneg %p29
      $region26: #{vqvae_forward.27} parent=23 // pred_check_branch
        %130 = sbr.rel (%p128) target = $region28
      $region27: #{vqvae_forward.27} parent=23 // pred_region
        %p131 = scmp.lt.s32.totalorder %s9, 1
        %s132 = scalar_select %p131, %s9, 1
        %s133 = smul.addr %s132, 54
        %s134 = smul.addr %s133, 4
        %s135 = scalar_lea.vmem %s0, %s134
      $region28: #{vqvae_forward.27} parent=23 // pred_fallthru
        _
    $region24: #{vqvae_forward.27} parent=5 // pred_fallthru
      _
    %p136 = scmp.le.s32.totalorder 1, %s9
    %p137 = scmp.lt.s32.totalorder %s9, 3
    %p138 = pnand %p136, %p137
    %p139 = pneg %p138
    // Predicated region
    $region29: #{vqvae_forward.27} parent=5 // pred_check
      _
    $region30: #{vqvae_forward.27} parent=5 // pred_check_branch
      %141 = sbr.rel (%p138) target = $region32
    $region31: #{vqvae_forward.27} parent=5 // pred_region
      %s142 = ssub.s32 %s9, 1
      %p143 = scmp.lt.s32.totalorder %s14, 1
      %s144 = scalar_select %p143, %s14, 1
      %s145 = smul.addr %s144, 54
      %s146 = smul.addr %s145, 4
      %s147 = scalar_lea.vmem %s0, %s146
      %p148 = pneg %p35
      %p149 = pneg %p32
      %p150 = pneg %p56
      %p151 = pneg %p53
      %p152 = pneg %p77
      %p153 = pneg %p74
      %p154 = pneg %p103
      %p155 = pneg %p100
      %p156 = scmp.lt.s32.totalorder %s14, 1
      %s157 = scalar_select %p156, %s14, 1
      %s158 = smul.addr %s157, 64
      %s159 = smul.addr %s158, 8
      %s160 = scalar_lea.vmem %s3, %s159
      %p161 = scmp.lt.s32.totalorder %s14, 1
      %s162 = scalar_select %p161, %s14, 1
      %s163 = smul.addr %s162, 54
      %s164 = smul.addr %s163, 4
      %s165 = scalar_lea.vmem %s0, %s164
      %p166 = scmp.lt.s32.totalorder %s14, 1
      %s167 = scalar_select %p166, %s14, 1
      %s168 = smul.addr %s167, 64
      %s169 = smul.addr %s168, 8
      %s170 = scalar_lea.vmem %s3, %s169
      %v172 = vld [vmem:[%s165] sm:$0xf]
      %v173 = vld [vmem:[%s165 + $0x4] sm:$0xf]
      %v174 = vld [vmem:[%s165 + $0x8] sm:$0x1]
      %v175 = vld [vmem:[%s165 + $0xc] sm:$0xf]
      %v176 = vld [vmem:[%s165 + $0x10] sm:$0xf]
      %v177 = vld [vmem:[%s165 + $0x14] sm:$0x1]
      %v178 = vld [vmem:[%s165 + $0x18] sm:$0xf]
      %v179 = vld [vmem:[%s165 + $0x1c] sm:$0xf]
      %v180 = vld [vmem:[%s165 + $0x20] sm:$0x1]
      %v181 = vld [vmem:[%s165 + $0x24] sm:$0xf]
      %v182 = vld [vmem:[%s165 + $0x28] sm:$0xf]
      %v183 = vld [vmem:[%s165 + $0x2c] sm:$0x1]
      %v184 = vld [vmem:[%s165 + $0x30] sm:$0xf]
      %v185 = vld [vmem:[%s165 + $0x34] sm:$0xf]
      %v186 = vld [vmem:[%s165 + $0x38] sm:$0x1]
      %v187 = vld [vmem:[%s165 + $0x3c] sm:$0xf]
      %v188 = vld [vmem:[%s165 + $0x40] sm:$0xf]
      %v189 = vld [vmem:[%s165 + $0x44] sm:$0x1]
      %v190 = vld [vmem:[%s165 + $0x48] sm:$0xf]
      %v191 = vld [vmem:[%s165 + $0x4c] sm:$0xf]
      %v192 = vld [vmem:[%s165 + $0x50] sm:$0x1]
      %v193 = vld [vmem:[%s165 + $0x54] sm:$0xf]
      %v194 = vld [vmem:[%s165 + $0x58] sm:$0xf]
      %v195 = vld [vmem:[%s165 + $0x5c] sm:$0x1]
      %v196 = vld [vmem:[%s165 + $0x60] sm:$0xf]
      %v197 = vld [vmem:[%s165 + $0x64] sm:$0xf]
      %v198 = vld [vmem:[%s165 + $0x68] sm:$0x1]
      %v199 = vld [vmem:[%s165 + $0x6c] sm:$0xf]
      %v200 = vld [vmem:[%s165 + $0x70] sm:$0xf]
      %v201 = vld [vmem:[%s165 + $0x74] sm:$0x1]
      %v202 = vld [vmem:[%s165 + $0x78] sm:$0xf]
      %v203 = vld [vmem:[%s165 + $0x7c] sm:$0xf]
      %v204 = vld [vmem:[%s165 + $0x80] sm:$0x1]
      %v205 = vld [vmem:[%s165 + $0x84] sm:$0xf]
      %v206 = vld [vmem:[%s165 + $0x88] sm:$0xf]
      %v207 = vld [vmem:[%s165 + $0x8c] sm:$0x1]
      %v208 = vld [vmem:[%s165 + $0x90] sm:$0xf]
      %v209 = vld [vmem:[%s165 + $0x94] sm:$0xf]
      %v210 = vld [vmem:[%s165 + $0x98] sm:$0x1]
      %v211 = vld [vmem:[%s165 + $0x9c] sm:$0xf]
      %v212 = vld [vmem:[%s165 + $0xa0] sm:$0xf]
      %v213 = vld [vmem:[%s165 + $0xa4] sm:$0x1]
      %v214 = vld [vmem:[%s165 + $0xa8] sm:$0xf]
      %v215 = vld [vmem:[%s165 + $0xac] sm:$0xf]
      %v216 = vld [vmem:[%s165 + $0xb0] sm:$0x1]
      %v217 = vld [vmem:[%s165 + $0xb4] sm:$0xf]
      %v218 = vld [vmem:[%s165 + $0xb8] sm:$0xf]
      %v219 = vld [vmem:[%s165 + $0xbc] sm:$0x1]
      %v220 = vld [vmem:[%s165 + $0xc0] sm:$0xf]
      %v221 = vld [vmem:[%s165 + $0xc4] sm:$0xf]
      %v222 = vld [vmem:[%s165 + $0xc8] sm:$0x1]
      %v223 = vld [vmem:[%s165 + $0xcc] sm:$0xf]
      %v224 = vld [vmem:[%s165 + $0xd0] sm:$0xf]
      %v225 = vld [vmem:[%s165 + $0xd4] sm:$0x1]
      %vm226 = vsmask.f32 3328
      %vm227 = vsmask.f32 7440
      %vm228 = vmor %vm226, %vm227
      %v230 = vshrl.u32 %v172, 16
      %v232 = vrot.slane %v230, 4
      %v233 = vshll.u32 %v172, 16
      %v235 = vrot.slane %v233, 5
      %v236 = vor.u32 %v232, %v235
      %v237 = vrot.slane %v236, 4
      %v239 = vshll.u32 %v173, 16
      %v241 = vrot.slane %v239, 5
      %v242 = vsel %vm228, %v237, %v241
      %v243 = vshrl.u32 %v173, 16
      %v245 = vrot.slane %v243, 4
      %v246 = vor.u32 %v245, %v241
      %v247 = vrot.slane %v246, 4
      %v249 = vshll.u32 %v174, 16
      %v251 = vrot.slane %v249, 5
      %v252 = vsel %vm228, %v247, %v251
      %v254 = vshrl.u32 %v175, 16
      %v256 = vrot.slane %v254, 4
      %v257 = vshll.u32 %v175, 16
      %v259 = vrot.slane %v257, 5
      %v260 = vor.u32 %v256, %v259
      %v261 = vrot.slane %v260, 4
      %v263 = vshll.u32 %v176, 16
      %v265 = vrot.slane %v263, 5
      %v266 = vsel %vm228, %v261, %v265
      %v267 = vshrl.u32 %v176, 16
      %v269 = vrot.slane %v267, 4
      %v270 = vor.u32 %v269, %v265
      %v271 = vrot.slane %v270, 4
      %v273 = vshll.u32 %v177, 16
      %v275 = vrot.slane %v273, 5
      %v276 = vsel %vm228, %v271, %v275
      %v278 = vshrl.u32 %v178, 16
      %v280 = vrot.slane %v278, 4
      %v281 = vshll.u32 %v178, 16
      %v283 = vrot.slane %v281, 5
      %v284 = vor.u32 %v280, %v283
      %v285 = vrot.slane %v284, 4
      %v287 = vshll.u32 %v179, 16
      %v289 = vrot.slane %v287, 5
      %v290 = vsel %vm228, %v285, %v289
      %v291 = vshrl.u32 %v179, 16
      %v293 = vrot.slane %v291, 4
      %v294 = vor.u32 %v293, %v289
      %v295 = vrot.slane %v294, 4
      %v297 = vshll.u32 %v180, 16
      %v299 = vrot.slane %v297, 5
      %v300 = vsel %vm228, %v295, %v299
      %v302 = vshrl.u32 %v181, 16
      %v304 = vrot.slane %v302, 4
      %v305 = vshll.u32 %v181, 16
      %v307 = vrot.slane %v305, 5
      %v308 = vor.u32 %v304, %v307
      %v309 = vrot.slane %v308, 4
      %v311 = vshll.u32 %v182, 16
      %v313 = vrot.slane %v311, 5
      %v314 = vsel %vm228, %v309, %v313
      %v315 = vshrl.u32 %v182, 16
      %v317 = vrot.slane %v315, 4
      %v318 = vor.u32 %v317, %v313
      %v319 = vrot.slane %v318, 4
      %v321 = vshll.u32 %v183, 16
      %v323 = vrot.slane %v321, 5
      %v324 = vsel %vm228, %v319, %v323
      %v326 = vshrl.u32 %v184, 16
      %v328 = vrot.slane %v326, 4
      %v329 = vshll.u32 %v184, 16
      %v331 = vrot.slane %v329, 5
      %v332 = vor.u32 %v328, %v331
      %v333 = vrot.slane %v332, 4
      %v335 = vshll.u32 %v185, 16
      %v337 = vrot.slane %v335, 5
      %v338 = vsel %vm228, %v333, %v337
      %v339 = vshrl.u32 %v185, 16
      %v341 = vrot.slane %v339, 4
      %v342 = vor.u32 %v341, %v337
      %v343 = vrot.slane %v342, 4
      %v345 = vshll.u32 %v186, 16
      %v347 = vrot.slane %v345, 5
      %v348 = vsel %vm228, %v343, %v347
      %v350 = vshrl.u32 %v187, 16
      %v352 = vrot.slane %v350, 4
      %v353 = vshll.u32 %v187, 16
      %v355 = vrot.slane %v353, 5
      %v356 = vor.u32 %v352, %v355
      %v357 = vrot.slane %v356, 4
      %v359 = vshll.u32 %v188, 16
      %v361 = vrot.slane %v359, 5
      %v362 = vsel %vm228, %v357, %v361
      %v363 = vshrl.u32 %v188, 16
      %v365 = vrot.slane %v363, 4
      %v366 = vor.u32 %v365, %v361
      %v367 = vrot.slane %v366, 4
      %v369 = vshll.u32 %v189, 16
      %v371 = vrot.slane %v369, 5
      %v372 = vsel %vm228, %v367, %v371
      %v374 = vshrl.u32 %v190, 16
      %v376 = vrot.slane %v374, 4
      %v377 = vshll.u32 %v190, 16
      %v379 = vrot.slane %v377, 5
      %v380 = vor.u32 %v376, %v379
      %v381 = vrot.slane %v380, 4
      %v383 = vshll.u32 %v191, 16
      %v385 = vrot.slane %v383, 5
      %v386 = vsel %vm228, %v381, %v385
      %v387 = vshrl.u32 %v191, 16
      %v389 = vrot.slane %v387, 4
      %v390 = vor.u32 %v389, %v385
      %v391 = vrot.slane %v390, 4
      %v393 = vshll.u32 %v192, 16
      %v395 = vrot.slane %v393, 5
      %v396 = vsel %vm228, %v391, %v395
      %v398 = vshrl.u32 %v193, 16
      %v400 = vrot.slane %v398, 4
      %v401 = vshll.u32 %v193, 16
      %v403 = vrot.slane %v401, 5
      %v404 = vor.u32 %v400, %v403
      %v405 = vrot.slane %v404, 4
      %v407 = vshll.u32 %v194, 16
      %v409 = vrot.slane %v407, 5
      %v410 = vsel %vm228, %v405, %v409
      %v411 = vshrl.u32 %v194, 16
      %v413 = vrot.slane %v411, 4
      %v414 = vor.u32 %v413, %v409
      %v415 = vrot.slane %v414, 4
      %v417 = vshll.u32 %v195, 16
      %v419 = vrot.slane %v417, 5
      %v420 = vsel %vm228, %v415, %v419
      %v422 = vshrl.u32 %v196, 16
      %v424 = vrot.slane %v422, 4
      %v425 = vshll.u32 %v196, 16
      %v427 = vrot.slane %v425, 5
      %v428 = vor.u32 %v424, %v427
      %v429 = vrot.slane %v428, 4
      %v431 = vshll.u32 %v197, 16
      %v433 = vrot.slane %v431, 5
      %v434 = vsel %vm228, %v429, %v433
      %v435 = vshrl.u32 %v197, 16
      %v437 = vrot.slane %v435, 4
      %v438 = vor.u32 %v437, %v433
      %v439 = vrot.slane %v438, 4
      %v441 = vshll.u32 %v198, 16
      %v443 = vrot.slane %v441, 5
      %v444 = vsel %vm228, %v439, %v443
      %v446 = vshrl.u32 %v199, 16
      %v448 = vrot.slane %v446, 4
      %v449 = vshll.u32 %v199, 16
      %v451 = vrot.slane %v449, 5
      %v452 = vor.u32 %v448, %v451
      %v453 = vrot.slane %v452, 4
      %v455 = vshll.u32 %v200, 16
      %v457 = vrot.slane %v455, 5
      %v458 = vsel %vm228, %v453, %v457
      %v459 = vshrl.u32 %v200, 16
      %v461 = vrot.slane %v459, 4
      %v462 = vor.u32 %v461, %v457
      %v463 = vrot.slane %v462, 4
      %v465 = vshll.u32 %v201, 16
      %v467 = vrot.slane %v465, 5
      %v468 = vsel %vm228, %v463, %v467
      %v470 = vshrl.u32 %v202, 16
      %v472 = vrot.slane %v470, 4
      %v473 = vshll.u32 %v202, 16
      %v475 = vrot.slane %v473, 5
      %v476 = vor.u32 %v472, %v475
      %v477 = vrot.slane %v476, 4
      %v479 = vshll.u32 %v203, 16
      %v481 = vrot.slane %v479, 5
      %v482 = vsel %vm228, %v477, %v481
      %v483 = vshrl.u32 %v203, 16
      %v485 = vrot.slane %v483, 4
      %v486 = vor.u32 %v485, %v481
      %v487 = vrot.slane %v486, 4
      %v489 = vshll.u32 %v204, 16
      %v491 = vrot.slane %v489, 5
      %v492 = vsel %vm228, %v487, %v491
      %v494 = vshrl.u32 %v205, 16
      %v496 = vrot.slane %v494, 4
      %v497 = vshll.u32 %v205, 16
      %v499 = vrot.slane %v497, 5
      %v500 = vor.u32 %v496, %v499
      %v501 = vrot.slane %v500, 4
      %v503 = vshll.u32 %v206, 16
      %v505 = vrot.slane %v503, 5
      %v506 = vsel %vm228, %v501, %v505
      %v507 = vshrl.u32 %v206, 16
      %v509 = vrot.slane %v507, 4
      %v510 = vor.u32 %v509, %v505
      %v511 = vrot.slane %v510, 4
      %v513 = vshll.u32 %v207, 16
      %v515 = vrot.slane %v513, 5
      %v516 = vsel %vm228, %v511, %v515
      %v518 = vshrl.u32 %v208, 16
      %v520 = vrot.slane %v518, 4
      %v521 = vshll.u32 %v208, 16
      %v523 = vrot.slane %v521, 5
      %v524 = vor.u32 %v520, %v523
      %v525 = vrot.slane %v524, 4
      %v527 = vshll.u32 %v209, 16
      %v529 = vrot.slane %v527, 5
      %v530 = vsel %vm228, %v525, %v529
      %v531 = vshrl.u32 %v209, 16
      %v533 = vrot.slane %v531, 4
      %v534 = vor.u32 %v533, %v529
      %v535 = vrot.slane %v534, 4
      %v537 = vshll.u32 %v210, 16
      %v539 = vrot.slane %v537, 5
      %v540 = vsel %vm228, %v535, %v539
      %v542 = vshrl.u32 %v211, 16
      %v544 = vrot.slane %v542, 4
      %v545 = vshll.u32 %v211, 16
      %v547 = vrot.slane %v545, 5
      %v548 = vor.u32 %v544, %v547
      %v549 = vrot.slane %v548, 4
      %v551 = vshll.u32 %v212, 16
      %v553 = vrot.slane %v551, 5
      %v554 = vsel %vm228, %v549, %v553
      %v555 = vshrl.u32 %v212, 16
      %v557 = vrot.slane %v555, 4
      %v558 = vor.u32 %v557, %v553
      %v559 = vrot.slane %v558, 4
      %v561 = vshll.u32 %v213, 16
      %v563 = vrot.slane %v561, 5
      %v564 = vsel %vm228, %v559, %v563
      %v566 = vshrl.u32 %v214, 16
      %v568 = vrot.slane %v566, 4
      %v569 = vshll.u32 %v214, 16
      %v571 = vrot.slane %v569, 5
      %v572 = vor.u32 %v568, %v571
      %v573 = vrot.slane %v572, 4
      %v575 = vshll.u32 %v215, 16
      %v577 = vrot.slane %v575, 5
      %v578 = vsel %vm228, %v573, %v577
      %v579 = vshrl.u32 %v215, 16
      %v581 = vrot.slane %v579, 4
      %v582 = vor.u32 %v581, %v577
      %v583 = vrot.slane %v582, 4
      %v585 = vshll.u32 %v216, 16
      %v587 = vrot.slane %v585, 5
      %v588 = vsel %vm228, %v583, %v587
      %v590 = vshrl.u32 %v217, 16
      %v592 = vrot.slane %v590, 4
      %v593 = vshll.u32 %v217, 16
      %v595 = vrot.slane %v593, 5
      %v596 = vor.u32 %v592, %v595
      %v597 = vrot.slane %v596, 4
      %v599 = vshll.u32 %v218, 16
      %v601 = vrot.slane %v599, 5
      %v602 = vsel %vm228, %v597, %v601
      %v603 = vshrl.u32 %v218, 16
      %v605 = vrot.slane %v603, 4
      %v606 = vor.u32 %v605, %v601
      %v607 = vrot.slane %v606, 4
      %v609 = vshll.u32 %v219, 16
      %v611 = vrot.slane %v609, 5
      %v612 = vsel %vm228, %v607, %v611
      %v614 = vshrl.u32 %v220, 16
      %v616 = vrot.slane %v614, 4
      %v617 = vshll.u32 %v220, 16
      %v619 = vrot.slane %v617, 5
      %v620 = vor.u32 %v616, %v619
      %v621 = vrot.slane %v620, 4
      %v623 = vshll.u32 %v221, 16
      %v625 = vrot.slane %v623, 5
      %v626 = vsel %vm228, %v621, %v625
      %v627 = vshrl.u32 %v221, 16
      %v629 = vrot.slane %v627, 4
      %v630 = vor.u32 %v629, %v625
      %v631 = vrot.slane %v630, 4
      %v633 = vshll.u32 %v222, 16
      %v635 = vrot.slane %v633, 5
      %v636 = vsel %vm228, %v631, %v635
      %v669 = vunpack.c.l.b16 %v172
      %v670 = vunpack.c.l.b16 %v173
      %v671 = vunpack.c.l.b16 %v175
      %v672 = vunpack.c.l.b16 %v176
      %v673 = vunpack.c.l.b16 %v178
      %v674 = vunpack.c.l.b16 %v179
      %v675 = vunpack.c.l.b16 %v181
      %v676 = vunpack.c.l.b16 %v182
      %v677 = vunpack.c.l.b16 %v184
      %v678 = vunpack.c.l.b16 %v185
      %v679 = vunpack.c.l.b16 %v187
      %v680 = vunpack.c.l.b16 %v188
      %v681 = vunpack.c.l.b16 %v190
      %v682 = vunpack.c.l.b16 %v191
      %v683 = vunpack.c.l.b16 %v193
      %v684 = vunpack.c.l.b16 %v194
      %v685 = vunpack.c.l.b16 %v196
      %v686 = vunpack.c.l.b16 %v197
      %v687 = vunpack.c.l.b16 %v199
      %v688 = vunpack.c.l.b16 %v200
      %v689 = vunpack.c.l.b16 %v202
      %v690 = vunpack.c.l.b16 %v203
      %v691 = vunpack.c.l.b16 %v205
      %v692 = vunpack.c.l.b16 %v206
      %v693 = vunpack.c.l.b16 %v208
      %v694 = vunpack.c.l.b16 %v209
      %v695 = vunpack.c.l.b16 %v211
      %v696 = vunpack.c.l.b16 %v212
      %v697 = vunpack.c.l.b16 %v214
      %v698 = vunpack.c.l.b16 %v215
      %v699 = vunpack.c.l.b16 %v217
      %v700 = vunpack.c.l.b16 %v218
      %v701 = vpack.c.b16 %v670, %v669
      %v702 = vpack.c.b16 %v672, %v671
      %v703 = vpack.c.b16 %v674, %v673
      %v704 = vpack.c.b16 %v676, %v675
      %v705 = vpack.c.b16 %v678, %v677
      %v706 = vpack.c.b16 %v680, %v679
      %v707 = vpack.c.b16 %v682, %v681
      %v708 = vpack.c.b16 %v684, %v683
      %v709 = vpack.c.b16 %v686, %v685
      %v710 = vpack.c.b16 %v688, %v687
      %v711 = vpack.c.b16 %v690, %v689
      %v712 = vpack.c.b16 %v692, %v691
      %v713 = vpack.c.b16 %v694, %v693
      %v714 = vpack.c.b16 %v696, %v695
      %v715 = vpack.c.b16 %v698, %v697
      %v716 = vpack.c.b16 %v700, %v699
      %v717 = vunpack.c.l.b16 %v242
      %v718 = vunpack.c.l.b16 %v252
      %v719 = vunpack.c.l.b16 %v266
      %v720 = vunpack.c.l.b16 %v276
      %v721 = vunpack.c.l.b16 %v290
      %v722 = vunpack.c.l.b16 %v300
      %v723 = vunpack.c.l.b16 %v314
      %v724 = vunpack.c.l.b16 %v324
      %v725 = vunpack.c.l.b16 %v338
      %v726 = vunpack.c.l.b16 %v348
      %v727 = vunpack.c.l.b16 %v362
      %v728 = vunpack.c.l.b16 %v372
      %v729 = vunpack.c.l.b16 %v386
      %v730 = vunpack.c.l.b16 %v396
      %v731 = vunpack.c.l.b16 %v410
      %v732 = vunpack.c.l.b16 %v420
      %v733 = vunpack.c.l.b16 %v434
      %v734 = vunpack.c.l.b16 %v444
      %v735 = vunpack.c.l.b16 %v458
      %v736 = vunpack.c.l.b16 %v468
      %v737 = vunpack.c.l.b16 %v482
      %v738 = vunpack.c.l.b16 %v492
      %v739 = vunpack.c.l.b16 %v506
      %v740 = vunpack.c.l.b16 %v516
      %v741 = vunpack.c.l.b16 %v530
      %v742 = vunpack.c.l.b16 %v540
      %v743 = vunpack.c.l.b16 %v554
      %v744 = vunpack.c.l.b16 %v564
      %v745 = vunpack.c.l.b16 %v578
      %v746 = vunpack.c.l.b16 %v588
      %v747 = vunpack.c.l.b16 %v602
      %v748 = vunpack.c.l.b16 %v612
      %v749 = vpack.c.b16 %v718, %v717
      %v750 = vpack.c.b16 %v720, %v719
      %v751 = vpack.c.b16 %v722, %v721
      %v752 = vpack.c.b16 %v724, %v723
      %v753 = vpack.c.b16 %v726, %v725
      %v754 = vpack.c.b16 %v728, %v727
      %v755 = vpack.c.b16 %v730, %v729
      %v756 = vpack.c.b16 %v732, %v731
      %v757 = vpack.c.b16 %v734, %v733
      %v758 = vpack.c.b16 %v736, %v735
      %v759 = vpack.c.b16 %v738, %v737
      %v760 = vpack.c.b16 %v740, %v739
      %v761 = vpack.c.b16 %v742, %v741
      %v762 = vpack.c.b16 %v744, %v743
      %v763 = vpack.c.b16 %v746, %v745
      %v764 = vpack.c.b16 %v748, %v747
      %765 = vrot.lane.b32.xlu0 %v749, 32
      %v766 = vpop.permute.xlu0 %765
      %767 = vrot.lane.b32.xlu0 %v750, 32
      %v768 = vpop.permute.xlu0 %767
      %769 = vrot.lane.b32.xlu0 %v751, 32
      %v770 = vpop.permute.xlu0 %769
      %771 = vrot.lane.b32.xlu0 %v752, 32
      %v772 = vpop.permute.xlu0 %771
      %773 = vrot.lane.b32.xlu0 %v753, 32
      %v774 = vpop.permute.xlu0 %773
      %775 = vrot.lane.b32.xlu0 %v754, 32
      %v776 = vpop.permute.xlu0 %775
      %777 = vrot.lane.b32.xlu0 %v755, 32
      %v778 = vpop.permute.xlu0 %777
      %779 = vrot.lane.b32.xlu0 %v756, 32
      %v780 = vpop.permute.xlu0 %779
      %781 = vrot.lane.b32.xlu0 %v757, 32
      %v782 = vpop.permute.xlu0 %781
      %783 = vrot.lane.b32.xlu0 %v758, 32
      %v784 = vpop.permute.xlu0 %783
      %785 = vrot.lane.b32.xlu0 %v759, 32
      %v786 = vpop.permute.xlu0 %785
      %787 = vrot.lane.b32.xlu0 %v760, 32
      %v788 = vpop.permute.xlu0 %787
      %789 = vrot.lane.b32.xlu0 %v761, 32
      %v790 = vpop.permute.xlu0 %789
      %791 = vrot.lane.b32.xlu0 %v762, 32
      %v792 = vpop.permute.xlu0 %791
      %793 = vrot.lane.b32.xlu0 %v763, 32
      %v794 = vpop.permute.xlu0 %793
      %795 = vrot.lane.b32.xlu0 %v764, 32
      %v796 = vpop.permute.xlu0 %795
      %v799 = vunpack.c.l.b16 %v220
      %v800 = vunpack.c.l.b16 %v221
      %v801 = vpack.c.b16 %v800, %v799
      %802 = vrot.lane.b32.xlu0 %v702, 64
      %v803 = vpop.permute.xlu0 %802
      %804 = vrot.lane.b32.xlu0 %v703, 64
      %v805 = vpop.permute.xlu0 %804
      %806 = vrot.lane.b32.xlu0 %v704, 64
      %v807 = vpop.permute.xlu0 %806
      %808 = vrot.lane.b32.xlu0 %v705, 64
      %v809 = vpop.permute.xlu0 %808
      %810 = vrot.lane.b32.xlu0 %v706, 64
      %v811 = vpop.permute.xlu0 %810
      %812 = vrot.lane.b32.xlu0 %v707, 64
      %v813 = vpop.permute.xlu0 %812
      %814 = vrot.lane.b32.xlu0 %v708, 64
      %v815 = vpop.permute.xlu0 %814
      %816 = vrot.lane.b32.xlu0 %v709, 64
      %v817 = vpop.permute.xlu0 %816
      %818 = vrot.lane.b32.xlu0 %v710, 64
      %v819 = vpop.permute.xlu0 %818
      %820 = vrot.lane.b32.xlu0 %v711, 64
      %v821 = vpop.permute.xlu0 %820
      %822 = vrot.lane.b32.xlu0 %v712, 64
      %v823 = vpop.permute.xlu0 %822
      %824 = vrot.lane.b32.xlu0 %v713, 64
      %v825 = vpop.permute.xlu0 %824
      %826 = vrot.lane.b32.xlu0 %v714, 64
      %v827 = vpop.permute.xlu0 %826
      %828 = vrot.lane.b32.xlu0 %v715, 64
      %v829 = vpop.permute.xlu0 %828
      %830 = vrot.lane.b32.xlu0 %v716, 64
      %v831 = vpop.permute.xlu0 %830
      %832 = vrot.lane.b32.xlu0 %v801, 64
      %v833 = vpop.permute.xlu0 %832
      %v834 = vunpack.c.l.b16 %v626
      %v835 = vunpack.c.l.b16 %v636
      %v836 = vpack.c.b16 %v835, %v834
      %837 = vrot.lane.b32.xlu0 %v750, 96
      %v838 = vpop.permute.xlu0 %837
      %839 = vrot.lane.b32.xlu0 %v751, 96
      %v840 = vpop.permute.xlu0 %839
      %841 = vrot.lane.b32.xlu0 %v752, 96
      %v842 = vpop.permute.xlu0 %841
      %843 = vrot.lane.b32.xlu0 %v753, 96
      %v844 = vpop.permute.xlu0 %843
      %845 = vrot.lane.b32.xlu0 %v754, 96
      %v846 = vpop.permute.xlu0 %845
      %847 = vrot.lane.b32.xlu0 %v755, 96
      %v848 = vpop.permute.xlu0 %847
      %849 = vrot.lane.b32.xlu0 %v756, 96
      %v850 = vpop.permute.xlu0 %849
      %851 = vrot.lane.b32.xlu0 %v757, 96
      %v852 = vpop.permute.xlu0 %851
      %853 = vrot.lane.b32.xlu0 %v758, 96
      %v854 = vpop.permute.xlu0 %853
      %855 = vrot.lane.b32.xlu0 %v759, 96
      %v856 = vpop.permute.xlu0 %855
      %857 = vrot.lane.b32.xlu0 %v760, 96
      %v858 = vpop.permute.xlu0 %857
      %859 = vrot.lane.b32.xlu0 %v761, 96
      %v860 = vpop.permute.xlu0 %859
      %861 = vrot.lane.b32.xlu0 %v762, 96
      %v862 = vpop.permute.xlu0 %861
      %863 = vrot.lane.b32.xlu0 %v763, 96
      %v864 = vpop.permute.xlu0 %863
      %865 = vrot.lane.b32.xlu0 %v764, 96
      %v866 = vpop.permute.xlu0 %865
      %867 = vrot.lane.b32.xlu0 %v836, 96
      %v868 = vpop.permute.xlu0 %867
      %vm869 = vcmask 261120
      %v872 = vsel %vm869, %v701, %v766
      %v875 = vsel %vm869, %v702, %v768
      %v878 = vsel %vm869, %v703, %v770
      %v881 = vsel %vm869, %v704, %v772
      %v884 = vsel %vm869, %v705, %v774
      %v887 = vsel %vm869, %v706, %v776
      %v890 = vsel %vm869, %v707, %v778
      %v893 = vsel %vm869, %v708, %v780
      %v896 = vsel %vm869, %v709, %v782
      %v899 = vsel %vm869, %v710, %v784
      %v902 = vsel %vm869, %v711, %v786
      %v905 = vsel %vm869, %v712, %v788
      %v908 = vsel %vm869, %v713, %v790
      %v911 = vsel %vm869, %v714, %v792
      %v914 = vsel %vm869, %v715, %v794
      %v917 = vsel %vm869, %v716, %v796
      %vm918 = vcmask 523264
      %v920 = vsel %vm918, %v872, %v803
      %v922 = vsel %vm918, %v875, %v805
      %v924 = vsel %vm918, %v878, %v807
      %v926 = vsel %vm918, %v881, %v809
      %v928 = vsel %vm918, %v884, %v811
      %v930 = vsel %vm918, %v887, %v813
      %v932 = vsel %vm918, %v890, %v815
      %v934 = vsel %vm918, %v893, %v817
      %v936 = vsel %vm918, %v896, %v819
      %v938 = vsel %vm918, %v899, %v821
      %v940 = vsel %vm918, %v902, %v823
      %v942 = vsel %vm918, %v905, %v825
      %v944 = vsel %vm918, %v908, %v827
      %v946 = vsel %vm918, %v911, %v829
      %v948 = vsel %vm918, %v914, %v831
      %v950 = vsel %vm918, %v917, %v833
      %vm951 = vcmask 785408
      %v953 = vsel %vm951, %v920, %v838
      %v956 = vsel %vm951, %v922, %v840
      %v959 = vsel %vm951, %v924, %v842
      %v962 = vsel %vm951, %v926, %v844
      %v965 = vsel %vm951, %v928, %v846
      %v968 = vsel %vm951, %v930, %v848
      %v971 = vsel %vm951, %v932, %v850
      %v974 = vsel %vm951, %v934, %v852
      %v977 = vsel %vm951, %v936, %v854
      %v980 = vsel %vm951, %v938, %v856
      %v983 = vsel %vm951, %v940, %v858
      %v986 = vsel %vm951, %v942, %v860
      %v989 = vsel %vm951, %v944, %v862
      %v992 = vsel %vm951, %v946, %v864
      %v995 = vsel %vm951, %v948, %v866
      %v998 = vsel %vm951, %v950, %v868
      %v1000 = vld [vmem:[%s1] sm:$0xf]
      %v1001 = vld [vmem:[%s1 + $0x4] sm:$0xf]
      %v1002 = vld [vmem:[%s1 + $0x8] sm:$0xf]
      %v1003 = vld [vmem:[%s1 + $0xc] sm:$0xf]
      %v1004 = vld [vmem:[%s1 + $0x10] sm:$0xf]
      %v1005 = vld [vmem:[%s1 + $0x14] sm:$0xf]
      %v1006 = vld [vmem:[%s1 + $0x18] sm:$0xf]
      %v1007 = vld [vmem:[%s1 + $0x1c] sm:$0xf]
      %v1008 = vld [vmem:[%s1 + $0x20] sm:$0xf]
      %v1009 = vld [vmem:[%s1 + $0x24] sm:$0xf]
      %v1010 = vld [vmem:[%s1 + $0x28] sm:$0xf]
      %v1011 = vld [vmem:[%s1 + $0x2c] sm:$0xf]
      %v1012 = vld [vmem:[%s1 + $0x30] sm:$0xf]
      %v1013 = vld [vmem:[%s1 + $0x34] sm:$0xf]
      %v1014 = vld [vmem:[%s1 + $0x38] sm:$0xf]
      %v1015 = vld [vmem:[%s1 + $0x3c] sm:$0xf]
      %v1016 = vld [vmem:[%s2] sm:$0x1]
      %v1018 = vlaneseq
      %v1019 = vshrl.u32 %v1018, 7
      %v1020 = vsub.s32 0, %v1019
      %v1021 = vrot.slane %v1016, %v1020
      %v1039 = vunpack.c.l.b16 %v1000
      %v1040 = vunpack.c.l.b16 %v1001
      %v1041 = vunpack.c.l.b16 %v1002
      %v1042 = vunpack.c.l.b16 %v1003
      %v1043 = vunpack.c.l.b16 %v1004
      %v1044 = vunpack.c.l.b16 %v1005
      %v1045 = vunpack.c.l.b16 %v1006
      %v1046 = vunpack.c.l.b16 %v1007
      %v1047 = vunpack.c.l.b16 %v1008
      %v1048 = vunpack.c.l.b16 %v1009
      %v1049 = vunpack.c.l.b16 %v1010
      %v1050 = vunpack.c.l.b16 %v1011
      %v1051 = vunpack.c.l.b16 %v1012
      %v1052 = vunpack.c.l.b16 %v1013
      %v1053 = vunpack.c.l.b16 %v1014
      %v1054 = vunpack.c.l.b16 %v1015
      %v1055 = vpack.c.b16 %v1040, %v1039
      %v1056 = vpack.c.b16 %v1042, %v1041
      %v1057 = vpack.c.b16 %v1044, %v1043
      %v1058 = vpack.c.b16 %v1046, %v1045
      %v1059 = vpack.c.b16 %v1048, %v1047
      %v1060 = vpack.c.b16 %v1050, %v1049
      %v1061 = vpack.c.b16 %v1052, %v1051
      %v1062 = vpack.c.b16 %v1054, %v1053
      %1071 = vmatprep.subr.bf16.mxu0 0
      %1072 = vmatpush1.bf16.msra.mxu0 %v1055
      %1073 = vmatprep.subr.bf16.mxu0 0
      %1074 = vmatpush1.bf16.msra.mxu0 %v1056
      %1075 = vmatprep.subr.bf16.mxu0 0
      %1076 = vmatpush1.bf16.msra.mxu0 %v1057
      %1077 = vmatprep.subr.bf16.mxu0 0
      %1078 = vmatpush1.bf16.msra.mxu0 %v1058
      %1079 = vmatprep.subr.bf16.mxu0 0
      %1080 = vmatpush1.bf16.msra.mxu0 %v1059
      %1081 = vmatprep.subr.bf16.mxu0 0
      %1082 = vmatpush1.bf16.msra.mxu0 %v1060
      %1083 = vmatprep.subr.bf16.mxu0 0
      %1084 = vmatpush1.bf16.msra.mxu0 %v1061
      %1085 = vmatprep.subr.bf16.mxu0 0
      %1086 = vmatpush1.bf16.msra.mxu0 %v1062
      %1087 = vmatprep.subr.bf16.mxu0 0
      %1088 = vmatpush1.bf16.msra.mxu0 0
      %1089 = vmatprep.subr.bf16.mxu0 0
      %1090 = vmatpush1.bf16.msra.mxu0 0
      %1091 = vmatprep.subr.bf16.mxu0 0
      %1092 = vmatpush1.bf16.msra.mxu0 0
      %1093 = vmatprep.subr.bf16.mxu0 0
      %1094 = vmatpush1.bf16.msra.mxu0 0
      %1095 = vmatprep.subr.bf16.mxu0 0
      %1096 = vmatpush1.bf16.msra.mxu0 0
      %1097 = vmatprep.subr.bf16.mxu0 0
      %1098 = vmatpush1.bf16.msra.mxu0 0
      %1099 = vmatprep.subr.bf16.mxu0 0
      %1100 = vmatpush1.bf16.msra.mxu0 0
      %1101 = vmatprep.subr.bf16.mxu0 0
      %1102 = vmatpush1.bf16.msra.mxu0 0
      %1103 = vmatprep.mubr.bf16.mxu0 0
      %1104 = vmatmul.mubr.bf16.gmra.mrb[0].mxu0 %v953
      %v1105 = vpop.f32.mrb[0].mxu0
      %v1106 = vadd.f32 %v1021, %v1105
      %v1107 = vpop.f32.mrb[0].mxu0
      %v1108 = vpop.f32.mrb[0].mxu0
      %v1109 = vadd.f32 %v1021, %v1108
      %v1110 = vpop.f32.mrb[0].mxu0
      %1111 = vmatprep.mubr.bf16.mxu0 0
      %1112 = vmatmul.mubr.bf16.gmra.mrb[0].mxu0 %v956
      %v1113 = vpop.f32.mrb[0].mxu0
      %v1114 = vadd.f32 %v1021, %v1113
      %v1115 = vpop.f32.mrb[0].mxu0
      %v1116 = vpop.f32.mrb[0].mxu0
      %v1117 = vadd.f32 %v1021, %v1116
      %v1118 = vpop.f32.mrb[0].mxu0
      %1119 = vmatprep.mubr.bf16.mxu0 0
      %1120 = vmatmul.mubr.bf16.gmra.mrb[0].mxu0 %v959
      %v1121 = vpop.f32.mrb[0].mxu0
      %v1122 = vadd.f32 %v1021, %v1121
      %v1123 = vpop.f32.mrb[0].mxu0
      %v1124 = vpop.f32.mrb[0].mxu0
      %v1125 = vadd.f32 %v1021, %v1124
      %v1126 = vpop.f32.mrb[0].mxu0
      %1127 = vmatprep.mubr.bf16.mxu0 0
      %1128 = vmatmul.mubr.bf16.gmra.mrb[0].mxu0 %v962
      %v1129 = vpop.f32.mrb[0].mxu0
      %v1130 = vadd.f32 %v1021, %v1129
      %v1131 = vpop.f32.mrb[0].mxu0
      %v1132 = vpop.f32.mrb[0].mxu0
      %v1133 = vadd.f32 %v1021, %v1132
      %v1134 = vpop.f32.mrb[0].mxu0
      %1135 = vmatprep.mubr.bf16.mxu0 0
      %1136 = vmatmul.mubr.bf16.gmra.mrb[0].mxu0 %v965
      %v1137 = vpop.f32.mrb[0].mxu0
      %v1138 = vadd.f32 %v1021, %v1137
      %v1139 = vpop.f32.mrb[0].mxu0
      %v1140 = vpop.f32.mrb[0].mxu0
      %v1141 = vadd.f32 %v1021, %v1140
      %v1142 = vpop.f32.mrb[0].mxu0
      %1143 = vmatprep.mubr.bf16.mxu0 0
      %1144 = vmatmul.mubr.bf16.gmra.mrb[0].mxu0 %v968
      %v1145 = vpop.f32.mrb[0].mxu0
      %v1146 = vadd.f32 %v1021, %v1145
      %v1147 = vpop.f32.mrb[0].mxu0
      %v1148 = vpop.f32.mrb[0].mxu0
      %v1149 = vadd.f32 %v1021, %v1148
      %v1150 = vpop.f32.mrb[0].mxu0
      %1151 = vmatprep.mubr.bf16.mxu0 0
      %1152 = vmatmul.mubr.bf16.gmra.mrb[0].mxu0 %v971
      %v1153 = vpop.f32.mrb[0].mxu0
      %v1154 = vadd.f32 %v1021, %v1153
      %v1155 = vpop.f32.mrb[0].mxu0
      %v1156 = vpop.f32.mrb[0].mxu0
      %v1157 = vadd.f32 %v1021, %v1156
      %v1158 = vpop.f32.mrb[0].mxu0
      %1159 = vmatprep.mubr.bf16.mxu0 0
      %1160 = vmatmul.mubr.bf16.gmra.mrb[0].mxu0 %v974
      %v1161 = vpop.f32.mrb[0].mxu0
      %v1162 = vadd.f32 %v1021, %v1161
      %v1163 = vpop.f32.mrb[0].mxu0
      %v1164 = vpop.f32.mrb[0].mxu0
      %v1165 = vadd.f32 %v1021, %v1164
      %v1166 = vpop.f32.mrb[0].mxu0
      %1167 = vmatprep.mubr.bf16.mxu0 0
      %1168 = vmatmul.mubr.bf16.gmra.mrb[0].mxu0 %v977
      %v1169 = vpop.f32.mrb[0].mxu0
      %v1170 = vadd.f32 %v1021, %v1169
      %v1171 = vpop.f32.mrb[0].mxu0
      %v1172 = vpop.f32.mrb[0].mxu0
      %v1173 = vadd.f32 %v1021, %v1172
      %v1174 = vpop.f32.mrb[0].mxu0
      %1175 = vmatprep.mubr.bf16.mxu0 0
      %1176 = vmatmul.mubr.bf16.gmra.mrb[0].mxu0 %v980
      %v1177 = vpop.f32.mrb[0].mxu0
      %v1178 = vadd.f32 %v1021, %v1177
      %v1179 = vpop.f32.mrb[0].mxu0
      %v1180 = vpop.f32.mrb[0].mxu0
      %v1181 = vadd.f32 %v1021, %v1180
      %v1182 = vpop.f32.mrb[0].mxu0
      %1183 = vmatprep.mubr.bf16.mxu0 0
      %1184 = vmatmul.mubr.bf16.gmra.mrb[0].mxu0 %v983
      %v1185 = vpop.f32.mrb[0].mxu0
      %v1186 = vadd.f32 %v1021, %v1185
      %v1187 = vpop.f32.mrb[0].mxu0
      %v1188 = vpop.f32.mrb[0].mxu0
      %v1189 = vadd.f32 %v1021, %v1188
      %v1190 = vpop.f32.mrb[0].mxu0
      %1191 = vmatprep.mubr.bf16.mxu0 0
      %1192 = vmatmul.mubr.bf16.gmra.mrb[0].mxu0 %v986
      %v1193 = vpop.f32.mrb[0].mxu0
      %v1194 = vadd.f32 %v1021, %v1193
      %v1195 = vpop.f32.mrb[0].mxu0
      %v1196 = vpop.f32.mrb[0].mxu0
      %v1197 = vadd.f32 %v1021, %v1196
      %v1198 = vpop.f32.mrb[0].mxu0
      %1199 = vmatprep.mubr.bf16.mxu0 0
      %1200 = vmatmul.mubr.bf16.gmra.mrb[0].mxu0 %v989
      %v1201 = vpop.f32.mrb[0].mxu0
      %v1202 = vadd.f32 %v1021, %v1201
      %v1203 = vpop.f32.mrb[0].mxu0
      %v1204 = vpop.f32.mrb[0].mxu0
      %v1205 = vadd.f32 %v1021, %v1204
      %v1206 = vpop.f32.mrb[0].mxu0
      %1207 = vmatprep.mubr.bf16.mxu0 0
      %1208 = vmatmul.mubr.bf16.gmra.mrb[0].mxu0 %v992
      %v1209 = vpop.f32.mrb[0].mxu0
      %v1210 = vadd.f32 %v1021, %v1209
      %v1211 = vpop.f32.mrb[0].mxu0
      %v1212 = vpop.f32.mrb[0].mxu0
      %v1213 = vadd.f32 %v1021, %v1212
      %v1214 = vpop.f32.mrb[0].mxu0
      %1215 = vmatprep.mubr.bf16.mxu0 0
      %1216 = vmatmul.mubr.bf16.gmra.mrb[0].mxu0 %v995
      %v1217 = vpop.f32.mrb[0].mxu0
      %v1218 = vadd.f32 %v1021, %v1217
      %v1219 = vpop.f32.mrb[0].mxu0
      %v1220 = vpop.f32.mrb[0].mxu0
      %v1221 = vadd.f32 %v1021, %v1220
      %v1222 = vpop.f32.mrb[0].mxu0
      %1223 = vmatprep.mubr.bf16.mxu0 0
      %1224 = vmatmul.mubr.bf16.gmra.mrb[0].mxu0 %v998
      %v1225 = vpop.f32.mrb[0].mxu0
      %v1226 = vadd.f32 %v1021, %v1225
      %v1227 = vpop.f32.mrb[0].mxu0
      %v1228 = vpop.f32.mrb[0].mxu0
      %v1229 = vadd.f32 %v1021, %v1228
      %v1230 = vpop.f32.mrb[0].mxu0
      %1231 = vdwg.mxu0
      %v1232 = vtanh.pop %v1106
      %v1233 = vtanh.pop %v1109
      %v1234 = vtanh.pop %v1114
      %v1235 = vtanh.pop %v1117
      %v1236 = vtanh.pop %v1122
      %v1237 = vtanh.pop %v1125
      %v1238 = vtanh.pop %v1130
      %v1239 = vtanh.pop %v1133
      %v1240 = vtanh.pop %v1138
      %v1241 = vtanh.pop %v1141
      %v1242 = vtanh.pop %v1146
      %v1243 = vtanh.pop %v1149
      %v1244 = vtanh.pop %v1154
      %v1245 = vtanh.pop %v1157
      %v1246 = vtanh.pop %v1162
      %v1247 = vtanh.pop %v1165
      %v1248 = vtanh.pop %v1170
      %v1249 = vtanh.pop %v1173
      %v1250 = vtanh.pop %v1178
      %v1251 = vtanh.pop %v1181
      %v1252 = vtanh.pop %v1186
      %v1253 = vtanh.pop %v1189
      %v1254 = vtanh.pop %v1194
      %v1255 = vtanh.pop %v1197
      %v1256 = vtanh.pop %v1202
      %v1257 = vtanh.pop %v1205
      %v1258 = vtanh.pop %v1210
      %v1259 = vtanh.pop %v1213
      %v1260 = vtanh.pop %v1218
      %v1261 = vtanh.pop %v1221
      %v1262 = vtanh.pop %v1226
      %v1263 = vtanh.pop %v1229
      %vm1280 = vcmask 1042432
      %vm1281 = vcmask 1046532
      %vm1282 = vmor %vm1280, %vm1281
      %v1283 = vrot.slane %v172, 5
      %v1284 = vrot.slane %v1283, 4
      %v1285 = vrot.slane %v173, 5
      %v1286 = vsel %vm1282, %v1284, %v1285
      %v1287 = vrot.slane %v1285, 4
      %v1288 = vrot.slane %v174, 5
      %v1289 = vsel %vm1282, %v1287, %v1288
      %v1290 = vrot.slane %v175, 5
      %v1291 = vrot.slane %v1290, 4
      %v1292 = vrot.slane %v176, 5
      %v1293 = vsel %vm1282, %v1291, %v1292
      %v1294 = vrot.slane %v1292, 4
      %v1295 = vrot.slane %v177, 5
      %v1296 = vsel %vm1282, %v1294, %v1295
      %v1297 = vrot.slane %v178, 5
      %v1298 = vrot.slane %v1297, 4
      %v1299 = vrot.slane %v179, 5
      %v1300 = vsel %vm1282, %v1298, %v1299
      %v1301 = vrot.slane %v1299, 4
      %v1302 = vrot.slane %v180, 5
      %v1303 = vsel %vm1282, %v1301, %v1302
      %v1304 = vrot.slane %v181, 5
      %v1305 = vrot.slane %v1304, 4
      %v1306 = vrot.slane %v182, 5
      %v1307 = vsel %vm1282, %v1305, %v1306
      %v1308 = vrot.slane %v1306, 4
      %v1309 = vrot.slane %v183, 5
      %v1310 = vsel %vm1282, %v1308, %v1309
      %v1311 = vrot.slane %v184, 5
      %v1312 = vrot.slane %v1311, 4
      %v1313 = vrot.slane %v185, 5
      %v1314 = vsel %vm1282, %v1312, %v1313
      %v1315 = vrot.slane %v1313, 4
      %v1316 = vrot.slane %v186, 5
      %v1317 = vsel %vm1282, %v1315, %v1316
      %v1318 = vrot.slane %v187, 5
      %v1319 = vrot.slane %v1318, 4
      %v1320 = vrot.slane %v188, 5
      %v1321 = vsel %vm1282, %v1319, %v1320
      %v1322 = vrot.slane %v1320, 4
      %v1323 = vrot.slane %v189, 5
      %v1324 = vsel %vm1282, %v1322, %v1323
      %v1325 = vrot.slane %v190, 5
      %v1326 = vrot.slane %v1325, 4
      %v1327 = vrot.slane %v191, 5
      %v1328 = vsel %vm1282, %v1326, %v1327
      %v1329 = vrot.slane %v1327, 4
      %v1330 = vrot.slane %v192, 5
      %v1331 = vsel %vm1282, %v1329, %v1330
      %v1332 = vrot.slane %v193, 5
      %v1333 = vrot.slane %v1332, 4
      %v1334 = vrot.slane %v194, 5
      %v1335 = vsel %vm1282, %v1333, %v1334
      %v1336 = vrot.slane %v1334, 4
      %v1337 = vrot.slane %v195, 5
      %v1338 = vsel %vm1282, %v1336, %v1337
      %v1339 = vrot.slane %v196, 5
      %v1340 = vrot.slane %v1339, 4
      %v1341 = vrot.slane %v197, 5
      %v1342 = vsel %vm1282, %v1340, %v1341
      %v1343 = vrot.slane %v1341, 4
      %v1344 = vrot.slane %v198, 5
      %v1345 = vsel %vm1282, %v1343, %v1344
      %v1346 = vrot.slane %v199, 5
      %v1347 = vrot.slane %v1346, 4
      %v1348 = vrot.slane %v200, 5
      %v1349 = vsel %vm1282, %v1347, %v1348
      %v1350 = vrot.slane %v1348, 4
      %v1351 = vrot.slane %v201, 5
      %v1352 = vsel %vm1282, %v1350, %v1351
      %v1353 = vrot.slane %v202, 5
      %v1354 = vrot.slane %v1353, 4
      %v1355 = vrot.slane %v203, 5
      %v1356 = vsel %vm1282, %v1354, %v1355
      %v1357 = vrot.slane %v1355, 4
      %v1358 = vrot.slane %v204, 5
      %v1359 = vsel %vm1282, %v1357, %v1358
      %v1360 = vrot.slane %v205, 5
      %v1361 = vrot.slane %v1360, 4
      %v1362 = vrot.slane %v206, 5
      %v1363 = vsel %vm1282, %v1361, %v1362
      %v1364 = vrot.slane %v1362, 4
      %v1365 = vrot.slane %v207, 5
      %v1366 = vsel %vm1282, %v1364, %v1365
      %v1367 = vrot.slane %v208, 5
      %v1368 = vrot.slane %v1367, 4
      %v1369 = vrot.slane %v209, 5
      %v1370 = vsel %vm1282, %v1368, %v1369
      %v1371 = vrot.slane %v1369, 4
      %v1372 = vrot.slane %v210, 5
      %v1373 = vsel %vm1282, %v1371, %v1372
      %v1374 = vrot.slane %v211, 5
      %v1375 = vrot.slane %v1374, 4
      %v1376 = vrot.slane %v212, 5
      %v1377 = vsel %vm1282, %v1375, %v1376
      %v1378 = vrot.slane %v1376, 4
      %v1379 = vrot.slane %v213, 5
      %v1380 = vsel %vm1282, %v1378, %v1379
      %v1381 = vrot.slane %v214, 5
      %v1382 = vrot.slane %v1381, 4
      %v1383 = vrot.slane %v215, 5
      %v1384 = vsel %vm1282, %v1382, %v1383
      %v1385 = vrot.slane %v1383, 4
      %v1386 = vrot.slane %v216, 5
      %v1387 = vsel %vm1282, %v1385, %v1386
      %v1388 = vrot.slane %v217, 5
      %v1389 = vrot.slane %v1388, 4
      %v1390 = vrot.slane %v218, 5
      %v1391 = vsel %vm1282, %v1389, %v1390
      %v1392 = vrot.slane %v1390, 4
      %v1393 = vrot.slane %v219, 5
      %v1394 = vsel %vm1282, %v1392, %v1393
      %v1396 = vrot.slane %v220, 5
      %v1397 = vrot.slane %v1396, 4
      %v1398 = vrot.slane %v221, 5
      %v1399 = vsel %vm1282, %v1397, %v1398
      %v1400 = vrot.slane %v1398, 4
      %v1401 = vrot.slane %v222, 5
      %v1402 = vsel %vm1282, %v1400, %v1401
      %v1403 = vunpack.c.l.b16 %v1286
      %v1404 = vunpack.c.l.b16 %v1289
      %v1405 = vunpack.c.l.b16 %v1293
      %v1406 = vunpack.c.l.b16 %v1296
      %v1407 = vunpack.c.l.b16 %v1300
      %v1408 = vunpack.c.l.b16 %v1303
      %v1409 = vunpack.c.l.b16 %v1307
      %v1410 = vunpack.c.l.b16 %v1310
      %v1411 = vunpack.c.l.b16 %v1314
      %v1412 = vunpack.c.l.b16 %v1317
      %v1413 = vunpack.c.l.b16 %v1321
      %v1414 = vunpack.c.l.b16 %v1324
      %v1415 = vunpack.c.l.b16 %v1328
      %v1416 = vunpack.c.l.b16 %v1331
      %v1417 = vunpack.c.l.b16 %v1335
      %v1418 = vunpack.c.l.b16 %v1338
      %v1419 = vunpack.c.l.b16 %v1342
      %v1420 = vunpack.c.l.b16 %v1345
      %v1421 = vunpack.c.l.b16 %v1349
      %v1422 = vunpack.c.l.b16 %v1352
      %v1423 = vunpack.c.l.b16 %v1356
      %v1424 = vunpack.c.l.b16 %v1359
      %v1425 = vunpack.c.l.b16 %v1363
      %v1426 = vunpack.c.l.b16 %v1366
      %v1427 = vunpack.c.l.b16 %v1370
      %v1428 = vunpack.c.l.b16 %v1373
      %v1429 = vunpack.c.l.b16 %v1377
      %v1430 = vunpack.c.l.b16 %v1380
      %v1431 = vunpack.c.l.b16 %v1384
      %v1432 = vunpack.c.l.b16 %v1387
      %v1433 = vunpack.c.l.b16 %v1391
      %v1434 = vunpack.c.l.b16 %v1394
      %v1435 = vpack.c.b16 %v1404, %v1403
      %v1436 = vpack.c.b16 %v1406, %v1405
      %v1437 = vpack.c.b16 %v1408, %v1407
      %v1438 = vpack.c.b16 %v1410, %v1409
      %v1439 = vpack.c.b16 %v1412, %v1411
      %v1440 = vpack.c.b16 %v1414, %v1413
      %v1441 = vpack.c.b16 %v1416, %v1415
      %v1442 = vpack.c.b16 %v1418, %v1417
      %v1443 = vpack.c.b16 %v1420, %v1419
      %v1444 = vpack.c.b16 %v1422, %v1421
      %v1445 = vpack.c.b16 %v1424, %v1423
      %v1446 = vpack.c.b16 %v1426, %v1425
      %v1447 = vpack.c.b16 %v1428, %v1427
      %v1448 = vpack.c.b16 %v1430, %v1429
      %v1449 = vpack.c.b16 %v1432, %v1431
      %v1450 = vpack.c.b16 %v1434, %v1433
      %1451 = vrot.lane.b32.xlu0 %v1435, 32
      %v1452 = vpop.permute.xlu0 %1451
      %1453 = vrot.lane.b32.xlu0 %v1436, 32
      %v1454 = vpop.permute.xlu0 %1453
      %1455 = vrot.lane.b32.xlu0 %v1437, 32
      %v1456 = vpop.permute.xlu0 %1455
      %1457 = vrot.lane.b32.xlu0 %v1438, 32
      %v1458 = vpop.permute.xlu0 %1457
      %1459 = vrot.lane.b32.xlu0 %v1439, 32
      %v1460 = vpop.permute.xlu0 %1459
      %1461 = vrot.lane.b32.xlu0 %v1440, 32
      %v1462 = vpop.permute.xlu0 %1461
      %1463 = vrot.lane.b32.xlu0 %v1441, 32
      %v1464 = vpop.permute.xlu0 %1463
      %1465 = vrot.lane.b32.xlu0 %v1442, 32
      %v1466 = vpop.permute.xlu0 %1465
      %1467 = vrot.lane.b32.xlu0 %v1443, 32
      %v1468 = vpop.permute.xlu0 %1467
      %1469 = vrot.lane.b32.xlu0 %v1444, 32
      %v1470 = vpop.permute.xlu0 %1469
      %1471 = vrot.lane.b32.xlu0 %v1445, 32
      %v1472 = vpop.permute.xlu0 %1471
      %1473 = vrot.lane.b32.xlu0 %v1446, 32
      %v1474 = vpop.permute.xlu0 %1473
      %1475 = vrot.lane.b32.xlu0 %v1447, 32
      %v1476 = vpop.permute.xlu0 %1475
      %1477 = vrot.lane.b32.xlu0 %v1448, 32
      %v1478 = vpop.permute.xlu0 %1477
      %1479 = vrot.lane.b32.xlu0 %v1449, 32
      %v1480 = vpop.permute.xlu0 %1479
      %1481 = vrot.lane.b32.xlu0 %v1450, 32
      %v1482 = vpop.permute.xlu0 %1481
      %1483 = vrot.lane.b32.xlu0 %v750, 64
      %v1484 = vpop.permute.xlu0 %1483
      %1485 = vrot.lane.b32.xlu0 %v751, 64
      %v1486 = vpop.permute.xlu0 %1485
      %1487 = vrot.lane.b32.xlu0 %v752, 64
      %v1488 = vpop.permute.xlu0 %1487
      %1489 = vrot.lane.b32.xlu0 %v753, 64
      %v1490 = vpop.permute.xlu0 %1489
      %1491 = vrot.lane.b32.xlu0 %v754, 64
      %v1492 = vpop.permute.xlu0 %1491
      %1493 = vrot.lane.b32.xlu0 %v755, 64
      %v1494 = vpop.permute.xlu0 %1493
      %1495 = vrot.lane.b32.xlu0 %v756, 64
      %v1496 = vpop.permute.xlu0 %1495
      %1497 = vrot.lane.b32.xlu0 %v757, 64
      %v1498 = vpop.permute.xlu0 %1497
      %1499 = vrot.lane.b32.xlu0 %v758, 64
      %v1500 = vpop.permute.xlu0 %1499
      %1501 = vrot.lane.b32.xlu0 %v759, 64
      %v1502 = vpop.permute.xlu0 %1501
      %1503 = vrot.lane.b32.xlu0 %v760, 64
      %v1504 = vpop.permute.xlu0 %1503
      %1505 = vrot.lane.b32.xlu0 %v761, 64
      %v1506 = vpop.permute.xlu0 %1505
      %1507 = vrot.lane.b32.xlu0 %v762, 64
      %v1508 = vpop.permute.xlu0 %1507
      %1509 = vrot.lane.b32.xlu0 %v763, 64
      %v1510 = vpop.permute.xlu0 %1509
      %1511 = vrot.lane.b32.xlu0 %v764, 64
      %v1512 = vpop.permute.xlu0 %1511
      %1513 = vrot.lane.b32.xlu0 %v836, 64
      %v1514 = vpop.permute.xlu0 %1513
      %v1515 = vunpack.c.l.b16 %v1399
      %v1516 = vunpack.c.l.b16 %v1402
      %v1517 = vpack.c.b16 %v1516, %v1515
      %1518 = vrot.lane.b32.xlu0 %v1436, 96
      %v1519 = vpop.permute.xlu0 %1518
      %1520 = vrot.lane.b32.xlu0 %v1437, 96
      %v1521 = vpop.permute.xlu0 %1520
      %1522 = vrot.lane.b32.xlu0 %v1438, 96
      %v1523 = vpop.permute.xlu0 %1522
      %1524 = vrot.lane.b32.xlu0 %v1439, 96
      %v1525 = vpop.permute.xlu0 %1524
      %1526 = vrot.lane.b32.xlu0 %v1440, 96
      %v1527 = vpop.permute.xlu0 %1526
      %1528 = vrot.lane.b32.xlu0 %v1441, 96
      %v1529 = vpop.permute.xlu0 %1528
      %1530 = vrot.lane.b32.xlu0 %v1442, 96
      %v1531 = vpop.permute.xlu0 %1530
      %1532 = vrot.lane.b32.xlu0 %v1443, 96
      %v1533 = vpop.permute.xlu0 %1532
      %1534 = vrot.lane.b32.xlu0 %v1444, 96
      %v1535 = vpop.permute.xlu0 %1534
      %1536 = vrot.lane.b32.xlu0 %v1445, 96
      %v1537 = vpop.permute.xlu0 %1536
      %1538 = vrot.lane.b32.xlu0 %v1446, 96
      %v1539 = vpop.permute.xlu0 %1538
      %1540 = vrot.lane.b32.xlu0 %v1447, 96
      %v1541 = vpop.permute.xlu0 %1540
      %1542 = vrot.lane.b32.xlu0 %v1448, 96
      %v1543 = vpop.permute.xlu0 %1542
      %1544 = vrot.lane.b32.xlu0 %v1449, 96
      %v1545 = vpop.permute.xlu0 %1544
      %1546 = vrot.lane.b32.xlu0 %v1450, 96
      %v1547 = vpop.permute.xlu0 %1546
      %1548 = vrot.lane.b32.xlu0 %v1517, 96
      %v1549 = vpop.permute.xlu0 %1548
      %v1552 = vsel %vm869, %v749, %v1452
      %v1555 = vsel %vm869, %v750, %v1454
      %v1558 = vsel %vm869, %v751, %v1456
      %v1561 = vsel %vm869, %v752, %v1458
      %v1564 = vsel %vm869, %v753, %v1460
      %v1567 = vsel %vm869, %v754, %v1462
      %v1570 = vsel %vm869, %v755, %v1464
      %v1573 = vsel %vm869, %v756, %v1466
      %v1576 = vsel %vm869, %v757, %v1468
      %v1579 = vsel %vm869, %v758, %v1470
      %v1582 = vsel %vm869, %v759, %v1472
      %v1585 = vsel %vm869, %v760, %v1474
      %v1588 = vsel %vm869, %v761, %v1476
      %v1591 = vsel %vm869, %v762, %v1478
      %v1594 = vsel %vm869, %v763, %v1480
      %v1597 = vsel %vm869, %v764, %v1482
      %v1599 = vsel %vm918, %v1552, %v1484
      %v1601 = vsel %vm918, %v1555, %v1486
      %v1603 = vsel %vm918, %v1558, %v1488
      %v1605 = vsel %vm918, %v1561, %v1490
      %v1607 = vsel %vm918, %v1564, %v1492
      %v1609 = vsel %vm918, %v1567, %v1494
      %v1611 = vsel %vm918, %v1570, %v1496
      %v1613 = vsel %vm918, %v1573, %v1498
      %v1615 = vsel %vm918, %v1576, %v1500
      %v1617 = vsel %vm918, %v1579, %v1502
      %v1619 = vsel %vm918, %v1582, %v1504
      %v1621 = vsel %vm918, %v1585, %v1506
      %v1623 = vsel %vm918, %v1588, %v1508
      %v1625 = vsel %vm918, %v1591, %v1510
      %v1627 = vsel %vm918, %v1594, %v1512
      %v1629 = vsel %vm918, %v1597, %v1514
      %v1631 = vsel %vm951, %v1599, %v1519
      %v1634 = vsel %vm951, %v1601, %v1521
      %v1637 = vsel %vm951, %v1603, %v1523
      %v1640 = vsel %vm951, %v1605, %v1525
      %v1643 = vsel %vm951, %v1607, %v1527
      %v1646 = vsel %vm951, %v1609, %v1529
      %v1649 = vsel %vm951, %v1611, %v1531
      %v1652 = vsel %vm951, %v1613, %v1533
      %v1655 = vsel %vm951, %v1615, %v1535
      %v1658 = vsel %vm951, %v1617, %v1537
      %v1661 = vsel %vm951, %v1619, %v1539
      %v1664 = vsel %vm951, %v1621, %v1541
      %v1667 = vsel %vm951, %v1623, %v1543
      %v1670 = vsel %vm951, %v1625, %v1545
      %v1673 = vsel %vm951, %v1627, %v1547
      %v1676 = vsel %vm951, %v1629, %v1549
      %s1678 = scalar_lea.vmem %s1, 64
      %v1679 = vld [vmem:[%s1678] sm:$0xf]
      %v1680 = vld [vmem:[%s1678 + $0x4] sm:$0xf]
      %v1681 = vld [vmem:[%s1678 + $0x8] sm:$0xf]
      %v1682 = vld [vmem:[%s1678 + $0xc] sm:$0xf]
      %v1683 = vld [vmem:[%s1678 + $0x10] sm:$0xf]
      %v1684 = vld [vmem:[%s1678 + $0x14] sm:$0xf]
      %v1685 = vld [vmem:[%s1678 + $0x18] sm:$0xf]
      %v1686 = vld [vmem:[%s1678 + $0x1c] sm:$0xf]
      %v1687 = vld [vmem:[%s1678 + $0x20] sm:$0xf]
      %v1688 = vld [vmem:[%s1678 + $0x24] sm:$0xf]
      %v1689 = vld [vmem:[%s1678 + $0x28] sm:$0xf]
      %v1690 = vld [vmem:[%s1678 + $0x2c] sm:$0xf]
      %v1691 = vld [vmem:[%s1678 + $0x30] sm:$0xf]
      %v1692 = vld [vmem:[%s1678 + $0x34] sm:$0xf]
      %v1693 = vld [vmem:[%s1678 + $0x38] sm:$0xf]
      %v1694 = vld [vmem:[%s1678 + $0x3c] sm:$0xf]
      %v1711 = vunpack.c.l.b16 %v1679
      %v1712 = vunpack.c.l.b16 %v1680
      %v1713 = vunpack.c.l.b16 %v1681
      %v1714 = vunpack.c.l.b16 %v1682
      %v1715 = vunpack.c.l.b16 %v1683
      %v1716 = vunpack.c.l.b16 %v1684
      %v1717 = vunpack.c.l.b16 %v1685
      %v1718 = vunpack.c.l.b16 %v1686
      %v1719 = vunpack.c.l.b16 %v1687
      %v1720 = vunpack.c.l.b16 %v1688
      %v1721 = vunpack.c.l.b16 %v1689
      %v1722 = vunpack.c.l.b16 %v1690
      %v1723 = vunpack.c.l.b16 %v1691
      %v1724 = vunpack.c.l.b16 %v1692
      %v1725 = vunpack.c.l.b16 %v1693
      %v1726 = vunpack.c.l.b16 %v1694
      %v1727 = vpack.c.b16 %v1712, %v1711
      %v1728 = vpack.c.b16 %v1714, %v1713
      %v1729 = vpack.c.b16 %v1716, %v1715
      %v1730 = vpack.c.b16 %v1718, %v1717
      %v1731 = vpack.c.b16 %v1720, %v1719
      %v1732 = vpack.c.b16 %v1722, %v1721
      %v1733 = vpack.c.b16 %v1724, %v1723
      %v1734 = vpack.c.b16 %v1726, %v1725
      %1743 = vmatprep.subr.bf16.mxu0 0
      %1744 = vmatpush1.bf16.msra.mxu0 %v1727
      %1745 = vmatprep.subr.bf16.mxu0 0
      %1746 = vmatpush1.bf16.msra.mxu0 %v1728
      %1747 = vmatprep.subr.bf16.mxu0 0
      %1748 = vmatpush1.bf16.msra.mxu0 %v1729
      %1749 = vmatprep.subr.bf16.mxu0 0
      %1750 = vmatpush1.bf16.msra.mxu0 %v1730
      %1751 = vmatprep.subr.bf16.mxu0 0
      %1752 = vmatpush1.bf16.msra.mxu0 %v1731
      %1753 = vmatprep.subr.bf16.mxu0 0
      %1754 = vmatpush1.bf16.msra.mxu0 %v1732
      %1755 = vmatprep.subr.bf16.mxu0 0
      %1756 = vmatpush1.bf16.msra.mxu0 %v1733
      %1757 = vmatprep.subr.bf16.mxu0 0
      %1758 = vmatpush1.bf16.msra.mxu0 %v1734
      %1759 = vmatprep.subr.bf16.mxu0 0
      %1760 = vmatpush1.bf16.msra.mxu0 0
      %1761 = vmatprep.subr.bf16.mxu0 0
      %1762 = vmatpush1.bf16.msra.mxu0 0
      %1763 = vmatprep.subr.bf16.mxu0 0
      %1764 = vmatpush1.bf16.msra.mxu0 0
      %1765 = vmatprep.subr.bf16.mxu0 0
      %1766 = vmatpush1.bf16.msra.mxu0 0
      %1767 = vmatprep.subr.bf16.mxu0 0
      %1768 = vmatpush1.bf16.msra.mxu0 0
      %1769 = vmatprep.subr.bf16.mxu0 0
      %1770 = vmatpush1.bf16.msra.mxu0 0
      %1771 = vmatprep.subr.bf16.mxu0 0
      %1772 = vmatpush1.bf16.msra.mxu0 0
      %1773 = vmatprep.subr.bf16.mxu0 0
      %1774 = vmatpush1.bf16.msra.mxu0 0
      %1775 = vmatprep.mubr.bf16.mxu0 0
      %1776 = vmatmul.mubr.bf16.gmra.mrb[0].mxu0 %v1631
      %v1777 = vpop.f32.mrb[0].mxu0
      %v1778 = vadd.f32 %v1021, %v1777
      %v1779 = vpop.f32.mrb[0].mxu0
      %v1780 = vpop.f32.mrb[0].mxu0
      %v1781 = vadd.f32 %v1021, %v1780
      %v1782 = vpop.f32.mrb[0].mxu0
      %1783 = vmatprep.mubr.bf16.mxu0 0
      %1784 = vmatmul.mubr.bf16.gmra.mrb[0].mxu0 %v1634
      %v1785 = vpop.f32.mrb[0].mxu0
      %v1786 = vadd.f32 %v1021, %v1785
      %v1787 = vpop.f32.mrb[0].mxu0
      %v1788 = vpop.f32.mrb[0].mxu0
      %v1789 = vadd.f32 %v1021, %v1788
      %v1790 = vpop.f32.mrb[0].mxu0
      %1791 = vmatprep.mubr.bf16.mxu0 0
      %1792 = vmatmul.mubr.bf16.gmra.mrb[0].mxu0 %v1637
      %v1793 = vpop.f32.mrb[0].mxu0
      %v1794 = vadd.f32 %v1021, %v1793
      %v1795 = vpop.f32.mrb[0].mxu0
      %v1796 = vpop.f32.mrb[0].mxu0
      %v1797 = vadd.f32 %v1021, %v1796
      %v1798 = vpop.f32.mrb[0].mxu0
      %1799 = vmatprep.mubr.bf16.mxu0 0
      %1800 = vmatmul.mubr.bf16.gmra.mrb[0].mxu0 %v1640
      %v1801 = vpop.f32.mrb[0].mxu0
      %v1802 = vadd.f32 %v1021, %v1801
      %v1803 = vpop.f32.mrb[0].mxu0
      %v1804 = vpop.f32.mrb[0].mxu0
      %v1805 = vadd.f32 %v1021, %v1804
      %v1806 = vpop.f32.mrb[0].mxu0
      %1807 = vmatprep.mubr.bf16.mxu0 0
      %1808 = vmatmul.mubr.bf16.gmra.mrb[0].mxu0 %v1643
      %v1809 = vpop.f32.mrb[0].mxu0
      %v1810 = vadd.f32 %v1021, %v1809
      %v1811 = vpop.f32.mrb[0].mxu0
      %v1812 = vpop.f32.mrb[0].mxu0
      %v1813 = vadd.f32 %v1021, %v1812
      %v1814 = vpop.f32.mrb[0].mxu0
      %1815 = vmatprep.mubr.bf16.mxu0 0
      %1816 = vmatmul.mubr.bf16.gmra.mrb[0].mxu0 %v1646
      %v1817 = vpop.f32.mrb[0].mxu0
      %v1818 = vadd.f32 %v1021, %v1817
      %v1819 = vpop.f32.mrb[0].mxu0
      %v1820 = vpop.f32.mrb[0].mxu0
      %v1821 = vadd.f32 %v1021, %v1820
      %v1822 = vpop.f32.mrb[0].mxu0
      %1823 = vmatprep.mubr.bf16.mxu0 0
      %1824 = vmatmul.mubr.bf16.gmra.mrb[0].mxu0 %v1649
      %v1825 = vpop.f32.mrb[0].mxu0
      %v1826 = vadd.f32 %v1021, %v1825
      %v1827 = vpop.f32.mrb[0].mxu0
      %v1828 = vpop.f32.mrb[0].mxu0
      %v1829 = vadd.f32 %v1021, %v1828
      %v1830 = vpop.f32.mrb[0].mxu0
      %1831 = vmatprep.mubr.bf16.mxu0 0
      %1832 = vmatmul.mubr.bf16.gmra.mrb[0].mxu0 %v1652
      %v1833 = vpop.f32.mrb[0].mxu0
      %v1834 = vadd.f32 %v1021, %v1833
      %v1835 = vpop.f32.mrb[0].mxu0
      %v1836 = vpop.f32.mrb[0].mxu0
      %v1837 = vadd.f32 %v1021, %v1836
      %v1838 = vpop.f32.mrb[0].mxu0
      %1839 = vmatprep.mubr.bf16.mxu0 0
      %1840 = vmatmul.mubr.bf16.gmra.mrb[0].mxu0 %v1655
      %v1841 = vpop.f32.mrb[0].mxu0
      %v1842 = vadd.f32 %v1021, %v1841
      %v1843 = vpop.f32.mrb[0].mxu0
      %v1844 = vpop.f32.mrb[0].mxu0
      %v1845 = vadd.f32 %v1021, %v1844
      %v1846 = vpop.f32.mrb[0].mxu0
      %1847 = vmatprep.mubr.bf16.mxu0 0
      %1848 = vmatmul.mubr.bf16.gmra.mrb[0].mxu0 %v1658
      %v1849 = vpop.f32.mrb[0].mxu0
      %v1850 = vadd.f32 %v1021, %v1849
      %v1851 = vpop.f32.mrb[0].mxu0
      %v1852 = vpop.f32.mrb[0].mxu0
      %v1853 = vadd.f32 %v1021, %v1852
      %v1854 = vpop.f32.mrb[0].mxu0
      %1855 = vmatprep.mubr.bf16.mxu0 0
      %1856 = vmatmul.mubr.bf16.gmra.mrb[0].mxu0 %v1661
      %v1857 = vpop.f32.mrb[0].mxu0
      %v1858 = vadd.f32 %v1021, %v1857
      %v1859 = vpop.f32.mrb[0].mxu0
      %v1860 = vpop.f32.mrb[0].mxu0
      %v1861 = vadd.f32 %v1021, %v1860
      %v1862 = vpop.f32.mrb[0].mxu0
      %1863 = vmatprep.mubr.bf16.mxu0 0
      %1864 = vmatmul.mubr.bf16.gmra.mrb[0].mxu0 %v1664
      %v1865 = vpop.f32.mrb[0].mxu0
      %v1866 = vadd.f32 %v1021, %v1865
      %v1867 = vpop.f32.mrb[0].mxu0
      %v1868 = vpop.f32.mrb[0].mxu0
      %v1869 = vadd.f32 %v1021, %v1868
      %v1870 = vpop.f32.mrb[0].mxu0
      %1871 = vmatprep.mubr.bf16.mxu0 0
      %1872 = vmatmul.mubr.bf16.gmra.mrb[0].mxu0 %v1667
      %v1873 = vpop.f32.mrb[0].mxu0
      %v1874 = vadd.f32 %v1021, %v1873
      %v1875 = vpop.f32.mrb[0].mxu0
      %v1876 = vpop.f32.mrb[0].mxu0
      %v1877 = vadd.f32 %v1021, %v1876
      %v1878 = vpop.f32.mrb[0].mxu0
      %1879 = vmatprep.mubr.bf16.mxu0 0
      %1880 = vmatmul.mubr.bf16.gmra.mrb[0].mxu0 %v1670
      %v1881 = vpop.f32.mrb[0].mxu0
      %v1882 = vadd.f32 %v1021, %v1881
      %v1883 = vpop.f32.mrb[0].mxu0
      %v1884 = vpop.f32.mrb[0].mxu0
      %v1885 = vadd.f32 %v1021, %v1884
      %v1886 = vpop.f32.mrb[0].mxu0
      %1887 = vmatprep.mubr.bf16.mxu0 0
      %1888 = vmatmul.mubr.bf16.gmra.mrb[0].mxu0 %v1673
      %v1889 = vpop.f32.mrb[0].mxu0
      %v1890 = vadd.f32 %v1021, %v1889
      %v1891 = vpop.f32.mrb[0].mxu0
      %v1892 = vpop.f32.mrb[0].mxu0
      %v1893 = vadd.f32 %v1021, %v1892
      %v1894 = vpop.f32.mrb[0].mxu0
      %1895 = vmatprep.mubr.bf16.mxu0 0
      %1896 = vmatmul.mubr.bf16.gmra.mrb[0].mxu0 %v1676
      %v1897 = vpop.f32.mrb[0].mxu0
      %v1898 = vadd.f32 %v1021, %v1897
      %v1899 = vpop.f32.mrb[0].mxu0
      %v1900 = vpop.f32.mrb[0].mxu0
      %v1901 = vadd.f32 %v1021, %v1900
      %v1902 = vpop.f32.mrb[0].mxu0
      %1903 = vdwg.mxu0
      %v1904 = vtanh.pop %v1778
      %v1905 = vtanh.pop %v1781
      %v1906 = vtanh.pop %v1786
      %v1907 = vtanh.pop %v1789
      %v1908 = vtanh.pop %v1794
      %v1909 = vtanh.pop %v1797
      %v1910 = vtanh.pop %v1802
      %v1911 = vtanh.pop %v1805
      %v1912 = vtanh.pop %v1810
      %v1913 = vtanh.pop %v1813
      %v1914 = vtanh.pop %v1818
      %v1915 = vtanh.pop %v1821
      %v1916 = vtanh.pop %v1826
      %v1917 = vtanh.pop %v1829
      %v1918 = vtanh.pop %v1834
      %v1919 = vtanh.pop %v1837
      %v1920 = vtanh.pop %v1842
      %v1921 = vtanh.pop %v1845
      %v1922 = vtanh.pop %v1850
      %v1923 = vtanh.pop %v1853
      %v1924 = vtanh.pop %v1858
      %v1925 = vtanh.pop %v1861
      %v1926 = vtanh.pop %v1866
      %v1927 = vtanh.pop %v1869
      %v1928 = vtanh.pop %v1874
      %v1929 = vtanh.pop %v1877
      %v1930 = vtanh.pop %v1882
      %v1931 = vtanh.pop %v1885
      %v1932 = vtanh.pop %v1890
      %v1933 = vtanh.pop %v1893
      %v1934 = vtanh.pop %v1898
      %v1935 = vtanh.pop %v1901
      %1968 = vrot.lane.b32.xlu0 %v1904, 3
      %v1969 = vpop.permute.xlu0 %1968
      %1970 = vrot.lane.b32.xlu0 %v1905, 3
      %v1971 = vpop.permute.xlu0 %1970
      %1972 = vrot.lane.b32.xlu0 %v1906, 3
      %v1973 = vpop.permute.xlu0 %1972
      %1974 = vrot.lane.b32.xlu0 %v1907, 3
      %v1975 = vpop.permute.xlu0 %1974
      %1976 = vrot.lane.b32.xlu0 %v1908, 3
      %v1977 = vpop.permute.xlu0 %1976
      %1978 = vrot.lane.b32.xlu0 %v1909, 3
      %v1979 = vpop.permute.xlu0 %1978
      %1980 = vrot.lane.b32.xlu0 %v1910, 3
      %v1981 = vpop.permute.xlu0 %1980
      %1982 = vrot.lane.b32.xlu0 %v1911, 3
      %v1983 = vpop.permute.xlu0 %1982
      %1984 = vrot.lane.b32.xlu0 %v1912, 3
      %v1985 = vpop.permute.xlu0 %1984
      %1986 = vrot.lane.b32.xlu0 %v1913, 3
      %v1987 = vpop.permute.xlu0 %1986
      %1988 = vrot.lane.b32.xlu0 %v1914, 3
      %v1989 = vpop.permute.xlu0 %1988
      %1990 = vrot.lane.b32.xlu0 %v1915, 3
      %v1991 = vpop.permute.xlu0 %1990
      %1992 = vrot.lane.b32.xlu0 %v1916, 3
      %v1993 = vpop.permute.xlu0 %1992
      %1994 = vrot.lane.b32.xlu0 %v1917, 3
      %v1995 = vpop.permute.xlu0 %1994
      %1996 = vrot.lane.b32.xlu0 %v1918, 3
      %v1997 = vpop.permute.xlu0 %1996
      %1998 = vrot.lane.b32.xlu0 %v1919, 3
      %v1999 = vpop.permute.xlu0 %1998
      %2000 = vrot.lane.b32.xlu0 %v1920, 3
      %v2001 = vpop.permute.xlu0 %2000
      %2002 = vrot.lane.b32.xlu0 %v1921, 3
      %v2003 = vpop.permute.xlu0 %2002
      %2004 = vrot.lane.b32.xlu0 %v1922, 3
      %v2005 = vpop.permute.xlu0 %2004
      %2006 = vrot.lane.b32.xlu0 %v1923, 3
      %v2007 = vpop.permute.xlu0 %2006
      %2008 = vrot.lane.b32.xlu0 %v1924, 3
      %v2009 = vpop.permute.xlu0 %2008
      %2010 = vrot.lane.b32.xlu0 %v1925, 3
      %v2011 = vpop.permute.xlu0 %2010
      %2012 = vrot.lane.b32.xlu0 %v1926, 3
      %v2013 = vpop.permute.xlu0 %2012
      %2014 = vrot.lane.b32.xlu0 %v1927, 3
      %v2015 = vpop.permute.xlu0 %2014
      %2016 = vrot.lane.b32.xlu0 %v1928, 3
      %v2017 = vpop.permute.xlu0 %2016
      %2018 = vrot.lane.b32.xlu0 %v1929, 3
      %v2019 = vpop.permute.xlu0 %2018
      %2020 = vrot.lane.b32.xlu0 %v1930, 3
      %v2021 = vpop.permute.xlu0 %2020
      %2022 = vrot.lane.b32.xlu0 %v1931, 3
      %v2023 = vpop.permute.xlu0 %2022
      %2024 = vrot.lane.b32.xlu0 %v1932, 3
      %v2025 = vpop.permute.xlu0 %2024
      %2026 = vrot.lane.b32.xlu0 %v1933, 3
      %v2027 = vpop.permute.xlu0 %2026
      %2028 = vrot.lane.b32.xlu0 %v1934, 3
      %v2029 = vpop.permute.xlu0 %2028
      %2030 = vrot.lane.b32.xlu0 %v1935, 3
      %v2031 = vpop.permute.xlu0 %2030
      %vm2064 = vcmask 23552
      %v2065 = vsel %vm2064, %v1232, %v1969
      %v2066 = vsel %vm2064, %v1233, %v1971
      %v2067 = vsel %vm2064, %v1234, %v1973
      %v2068 = vsel %vm2064, %v1235, %v1975
      %v2069 = vsel %vm2064, %v1236, %v1977
      %v2070 = vsel %vm2064, %v1237, %v1979
      %v2071 = vsel %vm2064, %v1238, %v1981
      %v2072 = vsel %vm2064, %v1239, %v1983
      %v2073 = vsel %vm2064, %v1240, %v1985
      %v2074 = vsel %vm2064, %v1241, %v1987
      %v2075 = vsel %vm2064, %v1242, %v1989
      %v2076 = vsel %vm2064, %v1243, %v1991
      %v2077 = vsel %vm2064, %v1244, %v1993
      %v2078 = vsel %vm2064, %v1245, %v1995
      %v2079 = vsel %vm2064, %v1246, %v1997
      %v2080 = vsel %vm2064, %v1247, %v1999
      %v2081 = vsel %vm2064, %v1248, %v2001
      %v2082 = vsel %vm2064, %v1249, %v2003
      %v2083 = vsel %vm2064, %v1250, %v2005
      %v2084 = vsel %vm2064, %v1251, %v2007
      %v2085 = vsel %vm2064, %v1252, %v2009
      %v2086 = vsel %vm2064, %v1253, %v2011
      %v2087 = vsel %vm2064, %v1254, %v2013
      %v2088 = vsel %vm2064, %v1255, %v2015
      %v2089 = vsel %vm2064, %v1256, %v2017
      %v2090 = vsel %vm2064, %v1257, %v2019
      %v2091 = vsel %vm2064, %v1258, %v2021
      %v2092 = vsel %vm2064, %v1259, %v2023
      %v2093 = vsel %vm2064, %v1260, %v2025
      %v2094 = vsel %vm2064, %v1261, %v2027
      %v2095 = vsel %vm2064, %v1262, %v2029
      %v2096 = vsel %vm2064, %v1263, %v2031
      %v2098 = vshrl.u32 %v223, 16
      %v2100 = vrot.slane %v2098, 4
      %v2101 = vshll.u32 %v223, 16
      %v2103 = vrot.slane %v2101, 5
      %v2104 = vor.u32 %v2100, %v2103
      %v2105 = vrot.slane %v2104, 4
      %v2107 = vshll.u32 %v224, 16
      %v2109 = vrot.slane %v2107, 5
      %v2110 = vsel %vm228, %v2105, %v2109
      %v2111 = vshrl.u32 %v224, 16
      %v2113 = vrot.slane %v2111, 4
      %v2114 = vor.u32 %v2113, %v2109
      %v2115 = vrot.slane %v2114, 4
      %v2117 = vshll.u32 %v225, 16
      %v2119 = vrot.slane %v2117, 5
      %v2120 = vsel %vm228, %v2115, %v2119
      %2121 = vrot.lane.b32.xlu0 %v836, 32
      %v2122 = vpop.permute.xlu0 %2121
      %v2125 = vunpack.c.l.b16 %v223
      %v2126 = vunpack.c.l.b16 %v224
      %v2127 = vpack.c.b16 %v2126, %v2125
      %2128 = vrot.lane.b32.xlu0 %v2127, 64
      %v2129 = vpop.permute.xlu0 %2128
      %v2130 = vunpack.c.l.b16 %v2110
      %v2131 = vunpack.c.l.b16 %v2120
      %v2132 = vpack.c.b16 %v2131, %v2130
      %2133 = vrot.lane.b32.xlu0 %v2132, 96
      %v2134 = vpop.permute.xlu0 %2133
      %v2137 = vsel %vm869, %v801, %v2122
      %v2139 = vsel %vm918, %v2137, %v2129
      %v2141 = vsel %vm951, %v2139, %v2134
      %s2143 = scalar_lea.vmem %s1, 128
      %v2144 = vld [vmem:[%s2143] sm:$0xf]
      %v2145 = vld [vmem:[%s2143 + $0x4] sm:$0xf]
      %v2146 = vld [vmem:[%s2143 + $0x8] sm:$0xf]
      %v2147 = vld [vmem:[%s2143 + $0xc] sm:$0xf]
      %v2148 = vld [vmem:[%s2143 + $0x10] sm:$0xf]
      %v2149 = vld [vmem:[%s2143 + $0x14] sm:$0xf]
      %v2150 = vld [vmem:[%s2143 + $0x18] sm:$0xf]
      %v2151 = vld [vmem:[%s2143 + $0x1c] sm:$0xf]
      %v2152 = vld [vmem:[%s2143 + $0x20] sm:$0xf]
      %v2153 = vld [vmem:[%s2143 + $0x24] sm:$0xf]
      %v2154 = vld [vmem:[%s2143 + $0x28] sm:$0xf]
      %v2155 = vld [vmem:[%s2143 + $0x2c] sm:$0xf]
      %v2156 = vld [vmem:[%s2143 + $0x30] sm:$0xf]
      %v2157 = vld [vmem:[%s2143 + $0x34] sm:$0xf]
      %v2158 = vld [vmem:[%s2143 + $0x38] sm:$0xf]
      %v2159 = vld [vmem:[%s2143 + $0x3c] sm:$0xf]
      %v2176 = vunpack.c.l.b16 %v2144
      %v2177 = vunpack.c.l.b16 %v2145
      %v2178 = vunpack.c.l.b16 %v2146
      %v2179 = vunpack.c.l.b16 %v2147
      %v2180 = vunpack.c.l.b16 %v2148
      %v2181 = vunpack.c.l.b16 %v2149
      %v2182 = vunpack.c.l.b16 %v2150
      %v2183 = vunpack.c.l.b16 %v2151
      %v2184 = vunpack.c.l.b16 %v2152
      %v2185 = vunpack.c.l.b16 %v2153
      %v2186 = vunpack.c.l.b16 %v2154
      %v2187 = vunpack.c.l.b16 %v2155
      %v2188 = vunpack.c.l.b16 %v2156
      %v2189 = vunpack.c.l.b16 %v2157
      %v2190 = vunpack.c.l.b16 %v2158
      %v2191 = vunpack.c.l.b16 %v2159
      %v2192 = vpack.c.b16 %v2177, %v2176
      %v2193 = vpack.c.b16 %v2179, %v2178
      %v2194 = vpack.c.b16 %v2181, %v2180
      %v2195 = vpack.c.b16 %v2183, %v2182
      %v2196 = vpack.c.b16 %v2185, %v2184
      %v2197 = vpack.c.b16 %v2187, %v2186
      %v2198 = vpack.c.b16 %v2189, %v2188
      %v2199 = vpack.c.b16 %v2191, %v2190
      %2208 = vmatprep.subr.bf16.mxu0 0
      %2209 = vmatpush1.bf16.msra.mxu0 %v2192
      %2210 = vmatprep.subr.bf16.mxu0 0
      %2211 = vmatpush1.bf16.msra.mxu0 %v2193
      %2212 = vmatprep.subr.bf16.mxu0 0
      %2213 = vmatpush1.bf16.msra.mxu0 %v2194
      %2214 = vmatprep.subr.bf16.mxu0 0
      %2215 = vmatpush1.bf16.msra.mxu0 %v2195
      %2216 = vmatprep.subr.bf16.mxu0 0
      %2217 = vmatpush1.bf16.msra.mxu0 %v2196
      %2218 = vmatprep.subr.bf16.mxu0 0
      %2219 = vmatpush1.bf16.msra.mxu0 %v2197
      %2220 = vmatprep.subr.bf16.mxu0 0
      %2221 = vmatpush1.bf16.msra.mxu0 %v2198
      %2222 = vmatprep.subr.bf16.mxu0 0
      %2223 = vmatpush1.bf16.msra.mxu0 %v2199
      %2224 = vmatprep.subr.bf16.mxu0 0
      %2225 = vmatpush1.bf16.msra.mxu0 0
      %2226 = vmatprep.subr.bf16.mxu0 0
      %2227 = vmatpush1.bf16.msra.mxu0 0
      %2228 = vmatprep.subr.bf16.mxu0 0
      %2229 = vmatpush1.bf16.msra.mxu0 0
      %2230 = vmatprep.subr.bf16.mxu0 0
      %2231 = vmatpush1.bf16.msra.mxu0 0
      %2232 = vmatprep.subr.bf16.mxu0 0
      %2233 = vmatpush1.bf16.msra.mxu0 0
      %2234 = vmatprep.subr.bf16.mxu0 0
      %2235 = vmatpush1.bf16.msra.mxu0 0
      %2236 = vmatprep.subr.bf16.mxu0 0
      %2237 = vmatpush1.bf16.msra.mxu0 0
      %2238 = vmatprep.subr.bf16.mxu0 0
      %2239 = vmatpush1.bf16.msra.mxu0 0
      %2240 = vmatprep.mubr.bf16.mxu0 0
      %2241 = vmatmul.mubr.bf16.gmra.mrb[0].mxu0 %v956
      %v2242 = vpop.f32.mrb[0].mxu0
      %v2243 = vadd.f32 %v1021, %v2242
      %v2244 = vpop.f32.mrb[0].mxu0
      %v2245 = vpop.f32.mrb[0].mxu0
      %v2246 = vadd.f32 %v1021, %v2245
      %v2247 = vpop.f32.mrb[0].mxu0
      %2248 = vmatprep.mubr.bf16.mxu0 0
      %2249 = vmatmul.mubr.bf16.gmra.mrb[0].mxu0 %v959
      %v2250 = vpop.f32.mrb[0].mxu0
      %v2251 = vadd.f32 %v1021, %v2250
      %v2252 = vpop.f32.mrb[0].mxu0
      %v2253 = vpop.f32.mrb[0].mxu0
      %v2254 = vadd.f32 %v1021, %v2253
      %v2255 = vpop.f32.mrb[0].mxu0
      %2256 = vmatprep.mubr.bf16.mxu0 0
      %2257 = vmatmul.mubr.bf16.gmra.mrb[0].mxu0 %v962
      %v2258 = vpop.f32.mrb[0].mxu0
      %v2259 = vadd.f32 %v1021, %v2258
      %v2260 = vpop.f32.mrb[0].mxu0
      %v2261 = vpop.f32.mrb[0].mxu0
      %v2262 = vadd.f32 %v1021, %v2261
      %v2263 = vpop.f32.mrb[0].mxu0
      %2264 = vmatprep.mubr.bf16.mxu0 0
      %2265 = vmatmul.mubr.bf16.gmra.mrb[0].mxu0 %v965
      %v2266 = vpop.f32.mrb[0].mxu0
      %v2267 = vadd.f32 %v1021, %v2266
      %v2268 = vpop.f32.mrb[0].mxu0
      %v2269 = vpop.f32.mrb[0].mxu0
      %v2270 = vadd.f32 %v1021, %v2269
      %v2271 = vpop.f32.mrb[0].mxu0
      %2272 = vmatprep.mubr.bf16.mxu0 0
      %2273 = vmatmul.mubr.bf16.gmra.mrb[0].mxu0 %v968
      %v2274 = vpop.f32.mrb[0].mxu0
      %v2275 = vadd.f32 %v1021, %v2274
      %v2276 = vpop.f32.mrb[0].mxu0
      %v2277 = vpop.f32.mrb[0].mxu0
      %v2278 = vadd.f32 %v1021, %v2277
      %v2279 = vpop.f32.mrb[0].mxu0
      %2280 = vmatprep.mubr.bf16.mxu0 0
      %2281 = vmatmul.mubr.bf16.gmra.mrb[0].mxu0 %v971
      %v2282 = vpop.f32.mrb[0].mxu0
      %v2283 = vadd.f32 %v1021, %v2282
      %v2284 = vpop.f32.mrb[0].mxu0
      %v2285 = vpop.f32.mrb[0].mxu0
      %v2286 = vadd.f32 %v1021, %v2285
      %v2287 = vpop.f32.mrb[0].mxu0
      %2288 = vmatprep.mubr.bf16.mxu0 0
      %2289 = vmatmul.mubr.bf16.gmra.mrb[0].mxu0 %v974
      %v2290 = vpop.f32.mrb[0].mxu0
      %v2291 = vadd.f32 %v1021, %v2290
      %v2292 = vpop.f32.mrb[0].mxu0
      %v2293 = vpop.f32.mrb[0].mxu0
      %v2294 = vadd.f32 %v1021, %v2293
      %v2295 = vpop.f32.mrb[0].mxu0
      %2296 = vmatprep.mubr.bf16.mxu0 0
      %2297 = vmatmul.mubr.bf16.gmra.mrb[0].mxu0 %v977
      %v2298 = vpop.f32.mrb[0].mxu0
      %v2299 = vadd.f32 %v1021, %v2298
      %v2300 = vpop.f32.mrb[0].mxu0
      %v2301 = vpop.f32.mrb[0].mxu0
      %v2302 = vadd.f32 %v1021, %v2301
      %v2303 = vpop.f32.mrb[0].mxu0
      %2304 = vmatprep.mubr.bf16.mxu0 0
      %2305 = vmatmul.mubr.bf16.gmra.mrb[0].mxu0 %v980
      %v2306 = vpop.f32.mrb[0].mxu0
      %v2307 = vadd.f32 %v1021, %v2306
      %v2308 = vpop.f32.mrb[0].mxu0
      %v2309 = vpop.f32.mrb[0].mxu0
      %v2310 = vadd.f32 %v1021, %v2309
      %v2311 = vpop.f32.mrb[0].mxu0
      %2312 = vmatprep.mubr.bf16.mxu0 0
      %2313 = vmatmul.mubr.bf16.gmra.mrb[0].mxu0 %v983
      %v2314 = vpop.f32.mrb[0].mxu0
      %v2315 = vadd.f32 %v1021, %v2314
      %v2316 = vpop.f32.mrb[0].mxu0
      %v2317 = vpop.f32.mrb[0].mxu0
      %v2318 = vadd.f32 %v1021, %v2317
      %v2319 = vpop.f32.mrb[0].mxu0
      %2320 = vmatprep.mubr.bf16.mxu0 0
      %2321 = vmatmul.mubr.bf16.gmra.mrb[0].mxu0 %v986
      %v2322 = vpop.f32.mrb[0].mxu0
      %v2323 = vadd.f32 %v1021, %v2322
      %v2324 = vpop.f32.mrb[0].mxu0
      %v2325 = vpop.f32.mrb[0].mxu0
      %v2326 = vadd.f32 %v1021, %v2325
      %v2327 = vpop.f32.mrb[0].mxu0
      %2328 = vmatprep.mubr.bf16.mxu0 0
      %2329 = vmatmul.mubr.bf16.gmra.mrb[0].mxu0 %v989
      %v2330 = vpop.f32.mrb[0].mxu0
      %v2331 = vadd.f32 %v1021, %v2330
      %v2332 = vpop.f32.mrb[0].mxu0
      %v2333 = vpop.f32.mrb[0].mxu0
      %v2334 = vadd.f32 %v1021, %v2333
      %v2335 = vpop.f32.mrb[0].mxu0
      %2336 = vmatprep.mubr.bf16.mxu0 0
      %2337 = vmatmul.mubr.bf16.gmra.mrb[0].mxu0 %v992
      %v2338 = vpop.f32.mrb[0].mxu0
      %v2339 = vadd.f32 %v1021, %v2338
      %v2340 = vpop.f32.mrb[0].mxu0
      %v2341 = vpop.f32.mrb[0].mxu0
      %v2342 = vadd.f32 %v1021, %v2341
      %v2343 = vpop.f32.mrb[0].mxu0
      %2344 = vmatprep.mubr.bf16.mxu0 0
      %2345 = vmatmul.mubr.bf16.gmra.mrb[0].mxu0 %v995
      %v2346 = vpop.f32.mrb[0].mxu0
      %v2347 = vadd.f32 %v1021, %v2346
      %v2348 = vpop.f32.mrb[0].mxu0
      %v2349 = vpop.f32.mrb[0].mxu0
      %v2350 = vadd.f32 %v1021, %v2349
      %v2351 = vpop.f32.mrb[0].mxu0
      %2352 = vmatprep.mubr.bf16.mxu0 0
      %2353 = vmatmul.mubr.bf16.gmra.mrb[0].mxu0 %v998
      %v2354 = vpop.f32.mrb[0].mxu0
      %v2355 = vadd.f32 %v1021, %v2354
      %v2356 = vpop.f32.mrb[0].mxu0
      %v2357 = vpop.f32.mrb[0].mxu0
      %v2358 = vadd.f32 %v1021, %v2357
      %v2359 = vpop.f32.mrb[0].mxu0
      %2360 = vmatprep.mubr.bf16.mxu0 0
      %2361 = vmatmul.mubr.bf16.gmra.mrb[0].mxu0 %v2141
      %v2362 = vpop.f32.mrb[0].mxu0
      %v2363 = vadd.f32 %v1021, %v2362
      %v2364 = vpop.f32.mrb[0].mxu0
      %v2365 = vpop.f32.mrb[0].mxu0
      %v2366 = vadd.f32 %v1021, %v2365
      %v2367 = vpop.f32.mrb[0].mxu0
      %2368 = vdwg.mxu0
      %v2369 = vtanh.pop %v2243
      %v2370 = vtanh.pop %v2246
      %v2371 = vtanh.pop %v2251
      %v2372 = vtanh.pop %v2254
      %v2373 = vtanh.pop %v2259
      %v2374 = vtanh.pop %v2262
      %v2375 = vtanh.pop %v2267
      %v2376 = vtanh.pop %v2270
      %v2377 = vtanh.pop %v2275
      %v2378 = vtanh.pop %v2278
      %v2379 = vtanh.pop %v2283
      %v2380 = vtanh.pop %v2286
      %v2381 = vtanh.pop %v2291
      %v2382 = vtanh.pop %v2294
      %v2383 = vtanh.pop %v2299
      %v2384 = vtanh.pop %v2302
      %v2385 = vtanh.pop %v2307
      %v2386 = vtanh.pop %v2310
      %v2387 = vtanh.pop %v2315
      %v2388 = vtanh.pop %v2318
      %v2389 = vtanh.pop %v2323
      %v2390 = vtanh.pop %v2326
      %v2391 = vtanh.pop %v2331
      %v2392 = vtanh.pop %v2334
      %v2393 = vtanh.pop %v2339
      %v2394 = vtanh.pop %v2342
      %v2395 = vtanh.pop %v2347
      %v2396 = vtanh.pop %v2350
      %v2397 = vtanh.pop %v2355
      %v2398 = vtanh.pop %v2358
      %v2399 = vtanh.pop %v2363
      %v2400 = vtanh.pop %v2366
      %v2402 = vrot.slane %v223, 5
      %v2403 = vrot.slane %v2402, 4
      %v2404 = vrot.slane %v224, 5
      %v2405 = vsel %vm1282, %v2403, %v2404
      %v2406 = vrot.slane %v2404, 4
      %v2407 = vrot.slane %v225, 5
      %v2408 = vsel %vm1282, %v2406, %v2407
      %2409 = vrot.lane.b32.xlu0 %v1517, 32
      %v2410 = vpop.permute.xlu0 %2409
      %2411 = vrot.lane.b32.xlu0 %v2132, 64
      %v2412 = vpop.permute.xlu0 %2411
      %v2413 = vunpack.c.l.b16 %v2405
      %v2414 = vunpack.c.l.b16 %v2408
      %v2415 = vpack.c.b16 %v2414, %v2413
      %2416 = vrot.lane.b32.xlu0 %v2415, 96
      %v2417 = vpop.permute.xlu0 %2416
      %v2420 = vsel %vm869, %v836, %v2410
      %v2422 = vsel %vm918, %v2420, %v2412
      %v2424 = vsel %vm951, %v2422, %v2417
      %s2426 = scalar_lea.vmem %s1, 192
      %v2427 = vld [vmem:[%s2426] sm:$0xf]
      %v2428 = vld [vmem:[%s2426 + $0x4] sm:$0xf]
      %v2429 = vld [vmem:[%s2426 + $0x8] sm:$0xf]
      %v2430 = vld [vmem:[%s2426 + $0xc] sm:$0xf]
      %v2431 = vld [vmem:[%s2426 + $0x10] sm:$0xf]
      %v2432 = vld [vmem:[%s2426 + $0x14] sm:$0xf]
      %v2433 = vld [vmem:[%s2426 + $0x18] sm:$0xf]
      %v2434 = vld [vmem:[%s2426 + $0x1c] sm:$0xf]
      %v2435 = vld [vmem:[%s2426 + $0x20] sm:$0xf]
      %v2436 = vld [vmem:[%s2426 + $0x24] sm:$0xf]
      %v2437 = vld [vmem:[%s2426 + $0x28] sm:$0xf]
      %v2438 = vld [vmem:[%s2426 + $0x2c] sm:$0xf]
      %v2439 = vld [vmem:[%s2426 + $0x30] sm:$0xf]
      %v2440 = vld [vmem:[%s2426 + $0x34] sm:$0xf]
      %v2441 = vld [vmem:[%s2426 + $0x38] sm:$0xf]
      %v2442 = vld [vmem:[%s2426 + $0x3c] sm:$0xf]
      %v2459 = vunpack.c.l.b16 %v2427
      %v2460 = vunpack.c.l.b16 %v2428
      %v2461 = vunpack.c.l.b16 %v2429
      %v2462 = vunpack.c.l.b16 %v2430
      %v2463 = vunpack.c.l.b16 %v2431
      %v2464 = vunpack.c.l.b16 %v2432
      %v2465 = vunpack.c.l.b16 %v2433
      %v2466 = vunpack.c.l.b16 %v2434
      %v2467 = vunpack.c.l.b16 %v2435
      %v2468 = vunpack.c.l.b16 %v2436
      %v2469 = vunpack.c.l.b16 %v2437
      %v2470 = vunpack.c.l.b16 %v2438
      %v2471 = vunpack.c.l.b16 %v2439
      %v2472 = vunpack.c.l.b16 %v2440
      %v2473 = vunpack.c.l.b16 %v2441
      %v2474 = vunpack.c.l.b16 %v2442
      %v2475 = vpack.c.b16 %v2460, %v2459
      %v2476 = vpack.c.b16 %v2462, %v2461
      %v2477 = vpack.c.b16 %v2464, %v2463
      %v2478 = vpack.c.b16 %v2466, %v2465
      %v2479 = vpack.c.b16 %v2468, %v2467
      %v2480 = vpack.c.b16 %v2470, %v2469
      %v2481 = vpack.c.b16 %v2472, %v2471
      %v2482 = vpack.c.b16 %v2474, %v2473
      %2491 = vmatprep.subr.bf16.mxu0 0
      %2492 = vmatpush1.bf16.msra.mxu0 %v2475
      %2493 = vmatprep.subr.bf16.mxu0 0
      %2494 = vmatpush1.bf16.msra.mxu0 %v2476
      %2495 = vmatprep.subr.bf16.mxu0 0
      %2496 = vmatpush1.bf16.msra.mxu0 %v2477
      %2497 = vmatprep.subr.bf16.mxu0 0
      %2498 = vmatpush1.bf16.msra.mxu0 %v2478
      %2499 = vmatprep.subr.bf16.mxu0 0
      %2500 = vmatpush1.bf16.msra.mxu0 %v2479
      %2501 = vmatprep.subr.bf16.mxu0 0
      %2502 = vmatpush1.bf16.msra.mxu0 %v2480
      %2503 = vmatprep.subr.bf16.mxu0 0
      %2504 = vmatpush1.bf16.msra.mxu0 %v2481
      %2505 = vmatprep.subr.bf16.mxu0 0
      %2506 = vmatpush1.bf16.msra.mxu0 %v2482
      %2507 = vmatprep.subr.bf16.mxu0 0
      %2508 = vmatpush1.bf16.msra.mxu0 0
      %2509 = vmatprep.subr.bf16.mxu0 0
      %2510 = vmatpush1.bf16.msra.mxu0 0
      %2511 = vmatprep.subr.bf16.mxu0 0
      %2512 = vmatpush1.bf16.msra.mxu0 0
      %2513 = vmatprep.subr.bf16.mxu0 0
      %2514 = vmatpush1.bf16.msra.mxu0 0
      %2515 = vmatprep.subr.bf16.mxu0 0
      %2516 = vmatpush1.bf16.msra.mxu0 0
      %2517 = vmatprep.subr.bf16.mxu0 0
      %2518 = vmatpush1.bf16.msra.mxu0 0
      %2519 = vmatprep.subr.bf16.mxu0 0
      %2520 = vmatpush1.bf16.msra.mxu0 0
      %2521 = vmatprep.subr.bf16.mxu0 0
      %2522 = vmatpush1.bf16.msra.mxu0 0
      %2523 = vmatprep.mubr.bf16.mxu0 0
      %2524 = vmatmul.mubr.bf16.gmra.mrb[0].mxu0 %v1634
      %v2525 = vpop.f32.mrb[0].mxu0
      %v2526 = vadd.f32 %v1021, %v2525
      %v2527 = vpop.f32.mrb[0].mxu0
      %v2528 = vpop.f32.mrb[0].mxu0
      %v2529 = vadd.f32 %v1021, %v2528
      %v2530 = vpop.f32.mrb[0].mxu0
      %2531 = vmatprep.mubr.bf16.mxu0 0
      %2532 = vmatmul.mubr.bf16.gmra.mrb[0].mxu0 %v1637
      %v2533 = vpop.f32.mrb[0].mxu0
      %v2534 = vadd.f32 %v1021, %v2533
      %v2535 = vpop.f32.mrb[0].mxu0
      %v2536 = vpop.f32.mrb[0].mxu0
      %v2537 = vadd.f32 %v1021, %v2536
      %v2538 = vpop.f32.mrb[0].mxu0
      %2539 = vmatprep.mubr.bf16.mxu0 0
      %2540 = vmatmul.mubr.bf16.gmra.mrb[0].mxu0 %v1640
      %v2541 = vpop.f32.mrb[0].mxu0
      %v2542 = vadd.f32 %v1021, %v2541
      %v2543 = vpop.f32.mrb[0].mxu0
      %v2544 = vpop.f32.mrb[0].mxu0
      %v2545 = vadd.f32 %v1021, %v2544
      %v2546 = vpop.f32.mrb[0].mxu0
      %2547 = vmatprep.mubr.bf16.mxu0 0
      %2548 = vmatmul.mubr.bf16.gmra.mrb[0].mxu0 %v1643
      %v2549 = vpop.f32.mrb[0].mxu0
      %v2550 = vadd.f32 %v1021, %v2549
      %v2551 = vpop.f32.mrb[0].mxu0
      %v2552 = vpop.f32.mrb[0].mxu0
      %v2553 = vadd.f32 %v1021, %v2552
      %v2554 = vpop.f32.mrb[0].mxu0
      %2555 = vmatprep.mubr.bf16.mxu0 0
      %2556 = vmatmul.mubr.bf16.gmra.mrb[0].mxu0 %v1646
      %v2557 = vpop.f32.mrb[0].mxu0
      %v2558 = vadd.f32 %v1021, %v2557
      %v2559 = vpop.f32.mrb[0].mxu0
      %v2560 = vpop.f32.mrb[0].mxu0
      %v2561 = vadd.f32 %v1021, %v2560
      %v2562 = vpop.f32.mrb[0].mxu0
      %2563 = vmatprep.mubr.bf16.mxu0 0
      %2564 = vmatmul.mubr.bf16.gmra.mrb[0].mxu0 %v1649
      %v2565 = vpop.f32.mrb[0].mxu0
      %v2566 = vadd.f32 %v1021, %v2565
      %v2567 = vpop.f32.mrb[0].mxu0
      %v2568 = vpop.f32.mrb[0].mxu0
      %v2569 = vadd.f32 %v1021, %v2568
      %v2570 = vpop.f32.mrb[0].mxu0
      %2571 = vmatprep.mubr.bf16.mxu0 0
      %2572 = vmatmul.mubr.bf16.gmra.mrb[0].mxu0 %v1652
      %v2573 = vpop.f32.mrb[0].mxu0
      %v2574 = vadd.f32 %v1021, %v2573
      %v2575 = vpop.f32.mrb[0].mxu0
      %v2576 = vpop.f32.mrb[0].mxu0
      %v2577 = vadd.f32 %v1021, %v2576
      %v2578 = vpop.f32.mrb[0].mxu0
      %2579 = vmatprep.mubr.bf16.mxu0 0
      %2580 = vmatmul.mubr.bf16.gmra.mrb[0].mxu0 %v1655
      %v2581 = vpop.f32.mrb[0].mxu0
      %v2582 = vadd.f32 %v1021, %v2581
      %v2583 = vpop.f32.mrb[0].mxu0
      %v2584 = vpop.f32.mrb[0].mxu0
      %v2585 = vadd.f32 %v1021, %v2584
      %v2586 = vpop.f32.mrb[0].mxu0
      %2587 = vmatprep.mubr.bf16.mxu0 0
      %2588 = vmatmul.mubr.bf16.gmra.mrb[0].mxu0 %v1658
      %v2589 = vpop.f32.mrb[0].mxu0
      %v2590 = vadd.f32 %v1021, %v2589
      %v2591 = vpop.f32.mrb[0].mxu0
      %v2592 = vpop.f32.mrb[0].mxu0
      %v2593 = vadd.f32 %v1021, %v2592
      %v2594 = vpop.f32.mrb[0].mxu0
      %2595 = vmatprep.mubr.bf16.mxu0 0
      %2596 = vmatmul.mubr.bf16.gmra.mrb[0].mxu0 %v1661
      %v2597 = vpop.f32.mrb[0].mxu0
      %v2598 = vadd.f32 %v1021, %v2597
      %v2599 = vpop.f32.mrb[0].mxu0
      %v2600 = vpop.f32.mrb[0].mxu0
      %v2601 = vadd.f32 %v1021, %v2600
      %v2602 = vpop.f32.mrb[0].mxu0
      %2603 = vmatprep.mubr.bf16.mxu0 0
      %2604 = vmatmul.mubr.bf16.gmra.mrb[0].mxu0 %v1664
      %v2605 = vpop.f32.mrb[0].mxu0
      %v2606 = vadd.f32 %v1021, %v2605
      %v2607 = vpop.f32.mrb[0].mxu0
      %v2608 = vpop.f32.mrb[0].mxu0
      %v2609 = vadd.f32 %v1021, %v2608
      %v2610 = vpop.f32.mrb[0].mxu0
      %2611 = vmatprep.mubr.bf16.mxu0 0
      %2612 = vmatmul.mubr.bf16.gmra.mrb[0].mxu0 %v1667
      %v2613 = vpop.f32.mrb[0].mxu0
      %v2614 = vadd.f32 %v1021, %v2613
      %v2615 = vpop.f32.mrb[0].mxu0
      %v2616 = vpop.f32.mrb[0].mxu0
      %v2617 = vadd.f32 %v1021, %v2616
      %v2618 = vpop.f32.mrb[0].mxu0
      %2619 = vmatprep.mubr.bf16.mxu0 0
      %2620 = vmatmul.mubr.bf16.gmra.mrb[0].mxu0 %v1670
      %v2621 = vpop.f32.mrb[0].mxu0
      %v2622 = vadd.f32 %v1021, %v2621
      %v2623 = vpop.f32.mrb[0].mxu0
      %v2624 = vpop.f32.mrb[0].mxu0
      %v2625 = vadd.f32 %v1021, %v2624
      %v2626 = vpop.f32.mrb[0].mxu0
      %2627 = vmatprep.mubr.bf16.mxu0 0
      %2628 = vmatmul.mubr.bf16.gmra.mrb[0].mxu0 %v1673
      %v2629 = vpop.f32.mrb[0].mxu0
      %v2630 = vadd.f32 %v1021, %v2629
      %v2631 = vpop.f32.mrb[0].mxu0
      %v2632 = vpop.f32.mrb[0].mxu0
      %v2633 = vadd.f32 %v1021, %v2632
      %v2634 = vpop.f32.mrb[0].mxu0
      %2635 = vmatprep.mubr.bf16.mxu0 0
      %2636 = vmatmul.mubr.bf16.gmra.mrb[0].mxu0 %v1676
      %v2637 = vpop.f32.mrb[0].mxu0
      %v2638 = vadd.f32 %v1021, %v2637
      %v2639 = vpop.f32.mrb[0].mxu0
      %v2640 = vpop.f32.mrb[0].mxu0
      %v2641 = vadd.f32 %v1021, %v2640
      %v2642 = vpop.f32.mrb[0].mxu0
      %2643 = vmatprep.mubr.bf16.mxu0 0
      %2644 = vmatmul.mubr.bf16.gmra.mrb[0].mxu0 %v2424
      %v2645 = vpop.f32.mrb[0].mxu0
      %v2646 = vadd.f32 %v1021, %v2645
      %v2647 = vpop.f32.mrb[0].mxu0
      %v2648 = vpop.f32.mrb[0].mxu0
      %v2649 = vadd.f32 %v1021, %v2648
      %v2650 = vpop.f32.mrb[0].mxu0
      %2651 = vdwg.mxu0
      %v2652 = vtanh.pop %v2526
      %v2653 = vtanh.pop %v2529
      %v2654 = vtanh.pop %v2534
      %v2655 = vtanh.pop %v2537
      %v2656 = vtanh.pop %v2542
      %v2657 = vtanh.pop %v2545
      %v2658 = vtanh.pop %v2550
      %v2659 = vtanh.pop %v2553
      %v2660 = vtanh.pop %v2558
      %v2661 = vtanh.pop %v2561
      %v2662 = vtanh.pop %v2566
      %v2663 = vtanh.pop %v2569
      %v2664 = vtanh.pop %v2574
      %v2665 = vtanh.pop %v2577
      %v2666 = vtanh.pop %v2582
      %v2667 = vtanh.pop %v2585
      %v2668 = vtanh.pop %v2590
      %v2669 = vtanh.pop %v2593
      %v2670 = vtanh.pop %v2598
      %v2671 = vtanh.pop %v2601
      %v2672 = vtanh.pop %v2606
      %v2673 = vtanh.pop %v2609
      %v2674 = vtanh.pop %v2614
      %v2675 = vtanh.pop %v2617
      %v2676 = vtanh.pop %v2622
      %v2677 = vtanh.pop %v2625
      %v2678 = vtanh.pop %v2630
      %v2679 = vtanh.pop %v2633
      %v2680 = vtanh.pop %v2638
      %v2681 = vtanh.pop %v2641
      %v2682 = vtanh.pop %v2646
      %v2683 = vtanh.pop %v2649
      %2716 = vrot.lane.b32.xlu0 %v2652, 3
      %v2717 = vpop.permute.xlu0 %2716
      %2718 = vrot.lane.b32.xlu0 %v2653, 3
      %v2719 = vpop.permute.xlu0 %2718
      %2720 = vrot.lane.b32.xlu0 %v2654, 3
      %v2721 = vpop.permute.xlu0 %2720
      %2722 = vrot.lane.b32.xlu0 %v2655, 3
      %v2723 = vpop.permute.xlu0 %2722
      %2724 = vrot.lane.b32.xlu0 %v2656, 3
      %v2725 = vpop.permute.xlu0 %2724
      %2726 = vrot.lane.b32.xlu0 %v2657, 3
      %v2727 = vpop.permute.xlu0 %2726
      %2728 = vrot.lane.b32.xlu0 %v2658, 3
      %v2729 = vpop.permute.xlu0 %2728
      %2730 = vrot.lane.b32.xlu0 %v2659, 3
      %v2731 = vpop.permute.xlu0 %2730
      %2732 = vrot.lane.b32.xlu0 %v2660, 3
      %v2733 = vpop.permute.xlu0 %2732
      %2734 = vrot.lane.b32.xlu0 %v2661, 3
      %v2735 = vpop.permute.xlu0 %2734
      %2736 = vrot.lane.b32.xlu0 %v2662, 3
      %v2737 = vpop.permute.xlu0 %2736
      %2738 = vrot.lane.b32.xlu0 %v2663, 3
      %v2739 = vpop.permute.xlu0 %2738
      %2740 = vrot.lane.b32.xlu0 %v2664, 3
      %v2741 = vpop.permute.xlu0 %2740
      %2742 = vrot.lane.b32.xlu0 %v2665, 3
      %v2743 = vpop.permute.xlu0 %2742
      %2744 = vrot.lane.b32.xlu0 %v2666, 3
      %v2745 = vpop.permute.xlu0 %2744
      %2746 = vrot.lane.b32.xlu0 %v2667, 3
      %v2747 = vpop.permute.xlu0 %2746
      %2748 = vrot.lane.b32.xlu0 %v2668, 3
      %v2749 = vpop.permute.xlu0 %2748
      %2750 = vrot.lane.b32.xlu0 %v2669, 3
      %v2751 = vpop.permute.xlu0 %2750
      %2752 = vrot.lane.b32.xlu0 %v2670, 3
      %v2753 = vpop.permute.xlu0 %2752
      %2754 = vrot.lane.b32.xlu0 %v2671, 3
      %v2755 = vpop.permute.xlu0 %2754
      %2756 = vrot.lane.b32.xlu0 %v2672, 3
      %v2757 = vpop.permute.xlu0 %2756
      %2758 = vrot.lane.b32.xlu0 %v2673, 3
      %v2759 = vpop.permute.xlu0 %2758
      %2760 = vrot.lane.b32.xlu0 %v2674, 3
      %v2761 = vpop.permute.xlu0 %2760
      %2762 = vrot.lane.b32.xlu0 %v2675, 3
      %v2763 = vpop.permute.xlu0 %2762
      %2764 = vrot.lane.b32.xlu0 %v2676, 3
      %v2765 = vpop.permute.xlu0 %2764
      %2766 = vrot.lane.b32.xlu0 %v2677, 3
      %v2767 = vpop.permute.xlu0 %2766
      %2768 = vrot.lane.b32.xlu0 %v2678, 3
      %v2769 = vpop.permute.xlu0 %2768
      %2770 = vrot.lane.b32.xlu0 %v2679, 3
      %v2771 = vpop.permute.xlu0 %2770
      %2772 = vrot.lane.b32.xlu0 %v2680, 3
      %v2773 = vpop.permute.xlu0 %2772
      %2774 = vrot.lane.b32.xlu0 %v2681, 3
      %v2775 = vpop.permute.xlu0 %2774
      %2776 = vrot.lane.b32.xlu0 %v2682, 3
      %v2777 = vpop.permute.xlu0 %2776
      %2778 = vrot.lane.b32.xlu0 %v2683, 3
      %v2779 = vpop.permute.xlu0 %2778
      %v2812 = vsel %vm2064, %v2369, %v2717
      %v2813 = vsel %vm2064, %v2370, %v2719
      %v2814 = vsel %vm2064, %v2371, %v2721
      %v2815 = vsel %vm2064, %v2372, %v2723
      %v2816 = vsel %vm2064, %v2373, %v2725
      %v2817 = vsel %vm2064, %v2374, %v2727
      %v2818 = vsel %vm2064, %v2375, %v2729
      %v2819 = vsel %vm2064, %v2376, %v2731
      %v2820 = vsel %vm2064, %v2377, %v2733
      %v2821 = vsel %vm2064, %v2378, %v2735
      %v2822 = vsel %vm2064, %v2379, %v2737
      %v2823 = vsel %vm2064, %v2380, %v2739
      %v2824 = vsel %vm2064, %v2381, %v2741
      %v2825 = vsel %vm2064, %v2382, %v2743
      %v2826 = vsel %vm2064, %v2383, %v2745
      %v2827 = vsel %vm2064, %v2384, %v2747
      %v2828 = vsel %vm2064, %v2385, %v2749
      %v2829 = vsel %vm2064, %v2386, %v2751
      %v2830 = vsel %vm2064, %v2387, %v2753
      %v2831 = vsel %vm2064, %v2388, %v2755
      %v2832 = vsel %vm2064, %v2389, %v2757
      %v2833 = vsel %vm2064, %v2390, %v2759
      %v2834 = vsel %vm2064, %v2391, %v2761
      %v2835 = vsel %vm2064, %v2392, %v2763
      %v2836 = vsel %vm2064, %v2393, %v2765
      %v2837 = vsel %vm2064, %v2394, %v2767
      %v2838 = vsel %vm2064, %v2395, %v2769
      %v2839 = vsel %vm2064, %v2396, %v2771
      %v2840 = vsel %vm2064, %v2397, %v2773
      %v2841 = vsel %vm2064, %v2398, %v2775
      %v2842 = vsel %vm2064, %v2399, %v2777
      %v2843 = vsel %vm2064, %v2400, %v2779
      %vm2844 = vcmask 48128
      %2845 = vst.msk [vmem:[%s170] sm:$0xff] %vm2844, %v2065
      %2846 = vst.msk [vmem:[%s170 + $0x8] sm:$0xff] %vm2844, %v2066
      %2847 = vst.msk [vmem:[%s170 + $0x10] sm:$0xff] %vm2844, %v2812
      %2848 = vst.msk [vmem:[%s170 + $0x18] sm:$0xff] %vm2844, %v2813
      %2849 = vst.msk [vmem:[%s170 + $0x20] sm:$0xff] %vm2844, %v2067
      %2850 = vst.msk [vmem:[%s170 + $0x28] sm:$0xff] %vm2844, %v2068
      %2851 = vst.msk [vmem:[%s170 + $0x30] sm:$0xff] %vm2844, %v2814
      %2852 = vst.msk [vmem:[%s170 + $0x38] sm:$0xff] %vm2844, %v2815
      %2853 = vst.msk [vmem:[%s170 + $0x40] sm:$0xff] %vm2844, %v2069
      %2854 = vst.msk [vmem:[%s170 + $0x48] sm:$0xff] %vm2844, %v2070
      %2855 = vst.msk [vmem:[%s170 + $0x50] sm:$0xff] %vm2844, %v2816
      %2856 = vst.msk [vmem:[%s170 + $0x58] sm:$0xff] %vm2844, %v2817
      %2857 = vst.msk [vmem:[%s170 + $0x60] sm:$0xff] %vm2844, %v2071
      %2858 = vst.msk [vmem:[%s170 + $0x68] sm:$0xff] %vm2844, %v2072
      %2859 = vst.msk [vmem:[%s170 + $0x70] sm:$0xff] %vm2844, %v2818
      %2860 = vst.msk [vmem:[%s170 + $0x78] sm:$0xff] %vm2844, %v2819
      %2861 = vst.msk [vmem:[%s170 + $0x80] sm:$0xff] %vm2844, %v2073
      %2862 = vst.msk [vmem:[%s170 + $0x88] sm:$0xff] %vm2844, %v2074
      %2863 = vst.msk [vmem:[%s170 + $0x90] sm:$0xff] %vm2844, %v2820
      %2864 = vst.msk [vmem:[%s170 + $0x98] sm:$0xff] %vm2844, %v2821
      %2865 = vst.msk [vmem:[%s170 + $0xa0] sm:$0xff] %vm2844, %v2075
      %2866 = vst.msk [vmem:[%s170 + $0xa8] sm:$0xff] %vm2844, %v2076
      %2867 = vst.msk [vmem:[%s170 + $0xb0] sm:$0xff] %vm2844, %v2822
      %2868 = vst.msk [vmem:[%s170 + $0xb8] sm:$0xff] %vm2844, %v2823
      %2869 = vst.msk [vmem:[%s170 + $0xc0] sm:$0xff] %vm2844, %v2077
      %2870 = vst.msk [vmem:[%s170 + $0xc8] sm:$0xff] %vm2844, %v2078
      %2871 = vst.msk [vmem:[%s170 + $0xd0] sm:$0xff] %vm2844, %v2824
      %2872 = vst.msk [vmem:[%s170 + $0xd8] sm:$0xff] %vm2844, %v2825
      %2873 = vst.msk [vmem:[%s170 + $0xe0] sm:$0xff] %vm2844, %v2079
      %2874 = vst.msk [vmem:[%s170 + $0xe8] sm:$0xff] %vm2844, %v2080
      %2875 = vst.msk [vmem:[%s170 + $0xf0] sm:$0xff] %vm2844, %v2826
      %2876 = vst.msk [vmem:[%s170 + $0xf8] sm:$0xff] %vm2844, %v2827
      %2877 = vst.msk [vmem:[%s170 + $0x100] sm:$0xff] %vm2844, %v2081
      %2878 = vst.msk [vmem:[%s170 + $0x108] sm:$0xff] %vm2844, %v2082
      %2879 = vst.msk [vmem:[%s170 + $0x110] sm:$0xff] %vm2844, %v2828
      %2880 = vst.msk [vmem:[%s170 + $0x118] sm:$0xff] %vm2844, %v2829
      %2881 = vst.msk [vmem:[%s170 + $0x120] sm:$0xff] %vm2844, %v2083
      %2882 = vst.msk [vmem:[%s170 + $0x128] sm:$0xff] %vm2844, %v2084
      %2883 = vst.msk [vmem:[%s170 + $0x130] sm:$0xff] %vm2844, %v2830
      %2884 = vst.msk [vmem:[%s170 + $0x138] sm:$0xff] %vm2844, %v2831
      %2885 = vst.msk [vmem:[%s170 + $0x140] sm:$0xff] %vm2844, %v2085
      %2886 = vst.msk [vmem:[%s170 + $0x148] sm:$0xff] %vm2844, %v2086
      %2887 = vst.msk [vmem:[%s170 + $0x150] sm:$0xff] %vm2844, %v2832
      %2888 = vst.msk [vmem:[%s170 + $0x158] sm:$0xff] %vm2844, %v2833
      %2889 = vst.msk [vmem:[%s170 + $0x160] sm:$0xff] %vm2844, %v2087
      %2890 = vst.msk [vmem:[%s170 + $0x168] sm:$0xff] %vm2844, %v2088
      %2891 = vst.msk [vmem:[%s170 + $0x170] sm:$0xff] %vm2844, %v2834
      %2892 = vst.msk [vmem:[%s170 + $0x178] sm:$0xff] %vm2844, %v2835
      %2893 = vst.msk [vmem:[%s170 + $0x180] sm:$0xff] %vm2844, %v2089
      %2894 = vst.msk [vmem:[%s170 + $0x188] sm:$0xff] %vm2844, %v2090
      %2895 = vst.msk [vmem:[%s170 + $0x190] sm:$0xff] %vm2844, %v2836
      %2896 = vst.msk [vmem:[%s170 + $0x198] sm:$0xff] %vm2844, %v2837
      %2897 = vst.msk [vmem:[%s170 + $0x1a0] sm:$0xff] %vm2844, %v2091
      %2898 = vst.msk [vmem:[%s170 + $0x1a8] sm:$0xff] %vm2844, %v2092
      %2899 = vst.msk [vmem:[%s170 + $0x1b0] sm:$0xff] %vm2844, %v2838
      %2900 = vst.msk [vmem:[%s170 + $0x1b8] sm:$0xff] %vm2844, %v2839
      %2901 = vst.msk [vmem:[%s170 + $0x1c0] sm:$0xff] %vm2844, %v2093
      %2902 = vst.msk [vmem:[%s170 + $0x1c8] sm:$0xff] %vm2844, %v2094
      %2903 = vst.msk [vmem:[%s170 + $0x1d0] sm:$0xff] %vm2844, %v2840
      %2904 = vst.msk [vmem:[%s170 + $0x1d8] sm:$0xff] %vm2844, %v2841
      %2905 = vst.msk [vmem:[%s170 + $0x1e0] sm:$0xff] %vm2844, %v2095
      %2906 = vst.msk [vmem:[%s170 + $0x1e8] sm:$0xff] %vm2844, %v2096
      %2907 = vst.msk [vmem:[%s170 + $0x1f0] sm:$0xff] %vm2844, %v2842
      %2908 = vst.msk [vmem:[%s170 + $0x1f8] sm:$0xff] %vm2844, %v2843
      %p2909 = scmp.lt.s32.totalorder %s14, 1
      %s2910 = scalar_select %p2909, %s14, 1
      %s2911 = smul.addr %s2910, 64
      %s2912 = smul.addr %s2911, 8
      %s2913 = scalar_lea.vmem %s3, %s2912
      // Predicated region
      $region33: #{vqvae_forward.27} parent=31 // pred_check
        %p2914 = pneg %p100
      $region34: #{vqvae_forward.27} parent=31 // pred_check_branch
        %2916 = sbr.rel (%p2914) target = $region36
      $region35: #{vqvae_forward.27} parent=31 // pred_region
        _
      $region36: #{vqvae_forward.27} parent=31 // pred_fallthru
        _
    $region32: #{vqvae_forward.27} parent=5 // pred_fallthru
      _
    %p2917 = scmp.le.s32.totalorder 2, %s9
    // Predicated region
    $region37: #{vqvae_forward.27} parent=5 // pred_check
      %p2918 = pneg %p2917
    $region38: #{vqvae_forward.27} parent=5 // pred_check_branch
      %2920 = sbr.rel (%p2918) target = $region40
    $region39: #{vqvae_forward.27} parent=5 // pred_region
      %s2921 = ssub.s32 %s9, 2
      // Predicated region
      $region41: #{vqvae_forward.27} parent=39 // pred_check
        %p2922 = pneg %p106
      $region42: #{vqvae_forward.27} parent=39 // pred_check_branch
        %2924 = sbr.rel (%p2922) target = $region44
      $region43: #{vqvae_forward.27} parent=39 // pred_region
        %p2925 = scmp.lt.s32.totalorder %s15, 1
        %s2926 = scalar_select %p2925, %s15, 1
        %s2927 = smul.addr %s2926, 64
        %s2928 = smul.addr %s2927, 8
        %s2929 = scalar_lea.vmem %s3, %s2928
      $region44: #{vqvae_forward.27} parent=39 // pred_fallthru
        _
    $region40: #{vqvae_forward.27} parent=5 // pred_fallthru
      _
  $region6: #{vqvae_forward.27} parent=0 // loop_footer
    %s13 = sadd.s32 1, %s9
  $region7: #{vqvae_forward.27} parent=0 // loop_footer_branch
    %8 = sbr.rel target = $region3
  $region8: #{vqvae_forward.27} parent=0 // loop_exit
    _

</llo_original>
